<compile_context>
chip_gen: v7x
topology: tpu7x:2x2x1
jax: 0.10.0
libtpu: 0.0.40
codegen_flags: <defaults>
</compile_context>

<pallas_src>
import math

import jax
import jax.numpy as jnp
from jax.experimental import pallas as pl
from jax.experimental.pallas import tpu as pltpu


def _round_up(v, m):
    return ((v + m - 1) // m) * m


# --------------------------------------------------------------------------------------
# Single fused kernel: stacked DFT, power spectra, fused IDFT -> autocorrelations,
# Levinson-Durbin (both orders), energy, centroid, tilt, pitch ACF, packed output.
# --------------------------------------------------------------------------------------
def _make_feature_kernel(cfg):
    BP = cfg["BP"]
    TM = cfg["TM"]
    DS_P = cfg["DS_P"]
    SEC_DS = cfg["SEC_DS"]
    SEC_US = cfg["SEC_US"]
    SEC_P = cfg["SEC_P"]
    O_AP = cfg["O_AP"]
    O_RC = cfg["O_RC"]
    O_SC = cfg["O_SC"]
    ap_order = cfg["allpole_order"]
    rc_order = cfg["r_coeff_order"]
    min_lag = cfg["min_lag"]
    max_lag = cfg["max_lag"]
    sr = cfg["sr"]
    O_P = SEC_DS + SEC_US
    DB_SCALE = 10.0 / math.log(10.0)

    def _levinson(r_rows, order):
        # r_rows: python list of (1, TM) float32 values (lags 0..order).
        # All recursion state stays in vregs; nothing is written back per step.
        a = [None] * (order + 1)
        err = r_rows[0]
        ks = []
        for m in range(1, order + 1):
            acc = r_rows[m]
            for j in range(1, m):
                acc = acc + a[j] * r_rows[m - j]
            km = -acc / (err + 1e-12)
            # TODO(synk): reference levinson() has no |k|<1 / err>0 safeguard; parity kept.
            new_a = [a[j] + km * a[m - j] for j in range(1, m)]
            for j in range(1, m):
                a[j] = new_a[j - 1]
            a[m] = km
            ks.append(km)
            err = err * (1.0 - km * km)
        return a, ks

    def kernel(f_ref, dft_ref, idft_ref, freq_ref, out_ref, ac_ref):
        f = f_ref[...]                                            # (frame_len, TM)

        # ---- one MXU matmul -> windowed + unwindowed real spectra (re/im stacked) ----
        # The blackman (power-normalized) window is pre-folded into the first two
        # BP-row blocks of dft_ref, so no per-frame window multiply is needed.
        spec = jnp.dot(dft_ref[...], f, preferred_element_type=jnp.float32)
        re_w = spec[0 * BP:1 * BP, :]
        im_w = spec[1 * BP:2 * BP, :]
        re_u = spec[2 * BP:3 * BP, :]
        im_u = spec[3 * BP:4 * BP, :]

        # Downsampled (windowed) spectrum x_ds -> packed straight into the output slab.
        out_ref[0:DS_P, :] = spec[0:DS_P, :]
        out_ref[DS_P:2 * DS_P, :] = spec[BP:BP + DS_P, :]

        p_w = re_w * re_w + im_w * im_w                           # |X_windowed|^2
        p_u = re_u * re_u + im_u * im_u                           # |X_frame|^2

        # ---- one fused IDFT matmul -> every autocorrelation lag we need ----
        #   rows    = [ds-acorr lags | full-band acorr lags | pitch-ACF lags]
        #   columns = [windowed frames | unwindowed frames]
        p_stack = jnp.concatenate([p_w, p_u], axis=1)             # (BP, 2*TM)
        ac_ref[...] = jnp.dot(idft_ref[...], p_stack,
                              preferred_element_type=jnp.float32)

        # ---- Levinson-Durbin, register-carried (r rows loaded once from VMEM) ----
        r_ds = [ac_ref[m:m + 1, 0:TM] for m in range(ap_order + 1)]
        a_ds, _ = _levinson(r_ds, ap_order)
        r_us = [ac_ref[SEC_DS + m:SEC_DS + m + 1, 0:TM] for m in range(rc_order + 1)]
        _, k_us = _levinson(r_us, rc_order)

        out_ref[O_AP:O_AP + 1, :] = jnp.ones((1, TM), jnp.float32)
        for j in range(1, ap_order + 1):
            out_ref[O_AP + j:O_AP + j + 1, :] = a_ds[j]
        for j in range(rc_order):
            out_ref[O_RC + j:O_RC + j + 1, :] = k_us[j]

        # ---- frame energy in dB (unwindowed frame) ----
        en = jnp.sum(f * f, axis=0, keepdims=True)
        energy = DB_SCALE * jnp.log(en + 1e-12)

        # ---- spectral centroid of the unwindowed frame ----
        mag_u = jnp.sqrt(p_u)                                     # padded bins are exactly 0
        num = jnp.sum(mag_u * freq_ref[...], axis=0, keepdims=True)
        den = jnp.sum(mag_u, axis=0, keepdims=True) + 1e-12
        centroid = num / den

        # ---- spectral tilt from the downsampled autocorrelation ----
        # TODO(synk): exact tilt_levinson() formula is external; first normalized lag used.
        tilt = ac_ref[1:2, 0:TM] / (ac_ref[0:1, 0:TM] + 1e-12)

        # ---- pitch / voicing via normalized circular autocorrelation ----
        # TODO(synk): pitch_extraction() is an external model-based tracker; ACF proxy here.
        ac_p = ac_ref[O_P:O_P + SEC_P, TM:2 * TM]
        nac = ac_p / (ac_ref[O_P:O_P + 1, TM:2 * TM] + 1e-12)
        lags = jax.lax.broadcasted_iota(jnp.int32, nac.shape, 0).astype(jnp.float32)
        valid = (lags >= float(min_lag)) & (lags <= float(max_lag))
        masked = jnp.where(valid, nac, -jnp.inf)
        vmax = jnp.max(masked, axis=0, keepdims=True)
        best = jnp.where((masked >= vmax) & valid, lags, 0.0)
        best_lag = jnp.maximum(jnp.max(best, axis=0, keepdims=True), 1.0)

        out_ref[O_SC + 0:O_SC + 1, :] = energy
        out_ref[O_SC + 1:O_SC + 2, :] = centroid
        out_ref[O_SC + 2:O_SC + 3, :] = tilt
        out_ref[O_SC + 3:O_SC + 4, :] = jnp.log(float(sr) / best_lag)   # log(pitch)
        out_ref[O_SC + 4:O_SC + 5, :] = jnp.clip(vmax, 0.0, 1.0)        # voicing
        out_ref[O_SC + 5:O_SC + 6, :] = vmax                            # "ignored"

    return kernel


def _extract_packed(frames_t, dft_stack, idft_stack, freq_col, cfg):
    fl, n_pad = frames_t.shape
    TM = cfg["TM"]
    BP = cfg["BP"]
    LAGS_P = cfg["LAGS_P"]
    R_TOTAL = cfg["R_TOTAL"]
    kernel = _make_feature_kernel(cfg)
    return pl.pallas_call(
        kernel,
        out_shape=jax.ShapeDtypeStruct((R_TOTAL, n_pad), jnp.float32),
        grid=(n_pad // TM,),
        in_specs=[
            pl.BlockSpec((fl, TM), lambda i: (0, i)),         # frames, tiled on frame axis
            pl.BlockSpec((4 * BP, fl), lambda i: (0, 0)),     # stacked (windowed) DFT, resident
            pl.BlockSpec((LAGS_P, BP), lambda i: (0, 0)),     # stacked IDFT, resident
            pl.BlockSpec((BP, 1), lambda i: (0, 0)),          # bin frequencies (Hz)
        ],
        out_specs=pl.BlockSpec((R_TOTAL, TM), lambda i: (0, i)),
        scratch_shapes=[pltpu.VMEM((LAGS_P, 2 * TM), jnp.float32)],
        compiler_params=pltpu.CompilerParams(
            dimension_semantics=("parallel",),    # v7x: shard frame tiles across 2 TCs
            vmem_limit_bytes=32 * 1024 * 1024,
        ),
    )(frames_t, dft_stack, idft_stack, freq_col)


# --------------------------------------------------------------------------------------
# Glue: polynomial roots (Durand-Kerner) and root_to_formant
# --------------------------------------------------------------------------------------
def _poly_roots_durand_kerner(a, iters=100):
    # TODO(synk): diffsptk.PolynomialToRoots uses complex eigvals (no TPU primitive);
    #             Durand-Kerner fixed-point iteration used instead.
    n, pc = a.shape
    p = pc - 1
    coeffs = (a / a[:, :1]).astype(jnp.complex64)
    seed = jnp.cumprod(jnp.full((p,), 0.4 + 0.9j, dtype=jnp.complex64))
    z0 = jnp.broadcast_to(seed, (n, p)).astype(jnp.complex64)

    def body(_, z):
        pz = jnp.broadcast_to(coeffs[:, 0:1], z.shape)
        for j in range(1, p + 1):
            pz = pz * z + coeffs[:, j:j + 1]
        diff = z[:, :, None] - z[:, None, :]
        diff = diff + jnp.eye(p, dtype=z.dtype)
        denom = jnp.prod(diff, axis=-1)
        denom = jnp.where(jnp.abs(denom) < 1e-12, 1e-12 + 0j, denom)
        return z - pz / denom

    return jax.lax.fori_loop(0, iters, body, z0)


def _root_to_formant(roots, scale_hz, formant_ceiling, max_formants):
    # TODO(synk): exact root-selection heuristic of root_to_formant() is external; pole
    #             angles are mapped with the *effective* downsampled sample rate.
    ang = jnp.angle(roots)
    freqs = ang / (2.0 * jnp.pi) * float(scale_hz)
    valid = (ang > 1e-4) & (ang < (jnp.pi - 1e-4))
    freqs = jnp.where(valid, freqs, float(formant_ceiling))
    freqs = jnp.sort(freqs, axis=-1)
    return freqs[:, :max_formants]


# --------------------------------------------------------------------------------------
# Full forward
# --------------------------------------------------------------------------------------
def feature_extractor_forward(x, *, sr, window_samples, step_samples,
                              formant_ceiling, max_formants,
                              allpole_order=10, r_coeff_order=30,
                              fmin=50.0, fmax=500.0, frame_tile=128):
    x = x.astype(jnp.float32)
    T = x.shape[-1]
    fl, fp = int(window_samples), int(step_samples)

    n_frames = T // fp + 1                         # diffsptk.Frame (center=True) frame count
    TM = int(frame_tile)
    n_pad = _round_up(max(n_frames, 1), TM)        # frames padded to a lane-dense multiple

    bins = fl // 2 + 1
    BP = _round_up(bins, 8)                        # sublane-aligned spectrum height
    ds_samples = int(formant_ceiling / sr * bins)  # as in the PyTorch reference
    n_ds = 2 * (ds_samples - 1)
    DS_P = _round_up(ds_samples, 8)

    min_lag = int(math.ceil(sr / fmax))
    max_lag = min(int(sr // fmin), fl - 1)

    SEC_DS = _round_up(allpole_order + 1, 8)
    SEC_US = _round_up(r_coeff_order + 1, 8)
    SEC_P = _round_up(max_lag + 1, 8)
    LAGS_P = SEC_DS + SEC_US + SEC_P

    AP_P = _round_up(allpole_order + 1, 8)
    RC_P = _round_up(r_coeff_order, 8)
    O_AP = 2 * DS_P
    O_RC = O_AP + AP_P
    O_SC = O_RC + RC_P
    R_TOTAL = O_SC + 8

    # ---- framing in the wrapper (gather); padded frames are all-zero ----
    pad_left = fl // 2
    total_len = (n_pad - 1) * fp + fl
    pad_right = max(0, total_len - (T + pad_left))
    x_pad = jnp.pad(x, (pad_left, pad_right))
    idx = (jnp.arange(fl, dtype=jnp.int32)[:, None]
           + fp * jnp.arange(n_pad, dtype=jnp.int32)[None, :])
    frames_t = x_pad[idx]                                         # (fl, n_pad)

    # ---- blackman window (power-normalized == diffsptk.Window defaults), folded into DFT ----
    w = jnp.blackman(fl).astype(jnp.float32)
    w = w / jnp.sqrt(jnp.sum(w * w))

    t = jnp.arange(fl, dtype=jnp.int32)[None, :]
    k = jnp.arange(bins, dtype=jnp.int32)[:, None]
    ang = 2.0 * jnp.pi * ((k * t) % fl).astype(jnp.float32) / fl
    cosm = jnp.cos(ang)                                           # (bins, fl)
    sinm = -jnp.sin(ang)                                          # rfft sign convention

    def _pad_rows(m):
        return jnp.pad(m, ((0, BP - m.shape[0]), (0, 0)))

    dft_stack = jnp.concatenate(
        [_pad_rows(cosm * w[None, :]), _pad_rows(sinm * w[None, :]),
         _pad_rows(cosm), _pad_rows(sinm)], axis=0).astype(jnp.float32)   # (4*BP, fl)

    def _idft_real_t(num_bins, n_fft, n_lags, sec_len):
        # irfft of a real (power) spectrum, expressed as a (n_lags, num_bins) matrix,
        # zero-padded to (sec_len, BP) so fused sections stay sublane-aligned.
        kk = jnp.arange(num_bins, dtype=jnp.int32)[None, :]
        tt = jnp.arange(n_lags, dtype=jnp.int32)[:, None]
        wgt = jnp.where((kk == 0) | (kk == num_bins - 1), 1.0, 2.0)
        a = 2.0 * jnp.pi * ((kk * tt) % n_fft).astype(jnp.float32) / n_fft
        m = (wgt * jnp.cos(a) / n_fft).astype(jnp.float32)
        return jnp.pad(m, ((0, sec_len - n_lags), (0, BP - num_bins)))

    idft_stack = jnp.concatenate(
        [_idft_real_t(ds_samples, n_ds, allpole_order + 1, SEC_DS),
         _idft_real_t(bins, fl, r_coeff_order + 1, SEC_US),
         _idft_real_t(bins, fl, max_lag + 1, SEC_P)], axis=0)     # (LAGS_P, BP)

    freq_col = jnp.pad(jnp.arange(bins, dtype=jnp.float32) * (sr / fl),
                       (0, BP - bins)).reshape(BP, 1)

    cfg = dict(BP=BP, TM=TM, DS_P=DS_P, SEC_DS=SEC_DS, SEC_US=SEC_US, SEC_P=SEC_P,
               O_AP=O_AP, O_RC=O_RC, O_SC=O_SC, LAGS_P=LAGS_P, R_TOTAL=R_TOTAL,
               allpole_order=allpole_order, r_coeff_order=r_coeff_order,
               min_lag=min_lag, max_lag=max_lag, sr=sr)

    packed = _extract_packed(frames_t, dft_stack, idft_stack, freq_col, cfg)

    n = n_frames
    xds_re = packed[0:ds_samples, :n].T
    xds_im = packed[DS_P:DS_P + ds_samples, :n].T
    x_ds = (xds_re + 1j * xds_im).astype(jnp.complex64)

    ap_env = packed[O_AP:O_AP + allpole_order + 1, :n].T          # (n, order+1), a[0]=1
    r_coeff_ref = packed[O_RC:O_RC + r_coeff_order, :n].T         # reflection coefficients

    energy = packed[O_SC + 0, :n]
    centroid = packed[O_SC + 1, :n]
    tilt = packed[O_SC + 2, :n]
    log_pitch = packed[O_SC + 3, :n]
    voicing = packed[O_SC + 4, :n]
    ignored = packed[O_SC + 5, :n]

    roots_env = _poly_roots_durand_kerner(ap_env)
    sr_ds = float(sr) * n_ds / fl      # effective sample rate of the downsampled envelope
    formants = _root_to_formant(roots_env, sr_ds, formant_ceiling, max_formants)

    return (formants, energy, centroid, tilt, log_pitch, voicing,
            r_coeff_ref, x_ds, ignored)


if __name__ == "__main__":
    key = jax.random.PRNGKey(0)
    sr = 8000
    window_samples = 256
    step_samples = 128
    formant_ceiling = 3000
    max_formants = 4
    T = 2048

    x = jax.random.normal(key, (T,), dtype=jnp.float32)

    outs = feature_extractor_forward(
        x, sr=sr, window_samples=window_samples, step_samples=step_samples,
        formant_ceiling=formant_ceiling, max_formants=max_formants,
        allpole_order=10, r_coeff_order=30)

    outs = jax.block_until_ready(outs)
    print("KERNEL_OK")
</pallas_src>

<mosaic_0001>
module attributes {stable_mosaic.version = 11 : i64} {
  func.func @kernel(%arg0: i32, %arg1: memref<256x128xf32, #tpu.memory_space<vmem>>, %arg2: memref<544x256xf32, #tpu.memory_space<vmem>>, %arg3: memref<216x136xf32, #tpu.memory_space<vmem>>, %arg4: memref<136x1xf32, #tpu.memory_space<vmem>>, %arg5: memref<152x128xf32, #tpu.memory_space<vmem>>, %arg6: memref<216x256xf32, #tpu.memory_space<vmem>>) attributes {dimension_semantics = [#tpu.dimension_semantics<parallel>], iteration_bounds = array<i64: 1>, scalar_prefetch = 0 : i64, scratch_operands = 1 : i64, tpu.core_type = #tpu.core_type<tc>, window_params = [{transform_indices = @transform_0, window_bounds = array<i64: 256, 128>}, {pipeline_mode = #tpu.pipeline_mode<synchronous>, transform_indices = @transform_1, window_bounds = array<i64: 544, 256>}, {pipeline_mode = #tpu.pipeline_mode<synchronous>, transform_indices = @transform_2, window_bounds = array<i64: 216, 136>}, {pipeline_mode = #tpu.pipeline_mode<synchronous>, transform_indices = @transform_3, window_bounds = array<i64: 136, 1>}, {transform_indices = @transform_4, window_bounds = array<i64: 152, 128>}]} {
    %c0 = arith.constant 0 : index
    %c0_0 = arith.constant 0 : index
    %0 = vector.load %arg1[%c0, %c0_0] : memref<256x128xf32, #tpu.memory_space<vmem>>, vector<256x128xf32>
    %c0_1 = arith.constant 0 : index
    %c0_2 = arith.constant 0 : index
    %1 = vector.load %arg2[%c0_1, %c0_2] : memref<544x256xf32, #tpu.memory_space<vmem>>, vector<544x256xf32>
    %cst = arith.constant dense<0.000000e+00> : vector<544x128xf32>
    %2 = tpu.matmul %1, %0, %cst {dimension_numbers = #tpu.dot_dimension_numbers<[1], [0], [0], [1], [0, 0, 1, 1], [], []>} : vector<544x256xf32>, vector<256x128xf32>, vector<544x128xf32> -> vector<544x128xf32>
    %3 = vector.extract_strided_slice %2 {offsets = [0, 0], sizes = [136, 128], strides = [1, 1]} : vector<544x128xf32> to vector<136x128xf32>
    %4 = vector.extract_strided_slice %2 {offsets = [136, 0], sizes = [136, 128], strides = [1, 1]} : vector<544x128xf32> to vector<136x128xf32>
    %5 = vector.extract_strided_slice %2 {offsets = [272, 0], sizes = [136, 128], strides = [1, 1]} : vector<544x128xf32> to vector<136x128xf32>
    %6 = vector.extract_strided_slice %2 {offsets = [408, 0], sizes = [136, 128], strides = [1, 1]} : vector<544x128xf32> to vector<136x128xf32>
    %7 = vector.extract_strided_slice %2 {offsets = [0, 0], sizes = [48, 128], strides = [1, 1]} : vector<544x128xf32> to vector<48x128xf32>
    %c0_3 = arith.constant 0 : index
    %c0_4 = arith.constant 0 : index
    %8 = vector.load %arg5[%c0_3, %c0_4] : memref<152x128xf32, #tpu.memory_space<vmem>>, vector<48x128xf32>
    tpu.vector_store %arg5[%c0_3, %c0_4], %7 {strides = array<i32>} : memref<152x128xf32, #tpu.memory_space<vmem>>, vector<48x128xf32>,
    %9 = vector.extract_strided_slice %2 {offsets = [136, 0], sizes = [48, 128], strides = [1, 1]} : vector<544x128xf32> to vector<48x128xf32>
    %c48 = arith.constant 48 : index
    %c0_5 = arith.constant 0 : index
    %10 = vector.load %arg5[%c48, %c0_5] : memref<152x128xf32, #tpu.memory_space<vmem>>, vector<48x128xf32>
    tpu.vector_store %arg5[%c48, %c0_5], %9 {strides = array<i32>} : memref<152x128xf32, #tpu.memory_space<vmem>>, vector<48x128xf32>,
    %11 = arith.mulf %3, %3 : vector<136x128xf32>
    %12 = arith.mulf %4, %4 : vector<136x128xf32>
    %13 = arith.addf %11, %12 : vector<136x128xf32>
    %14 = arith.mulf %5, %5 : vector<136x128xf32>
    %15 = arith.mulf %6, %6 : vector<136x128xf32>
    %16 = arith.addf %14, %15 : vector<136x128xf32>
    %17 = tpu.concatenate %13, %16 in 1 : vector<136x128xf32>, vector<136x128xf32> -> vector<136x256xf32>
    %c0_6 = arith.constant 0 : index
    %c0_7 = arith.constant 0 : index
    %18 = vector.load %arg3[%c0_6, %c0_7] : memref<216x136xf32, #tpu.memory_space<vmem>>, vector<216x136xf32>
    %cst_8 = arith.constant dense<0.000000e+00> : vector<216x256xf32>
    %19 = tpu.matmul %18, %17, %cst_8 {dimension_numbers = #tpu.dot_dimension_numbers<[1], [0], [0], [1], [0, 0, 1, 1], [], []>} : vector<216x136xf32>, vector<136x256xf32>, vector<216x256xf32> -> vector<216x256xf32>
    %c0_9 = arith.constant 0 : index
    %c0_10 = arith.constant 0 : index
    %20 = vector.load %arg6[%c0_9, %c0_10] : memref<216x256xf32, #tpu.memory_space<vmem>>, vector<216x256xf32>
    tpu.vector_store %arg6[%c0_9, %c0_10], %19 {strides = array<i32>} : memref<216x256xf32, #tpu.memory_space<vmem>>, vector<216x256xf32>,
    %c0_11 = arith.constant 0 : index
    %c0_12 = arith.constant 0 : index
    %21 = vector.load %arg6[%c0_11, %c0_12] : memref<216x256xf32, #tpu.memory_space<vmem>>, vector<1x128xf32>
    %c1 = arith.constant 1 : index
    %c0_13 = arith.constant 0 : index
    %22 = vector.load %arg6[%c1, %c0_13] : memref<216x256xf32, #tpu.memory_space<vmem>>, vector<1x128xf32>
    %c2 = arith.constant 2 : index
    %c0_14 = arith.constant 0 : index
    %23 = vector.load %arg6[%c2, %c0_14] : memref<216x256xf32, #tpu.memory_space<vmem>>, vector<1x128xf32>
    %c3 = arith.constant 3 : index
    %c0_15 = arith.constant 0 : index
    %24 = vector.load %arg6[%c3, %c0_15] : memref<216x256xf32, #tpu.memory_space<vmem>>, vector<1x128xf32>
    %c4 = arith.constant 4 : index
    %c0_16 = arith.constant 0 : index
    %25 = vector.load %arg6[%c4, %c0_16] : memref<216x256xf32, #tpu.memory_space<vmem>>, vector<1x128xf32>
    %c5 = arith.constant 5 : index
    %c0_17 = arith.constant 0 : index
    %26 = vector.load %arg6[%c5, %c0_17] : memref<216x256xf32, #tpu.memory_space<vmem>>, vector<1x128xf32>
    %c6 = arith.constant 6 : index
    %c0_18 = arith.constant 0 : index
    %27 = vector.load %arg6[%c6, %c0_18] : memref<216x256xf32, #tpu.memory_space<vmem>>, vector<1x128xf32>
    %c7 = arith.constant 7 : index
    %c0_19 = arith.constant 0 : index
    %28 = vector.load %arg6[%c7, %c0_19] : memref<216x256xf32, #tpu.memory_space<vmem>>, vector<1x128xf32>
    %c8 = arith.constant 8 : index
    %c0_20 = arith.constant 0 : index
    %29 = vector.load %arg6[%c8, %c0_20] : memref<216x256xf32, #tpu.memory_space<vmem>>, vector<1x128xf32>
    %c9 = arith.constant 9 : index
    %c0_21 = arith.constant 0 : index
    %30 = vector.load %arg6[%c9, %c0_21] : memref<216x256xf32, #tpu.memory_space<vmem>>, vector<1x128xf32>
    %c10 = arith.constant 10 : index
    %c0_22 = arith.constant 0 : index
    %31 = vector.load %arg6[%c10, %c0_22] : memref<216x256xf32, #tpu.memory_space<vmem>>, vector<1x128xf32>
    %cst_23 = arith.constant 0.000000e+00 : f32
    %32 = vector.broadcast %cst_23 : f32 to vector<1x128xf32>
    %33 = arith.subf %32, %22 : vector<1x128xf32>
    %cst_24 = arith.constant 9.99999996E-13 : f32
    %34 = vector.broadcast %cst_24 : f32 to vector<1x128xf32>
    %35 = arith.addf %21, %34 : vector<1x128xf32>
    %36 = arith.divf %33, %35 : vector<1x128xf32>
    %37 = arith.mulf %36, %36 : vector<1x128xf32>
    %cst_25 = arith.constant 1.000000e+00 : f32
    %38 = vector.broadcast %cst_25 : f32 to vector<1x128xf32>
    %39 = arith.subf %38, %37 : vector<1x128xf32>
    %40 = arith.mulf %21, %39 : vector<1x128xf32>
    %41 = arith.mulf %36, %22 : vector<1x128xf32>
    %42 = arith.addf %23, %41 : vector<1x128xf32>
    %cst_26 = arith.constant 0.000000e+00 : f32
    %43 = vector.broadcast %cst_26 : f32 to vector<1x128xf32>
    %44 = arith.subf %43, %42 : vector<1x128xf32>
    %cst_27 = arith.constant 9.99999996E-13 : f32
    %45 = vector.broadcast %cst_27 : f32 to vector<1x128xf32>
    %46 = arith.addf %40, %45 : vector<1x128xf32>
    %47 = arith.divf %44, %46 : vector<1x128xf32>
    %48 = arith.mulf %47, %36 : vector<1x128xf32>
    %49 = arith.addf %36, %48 : vector<1x128xf32>
    %50 = arith.mulf %47, %47 : vector<1x128xf32>
    %cst_28 = arith.constant 1.000000e+00 : f32
    %51 = vector.broadcast %cst_28 : f32 to vector<1x128xf32>
    %52 = arith.subf %51, %50 : vector<1x128xf32>
    %53 = arith.mulf %40, %52 : vector<1x128xf32>
    %54 = arith.mulf %49, %23 : vector<1x128xf32>
    %55 = arith.addf %24, %54 : vector<1x128xf32>
    %56 = arith.mulf %47, %22 : vector<1x128xf32>
    %57 = arith.addf %55, %56 : vector<1x128xf32>
    %cst_29 = arith.constant 0.000000e+00 : f32
    %58 = vector.broadcast %cst_29 : f32 to vector<1x128xf32>
    %59 = arith.subf %58, %57 : vector<1x128xf32>
    %cst_30 = arith.constant 9.99999996E-13 : f32
    %60 = vector.broadcast %cst_30 : f32 to vector<1x128xf32>
    %61 = arith.addf %53, %60 : vector<1x128xf32>
    %62 = arith.divf %59, %61 : vector<1x128xf32>
    %63 = arith.mulf %62, %47 : vector<1x128xf32>
    %64 = arith.addf %49, %63 : vector<1x128xf32>
    %65 = arith.mulf %62, %49 : vector<1x128xf32>
    %66 = arith.addf %47, %65 : vector<1x128xf32>
    %67 = arith.mulf %62, %62 : vector<1x128xf32>
    %cst_31 = arith.constant 1.000000e+00 : f32
    %68 = vector.broadcast %cst_31 : f32 to vector<1x128xf32>
    %69 = arith.subf %68, %67 : vector<1x128xf32>
    %70 = arith.mulf %53, %69 : vector<1x128xf32>
    %71 = arith.mulf %64, %24 : vector<1x128xf32>
    %72 = arith.addf %25, %71 : vector<1x128xf32>
    %73 = arith.mulf %66, %23 : vector<1x128xf32>
    %74 = arith.addf %72, %73 : vector<1x128xf32>
    %75 = arith.mulf %62, %22 : vector<1x128xf32>
    %76 = arith.addf %74, %75 : vector<1x128xf32>
    %cst_32 = arith.constant 0.000000e+00 : f32
    %77 = vector.broadcast %cst_32 : f32 to vector<1x128xf32>
    %78 = arith.subf %77, %76 : vector<1x128xf32>
    %cst_33 = arith.constant 9.99999996E-13 : f32
    %79 = vector.broadcast %cst_33 : f32 to vector<1x128xf32>
    %80 = arith.addf %70, %79 : vector<1x128xf32>
    %81 = arith.divf %78, %80 : vector<1x128xf32>
    %82 = arith.mulf %81, %62 : vector<1x128xf32>
    %83 = arith.addf %64, %82 : vector<1x128xf32>
    %84 = arith.mulf %81, %66 : vector<1x128xf32>
    %85 = arith.addf %66, %84 : vector<1x128xf32>
    %86 = arith.mulf %81, %64 : vector<1x128xf32>
    %87 = arith.addf %62, %86 : vector<1x128xf32>
    %88 = arith.mulf %81, %81 : vector<1x128xf32>
    %cst_34 = arith.constant 1.000000e+00 : f32
    %89 = vector.broadcast %cst_34 : f32 to vector<1x128xf32>
    %90 = arith.subf %89, %88 : vector<1x128xf32>
    %91 = arith.mulf %70, %90 : vector<1x128xf32>
    %92 = arith.mulf %83, %25 : vector<1x128xf32>
    %93 = arith.addf %26, %92 : vector<1x128xf32>
    %94 = arith.mulf %85, %24 : vector<1x128xf32>
    %95 = arith.addf %93, %94 : vector<1x128xf32>
    %96 = arith.mulf %87, %23 : vector<1x128xf32>
    %97 = arith.addf %95, %96 : vector<1x128xf32>
    %98 = arith.mulf %81, %22 : vector<1x128xf32>
    %99 = arith.addf %97, %98 : vector<1x128xf32>
    %cst_35 = arith.constant 0.000000e+00 : f32
    %100 = vector.broadcast %cst_35 : f32 to vector<1x128xf32>
    %101 = arith.subf %100, %99 : vector<1x128xf32>
    %cst_36 = arith.constant 9.99999996E-13 : f32
    %102 = vector.broadcast %cst_36 : f32 to vector<1x128xf32>
    %103 = arith.addf %91, %102 : vector<1x128xf32>
    %104 = arith.divf %101, %103 : vector<1x128xf32>
    %105 = arith.mulf %104, %81 : vector<1x128xf32>
    %106 = arith.addf %83, %105 : vector<1x128xf32>
    %107 = arith.mulf %104, %87 : vector<1x128xf32>
    %108 = arith.addf %85, %107 : vector<1x128xf32>
    %109 = arith.mulf %104, %85 : vector<1x128xf32>
    %110 = arith.addf %87, %109 : vector<1x128xf32>
    %111 = arith.mulf %104, %83 : vector<1x128xf32>
    %112 = arith.addf %81, %111 : vector<1x128xf32>
    %113 = arith.mulf %104, %104 : vector<1x128xf32>
    %cst_37 = arith.constant 1.000000e+00 : f32
    %114 = vector.broadcast %cst_37 : f32 to vector<1x128xf32>
    %115 = arith.subf %114, %113 : vector<1x128xf32>
    %116 = arith.mulf %91, %115 : vector<1x128xf32>
    %117 = arith.mulf %106, %26 : vector<1x128xf32>
    %118 = arith.addf %27, %117 : vector<1x128xf32>
    %119 = arith.mulf %108, %25 : vector<1x128xf32>
    %120 = arith.addf %118, %119 : vector<1x128xf32>
    %121 = arith.mulf %110, %24 : vector<1x128xf32>
    %122 = arith.addf %120, %121 : vector<1x128xf32>
    %123 = arith.mulf %112, %23 : vector<1x128xf32>
    %124 = arith.addf %122, %123 : vector<1x128xf32>
    %125 = arith.mulf %104, %22 : vector<1x128xf32>
    %126 = arith.addf %124, %125 : vector<1x128xf32>
    %cst_38 = arith.constant 0.000000e+00 : f32
    %127 = vector.broadcast %cst_38 : f32 to vector<1x128xf32>
    %128 = arith.subf %127, %126 : vector<1x128xf32>
    %cst_39 = arith.constant 9.99999996E-13 : f32
    %129 = vector.broadcast %cst_39 : f32 to vector<1x128xf32>
    %130 = arith.addf %116, %129 : vector<1x128xf32>
    %131 = arith.divf %128, %130 : vector<1x128xf32>
    %132 = arith.mulf %131, %104 : vector<1x128xf32>
    %133 = arith.addf %106, %132 : vector<1x128xf32>
    %134 = arith.mulf %131, %112 : vector<1x128xf32>
    %135 = arith.addf %108, %134 : vector<1x128xf32>
    %136 = arith.mulf %131, %110 : vector<1x128xf32>
    %137 = arith.addf %110, %136 : vector<1x128xf32>
    %138 = arith.mulf %131, %108 : vector<1x128xf32>
    %139 = arith.addf %112, %138 : vector<1x128xf32>
    %140 = arith.mulf %131, %106 : vector<1x128xf32>
    %141 = arith.addf %104, %140 : vector<1x128xf32>
    %142 = arith.mulf %131, %131 : vector<1x128xf32>
    %cst_40 = arith.constant 1.000000e+00 : f32
    %143 = vector.broadcast %cst_40 : f32 to vector<1x128xf32>
    %144 = arith.subf %143, %142 : vector<1x128xf32>
    %145 = arith.mulf %116, %144 : vector<1x128xf32>
    %146 = arith.mulf %133, %27 : vector<1x128xf32>
    %147 = arith.addf %28, %146 : vector<1x128xf32>
    %148 = arith.mulf %135, %26 : vector<1x128xf32>
    %149 = arith.addf %147, %148 : vector<1x128xf32>
    %150 = arith.mulf %137, %25 : vector<1x128xf32>
    %151 = arith.addf %149, %150 : vector<1x128xf32>
    %152 = arith.mulf %139, %24 : vector<1x128xf32>
    %153 = arith.addf %151, %152 : vector<1x128xf32>
    %154 = arith.mulf %141, %23 : vector<1x128xf32>
    %155 = arith.addf %153, %154 : vector<1x128xf32>
    %156 = arith.mulf %131, %22 : vector<1x128xf32>
    %157 = arith.addf %155, %156 : vector<1x128xf32>
    %cst_41 = arith.constant 0.000000e+00 : f32
    %158 = vector.broadcast %cst_41 : f32 to vector<1x128xf32>
    %159 = arith.subf %158, %157 : vector<1x128xf32>
    %cst_42 = arith.constant 9.99999996E-13 : f32
    %160 = vector.broadcast %cst_42 : f32 to vector<1x128xf32>
    %161 = arith.addf %145, %160 : vector<1x128xf32>
    %162 = arith.divf %159, %161 : vector<1x128xf32>
    %163 = arith.mulf %162, %131 : vector<1x128xf32>
    %164 = arith.addf %133, %163 : vector<1x128xf32>
    %165 = arith.mulf %162, %141 : vector<1x128xf32>
    %166 = arith.addf %135, %165 : vector<1x128xf32>
    %167 = arith.mulf %162, %139 : vector<1x128xf32>
    %168 = arith.addf %137, %167 : vector<1x128xf32>
    %169 = arith.mulf %162, %137 : vector<1x128xf32>
    %170 = arith.addf %139, %169 : vector<1x128xf32>
    %171 = arith.mulf %162, %135 : vector<1x128xf32>
    %172 = arith.addf %141, %171 : vector<1x128xf32>
    %173 = arith.mulf %162, %133 : vector<1x128xf32>
    %174 = arith.addf %131, %173 : vector<1x128xf32>
    %175 = arith.mulf %162, %162 : vector<1x128xf32>
    %cst_43 = arith.constant 1.000000e+00 : f32
    %176 = vector.broadcast %cst_43 : f32 to vector<1x128xf32>
    %177 = arith.subf %176, %175 : vector<1x128xf32>
    %178 = arith.mulf %145, %177 : vector<1x128xf32>
    %179 = arith.mulf %164, %28 : vector<1x128xf32>
    %180 = arith.addf %29, %179 : vector<1x128xf32>
    %181 = arith.mulf %166, %27 : vector<1x128xf32>
    %182 = arith.addf %180, %181 : vector<1x128xf32>
    %183 = arith.mulf %168, %26 : vector<1x128xf32>
    %184 = arith.addf %182, %183 : vector<1x128xf32>
    %185 = arith.mulf %170, %25 : vector<1x128xf32>
    %186 = arith.addf %184, %185 : vector<1x128xf32>
    %187 = arith.mulf %172, %24 : vector<1x128xf32>
    %188 = arith.addf %186, %187 : vector<1x128xf32>
    %189 = arith.mulf %174, %23 : vector<1x128xf32>
    %190 = arith.addf %188, %189 : vector<1x128xf32>
    %191 = arith.mulf %162, %22 : vector<1x128xf32>
    %192 = arith.addf %190, %191 : vector<1x128xf32>
    %cst_44 = arith.constant 0.000000e+00 : f32
    %193 = vector.broadcast %cst_44 : f32 to vector<1x128xf32>
    %194 = arith.subf %193, %192 : vector<1x128xf32>
    %cst_45 = arith.constant 9.99999996E-13 : f32
    %195 = vector.broadcast %cst_45 : f32 to vector<1x128xf32>
    %196 = arith.addf %178, %195 : vector<1x128xf32>
    %197 = arith.divf %194, %196 : vector<1x128xf32>
    %198 = arith.mulf %197, %162 : vector<1x128xf32>
    %199 = arith.addf %164, %198 : vector<1x128xf32>
    %200 = arith.mulf %197, %174 : vector<1x128xf32>
    %201 = arith.addf %166, %200 : vector<1x128xf32>
    %202 = arith.mulf %197, %172 : vector<1x128xf32>
    %203 = arith.addf %168, %202 : vector<1x128xf32>
    %204 = arith.mulf %197, %170 : vector<1x128xf32>
    %205 = arith.addf %170, %204 : vector<1x128xf32>
    %206 = arith.mulf %197, %168 : vector<1x128xf32>
    %207 = arith.addf %172, %206 : vector<1x128xf32>
    %208 = arith.mulf %197, %166 : vector<1x128xf32>
    %209 = arith.addf %174, %208 : vector<1x128xf32>
    %210 = arith.mulf %197, %164 : vector<1x128xf32>
    %211 = arith.addf %162, %210 : vector<1x128xf32>
    %212 = arith.mulf %197, %197 : vector<1x128xf32>
    %cst_46 = arith.constant 1.000000e+00 : f32
    %213 = vector.broadcast %cst_46 : f32 to vector<1x128xf32>
    %214 = arith.subf %213, %212 : vector<1x128xf32>
    %215 = arith.mulf %178, %214 : vector<1x128xf32>
    %216 = arith.mulf %199, %29 : vector<1x128xf32>
    %217 = arith.addf %30, %216 : vector<1x128xf32>
    %218 = arith.mulf %201, %28 : vector<1x128xf32>
    %219 = arith.addf %217, %218 : vector<1x128xf32>
    %220 = arith.mulf %203, %27 : vector<1x128xf32>
    %221 = arith.addf %219, %220 : vector<1x128xf32>
    %222 = arith.mulf %205, %26 : vector<1x128xf32>
    %223 = arith.addf %221, %222 : vector<1x128xf32>
    %224 = arith.mulf %207, %25 : vector<1x128xf32>
    %225 = arith.addf %223, %224 : vector<1x128xf32>
    %226 = arith.mulf %209, %24 : vector<1x128xf32>
    %227 = arith.addf %225, %226 : vector<1x128xf32>
    %228 = arith.mulf %211, %23 : vector<1x128xf32>
    %229 = arith.addf %227, %228 : vector<1x128xf32>
    %230 = arith.mulf %197, %22 : vector<1x128xf32>
    %231 = arith.addf %229, %230 : vector<1x128xf32>
    %cst_47 = arith.constant 0.000000e+00 : f32
    %232 = vector.broadcast %cst_47 : f32 to vector<1x128xf32>
    %233 = arith.subf %232, %231 : vector<1x128xf32>
    %cst_48 = arith.constant 9.99999996E-13 : f32
    %234 = vector.broadcast %cst_48 : f32 to vector<1x128xf32>
    %235 = arith.addf %215, %234 : vector<1x128xf32>
    %236 = arith.divf %233, %235 : vector<1x128xf32>
    %237 = arith.mulf %236, %197 : vector<1x128xf32>
    %238 = arith.addf %199, %237 : vector<1x128xf32>
    %239 = arith.mulf %236, %211 : vector<1x128xf32>
    %240 = arith.addf %201, %239 : vector<1x128xf32>
    %241 = arith.mulf %236, %209 : vector<1x128xf32>
    %242 = arith.addf %203, %241 : vector<1x128xf32>
    %243 = arith.mulf %236, %207 : vector<1x128xf32>
    %244 = arith.addf %205, %243 : vector<1x128xf32>
    %245 = arith.mulf %236, %205 : vector<1x128xf32>
    %246 = arith.addf %207, %245 : vector<1x128xf32>
    %247 = arith.mulf %236, %203 : vector<1x128xf32>
    %248 = arith.addf %209, %247 : vector<1x128xf32>
    %249 = arith.mulf %236, %201 : vector<1x128xf32>
    %250 = arith.addf %211, %249 : vector<1x128xf32>
    %251 = arith.mulf %236, %199 : vector<1x128xf32>
    %252 = arith.addf %197, %251 : vector<1x128xf32>
    %253 = arith.mulf %236, %236 : vector<1x128xf32>
    %cst_49 = arith.constant 1.000000e+00 : f32
    %254 = vector.broadcast %cst_49 : f32 to vector<1x128xf32>
    %255 = arith.subf %254, %253 : vector<1x128xf32>
    %256 = arith.mulf %215, %255 : vector<1x128xf32>
    %257 = arith.mulf %238, %30 : vector<1x128xf32>
    %258 = arith.addf %31, %257 : vector<1x128xf32>
    %259 = arith.mulf %240, %29 : vector<1x128xf32>
    %260 = arith.addf %258, %259 : vector<1x128xf32>
    %261 = arith.mulf %242, %28 : vector<1x128xf32>
    %262 = arith.addf %260, %261 : vector<1x128xf32>
    %263 = arith.mulf %244, %27 : vector<1x128xf32>
    %264 = arith.addf %262, %263 : vector<1x128xf32>
    %265 = arith.mulf %246, %26 : vector<1x128xf32>
    %266 = arith.addf %264, %265 : vector<1x128xf32>
    %267 = arith.mulf %248, %25 : vector<1x128xf32>
    %268 = arith.addf %266, %267 : vector<1x128xf32>
    %269 = arith.mulf %250, %24 : vector<1x128xf32>
    %270 = arith.addf %268, %269 : vector<1x128xf32>
    %271 = arith.mulf %252, %23 : vector<1x128xf32>
    %272 = arith.addf %270, %271 : vector<1x128xf32>
    %273 = arith.mulf %236, %22 : vector<1x128xf32>
    %274 = arith.addf %272, %273 : vector<1x128xf32>
    %cst_50 = arith.constant 0.000000e+00 : f32
    %275 = vector.broadcast %cst_50 : f32 to vector<1x128xf32>
    %276 = arith.subf %275, %274 : vector<1x128xf32>
    %cst_51 = arith.constant 9.99999996E-13 : f32
    %277 = vector.broadcast %cst_51 : f32 to vector<1x128xf32>
    %278 = arith.addf %256, %277 : vector<1x128xf32>
    %279 = arith.divf %276, %278 : vector<1x128xf32>
    %280 = arith.mulf %279, %236 : vector<1x128xf32>
    %281 = arith.addf %238, %280 : vector<1x128xf32>
    %282 = arith.mulf %279, %252 : vector<1x128xf32>
    %283 = arith.addf %240, %282 : vector<1x128xf32>
    %284 = arith.mulf %279, %250 : vector<1x128xf32>
    %285 = arith.addf %242, %284 : vector<1x128xf32>
    %286 = arith.mulf %279, %248 : vector<1x128xf32>
    %287 = arith.addf %244, %286 : vector<1x128xf32>
    %288 = arith.mulf %279, %246 : vector<1x128xf32>
    %289 = arith.addf %246, %288 : vector<1x128xf32>
    %290 = arith.mulf %279, %244 : vector<1x128xf32>
    %291 = arith.addf %248, %290 : vector<1x128xf32>
    %292 = arith.mulf %279, %242 : vector<1x128xf32>
    %293 = arith.addf %250, %292 : vector<1x128xf32>
    %294 = arith.mulf %279, %240 : vector<1x128xf32>
    %295 = arith.addf %252, %294 : vector<1x128xf32>
    %296 = arith.mulf %279, %238 : vector<1x128xf32>
    %297 = arith.addf %236, %296 : vector<1x128xf32>
    %c16 = arith.constant 16 : index
    %c0_52 = arith.constant 0 : index
    %298 = vector.load %arg6[%c16, %c0_52] : memref<216x256xf32, #tpu.memory_space<vmem>>, vector<1x128xf32>
    %c17 = arith.constant 17 : index
    %c0_53 = arith.constant 0 : index
    %299 = vector.load %arg6[%c17, %c0_53] : memref<216x256xf32, #tpu.memory_space<vmem>>, vector<1x128xf32>
    %c18 = arith.constant 18 : index
    %c0_54 = arith.constant 0 : index
    %300 = vector.load %arg6[%c18, %c0_54] : memref<216x256xf32, #tpu.memory_space<vmem>>, vector<1x128xf32>
    %c19 = arith.constant 19 : index
    %c0_55 = arith.constant 0 : index
    %301 = vector.load %arg6[%c19, %c0_55] : memref<216x256xf32, #tpu.memory_space<vmem>>, vector<1x128xf32>
    %c20 = arith.constant 20 : index
    %c0_56 = arith.constant 0 : index
    %302 = vector.load %arg6[%c20, %c0_56] : memref<216x256xf32, #tpu.memory_space<vmem>>, vector<1x128xf32>
    %c21 = arith.constant 21 : index
    %c0_57 = arith.constant 0 : index
    %303 = vector.load %arg6[%c21, %c0_57] : memref<216x256xf32, #tpu.memory_space<vmem>>, vector<1x128xf32>
    %c22 = arith.constant 22 : index
    %c0_58 = arith.constant 0 : index
    %304 = vector.load %arg6[%c22, %c0_58] : memref<216x256xf32, #tpu.memory_space<vmem>>, vector<1x128xf32>
    %c23 = arith.constant 23 : index
    %c0_59 = arith.constant 0 : index
    %305 = vector.load %arg6[%c23, %c0_59] : memref<216x256xf32, #tpu.memory_space<vmem>>, vector<1x128xf32>
    %c24 = arith.constant 24 : index
    %c0_60 = arith.constant 0 : index
    %306 = vector.load %arg6[%c24, %c0_60] : memref<216x256xf32, #tpu.memory_space<vmem>>, vector<1x128xf32>
    %c25 = arith.constant 25 : index
    %c0_61 = arith.constant 0 : index
    %307 = vector.load %arg6[%c25, %c0_61] : memref<216x256xf32, #tpu.memory_space<vmem>>, vector<1x128xf32>
    %c26 = arith.constant 26 : index
    %c0_62 = arith.constant 0 : index
    %308 = vector.load %arg6[%c26, %c0_62] : memref<216x256xf32, #tpu.memory_space<vmem>>, vector<1x128xf32>
    %c27 = arith.constant 27 : index
    %c0_63 = arith.constant 0 : index
    %309 = vector.load %arg6[%c27, %c0_63] : memref<216x256xf32, #tpu.memory_space<vmem>>, vector<1x128xf32>
    %c28 = arith.constant 28 : index
    %c0_64 = arith.constant 0 : index
    %310 = vector.load %arg6[%c28, %c0_64] : memref<216x256xf32, #tpu.memory_space<vmem>>, vector<1x128xf32>
    %c29 = arith.constant 29 : index
    %c0_65 = arith.constant 0 : index
    %311 = vector.load %arg6[%c29, %c0_65] : memref<216x256xf32, #tpu.memory_space<vmem>>, vector<1x128xf32>
    %c30 = arith.constant 30 : index
    %c0_66 = arith.constant 0 : index
    %312 = vector.load %arg6[%c30, %c0_66] : memref<216x256xf32, #tpu.memory_space<vmem>>, vector<1x128xf32>
    %c31 = arith.constant 31 : index
    %c0_67 = arith.constant 0 : index
    %313 = vector.load %arg6[%c31, %c0_67] : memref<216x256xf32, #tpu.memory_space<vmem>>, vector<1x128xf32>
    %c32 = arith.constant 32 : index
    %c0_68 = arith.constant 0 : index
    %314 = vector.load %arg6[%c32, %c0_68] : memref<216x256xf32, #tpu.memory_space<vmem>>, vector<1x128xf32>
    %c33 = arith.constant 33 : index
    %c0_69 = arith.constant 0 : index
    %315 = vector.load %arg6[%c33, %c0_69] : memref<216x256xf32, #tpu.memory_space<vmem>>, vector<1x128xf32>
    %c34 = arith.constant 34 : index
    %c0_70 = arith.constant 0 : index
    %316 = vector.load %arg6[%c34, %c0_70] : memref<216x256xf32, #tpu.memory_space<vmem>>, vector<1x128xf32>
    %c35 = arith.constant 35 : index
    %c0_71 = arith.constant 0 : index
    %317 = vector.load %arg6[%c35, %c0_71] : memref<216x256xf32, #tpu.memory_space<vmem>>, vector<1x128xf32>
    %c36 = arith.constant 36 : index
    %c0_72 = arith.constant 0 : index
    %318 = vector.load %arg6[%c36, %c0_72] : memref<216x256xf32, #tpu.memory_space<vmem>>, vector<1x128xf32>
    %c37 = arith.constant 37 : index
    %c0_73 = arith.constant 0 : index
    %319 = vector.load %arg6[%c37, %c0_73] : memref<216x256xf32, #tpu.memory_space<vmem>>, vector<1x128xf32>
    %c38 = arith.constant 38 : index
    %c0_74 = arith.constant 0 : index
    %320 = vector.load %arg6[%c38, %c0_74] : memref<216x256xf32, #tpu.memory_space<vmem>>, vector<1x128xf32>
    %c39 = arith.constant 39 : index
    %c0_75 = arith.constant 0 : index
    %321 = vector.load %arg6[%c39, %c0_75] : memref<216x256xf32, #tpu.memory_space<vmem>>, vector<1x128xf32>
    %c40 = arith.constant 40 : index
    %c0_76 = arith.constant 0 : index
    %322 = vector.load %arg6[%c40, %c0_76] : memref<216x256xf32, #tpu.memory_space<vmem>>, vector<1x128xf32>
    %c41 = arith.constant 41 : index
    %c0_77 = arith.constant 0 : index
    %323 = vector.load %arg6[%c41, %c0_77] : memref<216x256xf32, #tpu.memory_space<vmem>>, vector<1x128xf32>
    %c42 = arith.constant 42 : index
    %c0_78 = arith.constant 0 : index
    %324 = vector.load %arg6[%c42, %c0_78] : memref<216x256xf32, #tpu.memory_space<vmem>>, vector<1x128xf32>
    %c43 = arith.constant 43 : index
    %c0_79 = arith.constant 0 : index
    %325 = vector.load %arg6[%c43, %c0_79] : memref<216x256xf32, #tpu.memory_space<vmem>>, vector<1x128xf32>
    %c44 = arith.constant 44 : index
    %c0_80 = arith.constant 0 : index
    %326 = vector.load %arg6[%c44, %c0_80] : memref<216x256xf32, #tpu.memory_space<vmem>>, vector<1x128xf32>
    %c45 = arith.constant 45 : index
    %c0_81 = arith.constant 0 : index
    %327 = vector.load %arg6[%c45, %c0_81] : memref<216x256xf32, #tpu.memory_space<vmem>>, vector<1x128xf32>
    %c46 = arith.constant 46 : index
    %c0_82 = arith.constant 0 : index
    %328 = vector.load %arg6[%c46, %c0_82] : memref<216x256xf32, #tpu.memory_space<vmem>>, vector<1x128xf32>
    %cst_83 = arith.constant 0.000000e+00 : f32
    %329 = vector.broadcast %cst_83 : f32 to vector<1x128xf32>
    %330 = arith.subf %329, %299 : vector<1x128xf32>
    %cst_84 = arith.constant 9.99999996E-13 : f32
    %331 = vector.broadcast %cst_84 : f32 to vector<1x128xf32>
    %332 = arith.addf %298, %331 : vector<1x128xf32>
    %333 = arith.divf %330, %332 : vector<1x128xf32>
    %334 = arith.mulf %333, %333 : vector<1x128xf32>
    %cst_85 = arith.constant 1.000000e+00 : f32
    %335 = vector.broadcast %cst_85 : f32 to vector<1x128xf32>
    %336 = arith.subf %335, %334 : vector<1x128xf32>
    %337 = arith.mulf %298, %336 : vector<1x128xf32>
    %338 = arith.mulf %333, %299 : vector<1x128xf32>
    %339 = arith.addf %300, %338 : vector<1x128xf32>
    %cst_86 = arith.constant 0.000000e+00 : f32
    %340 = vector.broadcast %cst_86 : f32 to vector<1x128xf32>
    %341 = arith.subf %340, %339 : vector<1x128xf32>
    %cst_87 = arith.constant 9.99999996E-13 : f32
    %342 = vector.broadcast %cst_87 : f32 to vector<1x128xf32>
    %343 = arith.addf %337, %342 : vector<1x128xf32>
    %344 = arith.divf %341, %343 : vector<1x128xf32>
    %345 = arith.mulf %344, %333 : vector<1x128xf32>
    %346 = arith.addf %333, %345 : vector<1x128xf32>
    %347 = arith.mulf %344, %344 : vector<1x128xf32>
    %cst_88 = arith.constant 1.000000e+00 : f32
    %348 = vector.broadcast %cst_88 : f32 to vector<1x128xf32>
    %349 = arith.subf %348, %347 : vector<1x128xf32>
    %350 = arith.mulf %337, %349 : vector<1x128xf32>
    %351 = arith.mulf %346, %300 : vector<1x128xf32>
    %352 = arith.addf %301, %351 : vector<1x128xf32>
    %353 = arith.mulf %344, %299 : vector<1x128xf32>
    %354 = arith.addf %352, %353 : vector<1x128xf32>
    %cst_89 = arith.constant 0.000000e+00 : f32
    %355 = vector.broadcast %cst_89 : f32 to vector<1x128xf32>
    %356 = arith.subf %355, %354 : vector<1x128xf32>
    %cst_90 = arith.constant 9.99999996E-13 : f32
    %357 = vector.broadcast %cst_90 : f32 to vector<1x128xf32>
    %358 = arith.addf %350, %357 : vector<1x128xf32>
    %359 = arith.divf %356, %358 : vector<1x128xf32>
    %360 = arith.mulf %359, %344 : vector<1x128xf32>
    %361 = arith.addf %346, %360 : vector<1x128xf32>
    %362 = arith.mulf %359, %346 : vector<1x128xf32>
    %363 = arith.addf %344, %362 : vector<1x128xf32>
    %364 = arith.mulf %359, %359 : vector<1x128xf32>
    %cst_91 = arith.constant 1.000000e+00 : f32
    %365 = vector.broadcast %cst_91 : f32 to vector<1x128xf32>
    %366 = arith.subf %365, %364 : vector<1x128xf32>
    %367 = arith.mulf %350, %366 : vector<1x128xf32>
    %368 = arith.mulf %361, %301 : vector<1x128xf32>
    %369 = arith.addf %302, %368 : vector<1x128xf32>
    %370 = arith.mulf %363, %300 : vector<1x128xf32>
    %371 = arith.addf %369, %370 : vector<1x128xf32>
    %372 = arith.mulf %359, %299 : vector<1x128xf32>
    %373 = arith.addf %371, %372 : vector<1x128xf32>
    %cst_92 = arith.constant 0.000000e+00 : f32
    %374 = vector.broadcast %cst_92 : f32 to vector<1x128xf32>
    %375 = arith.subf %374, %373 : vector<1x128xf32>
    %cst_93 = arith.constant 9.99999996E-13 : f32
    %376 = vector.broadcast %cst_93 : f32 to vector<1x128xf32>
    %377 = arith.addf %367, %376 : vector<1x128xf32>
    %378 = arith.divf %375, %377 : vector<1x128xf32>
    %379 = arith.mulf %378, %359 : vector<1x128xf32>
    %380 = arith.addf %361, %379 : vector<1x128xf32>
    %381 = arith.mulf %378, %363 : vector<1x128xf32>
    %382 = arith.addf %363, %381 : vector<1x128xf32>
    %383 = arith.mulf %378, %361 : vector<1x128xf32>
    %384 = arith.addf %359, %383 : vector<1x128xf32>
    %385 = arith.mulf %378, %378 : vector<1x128xf32>
    %cst_94 = arith.constant 1.000000e+00 : f32
    %386 = vector.broadcast %cst_94 : f32 to vector<1x128xf32>
    %387 = arith.subf %386, %385 : vector<1x128xf32>
    %388 = arith.mulf %367, %387 : vector<1x128xf32>
    %389 = arith.mulf %380, %302 : vector<1x128xf32>
    %390 = arith.addf %303, %389 : vector<1x128xf32>
    %391 = arith.mulf %382, %301 : vector<1x128xf32>
    %392 = arith.addf %390, %391 : vector<1x128xf32>
    %393 = arith.mulf %384, %300 : vector<1x128xf32>
    %394 = arith.addf %392, %393 : vector<1x128xf32>
    %395 = arith.mulf %378, %299 : vector<1x128xf32>
    %396 = arith.addf %394, %395 : vector<1x128xf32>
    %cst_95 = arith.constant 0.000000e+00 : f32
    %397 = vector.broadcast %cst_95 : f32 to vector<1x128xf32>
    %398 = arith.subf %397, %396 : vector<1x128xf32>
    %cst_96 = arith.constant 9.99999996E-13 : f32
    %399 = vector.broadcast %cst_96 : f32 to vector<1x128xf32>
    %400 = arith.addf %388, %399 : vector<1x128xf32>
    %401 = arith.divf %398, %400 : vector<1x128xf32>
    %402 = arith.mulf %401, %378 : vector<1x128xf32>
    %403 = arith.addf %380, %402 : vector<1x128xf32>
    %404 = arith.mulf %401, %384 : vector<1x128xf32>
    %405 = arith.addf %382, %404 : vector<1x128xf32>
    %406 = arith.mulf %401, %382 : vector<1x128xf32>
    %407 = arith.addf %384, %406 : vector<1x128xf32>
    %408 = arith.mulf %401, %380 : vector<1x128xf32>
    %409 = arith.addf %378, %408 : vector<1x128xf32>
    %410 = arith.mulf %401, %401 : vector<1x128xf32>
    %cst_97 = arith.constant 1.000000e+00 : f32
    %411 = vector.broadcast %cst_97 : f32 to vector<1x128xf32>
    %412 = arith.subf %411, %410 : vector<1x128xf32>
    %413 = arith.mulf %388, %412 : vector<1x128xf32>
    %414 = arith.mulf %403, %303 : vector<1x128xf32>
    %415 = arith.addf %304, %414 : vector<1x128xf32>
    %416 = arith.mulf %405, %302 : vector<1x128xf32>
    %417 = arith.addf %415, %416 : vector<1x128xf32>
    %418 = arith.mulf %407, %301 : vector<1x128xf32>
    %419 = arith.addf %417, %418 : vector<1x128xf32>
    %420 = arith.mulf %409, %300 : vector<1x128xf32>
    %421 = arith.addf %419, %420 : vector<1x128xf32>
    %422 = arith.mulf %401, %299 : vector<1x128xf32>
    %423 = arith.addf %421, %422 : vector<1x128xf32>
    %cst_98 = arith.constant 0.000000e+00 : f32
    %424 = vector.broadcast %cst_98 : f32 to vector<1x128xf32>
    %425 = arith.subf %424, %423 : vector<1x128xf32>
    %cst_99 = arith.constant 9.99999996E-13 : f32
    %426 = vector.broadcast %cst_99 : f32 to vector<1x128xf32>
    %427 = arith.addf %413, %426 : vector<1x128xf32>
    %428 = arith.divf %425, %427 : vector<1x128xf32>
    %429 = arith.mulf %428, %401 : vector<1x128xf32>
    %430 = arith.addf %403, %429 : vector<1x128xf32>
    %431 = arith.mulf %428, %409 : vector<1x128xf32>
    %432 = arith.addf %405, %431 : vector<1x128xf32>
    %433 = arith.mulf %428, %407 : vector<1x128xf32>
    %434 = arith.addf %407, %433 : vector<1x128xf32>
    %435 = arith.mulf %428, %405 : vector<1x128xf32>
    %436 = arith.addf %409, %435 : vector<1x128xf32>
    %437 = arith.mulf %428, %403 : vector<1x128xf32>
    %438 = arith.addf %401, %437 : vector<1x128xf32>
    %439 = arith.mulf %428, %428 : vector<1x128xf32>
    %cst_100 = arith.constant 1.000000e+00 : f32
    %440 = vector.broadcast %cst_100 : f32 to vector<1x128xf32>
    %441 = arith.subf %440, %439 : vector<1x128xf32>
    %442 = arith.mulf %413, %441 : vector<1x128xf32>
    %443 = arith.mulf %430, %304 : vector<1x128xf32>
    %444 = arith.addf %305, %443 : vector<1x128xf32>
    %445 = arith.mulf %432, %303 : vector<1x128xf32>
    %446 = arith.addf %444, %445 : vector<1x128xf32>
    %447 = arith.mulf %434, %302 : vector<1x128xf32>
    %448 = arith.addf %446, %447 : vector<1x128xf32>
    %449 = arith.mulf %436, %301 : vector<1x128xf32>
    %450 = arith.addf %448, %449 : vector<1x128xf32>
    %451 = arith.mulf %438, %300 : vector<1x128xf32>
    %452 = arith.addf %450, %451 : vector<1x128xf32>
    %453 = arith.mulf %428, %299 : vector<1x128xf32>
    %454 = arith.addf %452, %453 : vector<1x128xf32>
    %cst_101 = arith.constant 0.000000e+00 : f32
    %455 = vector.broadcast %cst_101 : f32 to vector<1x128xf32>
    %456 = arith.subf %455, %454 : vector<1x128xf32>
    %cst_102 = arith.constant 9.99999996E-13 : f32
    %457 = vector.broadcast %cst_102 : f32 to vector<1x128xf32>
    %458 = arith.addf %442, %457 : vector<1x128xf32>
    %459 = arith.divf %456, %458 : vector<1x128xf32>
    %460 = arith.mulf %459, %428 : vector<1x128xf32>
    %461 = arith.addf %430, %460 : vector<1x128xf32>
    %462 = arith.mulf %459, %438 : vector<1x128xf32>
    %463 = arith.addf %432, %462 : vector<1x128xf32>
    %464 = arith.mulf %459, %436 : vector<1x128xf32>
    %465 = arith.addf %434, %464 : vector<1x128xf32>
    %466 = arith.mulf %459, %434 : vector<1x128xf32>
    %467 = arith.addf %436, %466 : vector<1x128xf32>
    %468 = arith.mulf %459, %432 : vector<1x128xf32>
    %469 = arith.addf %438, %468 : vector<1x128xf32>
    %470 = arith.mulf %459, %430 : vector<1x128xf32>
    %471 = arith.addf %428, %470 : vector<1x128xf32>
    %472 = arith.mulf %459, %459 : vector<1x128xf32>
    %cst_103 = arith.constant 1.000000e+00 : f32
    %473 = vector.broadcast %cst_103 : f32 to vector<1x128xf32>
    %474 = arith.subf %473, %472 : vector<1x128xf32>
    %475 = arith.mulf %442, %474 : vector<1x128xf32>
    %476 = arith.mulf %461, %305 : vector<1x128xf32>
    %477 = arith.addf %306, %476 : vector<1x128xf32>
    %478 = arith.mulf %463, %304 : vector<1x128xf32>
    %479 = arith.addf %477, %478 : vector<1x128xf32>
    %480 = arith.mulf %465, %303 : vector<1x128xf32>
    %481 = arith.addf %479, %480 : vector<1x128xf32>
    %482 = arith.mulf %467, %302 : vector<1x128xf32>
    %483 = arith.addf %481, %482 : vector<1x128xf32>
    %484 = arith.mulf %469, %301 : vector<1x128xf32>
    %485 = arith.addf %483, %484 : vector<1x128xf32>
    %486 = arith.mulf %471, %300 : vector<1x128xf32>
    %487 = arith.addf %485, %486 : vector<1x128xf32>
    %488 = arith.mulf %459, %299 : vector<1x128xf32>
    %489 = arith.addf %487, %488 : vector<1x128xf32>
    %cst_104 = arith.constant 0.000000e+00 : f32
    %490 = vector.broadcast %cst_104 : f32 to vector<1x128xf32>
    %491 = arith.subf %490, %489 : vector<1x128xf32>
    %cst_105 = arith.constant 9.99999996E-13 : f32
    %492 = vector.broadcast %cst_105 : f32 to vector<1x128xf32>
    %493 = arith.addf %475, %492 : vector<1x128xf32>
    %494 = arith.divf %491, %493 : vector<1x128xf32>
    %495 = arith.mulf %494, %459 : vector<1x128xf32>
    %496 = arith.addf %461, %495 : vector<1x128xf32>
    %497 = arith.mulf %494, %471 : vector<1x128xf32>
    %498 = arith.addf %463, %497 : vector<1x128xf32>
    %499 = arith.mulf %494, %469 : vector<1x128xf32>
    %500 = arith.addf %465, %499 : vector<1x128xf32>
    %501 = arith.mulf %494, %467 : vector<1x128xf32>
    %502 = arith.addf %467, %501 : vector<1x128xf32>
    %503 = arith.mulf %494, %465 : vector<1x128xf32>
    %504 = arith.addf %469, %503 : vector<1x128xf32>
    %505 = arith.mulf %494, %463 : vector<1x128xf32>
    %506 = arith.addf %471, %505 : vector<1x128xf32>
    %507 = arith.mulf %494, %461 : vector<1x128xf32>
    %508 = arith.addf %459, %507 : vector<1x128xf32>
    %509 = arith.mulf %494, %494 : vector<1x128xf32>
    %cst_106 = arith.constant 1.000000e+00 : f32
    %510 = vector.broadcast %cst_106 : f32 to vector<1x128xf32>
    %511 = arith.subf %510, %509 : vector<1x128xf32>
    %512 = arith.mulf %475, %511 : vector<1x128xf32>
    %513 = arith.mulf %496, %306 : vector<1x128xf32>
    %514 = arith.addf %307, %513 : vector<1x128xf32>
    %515 = arith.mulf %498, %305 : vector<1x128xf32>
    %516 = arith.addf %514, %515 : vector<1x128xf32>
    %517 = arith.mulf %500, %304 : vector<1x128xf32>
    %518 = arith.addf %516, %517 : vector<1x128xf32>
    %519 = arith.mulf %502, %303 : vector<1x128xf32>
    %520 = arith.addf %518, %519 : vector<1x128xf32>
    %521 = arith.mulf %504, %302 : vector<1x128xf32>
    %522 = arith.addf %520, %521 : vector<1x128xf32>
    %523 = arith.mulf %506, %301 : vector<1x128xf32>
    %524 = arith.addf %522, %523 : vector<1x128xf32>
    %525 = arith.mulf %508, %300 : vector<1x128xf32>
    %526 = arith.addf %524, %525 : vector<1x128xf32>
    %527 = arith.mulf %494, %299 : vector<1x128xf32>
    %528 = arith.addf %526, %527 : vector<1x128xf32>
    %cst_107 = arith.constant 0.000000e+00 : f32
    %529 = vector.broadcast %cst_107 : f32 to vector<1x128xf32>
    %530 = arith.subf %529, %528 : vector<1x128xf32>
    %cst_108 = arith.constant 9.99999996E-13 : f32
    %531 = vector.broadcast %cst_108 : f32 to vector<1x128xf32>
    %532 = arith.addf %512, %531 : vector<1x128xf32>
    %533 = arith.divf %530, %532 : vector<1x128xf32>
    %534 = arith.mulf %533, %494 : vector<1x128xf32>
    %535 = arith.addf %496, %534 : vector<1x128xf32>
    %536 = arith.mulf %533, %508 : vector<1x128xf32>
    %537 = arith.addf %498, %536 : vector<1x128xf32>
    %538 = arith.mulf %533, %506 : vector<1x128xf32>
    %539 = arith.addf %500, %538 : vector<1x128xf32>
    %540 = arith.mulf %533, %504 : vector<1x128xf32>
    %541 = arith.addf %502, %540 : vector<1x128xf32>
    %542 = arith.mulf %533, %502 : vector<1x128xf32>
    %543 = arith.addf %504, %542 : vector<1x128xf32>
    %544 = arith.mulf %533, %500 : vector<1x128xf32>
    %545 = arith.addf %506, %544 : vector<1x128xf32>
    %546 = arith.mulf %533, %498 : vector<1x128xf32>
    %547 = arith.addf %508, %546 : vector<1x128xf32>
    %548 = arith.mulf %533, %496 : vector<1x128xf32>
    %549 = arith.addf %494, %548 : vector<1x128xf32>
    %550 = arith.mulf %533, %533 : vector<1x128xf32>
    %cst_109 = arith.constant 1.000000e+00 : f32
    %551 = vector.broadcast %cst_109 : f32 to vector<1x128xf32>
    %552 = arith.subf %551, %550 : vector<1x128xf32>
    %553 = arith.mulf %512, %552 : vector<1x128xf32>
    %554 = arith.mulf %535, %307 : vector<1x128xf32>
    %555 = arith.addf %308, %554 : vector<1x128xf32>
    %556 = arith.mulf %537, %306 : vector<1x128xf32>
    %557 = arith.addf %555, %556 : vector<1x128xf32>
    %558 = arith.mulf %539, %305 : vector<1x128xf32>
    %559 = arith.addf %557, %558 : vector<1x128xf32>
    %560 = arith.mulf %541, %304 : vector<1x128xf32>
    %561 = arith.addf %559, %560 : vector<1x128xf32>
    %562 = arith.mulf %543, %303 : vector<1x128xf32>
    %563 = arith.addf %561, %562 : vector<1x128xf32>
    %564 = arith.mulf %545, %302 : vector<1x128xf32>
    %565 = arith.addf %563, %564 : vector<1x128xf32>
    %566 = arith.mulf %547, %301 : vector<1x128xf32>
    %567 = arith.addf %565, %566 : vector<1x128xf32>
    %568 = arith.mulf %549, %300 : vector<1x128xf32>
    %569 = arith.addf %567, %568 : vector<1x128xf32>
    %570 = arith.mulf %533, %299 : vector<1x128xf32>
    %571 = arith.addf %569, %570 : vector<1x128xf32>
    %cst_110 = arith.constant 0.000000e+00 : f32
    %572 = vector.broadcast %cst_110 : f32 to vector<1x128xf32>
    %573 = arith.subf %572, %571 : vector<1x128xf32>
    %cst_111 = arith.constant 9.99999996E-13 : f32
    %574 = vector.broadcast %cst_111 : f32 to vector<1x128xf32>
    %575 = arith.addf %553, %574 : vector<1x128xf32>
    %576 = arith.divf %573, %575 : vector<1x128xf32>
    %577 = arith.mulf %576, %533 : vector<1x128xf32>
    %578 = arith.addf %535, %577 : vector<1x128xf32>
    %579 = arith.mulf %576, %549 : vector<1x128xf32>
    %580 = arith.addf %537, %579 : vector<1x128xf32>
    %581 = arith.mulf %576, %547 : vector<1x128xf32>
    %582 = arith.addf %539, %581 : vector<1x128xf32>
    %583 = arith.mulf %576, %545 : vector<1x128xf32>
    %584 = arith.addf %541, %583 : vector<1x128xf32>
    %585 = arith.mulf %576, %543 : vector<1x128xf32>
    %586 = arith.addf %543, %585 : vector<1x128xf32>
    %587 = arith.mulf %576, %541 : vector<1x128xf32>
    %588 = arith.addf %545, %587 : vector<1x128xf32>
    %589 = arith.mulf %576, %539 : vector<1x128xf32>
    %590 = arith.addf %547, %589 : vector<1x128xf32>
    %591 = arith.mulf %576, %537 : vector<1x128xf32>
    %592 = arith.addf %549, %591 : vector<1x128xf32>
    %593 = arith.mulf %576, %535 : vector<1x128xf32>
    %594 = arith.addf %533, %593 : vector<1x128xf32>
    %595 = arith.mulf %576, %576 : vector<1x128xf32>
    %cst_112 = arith.constant 1.000000e+00 : f32
    %596 = vector.broadcast %cst_112 : f32 to vector<1x128xf32>
    %597 = arith.subf %596, %595 : vector<1x128xf32>
    %598 = arith.mulf %553, %597 : vector<1x128xf32>
    %599 = arith.mulf %578, %308 : vector<1x128xf32>
    %600 = arith.addf %309, %599 : vector<1x128xf32>
    %601 = arith.mulf %580, %307 : vector<1x128xf32>
    %602 = arith.addf %600, %601 : vector<1x128xf32>
    %603 = arith.mulf %582, %306 : vector<1x128xf32>
    %604 = arith.addf %602, %603 : vector<1x128xf32>
    %605 = arith.mulf %584, %305 : vector<1x128xf32>
    %606 = arith.addf %604, %605 : vector<1x128xf32>
    %607 = arith.mulf %586, %304 : vector<1x128xf32>
    %608 = arith.addf %606, %607 : vector<1x128xf32>
    %609 = arith.mulf %588, %303 : vector<1x128xf32>
    %610 = arith.addf %608, %609 : vector<1x128xf32>
    %611 = arith.mulf %590, %302 : vector<1x128xf32>
    %612 = arith.addf %610, %611 : vector<1x128xf32>
    %613 = arith.mulf %592, %301 : vector<1x128xf32>
    %614 = arith.addf %612, %613 : vector<1x128xf32>
    %615 = arith.mulf %594, %300 : vector<1x128xf32>
    %616 = arith.addf %614, %615 : vector<1x128xf32>
    %617 = arith.mulf %576, %299 : vector<1x128xf32>
    %618 = arith.addf %616, %617 : vector<1x128xf32>
    %cst_113 = arith.constant 0.000000e+00 : f32
    %619 = vector.broadcast %cst_113 : f32 to vector<1x128xf32>
    %620 = arith.subf %619, %618 : vector<1x128xf32>
    %cst_114 = arith.constant 9.99999996E-13 : f32
    %621 = vector.broadcast %cst_114 : f32 to vector<1x128xf32>
    %622 = arith.addf %598, %621 : vector<1x128xf32>
    %623 = arith.divf %620, %622 : vector<1x128xf32>
    %624 = arith.mulf %623, %576 : vector<1x128xf32>
    %625 = arith.addf %578, %624 : vector<1x128xf32>
    %626 = arith.mulf %623, %594 : vector<1x128xf32>
    %627 = arith.addf %580, %626 : vector<1x128xf32>
    %628 = arith.mulf %623, %592 : vector<1x128xf32>
    %629 = arith.addf %582, %628 : vector<1x128xf32>
    %630 = arith.mulf %623, %590 : vector<1x128xf32>
    %631 = arith.addf %584, %630 : vector<1x128xf32>
    %632 = arith.mulf %623, %588 : vector<1x128xf32>
    %633 = arith.addf %586, %632 : vector<1x128xf32>
    %634 = arith.mulf %623, %586 : vector<1x128xf32>
    %635 = arith.addf %588, %634 : vector<1x128xf32>
    %636 = arith.mulf %623, %584 : vector<1x128xf32>
    %637 = arith.addf %590, %636 : vector<1x128xf32>
    %638 = arith.mulf %623, %582 : vector<1x128xf32>
    %639 = arith.addf %592, %638 : vector<1x128xf32>
    %640 = arith.mulf %623, %580 : vector<1x128xf32>
    %641 = arith.addf %594, %640 : vector<1x128xf32>
    %642 = arith.mulf %623, %578 : vector<1x128xf32>
    %643 = arith.addf %576, %642 : vector<1x128xf32>
    %644 = arith.mulf %623, %623 : vector<1x128xf32>
    %cst_115 = arith.constant 1.000000e+00 : f32
    %645 = vector.broadcast %cst_115 : f32 to vector<1x128xf32>
    %646 = arith.subf %645, %644 : vector<1x128xf32>
    %647 = arith.mulf %598, %646 : vector<1x128xf32>
    %648 = arith.mulf %625, %309 : vector<1x128xf32>
    %649 = arith.addf %310, %648 : vector<1x128xf32>
    %650 = arith.mulf %627, %308 : vector<1x128xf32>
    %651 = arith.addf %649, %650 : vector<1x128xf32>
    %652 = arith.mulf %629, %307 : vector<1x128xf32>
    %653 = arith.addf %651, %652 : vector<1x128xf32>
    %654 = arith.mulf %631, %306 : vector<1x128xf32>
    %655 = arith.addf %653, %654 : vector<1x128xf32>
    %656 = arith.mulf %633, %305 : vector<1x128xf32>
    %657 = arith.addf %655, %656 : vector<1x128xf32>
    %658 = arith.mulf %635, %304 : vector<1x128xf32>
    %659 = arith.addf %657, %658 : vector<1x128xf32>
    %660 = arith.mulf %637, %303 : vector<1x128xf32>
    %661 = arith.addf %659, %660 : vector<1x128xf32>
    %662 = arith.mulf %639, %302 : vector<1x128xf32>
    %663 = arith.addf %661, %662 : vector<1x128xf32>
    %664 = arith.mulf %641, %301 : vector<1x128xf32>
    %665 = arith.addf %663, %664 : vector<1x128xf32>
    %666 = arith.mulf %643, %300 : vector<1x128xf32>
    %667 = arith.addf %665, %666 : vector<1x128xf32>
    %668 = arith.mulf %623, %299 : vector<1x128xf32>
    %669 = arith.addf %667, %668 : vector<1x128xf32>
    %cst_116 = arith.constant 0.000000e+00 : f32
    %670 = vector.broadcast %cst_116 : f32 to vector<1x128xf32>
    %671 = arith.subf %670, %669 : vector<1x128xf32>
    %cst_117 = arith.constant 9.99999996E-13 : f32
    %672 = vector.broadcast %cst_117 : f32 to vector<1x128xf32>
    %673 = arith.addf %647, %672 : vector<1x128xf32>
    %674 = arith.divf %671, %673 : vector<1x128xf32>
    %675 = arith.mulf %674, %623 : vector<1x128xf32>
    %676 = arith.addf %625, %675 : vector<1x128xf32>
    %677 = arith.mulf %674, %643 : vector<1x128xf32>
    %678 = arith.addf %627, %677 : vector<1x128xf32>
    %679 = arith.mulf %674, %641 : vector<1x128xf32>
    %680 = arith.addf %629, %679 : vector<1x128xf32>
    %681 = arith.mulf %674, %639 : vector<1x128xf32>
    %682 = arith.addf %631, %681 : vector<1x128xf32>
    %683 = arith.mulf %674, %637 : vector<1x128xf32>
    %684 = arith.addf %633, %683 : vector<1x128xf32>
    %685 = arith.mulf %674, %635 : vector<1x128xf32>
    %686 = arith.addf %635, %685 : vector<1x128xf32>
    %687 = arith.mulf %674, %633 : vector<1x128xf32>
    %688 = arith.addf %637, %687 : vector<1x128xf32>
    %689 = arith.mulf %674, %631 : vector<1x128xf32>
    %690 = arith.addf %639, %689 : vector<1x128xf32>
    %691 = arith.mulf %674, %629 : vector<1x128xf32>
    %692 = arith.addf %641, %691 : vector<1x128xf32>
    %693 = arith.mulf %674, %627 : vector<1x128xf32>
    %694 = arith.addf %643, %693 : vector<1x128xf32>
    %695 = arith.mulf %674, %625 : vector<1x128xf32>
    %696 = arith.addf %623, %695 : vector<1x128xf32>
    %697 = arith.mulf %674, %674 : vector<1x128xf32>
    %cst_118 = arith.constant 1.000000e+00 : f32
    %698 = vector.broadcast %cst_118 : f32 to vector<1x128xf32>
    %699 = arith.subf %698, %697 : vector<1x128xf32>
    %700 = arith.mulf %647, %699 : vector<1x128xf32>
    %701 = arith.mulf %676, %310 : vector<1x128xf32>
    %702 = arith.addf %311, %701 : vector<1x128xf32>
    %703 = arith.mulf %678, %309 : vector<1x128xf32>
    %704 = arith.addf %702, %703 : vector<1x128xf32>
    %705 = arith.mulf %680, %308 : vector<1x128xf32>
    %706 = arith.addf %704, %705 : vector<1x128xf32>
    %707 = arith.mulf %682, %307 : vector<1x128xf32>
    %708 = arith.addf %706, %707 : vector<1x128xf32>
    %709 = arith.mulf %684, %306 : vector<1x128xf32>
    %710 = arith.addf %708, %709 : vector<1x128xf32>
    %711 = arith.mulf %686, %305 : vector<1x128xf32>
    %712 = arith.addf %710, %711 : vector<1x128xf32>
    %713 = arith.mulf %688, %304 : vector<1x128xf32>
    %714 = arith.addf %712, %713 : vector<1x128xf32>
    %715 = arith.mulf %690, %303 : vector<1x128xf32>
    %716 = arith.addf %714, %715 : vector<1x128xf32>
    %717 = arith.mulf %692, %302 : vector<1x128xf32>
    %718 = arith.addf %716, %717 : vector<1x128xf32>
    %719 = arith.mulf %694, %301 : vector<1x128xf32>
    %720 = arith.addf %718, %719 : vector<1x128xf32>
    %721 = arith.mulf %696, %300 : vector<1x128xf32>
    %722 = arith.addf %720, %721 : vector<1x128xf32>
    %723 = arith.mulf %674, %299 : vector<1x128xf32>
    %724 = arith.addf %722, %723 : vector<1x128xf32>
    %cst_119 = arith.constant 0.000000e+00 : f32
    %725 = vector.broadcast %cst_119 : f32 to vector<1x128xf32>
    %726 = arith.subf %725, %724 : vector<1x128xf32>
    %cst_120 = arith.constant 9.99999996E-13 : f32
    %727 = vector.broadcast %cst_120 : f32 to vector<1x128xf32>
    %728 = arith.addf %700, %727 : vector<1x128xf32>
    %729 = arith.divf %726, %728 : vector<1x128xf32>
    %730 = arith.mulf %729, %674 : vector<1x128xf32>
    %731 = arith.addf %676, %730 : vector<1x128xf32>
    %732 = arith.mulf %729, %696 : vector<1x128xf32>
    %733 = arith.addf %678, %732 : vector<1x128xf32>
    %734 = arith.mulf %729, %694 : vector<1x128xf32>
    %735 = arith.addf %680, %734 : vector<1x128xf32>
    %736 = arith.mulf %729, %692 : vector<1x128xf32>
    %737 = arith.addf %682, %736 : vector<1x128xf32>
    %738 = arith.mulf %729, %690 : vector<1x128xf32>
    %739 = arith.addf %684, %738 : vector<1x128xf32>
    %740 = arith.mulf %729, %688 : vector<1x128xf32>
    %741 = arith.addf %686, %740 : vector<1x128xf32>
    %742 = arith.mulf %729, %686 : vector<1x128xf32>
    %743 = arith.addf %688, %742 : vector<1x128xf32>
    %744 = arith.mulf %729, %684 : vector<1x128xf32>
    %745 = arith.addf %690, %744 : vector<1x128xf32>
    %746 = arith.mulf %729, %682 : vector<1x128xf32>
    %747 = arith.addf %692, %746 : vector<1x128xf32>
    %748 = arith.mulf %729, %680 : vector<1x128xf32>
    %749 = arith.addf %694, %748 : vector<1x128xf32>
    %750 = arith.mulf %729, %678 : vector<1x128xf32>
    %751 = arith.addf %696, %750 : vector<1x128xf32>
    %752 = arith.mulf %729, %676 : vector<1x128xf32>
    %753 = arith.addf %674, %752 : vector<1x128xf32>
    %754 = arith.mulf %729, %729 : vector<1x128xf32>
    %cst_121 = arith.constant 1.000000e+00 : f32
    %755 = vector.broadcast %cst_121 : f32 to vector<1x128xf32>
    %756 = arith.subf %755, %754 : vector<1x128xf32>
    %757 = arith.mulf %700, %756 : vector<1x128xf32>
    %758 = arith.mulf %731, %311 : vector<1x128xf32>
    %759 = arith.addf %312, %758 : vector<1x128xf32>
    %760 = arith.mulf %733, %310 : vector<1x128xf32>
    %761 = arith.addf %759, %760 : vector<1x128xf32>
    %762 = arith.mulf %735, %309 : vector<1x128xf32>
    %763 = arith.addf %761, %762 : vector<1x128xf32>
    %764 = arith.mulf %737, %308 : vector<1x128xf32>
    %765 = arith.addf %763, %764 : vector<1x128xf32>
    %766 = arith.mulf %739, %307 : vector<1x128xf32>
    %767 = arith.addf %765, %766 : vector<1x128xf32>
    %768 = arith.mulf %741, %306 : vector<1x128xf32>
    %769 = arith.addf %767, %768 : vector<1x128xf32>
    %770 = arith.mulf %743, %305 : vector<1x128xf32>
    %771 = arith.addf %769, %770 : vector<1x128xf32>
    %772 = arith.mulf %745, %304 : vector<1x128xf32>
    %773 = arith.addf %771, %772 : vector<1x128xf32>
    %774 = arith.mulf %747, %303 : vector<1x128xf32>
    %775 = arith.addf %773, %774 : vector<1x128xf32>
    %776 = arith.mulf %749, %302 : vector<1x128xf32>
    %777 = arith.addf %775, %776 : vector<1x128xf32>
    %778 = arith.mulf %751, %301 : vector<1x128xf32>
    %779 = arith.addf %777, %778 : vector<1x128xf32>
    %780 = arith.mulf %753, %300 : vector<1x128xf32>
    %781 = arith.addf %779, %780 : vector<1x128xf32>
    %782 = arith.mulf %729, %299 : vector<1x128xf32>
    %783 = arith.addf %781, %782 : vector<1x128xf32>
    %cst_122 = arith.constant 0.000000e+00 : f32
    %784 = vector.broadcast %cst_122 : f32 to vector<1x128xf32>
    %785 = arith.subf %784, %783 : vector<1x128xf32>
    %cst_123 = arith.constant 9.99999996E-13 : f32
    %786 = vector.broadcast %cst_123 : f32 to vector<1x128xf32>
    %787 = arith.addf %757, %786 : vector<1x128xf32>
    %788 = arith.divf %785, %787 : vector<1x128xf32>
    %789 = arith.mulf %788, %729 : vector<1x128xf32>
    %790 = arith.addf %731, %789 : vector<1x128xf32>
    %791 = arith.mulf %788, %753 : vector<1x128xf32>
    %792 = arith.addf %733, %791 : vector<1x128xf32>
    %793 = arith.mulf %788, %751 : vector<1x128xf32>
    %794 = arith.addf %735, %793 : vector<1x128xf32>
    %795 = arith.mulf %788, %749 : vector<1x128xf32>
    %796 = arith.addf %737, %795 : vector<1x128xf32>
    %797 = arith.mulf %788, %747 : vector<1x128xf32>
    %798 = arith.addf %739, %797 : vector<1x128xf32>
    %799 = arith.mulf %788, %745 : vector<1x128xf32>
    %800 = arith.addf %741, %799 : vector<1x128xf32>
    %801 = arith.mulf %788, %743 : vector<1x128xf32>
    %802 = arith.addf %743, %801 : vector<1x128xf32>
    %803 = arith.mulf %788, %741 : vector<1x128xf32>
    %804 = arith.addf %745, %803 : vector<1x128xf32>
    %805 = arith.mulf %788, %739 : vector<1x128xf32>
    %806 = arith.addf %747, %805 : vector<1x128xf32>
    %807 = arith.mulf %788, %737 : vector<1x128xf32>
    %808 = arith.addf %749, %807 : vector<1x128xf32>
    %809 = arith.mulf %788, %735 : vector<1x128xf32>
    %810 = arith.addf %751, %809 : vector<1x128xf32>
    %811 = arith.mulf %788, %733 : vector<1x128xf32>
    %812 = arith.addf %753, %811 : vector<1x128xf32>
    %813 = arith.mulf %788, %731 : vector<1x128xf32>
    %814 = arith.addf %729, %813 : vector<1x128xf32>
    %815 = arith.mulf %788, %788 : vector<1x128xf32>
    %cst_124 = arith.constant 1.000000e+00 : f32
    %816 = vector.broadcast %cst_124 : f32 to vector<1x128xf32>
    %817 = arith.subf %816, %815 : vector<1x128xf32>
    %818 = arith.mulf %757, %817 : vector<1x128xf32>
    %819 = arith.mulf %790, %312 : vector<1x128xf32>
    %820 = arith.addf %313, %819 : vector<1x128xf32>
    %821 = arith.mulf %792, %311 : vector<1x128xf32>
    %822 = arith.addf %820, %821 : vector<1x128xf32>
    %823 = arith.mulf %794, %310 : vector<1x128xf32>
    %824 = arith.addf %822, %823 : vector<1x128xf32>
    %825 = arith.mulf %796, %309 : vector<1x128xf32>
    %826 = arith.addf %824, %825 : vector<1x128xf32>
    %827 = arith.mulf %798, %308 : vector<1x128xf32>
    %828 = arith.addf %826, %827 : vector<1x128xf32>
    %829 = arith.mulf %800, %307 : vector<1x128xf32>
    %830 = arith.addf %828, %829 : vector<1x128xf32>
    %831 = arith.mulf %802, %306 : vector<1x128xf32>
    %832 = arith.addf %830, %831 : vector<1x128xf32>
    %833 = arith.mulf %804, %305 : vector<1x128xf32>
    %834 = arith.addf %832, %833 : vector<1x128xf32>
    %835 = arith.mulf %806, %304 : vector<1x128xf32>
    %836 = arith.addf %834, %835 : vector<1x128xf32>
    %837 = arith.mulf %808, %303 : vector<1x128xf32>
    %838 = arith.addf %836, %837 : vector<1x128xf32>
    %839 = arith.mulf %810, %302 : vector<1x128xf32>
    %840 = arith.addf %838, %839 : vector<1x128xf32>
    %841 = arith.mulf %812, %301 : vector<1x128xf32>
    %842 = arith.addf %840, %841 : vector<1x128xf32>
    %843 = arith.mulf %814, %300 : vector<1x128xf32>
    %844 = arith.addf %842, %843 : vector<1x128xf32>
    %845 = arith.mulf %788, %299 : vector<1x128xf32>
    %846 = arith.addf %844, %845 : vector<1x128xf32>
    %cst_125 = arith.constant 0.000000e+00 : f32
    %847 = vector.broadcast %cst_125 : f32 to vector<1x128xf32>
    %848 = arith.subf %847, %846 : vector<1x128xf32>
    %cst_126 = arith.constant 9.99999996E-13 : f32
    %849 = vector.broadcast %cst_126 : f32 to vector<1x128xf32>
    %850 = arith.addf %818, %849 : vector<1x128xf32>
    %851 = arith.divf %848, %850 : vector<1x128xf32>
    %852 = arith.mulf %851, %788 : vector<1x128xf32>
    %853 = arith.addf %790, %852 : vector<1x128xf32>
    %854 = arith.mulf %851, %814 : vector<1x128xf32>
    %855 = arith.addf %792, %854 : vector<1x128xf32>
    %856 = arith.mulf %851, %812 : vector<1x128xf32>
    %857 = arith.addf %794, %856 : vector<1x128xf32>
    %858 = arith.mulf %851, %810 : vector<1x128xf32>
    %859 = arith.addf %796, %858 : vector<1x128xf32>
    %860 = arith.mulf %851, %808 : vector<1x128xf32>
    %861 = arith.addf %798, %860 : vector<1x128xf32>
    %862 = arith.mulf %851, %806 : vector<1x128xf32>
    %863 = arith.addf %800, %862 : vector<1x128xf32>
    %864 = arith.mulf %851, %804 : vector<1x128xf32>
    %865 = arith.addf %802, %864 : vector<1x128xf32>
    %866 = arith.mulf %851, %802 : vector<1x128xf32>
    %867 = arith.addf %804, %866 : vector<1x128xf32>
    %868 = arith.mulf %851, %800 : vector<1x128xf32>
    %869 = arith.addf %806, %868 : vector<1x128xf32>
    %870 = arith.mulf %851, %798 : vector<1x128xf32>
    %871 = arith.addf %808, %870 : vector<1x128xf32>
    %872 = arith.mulf %851, %796 : vector<1x128xf32>
    %873 = arith.addf %810, %872 : vector<1x128xf32>
    %874 = arith.mulf %851, %794 : vector<1x128xf32>
    %875 = arith.addf %812, %874 : vector<1x128xf32>
    %876 = arith.mulf %851, %792 : vector<1x128xf32>
    %877 = arith.addf %814, %876 : vector<1x128xf32>
    %878 = arith.mulf %851, %790 : vector<1x128xf32>
    %879 = arith.addf %788, %878 : vector<1x128xf32>
    %880 = arith.mulf %851, %851 : vector<1x128xf32>
    %cst_127 = arith.constant 1.000000e+00 : f32
    %881 = vector.broadcast %cst_127 : f32 to vector<1x128xf32>
    %882 = arith.subf %881, %880 : vector<1x128xf32>
    %883 = arith.mulf %818, %882 : vector<1x128xf32>
    %884 = arith.mulf %853, %313 : vector<1x128xf32>
    %885 = arith.addf %314, %884 : vector<1x128xf32>
    %886 = arith.mulf %855, %312 : vector<1x128xf32>
    %887 = arith.addf %885, %886 : vector<1x128xf32>
    %888 = arith.mulf %857, %311 : vector<1x128xf32>
    %889 = arith.addf %887, %888 : vector<1x128xf32>
    %890 = arith.mulf %859, %310 : vector<1x128xf32>
    %891 = arith.addf %889, %890 : vector<1x128xf32>
    %892 = arith.mulf %861, %309 : vector<1x128xf32>
    %893 = arith.addf %891, %892 : vector<1x128xf32>
    %894 = arith.mulf %863, %308 : vector<1x128xf32>
    %895 = arith.addf %893, %894 : vector<1x128xf32>
    %896 = arith.mulf %865, %307 : vector<1x128xf32>
    %897 = arith.addf %895, %896 : vector<1x128xf32>
    %898 = arith.mulf %867, %306 : vector<1x128xf32>
    %899 = arith.addf %897, %898 : vector<1x128xf32>
    %900 = arith.mulf %869, %305 : vector<1x128xf32>
    %901 = arith.addf %899, %900 : vector<1x128xf32>
    %902 = arith.mulf %871, %304 : vector<1x128xf32>
    %903 = arith.addf %901, %902 : vector<1x128xf32>
    %904 = arith.mulf %873, %303 : vector<1x128xf32>
    %905 = arith.addf %903, %904 : vector<1x128xf32>
    %906 = arith.mulf %875, %302 : vector<1x128xf32>
    %907 = arith.addf %905, %906 : vector<1x128xf32>
    %908 = arith.mulf %877, %301 : vector<1x128xf32>
    %909 = arith.addf %907, %908 : vector<1x128xf32>
    %910 = arith.mulf %879, %300 : vector<1x128xf32>
    %911 = arith.addf %909, %910 : vector<1x128xf32>
    %912 = arith.mulf %851, %299 : vector<1x128xf32>
    %913 = arith.addf %911, %912 : vector<1x128xf32>
    %cst_128 = arith.constant 0.000000e+00 : f32
    %914 = vector.broadcast %cst_128 : f32 to vector<1x128xf32>
    %915 = arith.subf %914, %913 : vector<1x128xf32>
    %cst_129 = arith.constant 9.99999996E-13 : f32
    %916 = vector.broadcast %cst_129 : f32 to vector<1x128xf32>
    %917 = arith.addf %883, %916 : vector<1x128xf32>
    %918 = arith.divf %915, %917 : vector<1x128xf32>
    %919 = arith.mulf %918, %851 : vector<1x128xf32>
    %920 = arith.addf %853, %919 : vector<1x128xf32>
    %921 = arith.mulf %918, %879 : vector<1x128xf32>
    %922 = arith.addf %855, %921 : vector<1x128xf32>
    %923 = arith.mulf %918, %877 : vector<1x128xf32>
    %924 = arith.addf %857, %923 : vector<1x128xf32>
    %925 = arith.mulf %918, %875 : vector<1x128xf32>
    %926 = arith.addf %859, %925 : vector<1x128xf32>
    %927 = arith.mulf %918, %873 : vector<1x128xf32>
    %928 = arith.addf %861, %927 : vector<1x128xf32>
    %929 = arith.mulf %918, %871 : vector<1x128xf32>
    %930 = arith.addf %863, %929 : vector<1x128xf32>
    %931 = arith.mulf %918, %869 : vector<1x128xf32>
    %932 = arith.addf %865, %931 : vector<1x128xf32>
    %933 = arith.mulf %918, %867 : vector<1x128xf32>
    %934 = arith.addf %867, %933 : vector<1x128xf32>
    %935 = arith.mulf %918, %865 : vector<1x128xf32>
    %936 = arith.addf %869, %935 : vector<1x128xf32>
    %937 = arith.mulf %918, %863 : vector<1x128xf32>
    %938 = arith.addf %871, %937 : vector<1x128xf32>
    %939 = arith.mulf %918, %861 : vector<1x128xf32>
    %940 = arith.addf %873, %939 : vector<1x128xf32>
    %941 = arith.mulf %918, %859 : vector<1x128xf32>
    %942 = arith.addf %875, %941 : vector<1x128xf32>
    %943 = arith.mulf %918, %857 : vector<1x128xf32>
    %944 = arith.addf %877, %943 : vector<1x128xf32>
    %945 = arith.mulf %918, %855 : vector<1x128xf32>
    %946 = arith.addf %879, %945 : vector<1x128xf32>
    %947 = arith.mulf %918, %853 : vector<1x128xf32>
    %948 = arith.addf %851, %947 : vector<1x128xf32>
    %949 = arith.mulf %918, %918 : vector<1x128xf32>
    %cst_130 = arith.constant 1.000000e+00 : f32
    %950 = vector.broadcast %cst_130 : f32 to vector<1x128xf32>
    %951 = arith.subf %950, %949 : vector<1x128xf32>
    %952 = arith.mulf %883, %951 : vector<1x128xf32>
    %953 = arith.mulf %920, %314 : vector<1x128xf32>
    %954 = arith.addf %315, %953 : vector<1x128xf32>
    %955 = arith.mulf %922, %313 : vector<1x128xf32>
    %956 = arith.addf %954, %955 : vector<1x128xf32>
    %957 = arith.mulf %924, %312 : vector<1x128xf32>
    %958 = arith.addf %956, %957 : vector<1x128xf32>
    %959 = arith.mulf %926, %311 : vector<1x128xf32>
    %960 = arith.addf %958, %959 : vector<1x128xf32>
    %961 = arith.mulf %928, %310 : vector<1x128xf32>
    %962 = arith.addf %960, %961 : vector<1x128xf32>
    %963 = arith.mulf %930, %309 : vector<1x128xf32>
    %964 = arith.addf %962, %963 : vector<1x128xf32>
    %965 = arith.mulf %932, %308 : vector<1x128xf32>
    %966 = arith.addf %964, %965 : vector<1x128xf32>
    %967 = arith.mulf %934, %307 : vector<1x128xf32>
    %968 = arith.addf %966, %967 : vector<1x128xf32>
    %969 = arith.mulf %936, %306 : vector<1x128xf32>
    %970 = arith.addf %968, %969 : vector<1x128xf32>
    %971 = arith.mulf %938, %305 : vector<1x128xf32>
    %972 = arith.addf %970, %971 : vector<1x128xf32>
    %973 = arith.mulf %940, %304 : vector<1x128xf32>
    %974 = arith.addf %972, %973 : vector<1x128xf32>
    %975 = arith.mulf %942, %303 : vector<1x128xf32>
    %976 = arith.addf %974, %975 : vector<1x128xf32>
    %977 = arith.mulf %944, %302 : vector<1x128xf32>
    %978 = arith.addf %976, %977 : vector<1x128xf32>
    %979 = arith.mulf %946, %301 : vector<1x128xf32>
    %980 = arith.addf %978, %979 : vector<1x128xf32>
    %981 = arith.mulf %948, %300 : vector<1x128xf32>
    %982 = arith.addf %980, %981 : vector<1x128xf32>
    %983 = arith.mulf %918, %299 : vector<1x128xf32>
    %984 = arith.addf %982, %983 : vector<1x128xf32>
    %cst_131 = arith.constant 0.000000e+00 : f32
    %985 = vector.broadcast %cst_131 : f32 to vector<1x128xf32>
    %986 = arith.subf %985, %984 : vector<1x128xf32>
    %cst_132 = arith.constant 9.99999996E-13 : f32
    %987 = vector.broadcast %cst_132 : f32 to vector<1x128xf32>
    %988 = arith.addf %952, %987 : vector<1x128xf32>
    %989 = arith.divf %986, %988 : vector<1x128xf32>
    %990 = arith.mulf %989, %918 : vector<1x128xf32>
    %991 = arith.addf %920, %990 : vector<1x128xf32>
    %992 = arith.mulf %989, %948 : vector<1x128xf32>
    %993 = arith.addf %922, %992 : vector<1x128xf32>
    %994 = arith.mulf %989, %946 : vector<1x128xf32>
    %995 = arith.addf %924, %994 : vector<1x128xf32>
    %996 = arith.mulf %989, %944 : vector<1x128xf32>
    %997 = arith.addf %926, %996 : vector<1x128xf32>
    %998 = arith.mulf %989, %942 : vector<1x128xf32>
    %999 = arith.addf %928, %998 : vector<1x128xf32>
    %1000 = arith.mulf %989, %940 : vector<1x128xf32>
    %1001 = arith.addf %930, %1000 : vector<1x128xf32>
    %1002 = arith.mulf %989, %938 : vector<1x128xf32>
    %1003 = arith.addf %932, %1002 : vector<1x128xf32>
    %1004 = arith.mulf %989, %936 : vector<1x128xf32>
    %1005 = arith.addf %934, %1004 : vector<1x128xf32>
    %1006 = arith.mulf %989, %934 : vector<1x128xf32>
    %1007 = arith.addf %936, %1006 : vector<1x128xf32>
    %1008 = arith.mulf %989, %932 : vector<1x128xf32>
    %1009 = arith.addf %938, %1008 : vector<1x128xf32>
    %1010 = arith.mulf %989, %930 : vector<1x128xf32>
    %1011 = arith.addf %940, %1010 : vector<1x128xf32>
    %1012 = arith.mulf %989, %928 : vector<1x128xf32>
    %1013 = arith.addf %942, %1012 : vector<1x128xf32>
    %1014 = arith.mulf %989, %926 : vector<1x128xf32>
    %1015 = arith.addf %944, %1014 : vector<1x128xf32>
    %1016 = arith.mulf %989, %924 : vector<1x128xf32>
    %1017 = arith.addf %946, %1016 : vector<1x128xf32>
    %1018 = arith.mulf %989, %922 : vector<1x128xf32>
    %1019 = arith.addf %948, %1018 : vector<1x128xf32>
    %1020 = arith.mulf %989, %920 : vector<1x128xf32>
    %1021 = arith.addf %918, %1020 : vector<1x128xf32>
    %1022 = arith.mulf %989, %989 : vector<1x128xf32>
    %cst_133 = arith.constant 1.000000e+00 : f32
    %1023 = vector.broadcast %cst_133 : f32 to vector<1x128xf32>
    %1024 = arith.subf %1023, %1022 : vector<1x128xf32>
    %1025 = arith.mulf %952, %1024 : vector<1x128xf32>
    %1026 = arith.mulf %991, %315 : vector<1x128xf32>
    %1027 = arith.addf %316, %1026 : vector<1x128xf32>
    %1028 = arith.mulf %993, %314 : vector<1x128xf32>
    %1029 = arith.addf %1027, %1028 : vector<1x128xf32>
    %1030 = arith.mulf %995, %313 : vector<1x128xf32>
    %1031 = arith.addf %1029, %1030 : vector<1x128xf32>
    %1032 = arith.mulf %997, %312 : vector<1x128xf32>
    %1033 = arith.addf %1031, %1032 : vector<1x128xf32>
    %1034 = arith.mulf %999, %311 : vector<1x128xf32>
    %1035 = arith.addf %1033, %1034 : vector<1x128xf32>
    %1036 = arith.mulf %1001, %310 : vector<1x128xf32>
    %1037 = arith.addf %1035, %1036 : vector<1x128xf32>
    %1038 = arith.mulf %1003, %309 : vector<1x128xf32>
    %1039 = arith.addf %1037, %1038 : vector<1x128xf32>
    %1040 = arith.mulf %1005, %308 : vector<1x128xf32>
    %1041 = arith.addf %1039, %1040 : vector<1x128xf32>
    %1042 = arith.mulf %1007, %307 : vector<1x128xf32>
    %1043 = arith.addf %1041, %1042 : vector<1x128xf32>
    %1044 = arith.mulf %1009, %306 : vector<1x128xf32>
    %1045 = arith.addf %1043, %1044 : vector<1x128xf32>
    %1046 = arith.mulf %1011, %305 : vector<1x128xf32>
    %1047 = arith.addf %1045, %1046 : vector<1x128xf32>
    %1048 = arith.mulf %1013, %304 : vector<1x128xf32>
    %1049 = arith.addf %1047, %1048 : vector<1x128xf32>
    %1050 = arith.mulf %1015, %303 : vector<1x128xf32>
    %1051 = arith.addf %1049, %1050 : vector<1x128xf32>
    %1052 = arith.mulf %1017, %302 : vector<1x128xf32>
    %1053 = arith.addf %1051, %1052 : vector<1x128xf32>
    %1054 = arith.mulf %1019, %301 : vector<1x128xf32>
    %1055 = arith.addf %1053, %1054 : vector<1x128xf32>
    %1056 = arith.mulf %1021, %300 : vector<1x128xf32>
    %1057 = arith.addf %1055, %1056 : vector<1x128xf32>
    %1058 = arith.mulf %989, %299 : vector<1x128xf32>
    %1059 = arith.addf %1057, %1058 : vector<1x128xf32>
    %cst_134 = arith.constant 0.000000e+00 : f32
    %1060 = vector.broadcast %cst_134 : f32 to vector<1x128xf32>
    %1061 = arith.subf %1060, %1059 : vector<1x128xf32>
    %cst_135 = arith.constant 9.99999996E-13 : f32
    %1062 = vector.broadcast %cst_135 : f32 to vector<1x128xf32>
    %1063 = arith.addf %1025, %1062 : vector<1x128xf32>
    %1064 = arith.divf %1061, %1063 : vector<1x128xf32>
    %1065 = arith.mulf %1064, %989 : vector<1x128xf32>
    %1066 = arith.addf %991, %1065 : vector<1x128xf32>
    %1067 = arith.mulf %1064, %1021 : vector<1x128xf32>
    %1068 = arith.addf %993, %1067 : vector<1x128xf32>
    %1069 = arith.mulf %1064, %1019 : vector<1x128xf32>
    %1070 = arith.addf %995, %1069 : vector<1x128xf32>
    %1071 = arith.mulf %1064, %1017 : vector<1x128xf32>
    %1072 = arith.addf %997, %1071 : vector<1x128xf32>
    %1073 = arith.mulf %1064, %1015 : vector<1x128xf32>
    %1074 = arith.addf %999, %1073 : vector<1x128xf32>
    %1075 = arith.mulf %1064, %1013 : vector<1x128xf32>
    %1076 = arith.addf %1001, %1075 : vector<1x128xf32>
    %1077 = arith.mulf %1064, %1011 : vector<1x128xf32>
    %1078 = arith.addf %1003, %1077 : vector<1x128xf32>
    %1079 = arith.mulf %1064, %1009 : vector<1x128xf32>
    %1080 = arith.addf %1005, %1079 : vector<1x128xf32>
    %1081 = arith.mulf %1064, %1007 : vector<1x128xf32>
    %1082 = arith.addf %1007, %1081 : vector<1x128xf32>
    %1083 = arith.mulf %1064, %1005 : vector<1x128xf32>
    %1084 = arith.addf %1009, %1083 : vector<1x128xf32>
    %1085 = arith.mulf %1064, %1003 : vector<1x128xf32>
    %1086 = arith.addf %1011, %1085 : vector<1x128xf32>
    %1087 = arith.mulf %1064, %1001 : vector<1x128xf32>
    %1088 = arith.addf %1013, %1087 : vector<1x128xf32>
    %1089 = arith.mulf %1064, %999 : vector<1x128xf32>
    %1090 = arith.addf %1015, %1089 : vector<1x128xf32>
    %1091 = arith.mulf %1064, %997 : vector<1x128xf32>
    %1092 = arith.addf %1017, %1091 : vector<1x128xf32>
    %1093 = arith.mulf %1064, %995 : vector<1x128xf32>
    %1094 = arith.addf %1019, %1093 : vector<1x128xf32>
    %1095 = arith.mulf %1064, %993 : vector<1x128xf32>
    %1096 = arith.addf %1021, %1095 : vector<1x128xf32>
    %1097 = arith.mulf %1064, %991 : vector<1x128xf32>
    %1098 = arith.addf %989, %1097 : vector<1x128xf32>
    %1099 = arith.mulf %1064, %1064 : vector<1x128xf32>
    %cst_136 = arith.constant 1.000000e+00 : f32
    %1100 = vector.broadcast %cst_136 : f32 to vector<1x128xf32>
    %1101 = arith.subf %1100, %1099 : vector<1x128xf32>
    %1102 = arith.mulf %1025, %1101 : vector<1x128xf32>
    %1103 = arith.mulf %1066, %316 : vector<1x128xf32>
    %1104 = arith.addf %317, %1103 : vector<1x128xf32>
    %1105 = arith.mulf %1068, %315 : vector<1x128xf32>
    %1106 = arith.addf %1104, %1105 : vector<1x128xf32>
    %1107 = arith.mulf %1070, %314 : vector<1x128xf32>
    %1108 = arith.addf %1106, %1107 : vector<1x128xf32>
    %1109 = arith.mulf %1072, %313 : vector<1x128xf32>
    %1110 = arith.addf %1108, %1109 : vector<1x128xf32>
    %1111 = arith.mulf %1074, %312 : vector<1x128xf32>
    %1112 = arith.addf %1110, %1111 : vector<1x128xf32>
    %1113 = arith.mulf %1076, %311 : vector<1x128xf32>
    %1114 = arith.addf %1112, %1113 : vector<1x128xf32>
    %1115 = arith.mulf %1078, %310 : vector<1x128xf32>
    %1116 = arith.addf %1114, %1115 : vector<1x128xf32>
    %1117 = arith.mulf %1080, %309 : vector<1x128xf32>
    %1118 = arith.addf %1116, %1117 : vector<1x128xf32>
    %1119 = arith.mulf %1082, %308 : vector<1x128xf32>
    %1120 = arith.addf %1118, %1119 : vector<1x128xf32>
    %1121 = arith.mulf %1084, %307 : vector<1x128xf32>
    %1122 = arith.addf %1120, %1121 : vector<1x128xf32>
    %1123 = arith.mulf %1086, %306 : vector<1x128xf32>
    %1124 = arith.addf %1122, %1123 : vector<1x128xf32>
    %1125 = arith.mulf %1088, %305 : vector<1x128xf32>
    %1126 = arith.addf %1124, %1125 : vector<1x128xf32>
    %1127 = arith.mulf %1090, %304 : vector<1x128xf32>
    %1128 = arith.addf %1126, %1127 : vector<1x128xf32>
    %1129 = arith.mulf %1092, %303 : vector<1x128xf32>
    %1130 = arith.addf %1128, %1129 : vector<1x128xf32>
    %1131 = arith.mulf %1094, %302 : vector<1x128xf32>
    %1132 = arith.addf %1130, %1131 : vector<1x128xf32>
    %1133 = arith.mulf %1096, %301 : vector<1x128xf32>
    %1134 = arith.addf %1132, %1133 : vector<1x128xf32>
    %1135 = arith.mulf %1098, %300 : vector<1x128xf32>
    %1136 = arith.addf %1134, %1135 : vector<1x128xf32>
    %1137 = arith.mulf %1064, %299 : vector<1x128xf32>
    %1138 = arith.addf %1136, %1137 : vector<1x128xf32>
    %cst_137 = arith.constant 0.000000e+00 : f32
    %1139 = vector.broadcast %cst_137 : f32 to vector<1x128xf32>
    %1140 = arith.subf %1139, %1138 : vector<1x128xf32>
    %cst_138 = arith.constant 9.99999996E-13 : f32
    %1141 = vector.broadcast %cst_138 : f32 to vector<1x128xf32>
    %1142 = arith.addf %1102, %1141 : vector<1x128xf32>
    %1143 = arith.divf %1140, %1142 : vector<1x128xf32>
    %1144 = arith.mulf %1143, %1064 : vector<1x128xf32>
    %1145 = arith.addf %1066, %1144 : vector<1x128xf32>
    %1146 = arith.mulf %1143, %1098 : vector<1x128xf32>
    %1147 = arith.addf %1068, %1146 : vector<1x128xf32>
    %1148 = arith.mulf %1143, %1096 : vector<1x128xf32>
    %1149 = arith.addf %1070, %1148 : vector<1x128xf32>
    %1150 = arith.mulf %1143, %1094 : vector<1x128xf32>
    %1151 = arith.addf %1072, %1150 : vector<1x128xf32>
    %1152 = arith.mulf %1143, %1092 : vector<1x128xf32>
    %1153 = arith.addf %1074, %1152 : vector<1x128xf32>
    %1154 = arith.mulf %1143, %1090 : vector<1x128xf32>
    %1155 = arith.addf %1076, %1154 : vector<1x128xf32>
    %1156 = arith.mulf %1143, %1088 : vector<1x128xf32>
    %1157 = arith.addf %1078, %1156 : vector<1x128xf32>
    %1158 = arith.mulf %1143, %1086 : vector<1x128xf32>
    %1159 = arith.addf %1080, %1158 : vector<1x128xf32>
    %1160 = arith.mulf %1143, %1084 : vector<1x128xf32>
    %1161 = arith.addf %1082, %1160 : vector<1x128xf32>
    %1162 = arith.mulf %1143, %1082 : vector<1x128xf32>
    %1163 = arith.addf %1084, %1162 : vector<1x128xf32>
    %1164 = arith.mulf %1143, %1080 : vector<1x128xf32>
    %1165 = arith.addf %1086, %1164 : vector<1x128xf32>
    %1166 = arith.mulf %1143, %1078 : vector<1x128xf32>
    %1167 = arith.addf %1088, %1166 : vector<1x128xf32>
    %1168 = arith.mulf %1143, %1076 : vector<1x128xf32>
    %1169 = arith.addf %1090, %1168 : vector<1x128xf32>
    %1170 = arith.mulf %1143, %1074 : vector<1x128xf32>
    %1171 = arith.addf %1092, %1170 : vector<1x128xf32>
    %1172 = arith.mulf %1143, %1072 : vector<1x128xf32>
    %1173 = arith.addf %1094, %1172 : vector<1x128xf32>
    %1174 = arith.mulf %1143, %1070 : vector<1x128xf32>
    %1175 = arith.addf %1096, %1174 : vector<1x128xf32>
    %1176 = arith.mulf %1143, %1068 : vector<1x128xf32>
    %1177 = arith.addf %1098, %1176 : vector<1x128xf32>
    %1178 = arith.mulf %1143, %1066 : vector<1x128xf32>
    %1179 = arith.addf %1064, %1178 : vector<1x128xf32>
    %1180 = arith.mulf %1143, %1143 : vector<1x128xf32>
    %cst_139 = arith.constant 1.000000e+00 : f32
    %1181 = vector.broadcast %cst_139 : f32 to vector<1x128xf32>
    %1182 = arith.subf %1181, %1180 : vector<1x128xf32>
    %1183 = arith.mulf %1102, %1182 : vector<1x128xf32>
    %1184 = arith.mulf %1145, %317 : vector<1x128xf32>
    %1185 = arith.addf %318, %1184 : vector<1x128xf32>
    %1186 = arith.mulf %1147, %316 : vector<1x128xf32>
    %1187 = arith.addf %1185, %1186 : vector<1x128xf32>
    %1188 = arith.mulf %1149, %315 : vector<1x128xf32>
    %1189 = arith.addf %1187, %1188 : vector<1x128xf32>
    %1190 = arith.mulf %1151, %314 : vector<1x128xf32>
    %1191 = arith.addf %1189, %1190 : vector<1x128xf32>
    %1192 = arith.mulf %1153, %313 : vector<1x128xf32>
    %1193 = arith.addf %1191, %1192 : vector<1x128xf32>
    %1194 = arith.mulf %1155, %312 : vector<1x128xf32>
    %1195 = arith.addf %1193, %1194 : vector<1x128xf32>
    %1196 = arith.mulf %1157, %311 : vector<1x128xf32>
    %1197 = arith.addf %1195, %1196 : vector<1x128xf32>
    %1198 = arith.mulf %1159, %310 : vector<1x128xf32>
    %1199 = arith.addf %1197, %1198 : vector<1x128xf32>
    %1200 = arith.mulf %1161, %309 : vector<1x128xf32>
    %1201 = arith.addf %1199, %1200 : vector<1x128xf32>
    %1202 = arith.mulf %1163, %308 : vector<1x128xf32>
    %1203 = arith.addf %1201, %1202 : vector<1x128xf32>
    %1204 = arith.mulf %1165, %307 : vector<1x128xf32>
    %1205 = arith.addf %1203, %1204 : vector<1x128xf32>
    %1206 = arith.mulf %1167, %306 : vector<1x128xf32>
    %1207 = arith.addf %1205, %1206 : vector<1x128xf32>
    %1208 = arith.mulf %1169, %305 : vector<1x128xf32>
    %1209 = arith.addf %1207, %1208 : vector<1x128xf32>
    %1210 = arith.mulf %1171, %304 : vector<1x128xf32>
    %1211 = arith.addf %1209, %1210 : vector<1x128xf32>
    %1212 = arith.mulf %1173, %303 : vector<1x128xf32>
    %1213 = arith.addf %1211, %1212 : vector<1x128xf32>
    %1214 = arith.mulf %1175, %302 : vector<1x128xf32>
    %1215 = arith.addf %1213, %1214 : vector<1x128xf32>
    %1216 = arith.mulf %1177, %301 : vector<1x128xf32>
    %1217 = arith.addf %1215, %1216 : vector<1x128xf32>
    %1218 = arith.mulf %1179, %300 : vector<1x128xf32>
    %1219 = arith.addf %1217, %1218 : vector<1x128xf32>
    %1220 = arith.mulf %1143, %299 : vector<1x128xf32>
    %1221 = arith.addf %1219, %1220 : vector<1x128xf32>
    %cst_140 = arith.constant 0.000000e+00 : f32
    %1222 = vector.broadcast %cst_140 : f32 to vector<1x128xf32>
    %1223 = arith.subf %1222, %1221 : vector<1x128xf32>
    %cst_141 = arith.constant 9.99999996E-13 : f32
    %1224 = vector.broadcast %cst_141 : f32 to vector<1x128xf32>
    %1225 = arith.addf %1183, %1224 : vector<1x128xf32>
    %1226 = arith.divf %1223, %1225 : vector<1x128xf32>
    %1227 = arith.mulf %1226, %1143 : vector<1x128xf32>
    %1228 = arith.addf %1145, %1227 : vector<1x128xf32>
    %1229 = arith.mulf %1226, %1179 : vector<1x128xf32>
    %1230 = arith.addf %1147, %1229 : vector<1x128xf32>
    %1231 = arith.mulf %1226, %1177 : vector<1x128xf32>
    %1232 = arith.addf %1149, %1231 : vector<1x128xf32>
    %1233 = arith.mulf %1226, %1175 : vector<1x128xf32>
    %1234 = arith.addf %1151, %1233 : vector<1x128xf32>
    %1235 = arith.mulf %1226, %1173 : vector<1x128xf32>
    %1236 = arith.addf %1153, %1235 : vector<1x128xf32>
    %1237 = arith.mulf %1226, %1171 : vector<1x128xf32>
    %1238 = arith.addf %1155, %1237 : vector<1x128xf32>
    %1239 = arith.mulf %1226, %1169 : vector<1x128xf32>
    %1240 = arith.addf %1157, %1239 : vector<1x128xf32>
    %1241 = arith.mulf %1226, %1167 : vector<1x128xf32>
    %1242 = arith.addf %1159, %1241 : vector<1x128xf32>
    %1243 = arith.mulf %1226, %1165 : vector<1x128xf32>
    %1244 = arith.addf %1161, %1243 : vector<1x128xf32>
    %1245 = arith.mulf %1226, %1163 : vector<1x128xf32>
    %1246 = arith.addf %1163, %1245 : vector<1x128xf32>
    %1247 = arith.mulf %1226, %1161 : vector<1x128xf32>
    %1248 = arith.addf %1165, %1247 : vector<1x128xf32>
    %1249 = arith.mulf %1226, %1159 : vector<1x128xf32>
    %1250 = arith.addf %1167, %1249 : vector<1x128xf32>
    %1251 = arith.mulf %1226, %1157 : vector<1x128xf32>
    %1252 = arith.addf %1169, %1251 : vector<1x128xf32>
    %1253 = arith.mulf %1226, %1155 : vector<1x128xf32>
    %1254 = arith.addf %1171, %1253 : vector<1x128xf32>
    %1255 = arith.mulf %1226, %1153 : vector<1x128xf32>
    %1256 = arith.addf %1173, %1255 : vector<1x128xf32>
    %1257 = arith.mulf %1226, %1151 : vector<1x128xf32>
    %1258 = arith.addf %1175, %1257 : vector<1x128xf32>
    %1259 = arith.mulf %1226, %1149 : vector<1x128xf32>
    %1260 = arith.addf %1177, %1259 : vector<1x128xf32>
    %1261 = arith.mulf %1226, %1147 : vector<1x128xf32>
    %1262 = arith.addf %1179, %1261 : vector<1x128xf32>
    %1263 = arith.mulf %1226, %1145 : vector<1x128xf32>
    %1264 = arith.addf %1143, %1263 : vector<1x128xf32>
    %1265 = arith.mulf %1226, %1226 : vector<1x128xf32>
    %cst_142 = arith.constant 1.000000e+00 : f32
    %1266 = vector.broadcast %cst_142 : f32 to vector<1x128xf32>
    %1267 = arith.subf %1266, %1265 : vector<1x128xf32>
    %1268 = arith.mulf %1183, %1267 : vector<1x128xf32>
    %1269 = arith.mulf %1228, %318 : vector<1x128xf32>
    %1270 = arith.addf %319, %1269 : vector<1x128xf32>
    %1271 = arith.mulf %1230, %317 : vector<1x128xf32>
    %1272 = arith.addf %1270, %1271 : vector<1x128xf32>
    %1273 = arith.mulf %1232, %316 : vector<1x128xf32>
    %1274 = arith.addf %1272, %1273 : vector<1x128xf32>
    %1275 = arith.mulf %1234, %315 : vector<1x128xf32>
    %1276 = arith.addf %1274, %1275 : vector<1x128xf32>
    %1277 = arith.mulf %1236, %314 : vector<1x128xf32>
    %1278 = arith.addf %1276, %1277 : vector<1x128xf32>
    %1279 = arith.mulf %1238, %313 : vector<1x128xf32>
    %1280 = arith.addf %1278, %1279 : vector<1x128xf32>
    %1281 = arith.mulf %1240, %312 : vector<1x128xf32>
    %1282 = arith.addf %1280, %1281 : vector<1x128xf32>
    %1283 = arith.mulf %1242, %311 : vector<1x128xf32>
    %1284 = arith.addf %1282, %1283 : vector<1x128xf32>
    %1285 = arith.mulf %1244, %310 : vector<1x128xf32>
    %1286 = arith.addf %1284, %1285 : vector<1x128xf32>
    %1287 = arith.mulf %1246, %309 : vector<1x128xf32>
    %1288 = arith.addf %1286, %1287 : vector<1x128xf32>
    %1289 = arith.mulf %1248, %308 : vector<1x128xf32>
    %1290 = arith.addf %1288, %1289 : vector<1x128xf32>
    %1291 = arith.mulf %1250, %307 : vector<1x128xf32>
    %1292 = arith.addf %1290, %1291 : vector<1x128xf32>
    %1293 = arith.mulf %1252, %306 : vector<1x128xf32>
    %1294 = arith.addf %1292, %1293 : vector<1x128xf32>
    %1295 = arith.mulf %1254, %305 : vector<1x128xf32>
    %1296 = arith.addf %1294, %1295 : vector<1x128xf32>
    %1297 = arith.mulf %1256, %304 : vector<1x128xf32>
    %1298 = arith.addf %1296, %1297 : vector<1x128xf32>
    %1299 = arith.mulf %1258, %303 : vector<1x128xf32>
    %1300 = arith.addf %1298, %1299 : vector<1x128xf32>
    %1301 = arith.mulf %1260, %302 : vector<1x128xf32>
    %1302 = arith.addf %1300, %1301 : vector<1x128xf32>
    %1303 = arith.mulf %1262, %301 : vector<1x128xf32>
    %1304 = arith.addf %1302, %1303 : vector<1x128xf32>
    %1305 = arith.mulf %1264, %300 : vector<1x128xf32>
    %1306 = arith.addf %1304, %1305 : vector<1x128xf32>
    %1307 = arith.mulf %1226, %299 : vector<1x128xf32>
    %1308 = arith.addf %1306, %1307 : vector<1x128xf32>
    %cst_143 = arith.constant 0.000000e+00 : f32
    %1309 = vector.broadcast %cst_143 : f32 to vector<1x128xf32>
    %1310 = arith.subf %1309, %1308 : vector<1x128xf32>
    %cst_144 = arith.constant 9.99999996E-13 : f32
    %1311 = vector.broadcast %cst_144 : f32 to vector<1x128xf32>
    %1312 = arith.addf %1268, %1311 : vector<1x128xf32>
    %1313 = arith.divf %1310, %1312 : vector<1x128xf32>
    %1314 = arith.mulf %1313, %1226 : vector<1x128xf32>
    %1315 = arith.addf %1228, %1314 : vector<1x128xf32>
    %1316 = arith.mulf %1313, %1264 : vector<1x128xf32>
    %1317 = arith.addf %1230, %1316 : vector<1x128xf32>
    %1318 = arith.mulf %1313, %1262 : vector<1x128xf32>
    %1319 = arith.addf %1232, %1318 : vector<1x128xf32>
    %1320 = arith.mulf %1313, %1260 : vector<1x128xf32>
    %1321 = arith.addf %1234, %1320 : vector<1x128xf32>
    %1322 = arith.mulf %1313, %1258 : vector<1x128xf32>
    %1323 = arith.addf %1236, %1322 : vector<1x128xf32>
    %1324 = arith.mulf %1313, %1256 : vector<1x128xf32>
    %1325 = arith.addf %1238, %1324 : vector<1x128xf32>
    %1326 = arith.mulf %1313, %1254 : vector<1x128xf32>
    %1327 = arith.addf %1240, %1326 : vector<1x128xf32>
    %1328 = arith.mulf %1313, %1252 : vector<1x128xf32>
    %1329 = arith.addf %1242, %1328 : vector<1x128xf32>
    %1330 = arith.mulf %1313, %1250 : vector<1x128xf32>
    %1331 = arith.addf %1244, %1330 : vector<1x128xf32>
    %1332 = arith.mulf %1313, %1248 : vector<1x128xf32>
    %1333 = arith.addf %1246, %1332 : vector<1x128xf32>
    %1334 = arith.mulf %1313, %1246 : vector<1x128xf32>
    %1335 = arith.addf %1248, %1334 : vector<1x128xf32>
    %1336 = arith.mulf %1313, %1244 : vector<1x128xf32>
    %1337 = arith.addf %1250, %1336 : vector<1x128xf32>
    %1338 = arith.mulf %1313, %1242 : vector<1x128xf32>
    %1339 = arith.addf %1252, %1338 : vector<1x128xf32>
    %1340 = arith.mulf %1313, %1240 : vector<1x128xf32>
    %1341 = arith.addf %1254, %1340 : vector<1x128xf32>
    %1342 = arith.mulf %1313, %1238 : vector<1x128xf32>
    %1343 = arith.addf %1256, %1342 : vector<1x128xf32>
    %1344 = arith.mulf %1313, %1236 : vector<1x128xf32>
    %1345 = arith.addf %1258, %1344 : vector<1x128xf32>
    %1346 = arith.mulf %1313, %1234 : vector<1x128xf32>
    %1347 = arith.addf %1260, %1346 : vector<1x128xf32>
    %1348 = arith.mulf %1313, %1232 : vector<1x128xf32>
    %1349 = arith.addf %1262, %1348 : vector<1x128xf32>
    %1350 = arith.mulf %1313, %1230 : vector<1x128xf32>
    %1351 = arith.addf %1264, %1350 : vector<1x128xf32>
    %1352 = arith.mulf %1313, %1228 : vector<1x128xf32>
    %1353 = arith.addf %1226, %1352 : vector<1x128xf32>
    %1354 = arith.mulf %1313, %1313 : vector<1x128xf32>
    %cst_145 = arith.constant 1.000000e+00 : f32
    %1355 = vector.broadcast %cst_145 : f32 to vector<1x128xf32>
    %1356 = arith.subf %1355, %1354 : vector<1x128xf32>
    %1357 = arith.mulf %1268, %1356 : vector<1x128xf32>
    %1358 = arith.mulf %1315, %319 : vector<1x128xf32>
    %1359 = arith.addf %320, %1358 : vector<1x128xf32>
    %1360 = arith.mulf %1317, %318 : vector<1x128xf32>
    %1361 = arith.addf %1359, %1360 : vector<1x128xf32>
    %1362 = arith.mulf %1319, %317 : vector<1x128xf32>
    %1363 = arith.addf %1361, %1362 : vector<1x128xf32>
    %1364 = arith.mulf %1321, %316 : vector<1x128xf32>
    %1365 = arith.addf %1363, %1364 : vector<1x128xf32>
    %1366 = arith.mulf %1323, %315 : vector<1x128xf32>
    %1367 = arith.addf %1365, %1366 : vector<1x128xf32>
    %1368 = arith.mulf %1325, %314 : vector<1x128xf32>
    %1369 = arith.addf %1367, %1368 : vector<1x128xf32>
    %1370 = arith.mulf %1327, %313 : vector<1x128xf32>
    %1371 = arith.addf %1369, %1370 : vector<1x128xf32>
    %1372 = arith.mulf %1329, %312 : vector<1x128xf32>
    %1373 = arith.addf %1371, %1372 : vector<1x128xf32>
    %1374 = arith.mulf %1331, %311 : vector<1x128xf32>
    %1375 = arith.addf %1373, %1374 : vector<1x128xf32>
    %1376 = arith.mulf %1333, %310 : vector<1x128xf32>
    %1377 = arith.addf %1375, %1376 : vector<1x128xf32>
    %1378 = arith.mulf %1335, %309 : vector<1x128xf32>
    %1379 = arith.addf %1377, %1378 : vector<1x128xf32>
    %1380 = arith.mulf %1337, %308 : vector<1x128xf32>
    %1381 = arith.addf %1379, %1380 : vector<1x128xf32>
    %1382 = arith.mulf %1339, %307 : vector<1x128xf32>
    %1383 = arith.addf %1381, %1382 : vector<1x128xf32>
    %1384 = arith.mulf %1341, %306 : vector<1x128xf32>
    %1385 = arith.addf %1383, %1384 : vector<1x128xf32>
    %1386 = arith.mulf %1343, %305 : vector<1x128xf32>
    %1387 = arith.addf %1385, %1386 : vector<1x128xf32>
    %1388 = arith.mulf %1345, %304 : vector<1x128xf32>
    %1389 = arith.addf %1387, %1388 : vector<1x128xf32>
    %1390 = arith.mulf %1347, %303 : vector<1x128xf32>
    %1391 = arith.addf %1389, %1390 : vector<1x128xf32>
    %1392 = arith.mulf %1349, %302 : vector<1x128xf32>
    %1393 = arith.addf %1391, %1392 : vector<1x128xf32>
    %1394 = arith.mulf %1351, %301 : vector<1x128xf32>
    %1395 = arith.addf %1393, %1394 : vector<1x128xf32>
    %1396 = arith.mulf %1353, %300 : vector<1x128xf32>
    %1397 = arith.addf %1395, %1396 : vector<1x128xf32>
    %1398 = arith.mulf %1313, %299 : vector<1x128xf32>
    %1399 = arith.addf %1397, %1398 : vector<1x128xf32>
    %cst_146 = arith.constant 0.000000e+00 : f32
    %1400 = vector.broadcast %cst_146 : f32 to vector<1x128xf32>
    %1401 = arith.subf %1400, %1399 : vector<1x128xf32>
    %cst_147 = arith.constant 9.99999996E-13 : f32
    %1402 = vector.broadcast %cst_147 : f32 to vector<1x128xf32>
    %1403 = arith.addf %1357, %1402 : vector<1x128xf32>
    %1404 = arith.divf %1401, %1403 : vector<1x128xf32>
    %1405 = arith.mulf %1404, %1313 : vector<1x128xf32>
    %1406 = arith.addf %1315, %1405 : vector<1x128xf32>
    %1407 = arith.mulf %1404, %1353 : vector<1x128xf32>
    %1408 = arith.addf %1317, %1407 : vector<1x128xf32>
    %1409 = arith.mulf %1404, %1351 : vector<1x128xf32>
    %1410 = arith.addf %1319, %1409 : vector<1x128xf32>
    %1411 = arith.mulf %1404, %1349 : vector<1x128xf32>
    %1412 = arith.addf %1321, %1411 : vector<1x128xf32>
    %1413 = arith.mulf %1404, %1347 : vector<1x128xf32>
    %1414 = arith.addf %1323, %1413 : vector<1x128xf32>
    %1415 = arith.mulf %1404, %1345 : vector<1x128xf32>
    %1416 = arith.addf %1325, %1415 : vector<1x128xf32>
    %1417 = arith.mulf %1404, %1343 : vector<1x128xf32>
    %1418 = arith.addf %1327, %1417 : vector<1x128xf32>
    %1419 = arith.mulf %1404, %1341 : vector<1x128xf32>
    %1420 = arith.addf %1329, %1419 : vector<1x128xf32>
    %1421 = arith.mulf %1404, %1339 : vector<1x128xf32>
    %1422 = arith.addf %1331, %1421 : vector<1x128xf32>
    %1423 = arith.mulf %1404, %1337 : vector<1x128xf32>
    %1424 = arith.addf %1333, %1423 : vector<1x128xf32>
    %1425 = arith.mulf %1404, %1335 : vector<1x128xf32>
    %1426 = arith.addf %1335, %1425 : vector<1x128xf32>
    %1427 = arith.mulf %1404, %1333 : vector<1x128xf32>
    %1428 = arith.addf %1337, %1427 : vector<1x128xf32>
    %1429 = arith.mulf %1404, %1331 : vector<1x128xf32>
    %1430 = arith.addf %1339, %1429 : vector<1x128xf32>
    %1431 = arith.mulf %1404, %1329 : vector<1x128xf32>
    %1432 = arith.addf %1341, %1431 : vector<1x128xf32>
    %1433 = arith.mulf %1404, %1327 : vector<1x128xf32>
    %1434 = arith.addf %1343, %1433 : vector<1x128xf32>
    %1435 = arith.mulf %1404, %1325 : vector<1x128xf32>
    %1436 = arith.addf %1345, %1435 : vector<1x128xf32>
    %1437 = arith.mulf %1404, %1323 : vector<1x128xf32>
    %1438 = arith.addf %1347, %1437 : vector<1x128xf32>
    %1439 = arith.mulf %1404, %1321 : vector<1x128xf32>
    %1440 = arith.addf %1349, %1439 : vector<1x128xf32>
    %1441 = arith.mulf %1404, %1319 : vector<1x128xf32>
    %1442 = arith.addf %1351, %1441 : vector<1x128xf32>
    %1443 = arith.mulf %1404, %1317 : vector<1x128xf32>
    %1444 = arith.addf %1353, %1443 : vector<1x128xf32>
    %1445 = arith.mulf %1404, %1315 : vector<1x128xf32>
    %1446 = arith.addf %1313, %1445 : vector<1x128xf32>
    %1447 = arith.mulf %1404, %1404 : vector<1x128xf32>
    %cst_148 = arith.constant 1.000000e+00 : f32
    %1448 = vector.broadcast %cst_148 : f32 to vector<1x128xf32>
    %1449 = arith.subf %1448, %1447 : vector<1x128xf32>
    %1450 = arith.mulf %1357, %1449 : vector<1x128xf32>
    %1451 = arith.mulf %1406, %320 : vector<1x128xf32>
    %1452 = arith.addf %321, %1451 : vector<1x128xf32>
    %1453 = arith.mulf %1408, %319 : vector<1x128xf32>
    %1454 = arith.addf %1452, %1453 : vector<1x128xf32>
    %1455 = arith.mulf %1410, %318 : vector<1x128xf32>
    %1456 = arith.addf %1454, %1455 : vector<1x128xf32>
    %1457 = arith.mulf %1412, %317 : vector<1x128xf32>
    %1458 = arith.addf %1456, %1457 : vector<1x128xf32>
    %1459 = arith.mulf %1414, %316 : vector<1x128xf32>
    %1460 = arith.addf %1458, %1459 : vector<1x128xf32>
    %1461 = arith.mulf %1416, %315 : vector<1x128xf32>
    %1462 = arith.addf %1460, %1461 : vector<1x128xf32>
    %1463 = arith.mulf %1418, %314 : vector<1x128xf32>
    %1464 = arith.addf %1462, %1463 : vector<1x128xf32>
    %1465 = arith.mulf %1420, %313 : vector<1x128xf32>
    %1466 = arith.addf %1464, %1465 : vector<1x128xf32>
    %1467 = arith.mulf %1422, %312 : vector<1x128xf32>
    %1468 = arith.addf %1466, %1467 : vector<1x128xf32>
    %1469 = arith.mulf %1424, %311 : vector<1x128xf32>
    %1470 = arith.addf %1468, %1469 : vector<1x128xf32>
    %1471 = arith.mulf %1426, %310 : vector<1x128xf32>
    %1472 = arith.addf %1470, %1471 : vector<1x128xf32>
    %1473 = arith.mulf %1428, %309 : vector<1x128xf32>
    %1474 = arith.addf %1472, %1473 : vector<1x128xf32>
    %1475 = arith.mulf %1430, %308 : vector<1x128xf32>
    %1476 = arith.addf %1474, %1475 : vector<1x128xf32>
    %1477 = arith.mulf %1432, %307 : vector<1x128xf32>
    %1478 = arith.addf %1476, %1477 : vector<1x128xf32>
    %1479 = arith.mulf %1434, %306 : vector<1x128xf32>
    %1480 = arith.addf %1478, %1479 : vector<1x128xf32>
    %1481 = arith.mulf %1436, %305 : vector<1x128xf32>
    %1482 = arith.addf %1480, %1481 : vector<1x128xf32>
    %1483 = arith.mulf %1438, %304 : vector<1x128xf32>
    %1484 = arith.addf %1482, %1483 : vector<1x128xf32>
    %1485 = arith.mulf %1440, %303 : vector<1x128xf32>
    %1486 = arith.addf %1484, %1485 : vector<1x128xf32>
    %1487 = arith.mulf %1442, %302 : vector<1x128xf32>
    %1488 = arith.addf %1486, %1487 : vector<1x128xf32>
    %1489 = arith.mulf %1444, %301 : vector<1x128xf32>
    %1490 = arith.addf %1488, %1489 : vector<1x128xf32>
    %1491 = arith.mulf %1446, %300 : vector<1x128xf32>
    %1492 = arith.addf %1490, %1491 : vector<1x128xf32>
    %1493 = arith.mulf %1404, %299 : vector<1x128xf32>
    %1494 = arith.addf %1492, %1493 : vector<1x128xf32>
    %cst_149 = arith.constant 0.000000e+00 : f32
    %1495 = vector.broadcast %cst_149 : f32 to vector<1x128xf32>
    %1496 = arith.subf %1495, %1494 : vector<1x128xf32>
    %cst_150 = arith.constant 9.99999996E-13 : f32
    %1497 = vector.broadcast %cst_150 : f32 to vector<1x128xf32>
    %1498 = arith.addf %1450, %1497 : vector<1x128xf32>
    %1499 = arith.divf %1496, %1498 : vector<1x128xf32>
    %1500 = arith.mulf %1499, %1404 : vector<1x128xf32>
    %1501 = arith.addf %1406, %1500 : vector<1x128xf32>
    %1502 = arith.mulf %1499, %1446 : vector<1x128xf32>
    %1503 = arith.addf %1408, %1502 : vector<1x128xf32>
    %1504 = arith.mulf %1499, %1444 : vector<1x128xf32>
    %1505 = arith.addf %1410, %1504 : vector<1x128xf32>
    %1506 = arith.mulf %1499, %1442 : vector<1x128xf32>
    %1507 = arith.addf %1412, %1506 : vector<1x128xf32>
    %1508 = arith.mulf %1499, %1440 : vector<1x128xf32>
    %1509 = arith.addf %1414, %1508 : vector<1x128xf32>
    %1510 = arith.mulf %1499, %1438 : vector<1x128xf32>
    %1511 = arith.addf %1416, %1510 : vector<1x128xf32>
    %1512 = arith.mulf %1499, %1436 : vector<1x128xf32>
    %1513 = arith.addf %1418, %1512 : vector<1x128xf32>
    %1514 = arith.mulf %1499, %1434 : vector<1x128xf32>
    %1515 = arith.addf %1420, %1514 : vector<1x128xf32>
    %1516 = arith.mulf %1499, %1432 : vector<1x128xf32>
    %1517 = arith.addf %1422, %1516 : vector<1x128xf32>
    %1518 = arith.mulf %1499, %1430 : vector<1x128xf32>
    %1519 = arith.addf %1424, %1518 : vector<1x128xf32>
    %1520 = arith.mulf %1499, %1428 : vector<1x128xf32>
    %1521 = arith.addf %1426, %1520 : vector<1x128xf32>
    %1522 = arith.mulf %1499, %1426 : vector<1x128xf32>
    %1523 = arith.addf %1428, %1522 : vector<1x128xf32>
    %1524 = arith.mulf %1499, %1424 : vector<1x128xf32>
    %1525 = arith.addf %1430, %1524 : vector<1x128xf32>
    %1526 = arith.mulf %1499, %1422 : vector<1x128xf32>
    %1527 = arith.addf %1432, %1526 : vector<1x128xf32>
    %1528 = arith.mulf %1499, %1420 : vector<1x128xf32>
    %1529 = arith.addf %1434, %1528 : vector<1x128xf32>
    %1530 = arith.mulf %1499, %1418 : vector<1x128xf32>
    %1531 = arith.addf %1436, %1530 : vector<1x128xf32>
    %1532 = arith.mulf %1499, %1416 : vector<1x128xf32>
    %1533 = arith.addf %1438, %1532 : vector<1x128xf32>
    %1534 = arith.mulf %1499, %1414 : vector<1x128xf32>
    %1535 = arith.addf %1440, %1534 : vector<1x128xf32>
    %1536 = arith.mulf %1499, %1412 : vector<1x128xf32>
    %1537 = arith.addf %1442, %1536 : vector<1x128xf32>
    %1538 = arith.mulf %1499, %1410 : vector<1x128xf32>
    %1539 = arith.addf %1444, %1538 : vector<1x128xf32>
    %1540 = arith.mulf %1499, %1408 : vector<1x128xf32>
    %1541 = arith.addf %1446, %1540 : vector<1x128xf32>
    %1542 = arith.mulf %1499, %1406 : vector<1x128xf32>
    %1543 = arith.addf %1404, %1542 : vector<1x128xf32>
    %1544 = arith.mulf %1499, %1499 : vector<1x128xf32>
    %cst_151 = arith.constant 1.000000e+00 : f32
    %1545 = vector.broadcast %cst_151 : f32 to vector<1x128xf32>
    %1546 = arith.subf %1545, %1544 : vector<1x128xf32>
    %1547 = arith.mulf %1450, %1546 : vector<1x128xf32>
    %1548 = arith.mulf %1501, %321 : vector<1x128xf32>
    %1549 = arith.addf %322, %1548 : vector<1x128xf32>
    %1550 = arith.mulf %1503, %320 : vector<1x128xf32>
    %1551 = arith.addf %1549, %1550 : vector<1x128xf32>
    %1552 = arith.mulf %1505, %319 : vector<1x128xf32>
    %1553 = arith.addf %1551, %1552 : vector<1x128xf32>
    %1554 = arith.mulf %1507, %318 : vector<1x128xf32>
    %1555 = arith.addf %1553, %1554 : vector<1x128xf32>
    %1556 = arith.mulf %1509, %317 : vector<1x128xf32>
    %1557 = arith.addf %1555, %1556 : vector<1x128xf32>
    %1558 = arith.mulf %1511, %316 : vector<1x128xf32>
    %1559 = arith.addf %1557, %1558 : vector<1x128xf32>
    %1560 = arith.mulf %1513, %315 : vector<1x128xf32>
    %1561 = arith.addf %1559, %1560 : vector<1x128xf32>
    %1562 = arith.mulf %1515, %314 : vector<1x128xf32>
    %1563 = arith.addf %1561, %1562 : vector<1x128xf32>
    %1564 = arith.mulf %1517, %313 : vector<1x128xf32>
    %1565 = arith.addf %1563, %1564 : vector<1x128xf32>
    %1566 = arith.mulf %1519, %312 : vector<1x128xf32>
    %1567 = arith.addf %1565, %1566 : vector<1x128xf32>
    %1568 = arith.mulf %1521, %311 : vector<1x128xf32>
    %1569 = arith.addf %1567, %1568 : vector<1x128xf32>
    %1570 = arith.mulf %1523, %310 : vector<1x128xf32>
    %1571 = arith.addf %1569, %1570 : vector<1x128xf32>
    %1572 = arith.mulf %1525, %309 : vector<1x128xf32>
    %1573 = arith.addf %1571, %1572 : vector<1x128xf32>
    %1574 = arith.mulf %1527, %308 : vector<1x128xf32>
    %1575 = arith.addf %1573, %1574 : vector<1x128xf32>
    %1576 = arith.mulf %1529, %307 : vector<1x128xf32>
    %1577 = arith.addf %1575, %1576 : vector<1x128xf32>
    %1578 = arith.mulf %1531, %306 : vector<1x128xf32>
    %1579 = arith.addf %1577, %1578 : vector<1x128xf32>
    %1580 = arith.mulf %1533, %305 : vector<1x128xf32>
    %1581 = arith.addf %1579, %1580 : vector<1x128xf32>
    %1582 = arith.mulf %1535, %304 : vector<1x128xf32>
    %1583 = arith.addf %1581, %1582 : vector<1x128xf32>
    %1584 = arith.mulf %1537, %303 : vector<1x128xf32>
    %1585 = arith.addf %1583, %1584 : vector<1x128xf32>
    %1586 = arith.mulf %1539, %302 : vector<1x128xf32>
    %1587 = arith.addf %1585, %1586 : vector<1x128xf32>
    %1588 = arith.mulf %1541, %301 : vector<1x128xf32>
    %1589 = arith.addf %1587, %1588 : vector<1x128xf32>
    %1590 = arith.mulf %1543, %300 : vector<1x128xf32>
    %1591 = arith.addf %1589, %1590 : vector<1x128xf32>
    %1592 = arith.mulf %1499, %299 : vector<1x128xf32>
    %1593 = arith.addf %1591, %1592 : vector<1x128xf32>
    %cst_152 = arith.constant 0.000000e+00 : f32
    %1594 = vector.broadcast %cst_152 : f32 to vector<1x128xf32>
    %1595 = arith.subf %1594, %1593 : vector<1x128xf32>
    %cst_153 = arith.constant 9.99999996E-13 : f32
    %1596 = vector.broadcast %cst_153 : f32 to vector<1x128xf32>
    %1597 = arith.addf %1547, %1596 : vector<1x128xf32>
    %1598 = arith.divf %1595, %1597 : vector<1x128xf32>
    %1599 = arith.mulf %1598, %1499 : vector<1x128xf32>
    %1600 = arith.addf %1501, %1599 : vector<1x128xf32>
    %1601 = arith.mulf %1598, %1543 : vector<1x128xf32>
    %1602 = arith.addf %1503, %1601 : vector<1x128xf32>
    %1603 = arith.mulf %1598, %1541 : vector<1x128xf32>
    %1604 = arith.addf %1505, %1603 : vector<1x128xf32>
    %1605 = arith.mulf %1598, %1539 : vector<1x128xf32>
    %1606 = arith.addf %1507, %1605 : vector<1x128xf32>
    %1607 = arith.mulf %1598, %1537 : vector<1x128xf32>
    %1608 = arith.addf %1509, %1607 : vector<1x128xf32>
    %1609 = arith.mulf %1598, %1535 : vector<1x128xf32>
    %1610 = arith.addf %1511, %1609 : vector<1x128xf32>
    %1611 = arith.mulf %1598, %1533 : vector<1x128xf32>
    %1612 = arith.addf %1513, %1611 : vector<1x128xf32>
    %1613 = arith.mulf %1598, %1531 : vector<1x128xf32>
    %1614 = arith.addf %1515, %1613 : vector<1x128xf32>
    %1615 = arith.mulf %1598, %1529 : vector<1x128xf32>
    %1616 = arith.addf %1517, %1615 : vector<1x128xf32>
    %1617 = arith.mulf %1598, %1527 : vector<1x128xf32>
    %1618 = arith.addf %1519, %1617 : vector<1x128xf32>
    %1619 = arith.mulf %1598, %1525 : vector<1x128xf32>
    %1620 = arith.addf %1521, %1619 : vector<1x128xf32>
    %1621 = arith.mulf %1598, %1523 : vector<1x128xf32>
    %1622 = arith.addf %1523, %1621 : vector<1x128xf32>
    %1623 = arith.mulf %1598, %1521 : vector<1x128xf32>
    %1624 = arith.addf %1525, %1623 : vector<1x128xf32>
    %1625 = arith.mulf %1598, %1519 : vector<1x128xf32>
    %1626 = arith.addf %1527, %1625 : vector<1x128xf32>
    %1627 = arith.mulf %1598, %1517 : vector<1x128xf32>
    %1628 = arith.addf %1529, %1627 : vector<1x128xf32>
    %1629 = arith.mulf %1598, %1515 : vector<1x128xf32>
    %1630 = arith.addf %1531, %1629 : vector<1x128xf32>
    %1631 = arith.mulf %1598, %1513 : vector<1x128xf32>
    %1632 = arith.addf %1533, %1631 : vector<1x128xf32>
    %1633 = arith.mulf %1598, %1511 : vector<1x128xf32>
    %1634 = arith.addf %1535, %1633 : vector<1x128xf32>
    %1635 = arith.mulf %1598, %1509 : vector<1x128xf32>
    %1636 = arith.addf %1537, %1635 : vector<1x128xf32>
    %1637 = arith.mulf %1598, %1507 : vector<1x128xf32>
    %1638 = arith.addf %1539, %1637 : vector<1x128xf32>
    %1639 = arith.mulf %1598, %1505 : vector<1x128xf32>
    %1640 = arith.addf %1541, %1639 : vector<1x128xf32>
    %1641 = arith.mulf %1598, %1503 : vector<1x128xf32>
    %1642 = arith.addf %1543, %1641 : vector<1x128xf32>
    %1643 = arith.mulf %1598, %1501 : vector<1x128xf32>
    %1644 = arith.addf %1499, %1643 : vector<1x128xf32>
    %1645 = arith.mulf %1598, %1598 : vector<1x128xf32>
    %cst_154 = arith.constant 1.000000e+00 : f32
    %1646 = vector.broadcast %cst_154 : f32 to vector<1x128xf32>
    %1647 = arith.subf %1646, %1645 : vector<1x128xf32>
    %1648 = arith.mulf %1547, %1647 : vector<1x128xf32>
    %1649 = arith.mulf %1600, %322 : vector<1x128xf32>
    %1650 = arith.addf %323, %1649 : vector<1x128xf32>
    %1651 = arith.mulf %1602, %321 : vector<1x128xf32>
    %1652 = arith.addf %1650, %1651 : vector<1x128xf32>
    %1653 = arith.mulf %1604, %320 : vector<1x128xf32>
    %1654 = arith.addf %1652, %1653 : vector<1x128xf32>
    %1655 = arith.mulf %1606, %319 : vector<1x128xf32>
    %1656 = arith.addf %1654, %1655 : vector<1x128xf32>
    %1657 = arith.mulf %1608, %318 : vector<1x128xf32>
    %1658 = arith.addf %1656, %1657 : vector<1x128xf32>
    %1659 = arith.mulf %1610, %317 : vector<1x128xf32>
    %1660 = arith.addf %1658, %1659 : vector<1x128xf32>
    %1661 = arith.mulf %1612, %316 : vector<1x128xf32>
    %1662 = arith.addf %1660, %1661 : vector<1x128xf32>
    %1663 = arith.mulf %1614, %315 : vector<1x128xf32>
    %1664 = arith.addf %1662, %1663 : vector<1x128xf32>
    %1665 = arith.mulf %1616, %314 : vector<1x128xf32>
    %1666 = arith.addf %1664, %1665 : vector<1x128xf32>
    %1667 = arith.mulf %1618, %313 : vector<1x128xf32>
    %1668 = arith.addf %1666, %1667 : vector<1x128xf32>
    %1669 = arith.mulf %1620, %312 : vector<1x128xf32>
    %1670 = arith.addf %1668, %1669 : vector<1x128xf32>
    %1671 = arith.mulf %1622, %311 : vector<1x128xf32>
    %1672 = arith.addf %1670, %1671 : vector<1x128xf32>
    %1673 = arith.mulf %1624, %310 : vector<1x128xf32>
    %1674 = arith.addf %1672, %1673 : vector<1x128xf32>
    %1675 = arith.mulf %1626, %309 : vector<1x128xf32>
    %1676 = arith.addf %1674, %1675 : vector<1x128xf32>
    %1677 = arith.mulf %1628, %308 : vector<1x128xf32>
    %1678 = arith.addf %1676, %1677 : vector<1x128xf32>
    %1679 = arith.mulf %1630, %307 : vector<1x128xf32>
    %1680 = arith.addf %1678, %1679 : vector<1x128xf32>
    %1681 = arith.mulf %1632, %306 : vector<1x128xf32>
    %1682 = arith.addf %1680, %1681 : vector<1x128xf32>
    %1683 = arith.mulf %1634, %305 : vector<1x128xf32>
    %1684 = arith.addf %1682, %1683 : vector<1x128xf32>
    %1685 = arith.mulf %1636, %304 : vector<1x128xf32>
    %1686 = arith.addf %1684, %1685 : vector<1x128xf32>
    %1687 = arith.mulf %1638, %303 : vector<1x128xf32>
    %1688 = arith.addf %1686, %1687 : vector<1x128xf32>
    %1689 = arith.mulf %1640, %302 : vector<1x128xf32>
    %1690 = arith.addf %1688, %1689 : vector<1x128xf32>
    %1691 = arith.mulf %1642, %301 : vector<1x128xf32>
    %1692 = arith.addf %1690, %1691 : vector<1x128xf32>
    %1693 = arith.mulf %1644, %300 : vector<1x128xf32>
    %1694 = arith.addf %1692, %1693 : vector<1x128xf32>
    %1695 = arith.mulf %1598, %299 : vector<1x128xf32>
    %1696 = arith.addf %1694, %1695 : vector<1x128xf32>
    %cst_155 = arith.constant 0.000000e+00 : f32
    %1697 = vector.broadcast %cst_155 : f32 to vector<1x128xf32>
    %1698 = arith.subf %1697, %1696 : vector<1x128xf32>
    %cst_156 = arith.constant 9.99999996E-13 : f32
    %1699 = vector.broadcast %cst_156 : f32 to vector<1x128xf32>
    %1700 = arith.addf %1648, %1699 : vector<1x128xf32>
    %1701 = arith.divf %1698, %1700 : vector<1x128xf32>
    %1702 = arith.mulf %1701, %1598 : vector<1x128xf32>
    %1703 = arith.addf %1600, %1702 : vector<1x128xf32>
    %1704 = arith.mulf %1701, %1644 : vector<1x128xf32>
    %1705 = arith.addf %1602, %1704 : vector<1x128xf32>
    %1706 = arith.mulf %1701, %1642 : vector<1x128xf32>
    %1707 = arith.addf %1604, %1706 : vector<1x128xf32>
    %1708 = arith.mulf %1701, %1640 : vector<1x128xf32>
    %1709 = arith.addf %1606, %1708 : vector<1x128xf32>
    %1710 = arith.mulf %1701, %1638 : vector<1x128xf32>
    %1711 = arith.addf %1608, %1710 : vector<1x128xf32>
    %1712 = arith.mulf %1701, %1636 : vector<1x128xf32>
    %1713 = arith.addf %1610, %1712 : vector<1x128xf32>
    %1714 = arith.mulf %1701, %1634 : vector<1x128xf32>
    %1715 = arith.addf %1612, %1714 : vector<1x128xf32>
    %1716 = arith.mulf %1701, %1632 : vector<1x128xf32>
    %1717 = arith.addf %1614, %1716 : vector<1x128xf32>
    %1718 = arith.mulf %1701, %1630 : vector<1x128xf32>
    %1719 = arith.addf %1616, %1718 : vector<1x128xf32>
    %1720 = arith.mulf %1701, %1628 : vector<1x128xf32>
    %1721 = arith.addf %1618, %1720 : vector<1x128xf32>
    %1722 = arith.mulf %1701, %1626 : vector<1x128xf32>
    %1723 = arith.addf %1620, %1722 : vector<1x128xf32>
    %1724 = arith.mulf %1701, %1624 : vector<1x128xf32>
    %1725 = arith.addf %1622, %1724 : vector<1x128xf32>
    %1726 = arith.mulf %1701, %1622 : vector<1x128xf32>
    %1727 = arith.addf %1624, %1726 : vector<1x128xf32>
    %1728 = arith.mulf %1701, %1620 : vector<1x128xf32>
    %1729 = arith.addf %1626, %1728 : vector<1x128xf32>
    %1730 = arith.mulf %1701, %1618 : vector<1x128xf32>
    %1731 = arith.addf %1628, %1730 : vector<1x128xf32>
    %1732 = arith.mulf %1701, %1616 : vector<1x128xf32>
    %1733 = arith.addf %1630, %1732 : vector<1x128xf32>
    %1734 = arith.mulf %1701, %1614 : vector<1x128xf32>
    %1735 = arith.addf %1632, %1734 : vector<1x128xf32>
    %1736 = arith.mulf %1701, %1612 : vector<1x128xf32>
    %1737 = arith.addf %1634, %1736 : vector<1x128xf32>
    %1738 = arith.mulf %1701, %1610 : vector<1x128xf32>
    %1739 = arith.addf %1636, %1738 : vector<1x128xf32>
    %1740 = arith.mulf %1701, %1608 : vector<1x128xf32>
    %1741 = arith.addf %1638, %1740 : vector<1x128xf32>
    %1742 = arith.mulf %1701, %1606 : vector<1x128xf32>
    %1743 = arith.addf %1640, %1742 : vector<1x128xf32>
    %1744 = arith.mulf %1701, %1604 : vector<1x128xf32>
    %1745 = arith.addf %1642, %1744 : vector<1x128xf32>
    %1746 = arith.mulf %1701, %1602 : vector<1x128xf32>
    %1747 = arith.addf %1644, %1746 : vector<1x128xf32>
    %1748 = arith.mulf %1701, %1600 : vector<1x128xf32>
    %1749 = arith.addf %1598, %1748 : vector<1x128xf32>
    %1750 = arith.mulf %1701, %1701 : vector<1x128xf32>
    %cst_157 = arith.constant 1.000000e+00 : f32
    %1751 = vector.broadcast %cst_157 : f32 to vector<1x128xf32>
    %1752 = arith.subf %1751, %1750 : vector<1x128xf32>
    %1753 = arith.mulf %1648, %1752 : vector<1x128xf32>
    %1754 = arith.mulf %1703, %323 : vector<1x128xf32>
    %1755 = arith.addf %324, %1754 : vector<1x128xf32>
    %1756 = arith.mulf %1705, %322 : vector<1x128xf32>
    %1757 = arith.addf %1755, %1756 : vector<1x128xf32>
    %1758 = arith.mulf %1707, %321 : vector<1x128xf32>
    %1759 = arith.addf %1757, %1758 : vector<1x128xf32>
    %1760 = arith.mulf %1709, %320 : vector<1x128xf32>
    %1761 = arith.addf %1759, %1760 : vector<1x128xf32>
    %1762 = arith.mulf %1711, %319 : vector<1x128xf32>
    %1763 = arith.addf %1761, %1762 : vector<1x128xf32>
    %1764 = arith.mulf %1713, %318 : vector<1x128xf32>
    %1765 = arith.addf %1763, %1764 : vector<1x128xf32>
    %1766 = arith.mulf %1715, %317 : vector<1x128xf32>
    %1767 = arith.addf %1765, %1766 : vector<1x128xf32>
    %1768 = arith.mulf %1717, %316 : vector<1x128xf32>
    %1769 = arith.addf %1767, %1768 : vector<1x128xf32>
    %1770 = arith.mulf %1719, %315 : vector<1x128xf32>
    %1771 = arith.addf %1769, %1770 : vector<1x128xf32>
    %1772 = arith.mulf %1721, %314 : vector<1x128xf32>
    %1773 = arith.addf %1771, %1772 : vector<1x128xf32>
    %1774 = arith.mulf %1723, %313 : vector<1x128xf32>
    %1775 = arith.addf %1773, %1774 : vector<1x128xf32>
    %1776 = arith.mulf %1725, %312 : vector<1x128xf32>
    %1777 = arith.addf %1775, %1776 : vector<1x128xf32>
    %1778 = arith.mulf %1727, %311 : vector<1x128xf32>
    %1779 = arith.addf %1777, %1778 : vector<1x128xf32>
    %1780 = arith.mulf %1729, %310 : vector<1x128xf32>
    %1781 = arith.addf %1779, %1780 : vector<1x128xf32>
    %1782 = arith.mulf %1731, %309 : vector<1x128xf32>
    %1783 = arith.addf %1781, %1782 : vector<1x128xf32>
    %1784 = arith.mulf %1733, %308 : vector<1x128xf32>
    %1785 = arith.addf %1783, %1784 : vector<1x128xf32>
    %1786 = arith.mulf %1735, %307 : vector<1x128xf32>
    %1787 = arith.addf %1785, %1786 : vector<1x128xf32>
    %1788 = arith.mulf %1737, %306 : vector<1x128xf32>
    %1789 = arith.addf %1787, %1788 : vector<1x128xf32>
    %1790 = arith.mulf %1739, %305 : vector<1x128xf32>
    %1791 = arith.addf %1789, %1790 : vector<1x128xf32>
    %1792 = arith.mulf %1741, %304 : vector<1x128xf32>
    %1793 = arith.addf %1791, %1792 : vector<1x128xf32>
    %1794 = arith.mulf %1743, %303 : vector<1x128xf32>
    %1795 = arith.addf %1793, %1794 : vector<1x128xf32>
    %1796 = arith.mulf %1745, %302 : vector<1x128xf32>
    %1797 = arith.addf %1795, %1796 : vector<1x128xf32>
    %1798 = arith.mulf %1747, %301 : vector<1x128xf32>
    %1799 = arith.addf %1797, %1798 : vector<1x128xf32>
    %1800 = arith.mulf %1749, %300 : vector<1x128xf32>
    %1801 = arith.addf %1799, %1800 : vector<1x128xf32>
    %1802 = arith.mulf %1701, %299 : vector<1x128xf32>
    %1803 = arith.addf %1801, %1802 : vector<1x128xf32>
    %cst_158 = arith.constant 0.000000e+00 : f32
    %1804 = vector.broadcast %cst_158 : f32 to vector<1x128xf32>
    %1805 = arith.subf %1804, %1803 : vector<1x128xf32>
    %cst_159 = arith.constant 9.99999996E-13 : f32
    %1806 = vector.broadcast %cst_159 : f32 to vector<1x128xf32>
    %1807 = arith.addf %1753, %1806 : vector<1x128xf32>
    %1808 = arith.divf %1805, %1807 : vector<1x128xf32>
    %1809 = arith.mulf %1808, %1701 : vector<1x128xf32>
    %1810 = arith.addf %1703, %1809 : vector<1x128xf32>
    %1811 = arith.mulf %1808, %1749 : vector<1x128xf32>
    %1812 = arith.addf %1705, %1811 : vector<1x128xf32>
    %1813 = arith.mulf %1808, %1747 : vector<1x128xf32>
    %1814 = arith.addf %1707, %1813 : vector<1x128xf32>
    %1815 = arith.mulf %1808, %1745 : vector<1x128xf32>
    %1816 = arith.addf %1709, %1815 : vector<1x128xf32>
    %1817 = arith.mulf %1808, %1743 : vector<1x128xf32>
    %1818 = arith.addf %1711, %1817 : vector<1x128xf32>
    %1819 = arith.mulf %1808, %1741 : vector<1x128xf32>
    %1820 = arith.addf %1713, %1819 : vector<1x128xf32>
    %1821 = arith.mulf %1808, %1739 : vector<1x128xf32>
    %1822 = arith.addf %1715, %1821 : vector<1x128xf32>
    %1823 = arith.mulf %1808, %1737 : vector<1x128xf32>
    %1824 = arith.addf %1717, %1823 : vector<1x128xf32>
    %1825 = arith.mulf %1808, %1735 : vector<1x128xf32>
    %1826 = arith.addf %1719, %1825 : vector<1x128xf32>
    %1827 = arith.mulf %1808, %1733 : vector<1x128xf32>
    %1828 = arith.addf %1721, %1827 : vector<1x128xf32>
    %1829 = arith.mulf %1808, %1731 : vector<1x128xf32>
    %1830 = arith.addf %1723, %1829 : vector<1x128xf32>
    %1831 = arith.mulf %1808, %1729 : vector<1x128xf32>
    %1832 = arith.addf %1725, %1831 : vector<1x128xf32>
    %1833 = arith.mulf %1808, %1727 : vector<1x128xf32>
    %1834 = arith.addf %1727, %1833 : vector<1x128xf32>
    %1835 = arith.mulf %1808, %1725 : vector<1x128xf32>
    %1836 = arith.addf %1729, %1835 : vector<1x128xf32>
    %1837 = arith.mulf %1808, %1723 : vector<1x128xf32>
    %1838 = arith.addf %1731, %1837 : vector<1x128xf32>
    %1839 = arith.mulf %1808, %1721 : vector<1x128xf32>
    %1840 = arith.addf %1733, %1839 : vector<1x128xf32>
    %1841 = arith.mulf %1808, %1719 : vector<1x128xf32>
    %1842 = arith.addf %1735, %1841 : vector<1x128xf32>
    %1843 = arith.mulf %1808, %1717 : vector<1x128xf32>
    %1844 = arith.addf %1737, %1843 : vector<1x128xf32>
    %1845 = arith.mulf %1808, %1715 : vector<1x128xf32>
    %1846 = arith.addf %1739, %1845 : vector<1x128xf32>
    %1847 = arith.mulf %1808, %1713 : vector<1x128xf32>
    %1848 = arith.addf %1741, %1847 : vector<1x128xf32>
    %1849 = arith.mulf %1808, %1711 : vector<1x128xf32>
    %1850 = arith.addf %1743, %1849 : vector<1x128xf32>
    %1851 = arith.mulf %1808, %1709 : vector<1x128xf32>
    %1852 = arith.addf %1745, %1851 : vector<1x128xf32>
    %1853 = arith.mulf %1808, %1707 : vector<1x128xf32>
    %1854 = arith.addf %1747, %1853 : vector<1x128xf32>
    %1855 = arith.mulf %1808, %1705 : vector<1x128xf32>
    %1856 = arith.addf %1749, %1855 : vector<1x128xf32>
    %1857 = arith.mulf %1808, %1703 : vector<1x128xf32>
    %1858 = arith.addf %1701, %1857 : vector<1x128xf32>
    %1859 = arith.mulf %1808, %1808 : vector<1x128xf32>
    %cst_160 = arith.constant 1.000000e+00 : f32
    %1860 = vector.broadcast %cst_160 : f32 to vector<1x128xf32>
    %1861 = arith.subf %1860, %1859 : vector<1x128xf32>
    %1862 = arith.mulf %1753, %1861 : vector<1x128xf32>
    %1863 = arith.mulf %1810, %324 : vector<1x128xf32>
    %1864 = arith.addf %325, %1863 : vector<1x128xf32>
    %1865 = arith.mulf %1812, %323 : vector<1x128xf32>
    %1866 = arith.addf %1864, %1865 : vector<1x128xf32>
    %1867 = arith.mulf %1814, %322 : vector<1x128xf32>
    %1868 = arith.addf %1866, %1867 : vector<1x128xf32>
    %1869 = arith.mulf %1816, %321 : vector<1x128xf32>
    %1870 = arith.addf %1868, %1869 : vector<1x128xf32>
    %1871 = arith.mulf %1818, %320 : vector<1x128xf32>
    %1872 = arith.addf %1870, %1871 : vector<1x128xf32>
    %1873 = arith.mulf %1820, %319 : vector<1x128xf32>
    %1874 = arith.addf %1872, %1873 : vector<1x128xf32>
    %1875 = arith.mulf %1822, %318 : vector<1x128xf32>
    %1876 = arith.addf %1874, %1875 : vector<1x128xf32>
    %1877 = arith.mulf %1824, %317 : vector<1x128xf32>
    %1878 = arith.addf %1876, %1877 : vector<1x128xf32>
    %1879 = arith.mulf %1826, %316 : vector<1x128xf32>
    %1880 = arith.addf %1878, %1879 : vector<1x128xf32>
    %1881 = arith.mulf %1828, %315 : vector<1x128xf32>
    %1882 = arith.addf %1880, %1881 : vector<1x128xf32>
    %1883 = arith.mulf %1830, %314 : vector<1x128xf32>
    %1884 = arith.addf %1882, %1883 : vector<1x128xf32>
    %1885 = arith.mulf %1832, %313 : vector<1x128xf32>
    %1886 = arith.addf %1884, %1885 : vector<1x128xf32>
    %1887 = arith.mulf %1834, %312 : vector<1x128xf32>
    %1888 = arith.addf %1886, %1887 : vector<1x128xf32>
    %1889 = arith.mulf %1836, %311 : vector<1x128xf32>
    %1890 = arith.addf %1888, %1889 : vector<1x128xf32>
    %1891 = arith.mulf %1838, %310 : vector<1x128xf32>
    %1892 = arith.addf %1890, %1891 : vector<1x128xf32>
    %1893 = arith.mulf %1840, %309 : vector<1x128xf32>
    %1894 = arith.addf %1892, %1893 : vector<1x128xf32>
    %1895 = arith.mulf %1842, %308 : vector<1x128xf32>
    %1896 = arith.addf %1894, %1895 : vector<1x128xf32>
    %1897 = arith.mulf %1844, %307 : vector<1x128xf32>
    %1898 = arith.addf %1896, %1897 : vector<1x128xf32>
    %1899 = arith.mulf %1846, %306 : vector<1x128xf32>
    %1900 = arith.addf %1898, %1899 : vector<1x128xf32>
    %1901 = arith.mulf %1848, %305 : vector<1x128xf32>
    %1902 = arith.addf %1900, %1901 : vector<1x128xf32>
    %1903 = arith.mulf %1850, %304 : vector<1x128xf32>
    %1904 = arith.addf %1902, %1903 : vector<1x128xf32>
    %1905 = arith.mulf %1852, %303 : vector<1x128xf32>
    %1906 = arith.addf %1904, %1905 : vector<1x128xf32>
    %1907 = arith.mulf %1854, %302 : vector<1x128xf32>
    %1908 = arith.addf %1906, %1907 : vector<1x128xf32>
    %1909 = arith.mulf %1856, %301 : vector<1x128xf32>
    %1910 = arith.addf %1908, %1909 : vector<1x128xf32>
    %1911 = arith.mulf %1858, %300 : vector<1x128xf32>
    %1912 = arith.addf %1910, %1911 : vector<1x128xf32>
    %1913 = arith.mulf %1808, %299 : vector<1x128xf32>
    %1914 = arith.addf %1912, %1913 : vector<1x128xf32>
    %cst_161 = arith.constant 0.000000e+00 : f32
    %1915 = vector.broadcast %cst_161 : f32 to vector<1x128xf32>
    %1916 = arith.subf %1915, %1914 : vector<1x128xf32>
    %cst_162 = arith.constant 9.99999996E-13 : f32
    %1917 = vector.broadcast %cst_162 : f32 to vector<1x128xf32>
    %1918 = arith.addf %1862, %1917 : vector<1x128xf32>
    %1919 = arith.divf %1916, %1918 : vector<1x128xf32>
    %1920 = arith.mulf %1919, %1808 : vector<1x128xf32>
    %1921 = arith.addf %1810, %1920 : vector<1x128xf32>
    %1922 = arith.mulf %1919, %1858 : vector<1x128xf32>
    %1923 = arith.addf %1812, %1922 : vector<1x128xf32>
    %1924 = arith.mulf %1919, %1856 : vector<1x128xf32>
    %1925 = arith.addf %1814, %1924 : vector<1x128xf32>
    %1926 = arith.mulf %1919, %1854 : vector<1x128xf32>
    %1927 = arith.addf %1816, %1926 : vector<1x128xf32>
    %1928 = arith.mulf %1919, %1852 : vector<1x128xf32>
    %1929 = arith.addf %1818, %1928 : vector<1x128xf32>
    %1930 = arith.mulf %1919, %1850 : vector<1x128xf32>
    %1931 = arith.addf %1820, %1930 : vector<1x128xf32>
    %1932 = arith.mulf %1919, %1848 : vector<1x128xf32>
    %1933 = arith.addf %1822, %1932 : vector<1x128xf32>
    %1934 = arith.mulf %1919, %1846 : vector<1x128xf32>
    %1935 = arith.addf %1824, %1934 : vector<1x128xf32>
    %1936 = arith.mulf %1919, %1844 : vector<1x128xf32>
    %1937 = arith.addf %1826, %1936 : vector<1x128xf32>
    %1938 = arith.mulf %1919, %1842 : vector<1x128xf32>
    %1939 = arith.addf %1828, %1938 : vector<1x128xf32>
    %1940 = arith.mulf %1919, %1840 : vector<1x128xf32>
    %1941 = arith.addf %1830, %1940 : vector<1x128xf32>
    %1942 = arith.mulf %1919, %1838 : vector<1x128xf32>
    %1943 = arith.addf %1832, %1942 : vector<1x128xf32>
    %1944 = arith.mulf %1919, %1836 : vector<1x128xf32>
    %1945 = arith.addf %1834, %1944 : vector<1x128xf32>
    %1946 = arith.mulf %1919, %1834 : vector<1x128xf32>
    %1947 = arith.addf %1836, %1946 : vector<1x128xf32>
    %1948 = arith.mulf %1919, %1832 : vector<1x128xf32>
    %1949 = arith.addf %1838, %1948 : vector<1x128xf32>
    %1950 = arith.mulf %1919, %1830 : vector<1x128xf32>
    %1951 = arith.addf %1840, %1950 : vector<1x128xf32>
    %1952 = arith.mulf %1919, %1828 : vector<1x128xf32>
    %1953 = arith.addf %1842, %1952 : vector<1x128xf32>
    %1954 = arith.mulf %1919, %1826 : vector<1x128xf32>
    %1955 = arith.addf %1844, %1954 : vector<1x128xf32>
    %1956 = arith.mulf %1919, %1824 : vector<1x128xf32>
    %1957 = arith.addf %1846, %1956 : vector<1x128xf32>
    %1958 = arith.mulf %1919, %1822 : vector<1x128xf32>
    %1959 = arith.addf %1848, %1958 : vector<1x128xf32>
    %1960 = arith.mulf %1919, %1820 : vector<1x128xf32>
    %1961 = arith.addf %1850, %1960 : vector<1x128xf32>
    %1962 = arith.mulf %1919, %1818 : vector<1x128xf32>
    %1963 = arith.addf %1852, %1962 : vector<1x128xf32>
    %1964 = arith.mulf %1919, %1816 : vector<1x128xf32>
    %1965 = arith.addf %1854, %1964 : vector<1x128xf32>
    %1966 = arith.mulf %1919, %1814 : vector<1x128xf32>
    %1967 = arith.addf %1856, %1966 : vector<1x128xf32>
    %1968 = arith.mulf %1919, %1812 : vector<1x128xf32>
    %1969 = arith.addf %1858, %1968 : vector<1x128xf32>
    %1970 = arith.mulf %1919, %1810 : vector<1x128xf32>
    %1971 = arith.addf %1808, %1970 : vector<1x128xf32>
    %1972 = arith.mulf %1919, %1919 : vector<1x128xf32>
    %cst_163 = arith.constant 1.000000e+00 : f32
    %1973 = vector.broadcast %cst_163 : f32 to vector<1x128xf32>
    %1974 = arith.subf %1973, %1972 : vector<1x128xf32>
    %1975 = arith.mulf %1862, %1974 : vector<1x128xf32>
    %1976 = arith.mulf %1921, %325 : vector<1x128xf32>
    %1977 = arith.addf %326, %1976 : vector<1x128xf32>
    %1978 = arith.mulf %1923, %324 : vector<1x128xf32>
    %1979 = arith.addf %1977, %1978 : vector<1x128xf32>
    %1980 = arith.mulf %1925, %323 : vector<1x128xf32>
    %1981 = arith.addf %1979, %1980 : vector<1x128xf32>
    %1982 = arith.mulf %1927, %322 : vector<1x128xf32>
    %1983 = arith.addf %1981, %1982 : vector<1x128xf32>
    %1984 = arith.mulf %1929, %321 : vector<1x128xf32>
    %1985 = arith.addf %1983, %1984 : vector<1x128xf32>
    %1986 = arith.mulf %1931, %320 : vector<1x128xf32>
    %1987 = arith.addf %1985, %1986 : vector<1x128xf32>
    %1988 = arith.mulf %1933, %319 : vector<1x128xf32>
    %1989 = arith.addf %1987, %1988 : vector<1x128xf32>
    %1990 = arith.mulf %1935, %318 : vector<1x128xf32>
    %1991 = arith.addf %1989, %1990 : vector<1x128xf32>
    %1992 = arith.mulf %1937, %317 : vector<1x128xf32>
    %1993 = arith.addf %1991, %1992 : vector<1x128xf32>
    %1994 = arith.mulf %1939, %316 : vector<1x128xf32>
    %1995 = arith.addf %1993, %1994 : vector<1x128xf32>
    %1996 = arith.mulf %1941, %315 : vector<1x128xf32>
    %1997 = arith.addf %1995, %1996 : vector<1x128xf32>
    %1998 = arith.mulf %1943, %314 : vector<1x128xf32>
    %1999 = arith.addf %1997, %1998 : vector<1x128xf32>
    %2000 = arith.mulf %1945, %313 : vector<1x128xf32>
    %2001 = arith.addf %1999, %2000 : vector<1x128xf32>
    %2002 = arith.mulf %1947, %312 : vector<1x128xf32>
    %2003 = arith.addf %2001, %2002 : vector<1x128xf32>
    %2004 = arith.mulf %1949, %311 : vector<1x128xf32>
    %2005 = arith.addf %2003, %2004 : vector<1x128xf32>
    %2006 = arith.mulf %1951, %310 : vector<1x128xf32>
    %2007 = arith.addf %2005, %2006 : vector<1x128xf32>
    %2008 = arith.mulf %1953, %309 : vector<1x128xf32>
    %2009 = arith.addf %2007, %2008 : vector<1x128xf32>
    %2010 = arith.mulf %1955, %308 : vector<1x128xf32>
    %2011 = arith.addf %2009, %2010 : vector<1x128xf32>
    %2012 = arith.mulf %1957, %307 : vector<1x128xf32>
    %2013 = arith.addf %2011, %2012 : vector<1x128xf32>
    %2014 = arith.mulf %1959, %306 : vector<1x128xf32>
    %2015 = arith.addf %2013, %2014 : vector<1x128xf32>
    %2016 = arith.mulf %1961, %305 : vector<1x128xf32>
    %2017 = arith.addf %2015, %2016 : vector<1x128xf32>
    %2018 = arith.mulf %1963, %304 : vector<1x128xf32>
    %2019 = arith.addf %2017, %2018 : vector<1x128xf32>
    %2020 = arith.mulf %1965, %303 : vector<1x128xf32>
    %2021 = arith.addf %2019, %2020 : vector<1x128xf32>
    %2022 = arith.mulf %1967, %302 : vector<1x128xf32>
    %2023 = arith.addf %2021, %2022 : vector<1x128xf32>
    %2024 = arith.mulf %1969, %301 : vector<1x128xf32>
    %2025 = arith.addf %2023, %2024 : vector<1x128xf32>
    %2026 = arith.mulf %1971, %300 : vector<1x128xf32>
    %2027 = arith.addf %2025, %2026 : vector<1x128xf32>
    %2028 = arith.mulf %1919, %299 : vector<1x128xf32>
    %2029 = arith.addf %2027, %2028 : vector<1x128xf32>
    %cst_164 = arith.constant 0.000000e+00 : f32
    %2030 = vector.broadcast %cst_164 : f32 to vector<1x128xf32>
    %2031 = arith.subf %2030, %2029 : vector<1x128xf32>
    %cst_165 = arith.constant 9.99999996E-13 : f32
    %2032 = vector.broadcast %cst_165 : f32 to vector<1x128xf32>
    %2033 = arith.addf %1975, %2032 : vector<1x128xf32>
    %2034 = arith.divf %2031, %2033 : vector<1x128xf32>
    %2035 = arith.mulf %2034, %1919 : vector<1x128xf32>
    %2036 = arith.addf %1921, %2035 : vector<1x128xf32>
    %2037 = arith.mulf %2034, %1971 : vector<1x128xf32>
    %2038 = arith.addf %1923, %2037 : vector<1x128xf32>
    %2039 = arith.mulf %2034, %1969 : vector<1x128xf32>
    %2040 = arith.addf %1925, %2039 : vector<1x128xf32>
    %2041 = arith.mulf %2034, %1967 : vector<1x128xf32>
    %2042 = arith.addf %1927, %2041 : vector<1x128xf32>
    %2043 = arith.mulf %2034, %1965 : vector<1x128xf32>
    %2044 = arith.addf %1929, %2043 : vector<1x128xf32>
    %2045 = arith.mulf %2034, %1963 : vector<1x128xf32>
    %2046 = arith.addf %1931, %2045 : vector<1x128xf32>
    %2047 = arith.mulf %2034, %1961 : vector<1x128xf32>
    %2048 = arith.addf %1933, %2047 : vector<1x128xf32>
    %2049 = arith.mulf %2034, %1959 : vector<1x128xf32>
    %2050 = arith.addf %1935, %2049 : vector<1x128xf32>
    %2051 = arith.mulf %2034, %1957 : vector<1x128xf32>
    %2052 = arith.addf %1937, %2051 : vector<1x128xf32>
    %2053 = arith.mulf %2034, %1955 : vector<1x128xf32>
    %2054 = arith.addf %1939, %2053 : vector<1x128xf32>
    %2055 = arith.mulf %2034, %1953 : vector<1x128xf32>
    %2056 = arith.addf %1941, %2055 : vector<1x128xf32>
    %2057 = arith.mulf %2034, %1951 : vector<1x128xf32>
    %2058 = arith.addf %1943, %2057 : vector<1x128xf32>
    %2059 = arith.mulf %2034, %1949 : vector<1x128xf32>
    %2060 = arith.addf %1945, %2059 : vector<1x128xf32>
    %2061 = arith.mulf %2034, %1947 : vector<1x128xf32>
    %2062 = arith.addf %1947, %2061 : vector<1x128xf32>
    %2063 = arith.mulf %2034, %1945 : vector<1x128xf32>
    %2064 = arith.addf %1949, %2063 : vector<1x128xf32>
    %2065 = arith.mulf %2034, %1943 : vector<1x128xf32>
    %2066 = arith.addf %1951, %2065 : vector<1x128xf32>
    %2067 = arith.mulf %2034, %1941 : vector<1x128xf32>
    %2068 = arith.addf %1953, %2067 : vector<1x128xf32>
    %2069 = arith.mulf %2034, %1939 : vector<1x128xf32>
    %2070 = arith.addf %1955, %2069 : vector<1x128xf32>
    %2071 = arith.mulf %2034, %1937 : vector<1x128xf32>
    %2072 = arith.addf %1957, %2071 : vector<1x128xf32>
    %2073 = arith.mulf %2034, %1935 : vector<1x128xf32>
    %2074 = arith.addf %1959, %2073 : vector<1x128xf32>
    %2075 = arith.mulf %2034, %1933 : vector<1x128xf32>
    %2076 = arith.addf %1961, %2075 : vector<1x128xf32>
    %2077 = arith.mulf %2034, %1931 : vector<1x128xf32>
    %2078 = arith.addf %1963, %2077 : vector<1x128xf32>
    %2079 = arith.mulf %2034, %1929 : vector<1x128xf32>
    %2080 = arith.addf %1965, %2079 : vector<1x128xf32>
    %2081 = arith.mulf %2034, %1927 : vector<1x128xf32>
    %2082 = arith.addf %1967, %2081 : vector<1x128xf32>
    %2083 = arith.mulf %2034, %1925 : vector<1x128xf32>
    %2084 = arith.addf %1969, %2083 : vector<1x128xf32>
    %2085 = arith.mulf %2034, %1923 : vector<1x128xf32>
    %2086 = arith.addf %1971, %2085 : vector<1x128xf32>
    %2087 = arith.mulf %2034, %1921 : vector<1x128xf32>
    %2088 = arith.addf %1919, %2087 : vector<1x128xf32>
    %2089 = arith.mulf %2034, %2034 : vector<1x128xf32>
    %cst_166 = arith.constant 1.000000e+00 : f32
    %2090 = vector.broadcast %cst_166 : f32 to vector<1x128xf32>
    %2091 = arith.subf %2090, %2089 : vector<1x128xf32>
    %2092 = arith.mulf %1975, %2091 : vector<1x128xf32>
    %2093 = arith.mulf %2036, %326 : vector<1x128xf32>
    %2094 = arith.addf %327, %2093 : vector<1x128xf32>
    %2095 = arith.mulf %2038, %325 : vector<1x128xf32>
    %2096 = arith.addf %2094, %2095 : vector<1x128xf32>
    %2097 = arith.mulf %2040, %324 : vector<1x128xf32>
    %2098 = arith.addf %2096, %2097 : vector<1x128xf32>
    %2099 = arith.mulf %2042, %323 : vector<1x128xf32>
    %2100 = arith.addf %2098, %2099 : vector<1x128xf32>
    %2101 = arith.mulf %2044, %322 : vector<1x128xf32>
    %2102 = arith.addf %2100, %2101 : vector<1x128xf32>
    %2103 = arith.mulf %2046, %321 : vector<1x128xf32>
    %2104 = arith.addf %2102, %2103 : vector<1x128xf32>
    %2105 = arith.mulf %2048, %320 : vector<1x128xf32>
    %2106 = arith.addf %2104, %2105 : vector<1x128xf32>
    %2107 = arith.mulf %2050, %319 : vector<1x128xf32>
    %2108 = arith.addf %2106, %2107 : vector<1x128xf32>
    %2109 = arith.mulf %2052, %318 : vector<1x128xf32>
    %2110 = arith.addf %2108, %2109 : vector<1x128xf32>
    %2111 = arith.mulf %2054, %317 : vector<1x128xf32>
    %2112 = arith.addf %2110, %2111 : vector<1x128xf32>
    %2113 = arith.mulf %2056, %316 : vector<1x128xf32>
    %2114 = arith.addf %2112, %2113 : vector<1x128xf32>
    %2115 = arith.mulf %2058, %315 : vector<1x128xf32>
    %2116 = arith.addf %2114, %2115 : vector<1x128xf32>
    %2117 = arith.mulf %2060, %314 : vector<1x128xf32>
    %2118 = arith.addf %2116, %2117 : vector<1x128xf32>
    %2119 = arith.mulf %2062, %313 : vector<1x128xf32>
    %2120 = arith.addf %2118, %2119 : vector<1x128xf32>
    %2121 = arith.mulf %2064, %312 : vector<1x128xf32>
    %2122 = arith.addf %2120, %2121 : vector<1x128xf32>
    %2123 = arith.mulf %2066, %311 : vector<1x128xf32>
    %2124 = arith.addf %2122, %2123 : vector<1x128xf32>
    %2125 = arith.mulf %2068, %310 : vector<1x128xf32>
    %2126 = arith.addf %2124, %2125 : vector<1x128xf32>
    %2127 = arith.mulf %2070, %309 : vector<1x128xf32>
    %2128 = arith.addf %2126, %2127 : vector<1x128xf32>
    %2129 = arith.mulf %2072, %308 : vector<1x128xf32>
    %2130 = arith.addf %2128, %2129 : vector<1x128xf32>
    %2131 = arith.mulf %2074, %307 : vector<1x128xf32>
    %2132 = arith.addf %2130, %2131 : vector<1x128xf32>
    %2133 = arith.mulf %2076, %306 : vector<1x128xf32>
    %2134 = arith.addf %2132, %2133 : vector<1x128xf32>
    %2135 = arith.mulf %2078, %305 : vector<1x128xf32>
    %2136 = arith.addf %2134, %2135 : vector<1x128xf32>
    %2137 = arith.mulf %2080, %304 : vector<1x128xf32>
    %2138 = arith.addf %2136, %2137 : vector<1x128xf32>
    %2139 = arith.mulf %2082, %303 : vector<1x128xf32>
    %2140 = arith.addf %2138, %2139 : vector<1x128xf32>
    %2141 = arith.mulf %2084, %302 : vector<1x128xf32>
    %2142 = arith.addf %2140, %2141 : vector<1x128xf32>
    %2143 = arith.mulf %2086, %301 : vector<1x128xf32>
    %2144 = arith.addf %2142, %2143 : vector<1x128xf32>
    %2145 = arith.mulf %2088, %300 : vector<1x128xf32>
    %2146 = arith.addf %2144, %2145 : vector<1x128xf32>
    %2147 = arith.mulf %2034, %299 : vector<1x128xf32>
    %2148 = arith.addf %2146, %2147 : vector<1x128xf32>
    %cst_167 = arith.constant 0.000000e+00 : f32
    %2149 = vector.broadcast %cst_167 : f32 to vector<1x128xf32>
    %2150 = arith.subf %2149, %2148 : vector<1x128xf32>
    %cst_168 = arith.constant 9.99999996E-13 : f32
    %2151 = vector.broadcast %cst_168 : f32 to vector<1x128xf32>
    %2152 = arith.addf %2092, %2151 : vector<1x128xf32>
    %2153 = arith.divf %2150, %2152 : vector<1x128xf32>
    %2154 = arith.mulf %2153, %2034 : vector<1x128xf32>
    %2155 = arith.addf %2036, %2154 : vector<1x128xf32>
    %2156 = arith.mulf %2153, %2088 : vector<1x128xf32>
    %2157 = arith.addf %2038, %2156 : vector<1x128xf32>
    %2158 = arith.mulf %2153, %2086 : vector<1x128xf32>
    %2159 = arith.addf %2040, %2158 : vector<1x128xf32>
    %2160 = arith.mulf %2153, %2084 : vector<1x128xf32>
    %2161 = arith.addf %2042, %2160 : vector<1x128xf32>
    %2162 = arith.mulf %2153, %2082 : vector<1x128xf32>
    %2163 = arith.addf %2044, %2162 : vector<1x128xf32>
    %2164 = arith.mulf %2153, %2080 : vector<1x128xf32>
    %2165 = arith.addf %2046, %2164 : vector<1x128xf32>
    %2166 = arith.mulf %2153, %2078 : vector<1x128xf32>
    %2167 = arith.addf %2048, %2166 : vector<1x128xf32>
    %2168 = arith.mulf %2153, %2076 : vector<1x128xf32>
    %2169 = arith.addf %2050, %2168 : vector<1x128xf32>
    %2170 = arith.mulf %2153, %2074 : vector<1x128xf32>
    %2171 = arith.addf %2052, %2170 : vector<1x128xf32>
    %2172 = arith.mulf %2153, %2072 : vector<1x128xf32>
    %2173 = arith.addf %2054, %2172 : vector<1x128xf32>
    %2174 = arith.mulf %2153, %2070 : vector<1x128xf32>
    %2175 = arith.addf %2056, %2174 : vector<1x128xf32>
    %2176 = arith.mulf %2153, %2068 : vector<1x128xf32>
    %2177 = arith.addf %2058, %2176 : vector<1x128xf32>
    %2178 = arith.mulf %2153, %2066 : vector<1x128xf32>
    %2179 = arith.addf %2060, %2178 : vector<1x128xf32>
    %2180 = arith.mulf %2153, %2064 : vector<1x128xf32>
    %2181 = arith.addf %2062, %2180 : vector<1x128xf32>
    %2182 = arith.mulf %2153, %2062 : vector<1x128xf32>
    %2183 = arith.addf %2064, %2182 : vector<1x128xf32>
    %2184 = arith.mulf %2153, %2060 : vector<1x128xf32>
    %2185 = arith.addf %2066, %2184 : vector<1x128xf32>
    %2186 = arith.mulf %2153, %2058 : vector<1x128xf32>
    %2187 = arith.addf %2068, %2186 : vector<1x128xf32>
    %2188 = arith.mulf %2153, %2056 : vector<1x128xf32>
    %2189 = arith.addf %2070, %2188 : vector<1x128xf32>
    %2190 = arith.mulf %2153, %2054 : vector<1x128xf32>
    %2191 = arith.addf %2072, %2190 : vector<1x128xf32>
    %2192 = arith.mulf %2153, %2052 : vector<1x128xf32>
    %2193 = arith.addf %2074, %2192 : vector<1x128xf32>
    %2194 = arith.mulf %2153, %2050 : vector<1x128xf32>
    %2195 = arith.addf %2076, %2194 : vector<1x128xf32>
    %2196 = arith.mulf %2153, %2048 : vector<1x128xf32>
    %2197 = arith.addf %2078, %2196 : vector<1x128xf32>
    %2198 = arith.mulf %2153, %2046 : vector<1x128xf32>
    %2199 = arith.addf %2080, %2198 : vector<1x128xf32>
    %2200 = arith.mulf %2153, %2044 : vector<1x128xf32>
    %2201 = arith.addf %2082, %2200 : vector<1x128xf32>
    %2202 = arith.mulf %2153, %2042 : vector<1x128xf32>
    %2203 = arith.addf %2084, %2202 : vector<1x128xf32>
    %2204 = arith.mulf %2153, %2040 : vector<1x128xf32>
    %2205 = arith.addf %2086, %2204 : vector<1x128xf32>
    %2206 = arith.mulf %2153, %2038 : vector<1x128xf32>
    %2207 = arith.addf %2088, %2206 : vector<1x128xf32>
    %2208 = arith.mulf %2153, %2036 : vector<1x128xf32>
    %2209 = arith.addf %2034, %2208 : vector<1x128xf32>
    %2210 = arith.mulf %2153, %2153 : vector<1x128xf32>
    %cst_169 = arith.constant 1.000000e+00 : f32
    %2211 = vector.broadcast %cst_169 : f32 to vector<1x128xf32>
    %2212 = arith.subf %2211, %2210 : vector<1x128xf32>
    %2213 = arith.mulf %2092, %2212 : vector<1x128xf32>
    %2214 = arith.mulf %2155, %327 : vector<1x128xf32>
    %2215 = arith.addf %328, %2214 : vector<1x128xf32>
    %2216 = arith.mulf %2157, %326 : vector<1x128xf32>
    %2217 = arith.addf %2215, %2216 : vector<1x128xf32>
    %2218 = arith.mulf %2159, %325 : vector<1x128xf32>
    %2219 = arith.addf %2217, %2218 : vector<1x128xf32>
    %2220 = arith.mulf %2161, %324 : vector<1x128xf32>
    %2221 = arith.addf %2219, %2220 : vector<1x128xf32>
    %2222 = arith.mulf %2163, %323 : vector<1x128xf32>
    %2223 = arith.addf %2221, %2222 : vector<1x128xf32>
    %2224 = arith.mulf %2165, %322 : vector<1x128xf32>
    %2225 = arith.addf %2223, %2224 : vector<1x128xf32>
    %2226 = arith.mulf %2167, %321 : vector<1x128xf32>
    %2227 = arith.addf %2225, %2226 : vector<1x128xf32>
    %2228 = arith.mulf %2169, %320 : vector<1x128xf32>
    %2229 = arith.addf %2227, %2228 : vector<1x128xf32>
    %2230 = arith.mulf %2171, %319 : vector<1x128xf32>
    %2231 = arith.addf %2229, %2230 : vector<1x128xf32>
    %2232 = arith.mulf %2173, %318 : vector<1x128xf32>
    %2233 = arith.addf %2231, %2232 : vector<1x128xf32>
    %2234 = arith.mulf %2175, %317 : vector<1x128xf32>
    %2235 = arith.addf %2233, %2234 : vector<1x128xf32>
    %2236 = arith.mulf %2177, %316 : vector<1x128xf32>
    %2237 = arith.addf %2235, %2236 : vector<1x128xf32>
    %2238 = arith.mulf %2179, %315 : vector<1x128xf32>
    %2239 = arith.addf %2237, %2238 : vector<1x128xf32>
    %2240 = arith.mulf %2181, %314 : vector<1x128xf32>
    %2241 = arith.addf %2239, %2240 : vector<1x128xf32>
    %2242 = arith.mulf %2183, %313 : vector<1x128xf32>
    %2243 = arith.addf %2241, %2242 : vector<1x128xf32>
    %2244 = arith.mulf %2185, %312 : vector<1x128xf32>
    %2245 = arith.addf %2243, %2244 : vector<1x128xf32>
    %2246 = arith.mulf %2187, %311 : vector<1x128xf32>
    %2247 = arith.addf %2245, %2246 : vector<1x128xf32>
    %2248 = arith.mulf %2189, %310 : vector<1x128xf32>
    %2249 = arith.addf %2247, %2248 : vector<1x128xf32>
    %2250 = arith.mulf %2191, %309 : vector<1x128xf32>
    %2251 = arith.addf %2249, %2250 : vector<1x128xf32>
    %2252 = arith.mulf %2193, %308 : vector<1x128xf32>
    %2253 = arith.addf %2251, %2252 : vector<1x128xf32>
    %2254 = arith.mulf %2195, %307 : vector<1x128xf32>
    %2255 = arith.addf %2253, %2254 : vector<1x128xf32>
    %2256 = arith.mulf %2197, %306 : vector<1x128xf32>
    %2257 = arith.addf %2255, %2256 : vector<1x128xf32>
    %2258 = arith.mulf %2199, %305 : vector<1x128xf32>
    %2259 = arith.addf %2257, %2258 : vector<1x128xf32>
    %2260 = arith.mulf %2201, %304 : vector<1x128xf32>
    %2261 = arith.addf %2259, %2260 : vector<1x128xf32>
    %2262 = arith.mulf %2203, %303 : vector<1x128xf32>
    %2263 = arith.addf %2261, %2262 : vector<1x128xf32>
    %2264 = arith.mulf %2205, %302 : vector<1x128xf32>
    %2265 = arith.addf %2263, %2264 : vector<1x128xf32>
    %2266 = arith.mulf %2207, %301 : vector<1x128xf32>
    %2267 = arith.addf %2265, %2266 : vector<1x128xf32>
    %2268 = arith.mulf %2209, %300 : vector<1x128xf32>
    %2269 = arith.addf %2267, %2268 : vector<1x128xf32>
    %2270 = arith.mulf %2153, %299 : vector<1x128xf32>
    %2271 = arith.addf %2269, %2270 : vector<1x128xf32>
    %cst_170 = arith.constant 0.000000e+00 : f32
    %2272 = vector.broadcast %cst_170 : f32 to vector<1x128xf32>
    %2273 = arith.subf %2272, %2271 : vector<1x128xf32>
    %cst_171 = arith.constant 9.99999996E-13 : f32
    %2274 = vector.broadcast %cst_171 : f32 to vector<1x128xf32>
    %2275 = arith.addf %2213, %2274 : vector<1x128xf32>
    %2276 = arith.divf %2273, %2275 : vector<1x128xf32>
    %cst_172 = arith.constant 1.000000e+00 : f32
    %2277 = vector.broadcast %cst_172 : f32 to vector<1x128xf32>
    %c96 = arith.constant 96 : index
    %c0_173 = arith.constant 0 : index
    %2278 = vector.load %arg5[%c96, %c0_173] : memref<152x128xf32, #tpu.memory_space<vmem>>, vector<1x128xf32>
    tpu.vector_store %arg5[%c96, %c0_173], %2277 {strides = array<i32>} : memref<152x128xf32, #tpu.memory_space<vmem>>, vector<1x128xf32>,
    %c97 = arith.constant 97 : index
    %c0_174 = arith.constant 0 : index
    %2279 = vector.load %arg5[%c97, %c0_174] : memref<152x128xf32, #tpu.memory_space<vmem>>, vector<1x128xf32>
    tpu.vector_store %arg5[%c97, %c0_174], %281 {strides = array<i32>} : memref<152x128xf32, #tpu.memory_space<vmem>>, vector<1x128xf32>,
    %c98 = arith.constant 98 : index
    %c0_175 = arith.constant 0 : index
    %2280 = vector.load %arg5[%c98, %c0_175] : memref<152x128xf32, #tpu.memory_space<vmem>>, vector<1x128xf32>
    tpu.vector_store %arg5[%c98, %c0_175], %283 {strides = array<i32>} : memref<152x128xf32, #tpu.memory_space<vmem>>, vector<1x128xf32>,
    %c99 = arith.constant 99 : index
    %c0_176 = arith.constant 0 : index
    %2281 = vector.load %arg5[%c99, %c0_176] : memref<152x128xf32, #tpu.memory_space<vmem>>, vector<1x128xf32>
    tpu.vector_store %arg5[%c99, %c0_176], %285 {strides = array<i32>} : memref<152x128xf32, #tpu.memory_space<vmem>>, vector<1x128xf32>,
    %c100 = arith.constant 100 : index
    %c0_177 = arith.constant 0 : index
    %2282 = vector.load %arg5[%c100, %c0_177] : memref<152x128xf32, #tpu.memory_space<vmem>>, vector<1x128xf32>
    tpu.vector_store %arg5[%c100, %c0_177], %287 {strides = array<i32>} : memref<152x128xf32, #tpu.memory_space<vmem>>, vector<1x128xf32>,
    %c101 = arith.constant 101 : index
    %c0_178 = arith.constant 0 : index
    %2283 = vector.load %arg5[%c101, %c0_178] : memref<152x128xf32, #tpu.memory_space<vmem>>, vector<1x128xf32>
    tpu.vector_store %arg5[%c101, %c0_178], %289 {strides = array<i32>} : memref<152x128xf32, #tpu.memory_space<vmem>>, vector<1x128xf32>,
    %c102 = arith.constant 102 : index
    %c0_179 = arith.constant 0 : index
    %2284 = vector.load %arg5[%c102, %c0_179] : memref<152x128xf32, #tpu.memory_space<vmem>>, vector<1x128xf32>
    tpu.vector_store %arg5[%c102, %c0_179], %291 {strides = array<i32>} : memref<152x128xf32, #tpu.memory_space<vmem>>, vector<1x128xf32>,
    %c103 = arith.constant 103 : index
    %c0_180 = arith.constant 0 : index
    %2285 = vector.load %arg5[%c103, %c0_180] : memref<152x128xf32, #tpu.memory_space<vmem>>, vector<1x128xf32>
    tpu.vector_store %arg5[%c103, %c0_180], %293 {strides = array<i32>} : memref<152x128xf32, #tpu.memory_space<vmem>>, vector<1x128xf32>,
    %c104 = arith.constant 104 : index
    %c0_181 = arith.constant 0 : index
    %2286 = vector.load %arg5[%c104, %c0_181] : memref<152x128xf32, #tpu.memory_space<vmem>>, vector<1x128xf32>
    tpu.vector_store %arg5[%c104, %c0_181], %295 {strides = array<i32>} : memref<152x128xf32, #tpu.memory_space<vmem>>, vector<1x128xf32>,
    %c105 = arith.constant 105 : index
    %c0_182 = arith.constant 0 : index
    %2287 = vector.load %arg5[%c105, %c0_182] : memref<152x128xf32, #tpu.memory_space<vmem>>, vector<1x128xf32>
    tpu.vector_store %arg5[%c105, %c0_182], %297 {strides = array<i32>} : memref<152x128xf32, #tpu.memory_space<vmem>>, vector<1x128xf32>,
    %c106 = arith.constant 106 : index
    %c0_183 = arith.constant 0 : index
    %2288 = vector.load %arg5[%c106, %c0_183] : memref<152x128xf32, #tpu.memory_space<vmem>>, vector<1x128xf32>
    tpu.vector_store %arg5[%c106, %c0_183], %279 {strides = array<i32>} : memref<152x128xf32, #tpu.memory_space<vmem>>, vector<1x128xf32>,
    %c112 = arith.constant 112 : index
    %c0_184 = arith.constant 0 : index
    %2289 = vector.load %arg5[%c112, %c0_184] : memref<152x128xf32, #tpu.memory_space<vmem>>, vector<1x128xf32>
    tpu.vector_store %arg5[%c112, %c0_184], %333 {strides = array<i32>} : memref<152x128xf32, #tpu.memory_space<vmem>>, vector<1x128xf32>,
    %c113 = arith.constant 113 : index
    %c0_185 = arith.constant 0 : index
    %2290 = vector.load %arg5[%c113, %c0_185] : memref<152x128xf32, #tpu.memory_space<vmem>>, vector<1x128xf32>
    tpu.vector_store %arg5[%c113, %c0_185], %344 {strides = array<i32>} : memref<152x128xf32, #tpu.memory_space<vmem>>, vector<1x128xf32>,
    %c114 = arith.constant 114 : index
    %c0_186 = arith.constant 0 : index
    %2291 = vector.load %arg5[%c114, %c0_186] : memref<152x128xf32, #tpu.memory_space<vmem>>, vector<1x128xf32>
    tpu.vector_store %arg5[%c114, %c0_186], %359 {strides = array<i32>} : memref<152x128xf32, #tpu.memory_space<vmem>>, vector<1x128xf32>,
    %c115 = arith.constant 115 : index
    %c0_187 = arith.constant 0 : index
    %2292 = vector.load %arg5[%c115, %c0_187] : memref<152x128xf32, #tpu.memory_space<vmem>>, vector<1x128xf32>
    tpu.vector_store %arg5[%c115, %c0_187], %378 {strides = array<i32>} : memref<152x128xf32, #tpu.memory_space<vmem>>, vector<1x128xf32>,
    %c116 = arith.constant 116 : index
    %c0_188 = arith.constant 0 : index
    %2293 = vector.load %arg5[%c116, %c0_188] : memref<152x128xf32, #tpu.memory_space<vmem>>, vector<1x128xf32>
    tpu.vector_store %arg5[%c116, %c0_188], %401 {strides = array<i32>} : memref<152x128xf32, #tpu.memory_space<vmem>>, vector<1x128xf32>,
    %c117 = arith.constant 117 : index
    %c0_189 = arith.constant 0 : index
    %2294 = vector.load %arg5[%c117, %c0_189] : memref<152x128xf32, #tpu.memory_space<vmem>>, vector<1x128xf32>
    tpu.vector_store %arg5[%c117, %c0_189], %428 {strides = array<i32>} : memref<152x128xf32, #tpu.memory_space<vmem>>, vector<1x128xf32>,
    %c118 = arith.constant 118 : index
    %c0_190 = arith.constant 0 : index
    %2295 = vector.load %arg5[%c118, %c0_190] : memref<152x128xf32, #tpu.memory_space<vmem>>, vector<1x128xf32>
    tpu.vector_store %arg5[%c118, %c0_190], %459 {strides = array<i32>} : memref<152x128xf32, #tpu.memory_space<vmem>>, vector<1x128xf32>,
    %c119 = arith.constant 119 : index
    %c0_191 = arith.constant 0 : index
    %2296 = vector.load %arg5[%c119, %c0_191] : memref<152x128xf32, #tpu.memory_space<vmem>>, vector<1x128xf32>
    tpu.vector_store %arg5[%c119, %c0_191], %494 {strides = array<i32>} : memref<152x128xf32, #tpu.memory_space<vmem>>, vector<1x128xf32>,
    %c120 = arith.constant 120 : index
    %c0_192 = arith.constant 0 : index
    %2297 = vector.load %arg5[%c120, %c0_192] : memref<152x128xf32, #tpu.memory_space<vmem>>, vector<1x128xf32>
    tpu.vector_store %arg5[%c120, %c0_192], %533 {strides = array<i32>} : memref<152x128xf32, #tpu.memory_space<vmem>>, vector<1x128xf32>,
    %c121 = arith.constant 121 : index
    %c0_193 = arith.constant 0 : index
    %2298 = vector.load %arg5[%c121, %c0_193] : memref<152x128xf32, #tpu.memory_space<vmem>>, vector<1x128xf32>
    tpu.vector_store %arg5[%c121, %c0_193], %576 {strides = array<i32>} : memref<152x128xf32, #tpu.memory_space<vmem>>, vector<1x128xf32>,
    %c122 = arith.constant 122 : index
    %c0_194 = arith.constant 0 : index
    %2299 = vector.load %arg5[%c122, %c0_194] : memref<152x128xf32, #tpu.memory_space<vmem>>, vector<1x128xf32>
    tpu.vector_store %arg5[%c122, %c0_194], %623 {strides = array<i32>} : memref<152x128xf32, #tpu.memory_space<vmem>>, vector<1x128xf32>,
    %c123 = arith.constant 123 : index
    %c0_195 = arith.constant 0 : index
    %2300 = vector.load %arg5[%c123, %c0_195] : memref<152x128xf32, #tpu.memory_space<vmem>>, vector<1x128xf32>
    tpu.vector_store %arg5[%c123, %c0_195], %674 {strides = array<i32>} : memref<152x128xf32, #tpu.memory_space<vmem>>, vector<1x128xf32>,
    %c124 = arith.constant 124 : index
    %c0_196 = arith.constant 0 : index
    %2301 = vector.load %arg5[%c124, %c0_196] : memref<152x128xf32, #tpu.memory_space<vmem>>, vector<1x128xf32>
    tpu.vector_store %arg5[%c124, %c0_196], %729 {strides = array<i32>} : memref<152x128xf32, #tpu.memory_space<vmem>>, vector<1x128xf32>,
    %c125 = arith.constant 125 : index
    %c0_197 = arith.constant 0 : index
    %2302 = vector.load %arg5[%c125, %c0_197] : memref<152x128xf32, #tpu.memory_space<vmem>>, vector<1x128xf32>
    tpu.vector_store %arg5[%c125, %c0_197], %788 {strides = array<i32>} : memref<152x128xf32, #tpu.memory_space<vmem>>, vector<1x128xf32>,
    %c126 = arith.constant 126 : index
    %c0_198 = arith.constant 0 : index
    %2303 = vector.load %arg5[%c126, %c0_198] : memref<152x128xf32, #tpu.memory_space<vmem>>, vector<1x128xf32>
    tpu.vector_store %arg5[%c126, %c0_198], %851 {strides = array<i32>} : memref<152x128xf32, #tpu.memory_space<vmem>>, vector<1x128xf32>,
    %c127 = arith.constant 127 : index
    %c0_199 = arith.constant 0 : index
    %2304 = vector.load %arg5[%c127, %c0_199] : memref<152x128xf32, #tpu.memory_space<vmem>>, vector<1x128xf32>
    tpu.vector_store %arg5[%c127, %c0_199], %918 {strides = array<i32>} : memref<152x128xf32, #tpu.memory_space<vmem>>, vector<1x128xf32>,
    %c128 = arith.constant 128 : index
    %c0_200 = arith.constant 0 : index
    %2305 = vector.load %arg5[%c128, %c0_200] : memref<152x128xf32, #tpu.memory_space<vmem>>, vector<1x128xf32>
    tpu.vector_store %arg5[%c128, %c0_200], %989 {strides = array<i32>} : memref<152x128xf32, #tpu.memory_space<vmem>>, vector<1x128xf32>,
    %c129 = arith.constant 129 : index
    %c0_201 = arith.constant 0 : index
    %2306 = vector.load %arg5[%c129, %c0_201] : memref<152x128xf32, #tpu.memory_space<vmem>>, vector<1x128xf32>
    tpu.vector_store %arg5[%c129, %c0_201], %1064 {strides = array<i32>} : memref<152x128xf32, #tpu.memory_space<vmem>>, vector<1x128xf32>,
    %c130 = arith.constant 130 : index
    %c0_202 = arith.constant 0 : index
    %2307 = vector.load %arg5[%c130, %c0_202] : memref<152x128xf32, #tpu.memory_space<vmem>>, vector<1x128xf32>
    tpu.vector_store %arg5[%c130, %c0_202], %1143 {strides = array<i32>} : memref<152x128xf32, #tpu.memory_space<vmem>>, vector<1x128xf32>,
    %c131 = arith.constant 131 : index
    %c0_203 = arith.constant 0 : index
    %2308 = vector.load %arg5[%c131, %c0_203] : memref<152x128xf32, #tpu.memory_space<vmem>>, vector<1x128xf32>
    tpu.vector_store %arg5[%c131, %c0_203], %1226 {strides = array<i32>} : memref<152x128xf32, #tpu.memory_space<vmem>>, vector<1x128xf32>,
    %c132 = arith.constant 132 : index
    %c0_204 = arith.constant 0 : index
    %2309 = vector.load %arg5[%c132, %c0_204] : memref<152x128xf32, #tpu.memory_space<vmem>>, vector<1x128xf32>
    tpu.vector_store %arg5[%c132, %c0_204], %1313 {strides = array<i32>} : memref<152x128xf32, #tpu.memory_space<vmem>>, vector<1x128xf32>,
    %c133 = arith.constant 133 : index
    %c0_205 = arith.constant 0 : index
    %2310 = vector.load %arg5[%c133, %c0_205] : memref<152x128xf32, #tpu.memory_space<vmem>>, vector<1x128xf32>
    tpu.vector_store %arg5[%c133, %c0_205], %1404 {strides = array<i32>} : memref<152x128xf32, #tpu.memory_space<vmem>>, vector<1x128xf32>,
    %c134 = arith.constant 134 : index
    %c0_206 = arith.constant 0 : index
    %2311 = vector.load %arg5[%c134, %c0_206] : memref<152x128xf32, #tpu.memory_space<vmem>>, vector<1x128xf32>
    tpu.vector_store %arg5[%c134, %c0_206], %1499 {strides = array<i32>} : memref<152x128xf32, #tpu.memory_space<vmem>>, vector<1x128xf32>,
    %c135 = arith.constant 135 : index
    %c0_207 = arith.constant 0 : index
    %2312 = vector.load %arg5[%c135, %c0_207] : memref<152x128xf32, #tpu.memory_space<vmem>>, vector<1x128xf32>
    tpu.vector_store %arg5[%c135, %c0_207], %1598 {strides = array<i32>} : memref<152x128xf32, #tpu.memory_space<vmem>>, vector<1x128xf32>,
    %c136 = arith.constant 136 : index
    %c0_208 = arith.constant 0 : index
    %2313 = vector.load %arg5[%c136, %c0_208] : memref<152x128xf32, #tpu.memory_space<vmem>>, vector<1x128xf32>
    tpu.vector_store %arg5[%c136, %c0_208], %1701 {strides = array<i32>} : memref<152x128xf32, #tpu.memory_space<vmem>>, vector<1x128xf32>,
    %c137 = arith.constant 137 : index
    %c0_209 = arith.constant 0 : index
    %2314 = vector.load %arg5[%c137, %c0_209] : memref<152x128xf32, #tpu.memory_space<vmem>>, vector<1x128xf32>
    tpu.vector_store %arg5[%c137, %c0_209], %1808 {strides = array<i32>} : memref<152x128xf32, #tpu.memory_space<vmem>>, vector<1x128xf32>,
    %c138 = arith.constant 138 : index
    %c0_210 = arith.constant 0 : index
    %2315 = vector.load %arg5[%c138, %c0_210] : memref<152x128xf32, #tpu.memory_space<vmem>>, vector<1x128xf32>
    tpu.vector_store %arg5[%c138, %c0_210], %1919 {strides = array<i32>} : memref<152x128xf32, #tpu.memory_space<vmem>>, vector<1x128xf32>,
    %c139 = arith.constant 139 : index
    %c0_211 = arith.constant 0 : index
    %2316 = vector.load %arg5[%c139, %c0_211] : memref<152x128xf32, #tpu.memory_space<vmem>>, vector<1x128xf32>
    tpu.vector_store %arg5[%c139, %c0_211], %2034 {strides = array<i32>} : memref<152x128xf32, #tpu.memory_space<vmem>>, vector<1x128xf32>,
    %c140 = arith.constant 140 : index
    %c0_212 = arith.constant 0 : index
    %2317 = vector.load %arg5[%c140, %c0_212] : memref<152x128xf32, #tpu.memory_space<vmem>>, vector<1x128xf32>
    tpu.vector_store %arg5[%c140, %c0_212], %2153 {strides = array<i32>} : memref<152x128xf32, #tpu.memory_space<vmem>>, vector<1x128xf32>,
    %c141 = arith.constant 141 : index
    %c0_213 = arith.constant 0 : index
    %2318 = vector.load %arg5[%c141, %c0_213] : memref<152x128xf32, #tpu.memory_space<vmem>>, vector<1x128xf32>
    tpu.vector_store %arg5[%c141, %c0_213], %2276 {strides = array<i32>} : memref<152x128xf32, #tpu.memory_space<vmem>>, vector<1x128xf32>,
    %2319 = arith.mulf %0, %0 : vector<256x128xf32>
    %cst_214 = arith.constant dense<0.000000e+00> : vector<128xf32>
    %2320 = vector.multi_reduction <add>, %2319, %cst_214 [0] : vector<256x128xf32> to vector<128xf32>
    %2321 = vector.shape_cast %2320 : vector<128xf32> to vector<1x128xf32>
    %cst_215 = arith.constant 9.99999996E-13 : f32
    %2322 = vector.broadcast %cst_215 : f32 to vector<1x128xf32>
    %2323 = arith.addf %2321, %2322 : vector<1x128xf32>
    %2324 = math.log %2323 : vector<1x128xf32>
    %cst_216 = arith.constant 4.34294462 : f32
    %2325 = vector.broadcast %cst_216 : f32 to vector<1x128xf32>
    %2326 = arith.mulf %2325, %2324 : vector<1x128xf32>
    %2327 = math.sqrt %16 : vector<136x128xf32>
    %c0_217 = arith.constant 0 : index
    %c0_218 = arith.constant 0 : index
    %2328 = vector.load %arg4[%c0_217, %c0_218] : memref<136x1xf32, #tpu.memory_space<vmem>>, vector<136x1xf32>
    %2329 = vector.broadcast %2328 : vector<136x1xf32> to vector<136x128xf32>
    %2330 = arith.mulf %2327, %2329 : vector<136x128xf32>
    %cst_219 = arith.constant dense<0.000000e+00> : vector<128xf32>
    %2331 = vector.multi_reduction <add>, %2330, %cst_219 [0] : vector<136x128xf32> to vector<128xf32>
    %2332 = vector.shape_cast %2331 : vector<128xf32> to vector<1x128xf32>
    %cst_220 = arith.constant dense<0.000000e+00> : vector<128xf32>
    %2333 = vector.multi_reduction <add>, %2327, %cst_220 [0] : vector<136x128xf32> to vector<128xf32>
    %2334 = vector.shape_cast %2333 : vector<128xf32> to vector<1x128xf32>
    %cst_221 = arith.constant 9.99999996E-13 : f32
    %2335 = vector.broadcast %cst_221 : f32 to vector<1x128xf32>
    %2336 = arith.addf %2334, %2335 : vector<1x128xf32>
    %2337 = arith.divf %2332, %2336 : vector<1x128xf32>
    %c1_222 = arith.constant 1 : index
    %c0_223 = arith.constant 0 : index
    %2338 = vector.load %arg6[%c1_222, %c0_223] : memref<216x256xf32, #tpu.memory_space<vmem>>, vector<1x128xf32>
    %c0_224 = arith.constant 0 : index
    %c0_225 = arith.constant 0 : index
    %2339 = vector.load %arg6[%c0_224, %c0_225] : memref<216x256xf32, #tpu.memory_space<vmem>>, vector<1x128xf32>
    %cst_226 = arith.constant 9.99999996E-13 : f32
    %2340 = vector.broadcast %cst_226 : f32 to vector<1x128xf32>
    %2341 = arith.addf %2339, %2340 : vector<1x128xf32>
    %2342 = arith.divf %2338, %2341 : vector<1x128xf32>
    %c48_227 = arith.constant 48 : index
    %c128_228 = arith.constant 128 : index
    %2343 = vector.load %arg6[%c48_227, %c128_228] : memref<216x256xf32, #tpu.memory_space<vmem>>, vector<168x128xf32>
    %c48_229 = arith.constant 48 : index
    %c128_230 = arith.constant 128 : index
    %2344 = vector.load %arg6[%c48_229, %c128_230] : memref<216x256xf32, #tpu.memory_space<vmem>>, vector<1x128xf32>
    %cst_231 = arith.constant 9.99999996E-13 : f32
    %2345 = vector.broadcast %cst_231 : f32 to vector<1x128xf32>
    %2346 = arith.addf %2344, %2345 : vector<1x128xf32>
    %2347 = vector.broadcast %2346 : vector<1x128xf32> to vector<168x128xf32>
    %2348 = arith.divf %2343, %2347 : vector<168x128xf32>
    %2349 = tpu.iota {dimensions = array<i32: 0>} : vector<168x128xi32>
    %2350 = arith.sitofp %2349 : vector<168x128xi32> to vector<168x128xf32>
    %cst_232 = arith.constant 1.600000e+01 : f32
    %2351 = vector.broadcast %cst_232 : f32 to vector<168x128xf32>
    %2352 = arith.cmpf oge, %2350, %2351 : vector<168x128xf32>
    %cst_233 = arith.constant 1.600000e+02 : f32
    %2353 = vector.broadcast %cst_233 : f32 to vector<168x128xf32>
    %2354 = arith.cmpf ole, %2350, %2353 : vector<168x128xf32>
    %2355 = arith.andi %2352, %2354 : vector<168x128xi1>
    %cst_234 = arith.constant 0xFF800000 : f32
    %2356 = vector.broadcast %cst_234 : f32 to vector<168x128xf32>
    %2357 = arith.select %2355, %2348, %2356 : vector<168x128xi1>, vector<168x128xf32>
    %cst_235 = arith.constant dense<0xFF800000> : vector<128xf32>
    %2358 = vector.multi_reduction <maximumf>, %2357, %cst_235 [0] : vector<168x128xf32> to vector<128xf32>
    %2359 = vector.shape_cast %2358 : vector<128xf32> to vector<1x128xf32>
    %2360 = vector.broadcast %2359 : vector<1x128xf32> to vector<168x128xf32>
    %2361 = arith.cmpf oge, %2357, %2360 : vector<168x128xf32>
    %2362 = arith.andi %2361, %2355 : vector<168x128xi1>
    %cst_236 = arith.constant 0.000000e+00 : f32
    %2363 = vector.broadcast %cst_236 : f32 to vector<168x128xf32>
    %2364 = arith.select %2362, %2350, %2363 : vector<168x128xi1>, vector<168x128xf32>
    %cst_237 = arith.constant dense<0xFF800000> : vector<128xf32>
    %2365 = vector.multi_reduction <maximumf>, %2364, %cst_237 [0] : vector<168x128xf32> to vector<128xf32>
    %2366 = vector.shape_cast %2365 : vector<128xf32> to vector<1x128xf32>
    %cst_238 = arith.constant 1.000000e+00 : f32
    %2367 = vector.broadcast %cst_238 : f32 to vector<1x128xf32>
    %2368 = arith.maximumf %2366, %2367 : vector<1x128xf32>
    %c144 = arith.constant 144 : index
    %c0_239 = arith.constant 0 : index
    %2369 = vector.load %arg5[%c144, %c0_239] : memref<152x128xf32, #tpu.memory_space<vmem>>, vector<1x128xf32>
    tpu.vector_store %arg5[%c144, %c0_239], %2326 {strides = array<i32>} : memref<152x128xf32, #tpu.memory_space<vmem>>, vector<1x128xf32>,
    %c145 = arith.constant 145 : index
    %c0_240 = arith.constant 0 : index
    %2370 = vector.load %arg5[%c145, %c0_240] : memref<152x128xf32, #tpu.memory_space<vmem>>, vector<1x128xf32>
    tpu.vector_store %arg5[%c145, %c0_240], %2337 {strides = array<i32>} : memref<152x128xf32, #tpu.memory_space<vmem>>, vector<1x128xf32>,
    %c146 = arith.constant 146 : index
    %c0_241 = arith.constant 0 : index
    %2371 = vector.load %arg5[%c146, %c0_241] : memref<152x128xf32, #tpu.memory_space<vmem>>, vector<1x128xf32>
    tpu.vector_store %arg5[%c146, %c0_241], %2342 {strides = array<i32>} : memref<152x128xf32, #tpu.memory_space<vmem>>, vector<1x128xf32>,
    %cst_242 = arith.constant 8.000000e+03 : f32
    %2372 = vector.broadcast %cst_242 : f32 to vector<1x128xf32>
    %2373 = arith.divf %2372, %2368 : vector<1x128xf32>
    %2374 = math.log %2373 : vector<1x128xf32>
    %c147 = arith.constant 147 : index
    %c0_243 = arith.constant 0 : index
    %2375 = vector.load %arg5[%c147, %c0_243] : memref<152x128xf32, #tpu.memory_space<vmem>>, vector<1x128xf32>
    tpu.vector_store %arg5[%c147, %c0_243], %2374 {strides = array<i32>} : memref<152x128xf32, #tpu.memory_space<vmem>>, vector<1x128xf32>,
    %cst_244 = arith.constant 0.000000e+00 : f32
    %cst_245 = arith.constant 1.000000e+00 : f32
    %2376 = vector.broadcast %cst_244 : f32 to vector<1x128xf32>
    %2377 = arith.maximumf %2376, %2359 : vector<1x128xf32>
    %2378 = vector.broadcast %cst_245 : f32 to vector<1x128xf32>
    %2379 = arith.minimumf %2378, %2377 : vector<1x128xf32>
    %c148 = arith.constant 148 : index
    %c0_246 = arith.constant 0 : index
    %2380 = vector.load %arg5[%c148, %c0_246] : memref<152x128xf32, #tpu.memory_space<vmem>>, vector<1x128xf32>
    tpu.vector_store %arg5[%c148, %c0_246], %2379 {strides = array<i32>} : memref<152x128xf32, #tpu.memory_space<vmem>>, vector<1x128xf32>,
    %c149 = arith.constant 149 : index
    %c0_247 = arith.constant 0 : index
    %2381 = vector.load %arg5[%c149, %c0_247] : memref<152x128xf32, #tpu.memory_space<vmem>>, vector<1x128xf32>
    tpu.vector_store %arg5[%c149, %c0_247], %2359 {strides = array<i32>} : memref<152x128xf32, #tpu.memory_space<vmem>>, vector<1x128xf32>,
    return
  }
  func.func @transform_0(%arg0: i32) -> (i32, i32) {
    %c0_i32 = arith.constant 0 : i32
    %c0_i32_0 = arith.constant 0 : i32
    return %c0_i32, %arg0 : i32, i32
  }
  func.func @transform_1(%arg0: i32) -> (i32, i32) {
    %c0_i32 = arith.constant 0 : i32
    %c0_i32_0 = arith.constant 0 : i32
    %c0_i32_1 = arith.constant 0 : i32
    return %c0_i32, %c0_i32_0 : i32, i32
  }
  func.func @transform_2(%arg0: i32) -> (i32, i32) {
    %c0_i32 = arith.constant 0 : i32
    %c0_i32_0 = arith.constant 0 : i32
    %c0_i32_1 = arith.constant 0 : i32
    return %c0_i32, %c0_i32_0 : i32, i32
  }
  func.func @transform_3(%arg0: i32) -> (i32, i32) {
    %c0_i32 = arith.constant 0 : i32
    %c0_i32_0 = arith.constant 0 : i32
    %c0_i32_1 = arith.constant 0 : i32
    return %c0_i32, %c0_i32_0 : i32, i32
  }
  func.func @transform_4(%arg0: i32) -> (i32, i32) {
    %c0_i32 = arith.constant 0 : i32
    %c0_i32_0 = arith.constant 0 : i32
    return %c0_i32, %arg0 : i32, i32
  }
}

</mosaic_0001>

<llo_original>
// kernel: tpu_custom_call.1
$region0: #{tpu_custom_call.1}
  #allocation0 [shape = 'u32[]', space=smem, size = 0x4, offset = 0x4, fixed_abs, tag = 'smem constant byte address 0x4 - core index']
  #allocation1 [shape = 'u32[144,128]{1,0:T(1,128)}', space=vmem, size = 0x12000, scoped, tag = 'internal scratch']
  #allocation2 [shape = 'f32[216,256]{1,0:T(8,128)}', space=vmem, size = 0x36000, scoped, tag = 'scratch operand']
  %s0 = inlined_call_operand.vmem [shape: f32[256,128], index: 0, kind: input, shape index: {}]
  %s1 = inlined_call_operand.hbm [shape: f32[544,256], index: 1, kind: input, shape index: {}]
  %s2 = inlined_call_operand.vmem [shape: f32[216,136], index: 2, kind: input, shape index: {}]
  %s3 = inlined_call_operand.vmem [shape: f32[136,1], index: 3, kind: input, shape index: {}]
  %s4 = inlined_call_operand.hbm [shape: f32[152,128], index: 4, kind: output, shape index: {}]
  %s5 = sld [smem:[#allocation0]]
  $region30: #{tpu_custom_call.1} parent=0
    _
  %s7 = ssub.s32 1, %s5
  %s8 = scalar_select 0, %s7, %s5
  $region1: #{tpu_custom_call.1} parent=0
    #allocation3 [shape = 'u8[557056]{0}', space=vmem, size = 0x88000, scoped, tag = 'input window, operand 1, single buffered']
    #allocation4 [shape = 's32[1]{0}', space=sflag, size = 0x4, scoped, tag = 'scoped memory for tpu_custom_call.1']
    #allocation5 [shape = 's32[1]{0}', space=sflag, size = 0x4, scoped, tag = 'scoped memory for tpu_custom_call.1']
    #allocation6 [shape = 'u8[77824]{0}', space=vmem, size = 0x13000, scoped, tag = 'output window, operand 0, single buffered']
    %9 = vsyncpa [#allocation4], 0
    %10 = vsyncpa [#allocation5], 0
    // Predicated region
    $region2: #{tpu_custom_call.1} parent=1 // pred_check
      _
    $region3: #{tpu_custom_call.1} parent=1 // pred_check_branch
      %12 = sbr.rel (0) target = $region5
    $region4: #{tpu_custom_call.1} parent=1 // pred_region
      _
    $region5: #{tpu_custom_call.1} parent=1 // pred_fallthru
      _
    // Predicated region
    $region6: #{tpu_custom_call.1} parent=1 // pred_check
      _
    $region7: #{tpu_custom_call.1} parent=1 // pred_check_branch
      %14 = sbr.rel (0) target = $region9
    $region8: #{tpu_custom_call.1} parent=1 // pred_region
      %s16 = ssub.s32 17408, 17408
      %17 = vsyncadd [#allocation4], %s16
      %s18 = sshll.u32 [#allocation3], 4
      %s19 = int_to_ptr.vmem [resolvable:$true] %s18
      %24 = dma.hbm_to_vmem [thread:$0]  %s1, 17408, %s19, [#allocation4], 256, 256, 16
    $region9: #{tpu_custom_call.1} parent=1 // pred_fallthru
      _
    // Predicated region
    $region10: #{tpu_custom_call.1} parent=1 // pred_check
      _
    $region11: #{tpu_custom_call.1} parent=1 // pred_check_branch
      %26 = sbr.rel (0) target = $region13
    $region12: #{tpu_custom_call.1} parent=1 // pred_region
      _
    $region13: #{tpu_custom_call.1} parent=1 // pred_fallthru
      _
    // Predicated region
    $region14: #{tpu_custom_call.1} parent=1 // pred_check
      _
    $region15: #{tpu_custom_call.1} parent=1 // pred_check_branch
      %28 = sbr.rel (0) target = $region17
    $region16: #{tpu_custom_call.1} parent=1 // pred_region
      _
    $region17: #{tpu_custom_call.1} parent=1 // pred_fallthru
      _
    // Predicated region
    $region18: #{tpu_custom_call.1} parent=1 // pred_check
      _
    $region19: #{tpu_custom_call.1} parent=1 // pred_check_branch
      %30 = sbr.rel (0) target = $region21
    $region20: #{tpu_custom_call.1} parent=1 // pred_region
      %31 = dma.done [#allocation4], 17408
    $region21: #{tpu_custom_call.1} parent=1 // pred_fallthru
      _
    %v32 = vld [vmem:[%s0] sm:$0xff]
    %v33 = vld [vmem:[%s0 + $0x8] sm:$0xff]
    %v34 = vld [vmem:[%s0 + $0x10] sm:$0xff]
    %v35 = vld [vmem:[%s0 + $0x18] sm:$0xff]
    %v36 = vld [vmem:[%s0 + $0x20] sm:$0xff]
    %v37 = vld [vmem:[%s0 + $0x28] sm:$0xff]
    %v38 = vld [vmem:[%s0 + $0x30] sm:$0xff]
    %v39 = vld [vmem:[%s0 + $0x38] sm:$0xff]
    %v40 = vld [vmem:[%s0 + $0x40] sm:$0xff]
    %v41 = vld [vmem:[%s0 + $0x48] sm:$0xff]
    %v42 = vld [vmem:[%s0 + $0x50] sm:$0xff]
    %v43 = vld [vmem:[%s0 + $0x58] sm:$0xff]
    %v44 = vld [vmem:[%s0 + $0x60] sm:$0xff]
    %v45 = vld [vmem:[%s0 + $0x68] sm:$0xff]
    %v46 = vld [vmem:[%s0 + $0x70] sm:$0xff]
    %v47 = vld [vmem:[%s0 + $0x78] sm:$0xff]
    %v48 = vld [vmem:[%s0 + $0x80] sm:$0xff]
    %v49 = vld [vmem:[%s0 + $0x88] sm:$0xff]
    %v50 = vld [vmem:[%s0 + $0x90] sm:$0xff]
    %v51 = vld [vmem:[%s0 + $0x98] sm:$0xff]
    %v52 = vld [vmem:[%s0 + $0xa0] sm:$0xff]
    %v53 = vld [vmem:[%s0 + $0xa8] sm:$0xff]
    %v54 = vld [vmem:[%s0 + $0xb0] sm:$0xff]
    %v55 = vld [vmem:[%s0 + $0xb8] sm:$0xff]
    %v56 = vld [vmem:[%s0 + $0xc0] sm:$0xff]
    %v57 = vld [vmem:[%s0 + $0xc8] sm:$0xff]
    %v58 = vld [vmem:[%s0 + $0xd0] sm:$0xff]
    %v59 = vld [vmem:[%s0 + $0xd8] sm:$0xff]
    %v60 = vld [vmem:[%s0 + $0xe0] sm:$0xff]
    %v61 = vld [vmem:[%s0 + $0xe8] sm:$0xff]
    %v62 = vld [vmem:[%s0 + $0xf0] sm:$0xff]
    %v63 = vld [vmem:[%s0 + $0xf8] sm:$0xff]
    %v64 = vld [vmem:[#allocation3] sm:$0xff]
    %v65 = vld [vmem:[#allocation3 + $0x8] sm:$0xff]
    %v66 = vld [vmem:[#allocation3 + $0x10] sm:$0xff]
    %v67 = vld [vmem:[#allocation3 + $0x18] sm:$0xff]
    %v68 = vld [vmem:[#allocation3 + $0x20] sm:$0xff]
    %v69 = vld [vmem:[#allocation3 + $0x28] sm:$0xff]
    %v70 = vld [vmem:[#allocation3 + $0x30] sm:$0xff]
    %v71 = vld [vmem:[#allocation3 + $0x38] sm:$0xff]
    %v72 = vld [vmem:[#allocation3 + $0x40] sm:$0xff]
    %v73 = vld [vmem:[#allocation3 + $0x48] sm:$0xff]
    %v74 = vld [vmem:[#allocation3 + $0x50] sm:$0xff]
    %v75 = vld [vmem:[#allocation3 + $0x58] sm:$0xff]
    %v76 = vld [vmem:[#allocation3 + $0x60] sm:$0xff]
    %v77 = vld [vmem:[#allocation3 + $0x68] sm:$0xff]
    %v78 = vld [vmem:[#allocation3 + $0x70] sm:$0xff]
    %v79 = vld [vmem:[#allocation3 + $0x78] sm:$0xff]
    %v80 = vld [vmem:[#allocation3 + $0x80] sm:$0xff]
    %v81 = vld [vmem:[#allocation3 + $0x88] sm:$0xff]
    %v82 = vld [vmem:[#allocation3 + $0x90] sm:$0xff]
    %v83 = vld [vmem:[#allocation3 + $0x98] sm:$0xff]
    %v84 = vld [vmem:[#allocation3 + $0xa0] sm:$0xff]
    %v85 = vld [vmem:[#allocation3 + $0xa8] sm:$0xff]
    %v86 = vld [vmem:[#allocation3 + $0xb0] sm:$0xff]
    %v87 = vld [vmem:[#allocation3 + $0xb8] sm:$0xff]
    %v88 = vld [vmem:[#allocation3 + $0xc0] sm:$0xff]
    %v89 = vld [vmem:[#allocation3 + $0xc8] sm:$0xff]
    %v90 = vld [vmem:[#allocation3 + $0xd0] sm:$0xff]
    %v91 = vld [vmem:[#allocation3 + $0xd8] sm:$0xff]
    %v92 = vld [vmem:[#allocation3 + $0xe0] sm:$0xff]
    %v93 = vld [vmem:[#allocation3 + $0xe8] sm:$0xff]
    %v94 = vld [vmem:[#allocation3 + $0xf0] sm:$0xff]
    %v95 = vld [vmem:[#allocation3 + $0xf8] sm:$0xff]
    %v96 = vld [vmem:[#allocation3 + $0x100] sm:$0xff]
    %v97 = vld [vmem:[#allocation3 + $0x108] sm:$0xff]
    %v98 = vld [vmem:[#allocation3 + $0x110] sm:$0xff]
    %v99 = vld [vmem:[#allocation3 + $0x118] sm:$0xff]
    %v100 = vld [vmem:[#allocation3 + $0x120] sm:$0xff]
    %v101 = vld [vmem:[#allocation3 + $0x128] sm:$0xff]
    %v102 = vld [vmem:[#allocation3 + $0x130] sm:$0xff]
    %v103 = vld [vmem:[#allocation3 + $0x138] sm:$0xff]
    %v104 = vld [vmem:[#allocation3 + $0x140] sm:$0xff]
    %v105 = vld [vmem:[#allocation3 + $0x148] sm:$0xff]
    %v106 = vld [vmem:[#allocation3 + $0x150] sm:$0xff]
    %v107 = vld [vmem:[#allocation3 + $0x158] sm:$0xff]
    %v108 = vld [vmem:[#allocation3 + $0x160] sm:$0xff]
    %v109 = vld [vmem:[#allocation3 + $0x168] sm:$0xff]
    %v110 = vld [vmem:[#allocation3 + $0x170] sm:$0xff]
    %v111 = vld [vmem:[#allocation3 + $0x178] sm:$0xff]
    %v112 = vld [vmem:[#allocation3 + $0x180] sm:$0xff]
    %v113 = vld [vmem:[#allocation3 + $0x188] sm:$0xff]
    %v114 = vld [vmem:[#allocation3 + $0x190] sm:$0xff]
    %v115 = vld [vmem:[#allocation3 + $0x198] sm:$0xff]
    %v116 = vld [vmem:[#allocation3 + $0x1a0] sm:$0xff]
    %v117 = vld [vmem:[#allocation3 + $0x1a8] sm:$0xff]
    %v118 = vld [vmem:[#allocation3 + $0x1b0] sm:$0xff]
    %v119 = vld [vmem:[#allocation3 + $0x1b8] sm:$0xff]
    %v120 = vld [vmem:[#allocation3 + $0x1c0] sm:$0xff]
    %v121 = vld [vmem:[#allocation3 + $0x1c8] sm:$0xff]
    %v122 = vld [vmem:[#allocation3 + $0x1d0] sm:$0xff]
    %v123 = vld [vmem:[#allocation3 + $0x1d8] sm:$0xff]
    %v124 = vld [vmem:[#allocation3 + $0x1e0] sm:$0xff]
    %v125 = vld [vmem:[#allocation3 + $0x1e8] sm:$0xff]
    %v126 = vld [vmem:[#allocation3 + $0x1f0] sm:$0xff]
    %v127 = vld [vmem:[#allocation3 + $0x1f8] sm:$0xff]
    %v128 = vld [vmem:[#allocation3 + $0x200] sm:$0xff]
    %v129 = vld [vmem:[#allocation3 + $0x208] sm:$0xff]
    %v130 = vld [vmem:[#allocation3 + $0x210] sm:$0xff]
    %v131 = vld [vmem:[#allocation3 + $0x218] sm:$0xff]
    %v132 = vld [vmem:[#allocation3 + $0x220] sm:$0xff]
    %v133 = vld [vmem:[#allocation3 + $0x228] sm:$0xff]
    %v134 = vld [vmem:[#allocation3 + $0x230] sm:$0xff]
    %v135 = vld [vmem:[#allocation3 + $0x238] sm:$0xff]
    %v136 = vld [vmem:[#allocation3 + $0x240] sm:$0xff]
    %v137 = vld [vmem:[#allocation3 + $0x248] sm:$0xff]
    %v138 = vld [vmem:[#allocation3 + $0x250] sm:$0xff]
    %v139 = vld [vmem:[#allocation3 + $0x258] sm:$0xff]
    %v140 = vld [vmem:[#allocation3 + $0x260] sm:$0xff]
    %v141 = vld [vmem:[#allocation3 + $0x268] sm:$0xff]
    %v142 = vld [vmem:[#allocation3 + $0x270] sm:$0xff]
    %v143 = vld [vmem:[#allocation3 + $0x278] sm:$0xff]
    %v144 = vld [vmem:[#allocation3 + $0x280] sm:$0xff]
    %v145 = vld [vmem:[#allocation3 + $0x288] sm:$0xff]
    %v146 = vld [vmem:[#allocation3 + $0x290] sm:$0xff]
    %v147 = vld [vmem:[#allocation3 + $0x298] sm:$0xff]
    %v148 = vld [vmem:[#allocation3 + $0x2a0] sm:$0xff]
    %v149 = vld [vmem:[#allocation3 + $0x2a8] sm:$0xff]
    %v150 = vld [vmem:[#allocation3 + $0x2b0] sm:$0xff]
    %v151 = vld [vmem:[#allocation3 + $0x2b8] sm:$0xff]
    %v152 = vld [vmem:[#allocation3 + $0x2c0] sm:$0xff]
    %v153 = vld [vmem:[#allocation3 + $0x2c8] sm:$0xff]
    %v154 = vld [vmem:[#allocation3 + $0x2d0] sm:$0xff]
    %v155 = vld [vmem:[#allocation3 + $0x2d8] sm:$0xff]
    %v156 = vld [vmem:[#allocation3 + $0x2e0] sm:$0xff]
    %v157 = vld [vmem:[#allocation3 + $0x2e8] sm:$0xff]
    %v158 = vld [vmem:[#allocation3 + $0x2f0] sm:$0xff]
    %v159 = vld [vmem:[#allocation3 + $0x2f8] sm:$0xff]
    %v160 = vld [vmem:[#allocation3 + $0x300] sm:$0xff]
    %v161 = vld [vmem:[#allocation3 + $0x308] sm:$0xff]
    %v162 = vld [vmem:[#allocation3 + $0x310] sm:$0xff]
    %v163 = vld [vmem:[#allocation3 + $0x318] sm:$0xff]
    %v164 = vld [vmem:[#allocation3 + $0x320] sm:$0xff]
    %v165 = vld [vmem:[#allocation3 + $0x328] sm:$0xff]
    %v166 = vld [vmem:[#allocation3 + $0x330] sm:$0xff]
    %v167 = vld [vmem:[#allocation3 + $0x338] sm:$0xff]
    %v168 = vld [vmem:[#allocation3 + $0x340] sm:$0xff]
    %v169 = vld [vmem:[#allocation3 + $0x348] sm:$0xff]
    %v170 = vld [vmem:[#allocation3 + $0x350] sm:$0xff]
    %v171 = vld [vmem:[#allocation3 + $0x358] sm:$0xff]
    %v172 = vld [vmem:[#allocation3 + $0x360] sm:$0xff]
    %v173 = vld [vmem:[#allocation3 + $0x368] sm:$0xff]
    %v174 = vld [vmem:[#allocation3 + $0x370] sm:$0xff]
    %v175 = vld [vmem:[#allocation3 + $0x378] sm:$0xff]
    %v176 = vld [vmem:[#allocation3 + $0x380] sm:$0xff]
    %v177 = vld [vmem:[#allocation3 + $0x388] sm:$0xff]
    %v178 = vld [vmem:[#allocation3 + $0x390] sm:$0xff]
    %v179 = vld [vmem:[#allocation3 + $0x398] sm:$0xff]
    %v180 = vld [vmem:[#allocation3 + $0x3a0] sm:$0xff]
    %v181 = vld [vmem:[#allocation3 + $0x3a8] sm:$0xff]
    %v182 = vld [vmem:[#allocation3 + $0x3b0] sm:$0xff]
    %v183 = vld [vmem:[#allocation3 + $0x3b8] sm:$0xff]
    %v184 = vld [vmem:[#allocation3 + $0x3c0] sm:$0xff]
    %v185 = vld [vmem:[#allocation3 + $0x3c8] sm:$0xff]
    %v186 = vld [vmem:[#allocation3 + $0x3d0] sm:$0xff]
    %v187 = vld [vmem:[#allocation3 + $0x3d8] sm:$0xff]
    %v188 = vld [vmem:[#allocation3 + $0x3e0] sm:$0xff]
    %v189 = vld [vmem:[#allocation3 + $0x3e8] sm:$0xff]
    %v190 = vld [vmem:[#allocation3 + $0x3f0] sm:$0xff]
    %v191 = vld [vmem:[#allocation3 + $0x3f8] sm:$0xff]
    %v192 = vld [vmem:[#allocation3 + $0x400] sm:$0xff]
    %v193 = vld [vmem:[#allocation3 + $0x408] sm:$0xff]
    %v194 = vld [vmem:[#allocation3 + $0x410] sm:$0xff]
    %v195 = vld [vmem:[#allocation3 + $0x418] sm:$0xff]
    %v196 = vld [vmem:[#allocation3 + $0x420] sm:$0xff]
    %v197 = vld [vmem:[#allocation3 + $0x428] sm:$0xff]
    %v198 = vld [vmem:[#allocation3 + $0x430] sm:$0xff]
    %v199 = vld [vmem:[#allocation3 + $0x438] sm:$0xff]
    %200 = vmatprep.subr.mxu0 0.0
    %201 = vmatpush1.msra.mxu0 %v32
    %202 = vmatprep.subr.mxu0 0.0
    %203 = vmatpush1.msra.mxu0 %v33
    %204 = vmatprep.subr.mxu0 0.0
    %205 = vmatpush1.msra.mxu0 %v34
    %206 = vmatprep.subr.mxu0 0.0
    %207 = vmatpush1.msra.mxu0 %v35
    %208 = vmatprep.subr.mxu0 0.0
    %209 = vmatpush1.msra.mxu0 %v36
    %210 = vmatprep.subr.mxu0 0.0
    %211 = vmatpush1.msra.mxu0 %v37
    %212 = vmatprep.subr.mxu0 0.0
    %213 = vmatpush1.msra.mxu0 %v38
    %214 = vmatprep.subr.mxu0 0.0
    %215 = vmatpush1.msra.mxu0 %v39
    %216 = vmatprep.subr.mxu0 0.0
    %217 = vmatpush1.msra.mxu0 %v40
    %218 = vmatprep.subr.mxu0 0.0
    %219 = vmatpush1.msra.mxu0 %v41
    %220 = vmatprep.subr.mxu0 0.0
    %221 = vmatpush1.msra.mxu0 %v42
    %222 = vmatprep.subr.mxu0 0.0
    %223 = vmatpush1.msra.mxu0 %v43
    %224 = vmatprep.subr.mxu0 0.0
    %225 = vmatpush1.msra.mxu0 %v44
    %226 = vmatprep.subr.mxu0 0.0
    %227 = vmatpush1.msra.mxu0 %v45
    %228 = vmatprep.subr.mxu0 0.0
    %229 = vmatpush1.msra.mxu0 %v46
    %230 = vmatprep.subr.mxu0 0.0
    %231 = vmatpush1.msra.mxu0 %v47
    %232 = vmatprep.subr.mxu0 0.0
    %233 = vmatpush1.msra.mxu0 %v48
    %234 = vmatprep.subr.mxu0 0.0
    %235 = vmatpush1.msra.mxu0 %v49
    %236 = vmatprep.subr.mxu0 0.0
    %237 = vmatpush1.msra.mxu0 %v50
    %238 = vmatprep.subr.mxu0 0.0
    %239 = vmatpush1.msra.mxu0 %v51
    %240 = vmatprep.subr.mxu0 0.0
    %241 = vmatpush1.msra.mxu0 %v52
    %242 = vmatprep.subr.mxu0 0.0
    %243 = vmatpush1.msra.mxu0 %v53
    %244 = vmatprep.subr.mxu0 0.0
    %245 = vmatpush1.msra.mxu0 %v54
    %246 = vmatprep.subr.mxu0 0.0
    %247 = vmatpush1.msra.mxu0 %v55
    %248 = vmatprep.subr.mxu0 0.0
    %249 = vmatpush1.msra.mxu0 %v56
    %250 = vmatprep.subr.mxu0 0.0
    %251 = vmatpush1.msra.mxu0 %v57
    %252 = vmatprep.subr.mxu0 0.0
    %253 = vmatpush1.msra.mxu0 %v58
    %254 = vmatprep.subr.mxu0 0.0
    %255 = vmatpush1.msra.mxu0 %v59
    %256 = vmatprep.subr.mxu0 0.0
    %257 = vmatpush1.msra.mxu0 %v60
    %258 = vmatprep.subr.mxu0 0.0
    %259 = vmatpush1.msra.mxu0 %v61
    %260 = vmatprep.subr.mxu0 0.0
    %261 = vmatpush1.msra.mxu0 %v62
    %262 = vmatprep.subr.mxu0 0.0
    %263 = vmatpush1.msra.mxu0 %v63
    %264 = vmatprep.mubr.f32.mxu0 %v65
    %265 = vmatmul.mubr.f32.gmra.mrb[0].mxu0 %v64
    %v266 = vpop.f32.mrb[0].mxu0
    %v267 = vadd.f32 0.0, %v266
    %v268 = vpop.f32.mrb[0].mxu0
    %269 = vmatprep.mubr.f32.mxu0 %v67
    %270 = vmatmul.mubr.f32.gmra.mrb[0].mxu0 %v66
    %v271 = vpop.f32.mrb[0].mxu0
    %v272 = vadd.f32 0.0, %v271
    %v273 = vpop.f32.mrb[0].mxu0
    %274 = vmatprep.mubr.f32.mxu0 %v69
    %275 = vmatmul.mubr.f32.gmra.mrb[0].mxu0 %v68
    %v276 = vpop.f32.mrb[0].mxu0
    %v277 = vadd.f32 0.0, %v276
    %v278 = vpop.f32.mrb[0].mxu0
    %279 = vmatprep.mubr.f32.mxu0 %v71
    %280 = vmatmul.mubr.f32.gmra.mrb[0].mxu0 %v70
    %v281 = vpop.f32.mrb[0].mxu0
    %v282 = vadd.f32 0.0, %v281
    %v283 = vpop.f32.mrb[0].mxu0
    %284 = vmatprep.mubr.f32.mxu0 %v73
    %285 = vmatmul.mubr.f32.gmra.mrb[0].mxu0 %v72
    %v286 = vpop.f32.mrb[0].mxu0
    %v287 = vadd.f32 0.0, %v286
    %v288 = vpop.f32.mrb[0].mxu0
    %289 = vmatprep.mubr.f32.mxu0 %v75
    %290 = vmatmul.mubr.f32.gmra.mrb[0].mxu0 %v74
    %v291 = vpop.f32.mrb[0].mxu0
    %v292 = vadd.f32 0.0, %v291
    %v293 = vpop.f32.mrb[0].mxu0
    %294 = vmatprep.mubr.f32.mxu0 %v77
    %295 = vmatmul.mubr.f32.gmra.mrb[0].mxu0 %v76
    %v296 = vpop.f32.mrb[0].mxu0
    %v297 = vadd.f32 0.0, %v296
    %v298 = vpop.f32.mrb[0].mxu0
    %299 = vmatprep.mubr.f32.mxu0 %v79
    %300 = vmatmul.mubr.f32.gmra.mrb[0].mxu0 %v78
    %v301 = vpop.f32.mrb[0].mxu0
    %v302 = vadd.f32 0.0, %v301
    %v303 = vpop.f32.mrb[0].mxu0
    %304 = vmatprep.mubr.f32.mxu0 %v81
    %305 = vmatmul.mubr.f32.gmra.mrb[0].mxu0 %v80
    %v306 = vpop.f32.mrb[0].mxu0
    %v307 = vadd.f32 0.0, %v306
    %v308 = vpop.f32.mrb[0].mxu0
    %309 = vmatprep.mubr.f32.mxu0 %v83
    %310 = vmatmul.mubr.f32.gmra.mrb[0].mxu0 %v82
    %v311 = vpop.f32.mrb[0].mxu0
    %v312 = vadd.f32 0.0, %v311
    %v313 = vpop.f32.mrb[0].mxu0
    %314 = vmatprep.mubr.f32.mxu0 %v85
    %315 = vmatmul.mubr.f32.gmra.mrb[0].mxu0 %v84
    %v316 = vpop.f32.mrb[0].mxu0
    %v317 = vadd.f32 0.0, %v316
    %v318 = vpop.f32.mrb[0].mxu0
    %319 = vmatprep.mubr.f32.mxu0 %v87
    %320 = vmatmul.mubr.f32.gmra.mrb[0].mxu0 %v86
    %v321 = vpop.f32.mrb[0].mxu0
    %v322 = vadd.f32 0.0, %v321
    %v323 = vpop.f32.mrb[0].mxu0
    %324 = vmatprep.mubr.f32.mxu0 %v89
    %325 = vmatmul.mubr.f32.gmra.mrb[0].mxu0 %v88
    %v326 = vpop.f32.mrb[0].mxu0
    %v327 = vadd.f32 0.0, %v326
    %v328 = vpop.f32.mrb[0].mxu0
    %329 = vmatprep.mubr.f32.mxu0 %v91
    %330 = vmatmul.mubr.f32.gmra.mrb[0].mxu0 %v90
    %v331 = vpop.f32.mrb[0].mxu0
    %v332 = vadd.f32 0.0, %v331
    %v333 = vpop.f32.mrb[0].mxu0
    %334 = vmatprep.mubr.f32.mxu0 %v93
    %335 = vmatmul.mubr.f32.gmra.mrb[0].mxu0 %v92
    %v336 = vpop.f32.mrb[0].mxu0
    %v337 = vadd.f32 0.0, %v336
    %v338 = vpop.f32.mrb[0].mxu0
    %339 = vmatprep.mubr.f32.mxu0 %v95
    %340 = vmatmul.mubr.f32.gmra.mrb[0].mxu0 %v94
    %v341 = vpop.f32.mrb[0].mxu0
    %v342 = vadd.f32 0.0, %v341
    %v343 = vpop.f32.mrb[0].mxu0
    %344 = vmatprep.mubr.f32.mxu0 %v97
    %345 = vmatmul.mubr.f32.gmra.mrb[0].mxu0 %v96
    %v346 = vpop.f32.mrb[0].mxu0
    %v347 = vadd.f32 0.0, %v346
    %v348 = vpop.f32.mrb[0].mxu0
    %349 = vmatprep.mubr.f32.mxu0 %v99
    %350 = vmatmul.mubr.f32.gmra.mrb[0].mxu0 %v98
    %v351 = vpop.f32.mrb[0].mxu0
    %v352 = vadd.f32 0.0, %v351
    %v353 = vpop.f32.mrb[0].mxu0
    %354 = vmatprep.mubr.f32.mxu0 %v101
    %355 = vmatmul.mubr.f32.gmra.mrb[0].mxu0 %v100
    %v356 = vpop.f32.mrb[0].mxu0
    %v357 = vadd.f32 0.0, %v356
    %v358 = vpop.f32.mrb[0].mxu0
    %359 = vmatprep.mubr.f32.mxu0 %v103
    %360 = vmatmul.mubr.f32.gmra.mrb[0].mxu0 %v102
    %v361 = vpop.f32.mrb[0].mxu0
    %v362 = vadd.f32 0.0, %v361
    %v363 = vpop.f32.mrb[0].mxu0
    %364 = vmatprep.mubr.f32.mxu0 %v105
    %365 = vmatmul.mubr.f32.gmra.mrb[0].mxu0 %v104
    %v366 = vpop.f32.mrb[0].mxu0
    %v367 = vadd.f32 0.0, %v366
    %v368 = vpop.f32.mrb[0].mxu0
    %369 = vmatprep.mubr.f32.mxu0 %v107
    %370 = vmatmul.mubr.f32.gmra.mrb[0].mxu0 %v106
    %v371 = vpop.f32.mrb[0].mxu0
    %v372 = vadd.f32 0.0, %v371
    %v373 = vpop.f32.mrb[0].mxu0
    %374 = vmatprep.mubr.f32.mxu0 %v109
    %375 = vmatmul.mubr.f32.gmra.mrb[0].mxu0 %v108
    %v376 = vpop.f32.mrb[0].mxu0
    %v377 = vadd.f32 0.0, %v376
    %v378 = vpop.f32.mrb[0].mxu0
    %379 = vmatprep.mubr.f32.mxu0 %v111
    %380 = vmatmul.mubr.f32.gmra.mrb[0].mxu0 %v110
    %v381 = vpop.f32.mrb[0].mxu0
    %v382 = vadd.f32 0.0, %v381
    %v383 = vpop.f32.mrb[0].mxu0
    %384 = vmatprep.mubr.f32.mxu0 %v113
    %385 = vmatmul.mubr.f32.gmra.mrb[0].mxu0 %v112
    %v386 = vpop.f32.mrb[0].mxu0
    %v387 = vadd.f32 0.0, %v386
    %v388 = vpop.f32.mrb[0].mxu0
    %389 = vmatprep.mubr.f32.mxu0 %v115
    %390 = vmatmul.mubr.f32.gmra.mrb[0].mxu0 %v114
    %v391 = vpop.f32.mrb[0].mxu0
    %v392 = vadd.f32 0.0, %v391
    %v393 = vpop.f32.mrb[0].mxu0
    %394 = vmatprep.mubr.f32.mxu0 %v117
    %395 = vmatmul.mubr.f32.gmra.mrb[0].mxu0 %v116
    %v396 = vpop.f32.mrb[0].mxu0
    %v397 = vadd.f32 0.0, %v396
    %v398 = vpop.f32.mrb[0].mxu0
    %399 = vmatprep.mubr.f32.mxu0 %v119
    %400 = vmatmul.mubr.f32.gmra.mrb[0].mxu0 %v118
    %v401 = vpop.f32.mrb[0].mxu0
    %v402 = vadd.f32 0.0, %v401
    %v403 = vpop.f32.mrb[0].mxu0
    %404 = vmatprep.mubr.f32.mxu0 %v121
    %405 = vmatmul.mubr.f32.gmra.mrb[0].mxu0 %v120
    %v406 = vpop.f32.mrb[0].mxu0
    %v407 = vadd.f32 0.0, %v406
    %v408 = vpop.f32.mrb[0].mxu0
    %409 = vmatprep.mubr.f32.mxu0 %v123
    %410 = vmatmul.mubr.f32.gmra.mrb[0].mxu0 %v122
    %v411 = vpop.f32.mrb[0].mxu0
    %v412 = vadd.f32 0.0, %v411
    %v413 = vpop.f32.mrb[0].mxu0
    %414 = vmatprep.mubr.f32.mxu0 %v125
    %415 = vmatmul.mubr.f32.gmra.mrb[0].mxu0 %v124
    %v416 = vpop.f32.mrb[0].mxu0
    %v417 = vadd.f32 0.0, %v416
    %v418 = vpop.f32.mrb[0].mxu0
    %419 = vmatprep.mubr.f32.mxu0 %v127
    %420 = vmatmul.mubr.f32.gmra.mrb[0].mxu0 %v126
    %v421 = vpop.f32.mrb[0].mxu0
    %v422 = vadd.f32 0.0, %v421
    %v423 = vpop.f32.mrb[0].mxu0
    %424 = vmatprep.mubr.f32.mxu0 %v129
    %425 = vmatmul.mubr.f32.gmra.mrb[0].mxu0 %v128
    %v426 = vpop.f32.mrb[0].mxu0
    %v427 = vadd.f32 0.0, %v426
    %v428 = vpop.f32.mrb[0].mxu0
    %429 = vmatprep.mubr.f32.mxu0 %v131
    %430 = vmatmul.mubr.f32.gmra.mrb[0].mxu0 %v130
    %v431 = vpop.f32.mrb[0].mxu0
    %v432 = vadd.f32 0.0, %v431
    %v433 = vpop.f32.mrb[0].mxu0
    %434 = vmatprep.mubr.f32.mxu0 %v133
    %435 = vmatmul.mubr.f32.gmra.mrb[0].mxu0 %v132
    %v436 = vpop.f32.mrb[0].mxu0
    %v437 = vadd.f32 0.0, %v436
    %v438 = vpop.f32.mrb[0].mxu0
    %439 = vmatprep.mubr.f32.mxu0 %v135
    %440 = vmatmul.mubr.f32.gmra.mrb[0].mxu0 %v134
    %v441 = vpop.f32.mrb[0].mxu0
    %v442 = vadd.f32 0.0, %v441
    %v443 = vpop.f32.mrb[0].mxu0
    %444 = vmatprep.mubr.f32.mxu0 %v137
    %445 = vmatmul.mubr.f32.gmra.mrb[0].mxu0 %v136
    %v446 = vpop.f32.mrb[0].mxu0
    %v447 = vadd.f32 0.0, %v446
    %v448 = vpop.f32.mrb[0].mxu0
    %449 = vmatprep.mubr.f32.mxu0 %v139
    %450 = vmatmul.mubr.f32.gmra.mrb[0].mxu0 %v138
    %v451 = vpop.f32.mrb[0].mxu0
    %v452 = vadd.f32 0.0, %v451
    %v453 = vpop.f32.mrb[0].mxu0
    %454 = vmatprep.mubr.f32.mxu0 %v141
    %455 = vmatmul.mubr.f32.gmra.mrb[0].mxu0 %v140
    %v456 = vpop.f32.mrb[0].mxu0
    %v457 = vadd.f32 0.0, %v456
    %v458 = vpop.f32.mrb[0].mxu0
    %459 = vmatprep.mubr.f32.mxu0 %v143
    %460 = vmatmul.mubr.f32.gmra.mrb[0].mxu0 %v142
    %v461 = vpop.f32.mrb[0].mxu0
    %v462 = vadd.f32 0.0, %v461
    %v463 = vpop.f32.mrb[0].mxu0
    %464 = vmatprep.mubr.f32.mxu0 %v145
    %465 = vmatmul.mubr.f32.gmra.mrb[0].mxu0 %v144
    %v466 = vpop.f32.mrb[0].mxu0
    %v467 = vadd.f32 0.0, %v466
    %v468 = vpop.f32.mrb[0].mxu0
    %469 = vmatprep.mubr.f32.mxu0 %v147
    %470 = vmatmul.mubr.f32.gmra.mrb[0].mxu0 %v146
    %v471 = vpop.f32.mrb[0].mxu0
    %v472 = vadd.f32 0.0, %v471
    %v473 = vpop.f32.mrb[0].mxu0
    %474 = vmatprep.mubr.f32.mxu0 %v149
    %475 = vmatmul.mubr.f32.gmra.mrb[0].mxu0 %v148
    %v476 = vpop.f32.mrb[0].mxu0
    %v477 = vadd.f32 0.0, %v476
    %v478 = vpop.f32.mrb[0].mxu0
    %479 = vmatprep.mubr.f32.mxu0 %v151
    %480 = vmatmul.mubr.f32.gmra.mrb[0].mxu0 %v150
    %v481 = vpop.f32.mrb[0].mxu0
    %v482 = vadd.f32 0.0, %v481
    %v483 = vpop.f32.mrb[0].mxu0
    %484 = vmatprep.mubr.f32.mxu0 %v153
    %485 = vmatmul.mubr.f32.gmra.mrb[0].mxu0 %v152
    %v486 = vpop.f32.mrb[0].mxu0
    %v487 = vadd.f32 0.0, %v486
    %v488 = vpop.f32.mrb[0].mxu0
    %489 = vmatprep.mubr.f32.mxu0 %v155
    %490 = vmatmul.mubr.f32.gmra.mrb[0].mxu0 %v154
    %v491 = vpop.f32.mrb[0].mxu0
    %v492 = vadd.f32 0.0, %v491
    %v493 = vpop.f32.mrb[0].mxu0
    %494 = vmatprep.mubr.f32.mxu0 %v157
    %495 = vmatmul.mubr.f32.gmra.mrb[0].mxu0 %v156
    %v496 = vpop.f32.mrb[0].mxu0
    %v497 = vadd.f32 0.0, %v496
    %v498 = vpop.f32.mrb[0].mxu0
    %499 = vmatprep.mubr.f32.mxu0 %v159
    %500 = vmatmul.mubr.f32.gmra.mrb[0].mxu0 %v158
    %v501 = vpop.f32.mrb[0].mxu0
    %v502 = vadd.f32 0.0, %v501
    %v503 = vpop.f32.mrb[0].mxu0
    %504 = vmatprep.mubr.f32.mxu0 %v161
    %505 = vmatmul.mubr.f32.gmra.mrb[0].mxu0 %v160
    %v506 = vpop.f32.mrb[0].mxu0
    %v507 = vadd.f32 0.0, %v506
    %v508 = vpop.f32.mrb[0].mxu0
    %509 = vmatprep.mubr.f32.mxu0 %v163
    %510 = vmatmul.mubr.f32.gmra.mrb[0].mxu0 %v162
    %v511 = vpop.f32.mrb[0].mxu0
    %v512 = vadd.f32 0.0, %v511
    %v513 = vpop.f32.mrb[0].mxu0
    %514 = vmatprep.mubr.f32.mxu0 %v165
    %515 = vmatmul.mubr.f32.gmra.mrb[0].mxu0 %v164
    %v516 = vpop.f32.mrb[0].mxu0
    %v517 = vadd.f32 0.0, %v516
    %v518 = vpop.f32.mrb[0].mxu0
    %519 = vmatprep.mubr.f32.mxu0 %v167
    %520 = vmatmul.mubr.f32.gmra.mrb[0].mxu0 %v166
    %v521 = vpop.f32.mrb[0].mxu0
    %v522 = vadd.f32 0.0, %v521
    %v523 = vpop.f32.mrb[0].mxu0
    %524 = vmatprep.mubr.f32.mxu0 %v169
    %525 = vmatmul.mubr.f32.gmra.mrb[0].mxu0 %v168
    %v526 = vpop.f32.mrb[0].mxu0
    %v527 = vadd.f32 0.0, %v526
    %v528 = vpop.f32.mrb[0].mxu0
    %529 = vmatprep.mubr.f32.mxu0 %v171
    %530 = vmatmul.mubr.f32.gmra.mrb[0].mxu0 %v170
    %v531 = vpop.f32.mrb[0].mxu0
    %v532 = vadd.f32 0.0, %v531
    %v533 = vpop.f32.mrb[0].mxu0
    %534 = vmatprep.mubr.f32.mxu0 %v173
    %535 = vmatmul.mubr.f32.gmra.mrb[0].mxu0 %v172
    %v536 = vpop.f32.mrb[0].mxu0
    %v537 = vadd.f32 0.0, %v536
    %v538 = vpop.f32.mrb[0].mxu0
    %539 = vmatprep.mubr.f32.mxu0 %v175
    %540 = vmatmul.mubr.f32.gmra.mrb[0].mxu0 %v174
    %v541 = vpop.f32.mrb[0].mxu0
    %v542 = vadd.f32 0.0, %v541
    %v543 = vpop.f32.mrb[0].mxu0
    %544 = vmatprep.mubr.f32.mxu0 %v177
    %545 = vmatmul.mubr.f32.gmra.mrb[0].mxu0 %v176
    %v546 = vpop.f32.mrb[0].mxu0
    %v547 = vadd.f32 0.0, %v546
    %v548 = vpop.f32.mrb[0].mxu0
    %549 = vmatprep.mubr.f32.mxu0 %v179
    %550 = vmatmul.mubr.f32.gmra.mrb[0].mxu0 %v178
    %v551 = vpop.f32.mrb[0].mxu0
    %v552 = vadd.f32 0.0, %v551
    %v553 = vpop.f32.mrb[0].mxu0
    %554 = vmatprep.mubr.f32.mxu0 %v181
    %555 = vmatmul.mubr.f32.gmra.mrb[0].mxu0 %v180
    %v556 = vpop.f32.mrb[0].mxu0
    %v557 = vadd.f32 0.0, %v556
    %v558 = vpop.f32.mrb[0].mxu0
    %559 = vmatprep.mubr.f32.mxu0 %v183
    %560 = vmatmul.mubr.f32.gmra.mrb[0].mxu0 %v182
    %v561 = vpop.f32.mrb[0].mxu0
    %v562 = vadd.f32 0.0, %v561
    %v563 = vpop.f32.mrb[0].mxu0
    %564 = vmatprep.mubr.f32.mxu0 %v185
    %565 = vmatmul.mubr.f32.gmra.mrb[0].mxu0 %v184
    %v566 = vpop.f32.mrb[0].mxu0
    %v567 = vadd.f32 0.0, %v566
    %v568 = vpop.f32.mrb[0].mxu0
    %569 = vmatprep.mubr.f32.mxu0 %v187
    %570 = vmatmul.mubr.f32.gmra.mrb[0].mxu0 %v186
    %v571 = vpop.f32.mrb[0].mxu0
    %v572 = vadd.f32 0.0, %v571
    %v573 = vpop.f32.mrb[0].mxu0
    %574 = vmatprep.mubr.f32.mxu0 %v189
    %575 = vmatmul.mubr.f32.gmra.mrb[0].mxu0 %v188
    %v576 = vpop.f32.mrb[0].mxu0
    %v577 = vadd.f32 0.0, %v576
    %v578 = vpop.f32.mrb[0].mxu0
    %579 = vmatprep.mubr.f32.mxu0 %v191
    %580 = vmatmul.mubr.f32.gmra.mrb[0].mxu0 %v190
    %v581 = vpop.f32.mrb[0].mxu0
    %v582 = vadd.f32 0.0, %v581
    %v583 = vpop.f32.mrb[0].mxu0
    %584 = vmatprep.mubr.f32.mxu0 %v193
    %585 = vmatmul.mubr.f32.gmra.mrb[0].mxu0 %v192
    %v586 = vpop.f32.mrb[0].mxu0
    %v587 = vadd.f32 0.0, %v586
    %v588 = vpop.f32.mrb[0].mxu0
    %589 = vmatprep.mubr.f32.mxu0 %v195
    %590 = vmatmul.mubr.f32.gmra.mrb[0].mxu0 %v194
    %v591 = vpop.f32.mrb[0].mxu0
    %v592 = vadd.f32 0.0, %v591
    %v593 = vpop.f32.mrb[0].mxu0
    %594 = vmatprep.mubr.f32.mxu0 %v197
    %595 = vmatmul.mubr.f32.gmra.mrb[0].mxu0 %v196
    %v596 = vpop.f32.mrb[0].mxu0
    %v597 = vadd.f32 0.0, %v596
    %v598 = vpop.f32.mrb[0].mxu0
    %599 = vmatprep.mubr.f32.mxu0 %v199
    %600 = vmatmul.mubr.f32.gmra.mrb[0].mxu0 %v198
    %v601 = vpop.f32.mrb[0].mxu0
    %v602 = vadd.f32 0.0, %v601
    %v603 = vpop.f32.mrb[0].mxu0
    %604 = vdwg.mxu0
    %605 = vst [vmem:[#allocation6] sm:$0xff] %v267
    %606 = vst [vmem:[#allocation6 + $0x8] sm:$0xff] %v272
    %607 = vst [vmem:[#allocation6 + $0x10] sm:$0xff] %v277
    %608 = vst [vmem:[#allocation6 + $0x18] sm:$0xff] %v282
    %609 = vst [vmem:[#allocation6 + $0x20] sm:$0xff] %v287
    %610 = vst [vmem:[#allocation6 + $0x28] sm:$0xff] %v292
    %611 = vst [vmem:[#allocation6 + $0x30] sm:$0xff] %v352
    %612 = vst [vmem:[#allocation6 + $0x38] sm:$0xff] %v357
    %613 = vst [vmem:[#allocation6 + $0x40] sm:$0xff] %v362
    %614 = vst [vmem:[#allocation6 + $0x48] sm:$0xff] %v367
    %615 = vst [vmem:[#allocation6 + $0x50] sm:$0xff] %v372
    %616 = vst [vmem:[#allocation6 + $0x58] sm:$0xff] %v377
    %v617 = vmul.f32 %v267, %v267
    %v618 = vmul.f32 %v272, %v272
    %v619 = vmul.f32 %v277, %v277
    %v620 = vmul.f32 %v282, %v282
    %v621 = vmul.f32 %v287, %v287
    %v622 = vmul.f32 %v292, %v292
    %v623 = vmul.f32 %v297, %v297
    %v624 = vmul.f32 %v302, %v302
    %v625 = vmul.f32 %v307, %v307
    %v626 = vmul.f32 %v312, %v312
    %v627 = vmul.f32 %v317, %v317
    %v628 = vmul.f32 %v322, %v322
    %v629 = vmul.f32 %v327, %v327
    %v630 = vmul.f32 %v332, %v332
    %v631 = vmul.f32 %v337, %v337
    %v632 = vmul.f32 %v342, %v342
    %v633 = vmul.f32 %v347, %v347
    %v634 = vmul.f32 %v352, %v352
    %v635 = vmul.f32 %v357, %v357
    %v636 = vmul.f32 %v362, %v362
    %v637 = vmul.f32 %v367, %v367
    %v638 = vmul.f32 %v372, %v372
    %v639 = vmul.f32 %v377, %v377
    %v640 = vmul.f32 %v382, %v382
    %v641 = vmul.f32 %v387, %v387
    %v642 = vmul.f32 %v392, %v392
    %v643 = vmul.f32 %v397, %v397
    %v644 = vmul.f32 %v402, %v402
    %v645 = vmul.f32 %v407, %v407
    %v646 = vmul.f32 %v412, %v412
    %v647 = vmul.f32 %v417, %v417
    %v648 = vmul.f32 %v422, %v422
    %v649 = vmul.f32 %v427, %v427
    %v650 = vmul.f32 %v432, %v432
    %v651 = vadd.f32 %v617, %v634
    %v652 = vadd.f32 %v618, %v635
    %v653 = vadd.f32 %v619, %v636
    %v654 = vadd.f32 %v620, %v637
    %v655 = vadd.f32 %v621, %v638
    %v656 = vadd.f32 %v622, %v639
    %v657 = vadd.f32 %v623, %v640
    %v658 = vadd.f32 %v624, %v641
    %v659 = vadd.f32 %v625, %v642
    %v660 = vadd.f32 %v626, %v643
    %v661 = vadd.f32 %v627, %v644
    %v662 = vadd.f32 %v628, %v645
    %v663 = vadd.f32 %v629, %v646
    %v664 = vadd.f32 %v630, %v647
    %v665 = vadd.f32 %v631, %v648
    %v666 = vadd.f32 %v632, %v649
    %v667 = vadd.f32 %v633, %v650
    %v668 = vmul.f32 %v437, %v437
    %v669 = vmul.f32 %v442, %v442
    %v670 = vmul.f32 %v447, %v447
    %v671 = vmul.f32 %v452, %v452
    %v672 = vmul.f32 %v457, %v457
    %v673 = vmul.f32 %v462, %v462
    %v674 = vmul.f32 %v467, %v467
    %v675 = vmul.f32 %v472, %v472
    %v676 = vmul.f32 %v477, %v477
    %v677 = vmul.f32 %v482, %v482
    %v678 = vmul.f32 %v487, %v487
    %v679 = vmul.f32 %v492, %v492
    %v680 = vmul.f32 %v497, %v497
    %v681 = vmul.f32 %v502, %v502
    %v682 = vmul.f32 %v507, %v507
    %v683 = vmul.f32 %v512, %v512
    %v684 = vmul.f32 %v517, %v517
    %v685 = vmul.f32 %v522, %v522
    %v686 = vmul.f32 %v527, %v527
    %v687 = vmul.f32 %v532, %v532
    %v688 = vmul.f32 %v537, %v537
    %v689 = vmul.f32 %v542, %v542
    %v690 = vmul.f32 %v547, %v547
    %v691 = vmul.f32 %v552, %v552
    %v692 = vmul.f32 %v557, %v557
    %v693 = vmul.f32 %v562, %v562
    %v694 = vmul.f32 %v567, %v567
    %v695 = vmul.f32 %v572, %v572
    %v696 = vmul.f32 %v577, %v577
    %v697 = vmul.f32 %v582, %v582
    %v698 = vmul.f32 %v587, %v587
    %v699 = vmul.f32 %v592, %v592
    %v700 = vmul.f32 %v597, %v597
    %v701 = vmul.f32 %v602, %v602
    %v702 = vadd.f32 %v668, %v685
    %v703 = vadd.f32 %v669, %v686
    %v704 = vadd.f32 %v670, %v687
    %v705 = vadd.f32 %v671, %v688
    %v706 = vadd.f32 %v672, %v689
    %v707 = vadd.f32 %v673, %v690
    %v708 = vadd.f32 %v674, %v691
    %v709 = vadd.f32 %v675, %v692
    %v710 = vadd.f32 %v676, %v693
    %v711 = vadd.f32 %v677, %v694
    %v712 = vadd.f32 %v678, %v695
    %v713 = vadd.f32 %v679, %v696
    %v714 = vadd.f32 %v680, %v697
    %v715 = vadd.f32 %v681, %v698
    %v716 = vadd.f32 %v682, %v699
    %v717 = vadd.f32 %v683, %v700
    %v718 = vadd.f32 %v684, %v701
    %v719 = vld [vmem:[%s2] sm:$0xff]
    %v720 = vld [vmem:[%s2 + $0x8] sm:$0xff]
    %v721 = vld [vmem:[%s2 + $0x10] sm:$0xff]
    %v722 = vld [vmem:[%s2 + $0x18] sm:$0xff]
    %v723 = vld [vmem:[%s2 + $0x20] sm:$0xff]
    %v724 = vld [vmem:[%s2 + $0x28] sm:$0xff]
    %v725 = vld [vmem:[%s2 + $0x30] sm:$0xff]
    %v726 = vld [vmem:[%s2 + $0x38] sm:$0xff]
    %v727 = vld [vmem:[%s2 + $0x40] sm:$0xff]
    %v728 = vld [vmem:[%s2 + $0x48] sm:$0xff]
    %v729 = vld [vmem:[%s2 + $0x50] sm:$0xff]
    %v730 = vld [vmem:[%s2 + $0x58] sm:$0xff]
    %v731 = vld [vmem:[%s2 + $0x60] sm:$0xff]
    %v732 = vld [vmem:[%s2 + $0x68] sm:$0xff]
    %v733 = vld [vmem:[%s2 + $0x70] sm:$0xff]
    %v734 = vld [vmem:[%s2 + $0x78] sm:$0xff]
    %v735 = vld [vmem:[%s2 + $0x80] sm:$0xff]
    %v736 = vld [vmem:[%s2 + $0x88] sm:$0xff]
    %v737 = vld [vmem:[%s2 + $0x90] sm:$0xff]
    %v738 = vld [vmem:[%s2 + $0x98] sm:$0xff]
    %v739 = vld [vmem:[%s2 + $0xa0] sm:$0xff]
    %v740 = vld [vmem:[%s2 + $0xa8] sm:$0xff]
    %v741 = vld [vmem:[%s2 + $0xb0] sm:$0xff]
    %v742 = vld [vmem:[%s2 + $0xb8] sm:$0xff]
    %v743 = vld [vmem:[%s2 + $0xc0] sm:$0xff]
    %v744 = vld [vmem:[%s2 + $0xc8] sm:$0xff]
    %v745 = vld [vmem:[%s2 + $0xd0] sm:$0xff]
    %v746 = vld [vmem:[%s2 + $0xd8] sm:$0xff]
    %v747 = vld [vmem:[%s2 + $0xe0] sm:$0xff]
    %v748 = vld [vmem:[%s2 + $0xe8] sm:$0xff]
    %v749 = vld [vmem:[%s2 + $0xf0] sm:$0xff]
    %v750 = vld [vmem:[%s2 + $0xf8] sm:$0xff]
    %v751 = vld [vmem:[%s2 + $0x100] sm:$0xff]
    %v752 = vld [vmem:[%s2 + $0x108] sm:$0xff]
    %v753 = vld [vmem:[%s2 + $0x110] sm:$0xff]
    %v754 = vld [vmem:[%s2 + $0x118] sm:$0xff]
    %v755 = vld [vmem:[%s2 + $0x120] sm:$0xff]
    %v756 = vld [vmem:[%s2 + $0x128] sm:$0xff]
    %v757 = vld [vmem:[%s2 + $0x130] sm:$0xff]
    %v758 = vld [vmem:[%s2 + $0x138] sm:$0xff]
    %v759 = vld [vmem:[%s2 + $0x140] sm:$0xff]
    %v760 = vld [vmem:[%s2 + $0x148] sm:$0xff]
    %v761 = vld [vmem:[%s2 + $0x150] sm:$0xff]
    %v762 = vld [vmem:[%s2 + $0x158] sm:$0xff]
    %v763 = vld [vmem:[%s2 + $0x160] sm:$0xff]
    %v764 = vld [vmem:[%s2 + $0x168] sm:$0xff]
    %v765 = vld [vmem:[%s2 + $0x170] sm:$0xff]
    %v766 = vld [vmem:[%s2 + $0x178] sm:$0xff]
    %v767 = vld [vmem:[%s2 + $0x180] sm:$0xff]
    %v768 = vld [vmem:[%s2 + $0x188] sm:$0xff]
    %v769 = vld [vmem:[%s2 + $0x190] sm:$0xff]
    %v770 = vld [vmem:[%s2 + $0x198] sm:$0xff]
    %v771 = vld [vmem:[%s2 + $0x1a0] sm:$0xff]
    %v772 = vld [vmem:[%s2 + $0x1a8] sm:$0xff]
    %vm773 = vcmask 64512
    %v775 = vsel %vm773, %v720, 0
    %v778 = vsel %vm773, %v722, 0
    %v781 = vsel %vm773, %v724, 0
    %v784 = vsel %vm773, %v726, 0
    %v787 = vsel %vm773, %v728, 0
    %v790 = vsel %vm773, %v730, 0
    %v793 = vsel %vm773, %v732, 0
    %v796 = vsel %vm773, %v734, 0
    %v799 = vsel %vm773, %v736, 0
    %v802 = vsel %vm773, %v738, 0
    %v805 = vsel %vm773, %v740, 0
    %v808 = vsel %vm773, %v742, 0
    %v811 = vsel %vm773, %v744, 0
    %v814 = vsel %vm773, %v746, 0
    %v817 = vsel %vm773, %v748, 0
    %v820 = vsel %vm773, %v750, 0
    %v823 = vsel %vm773, %v752, 0
    %v826 = vsel %vm773, %v754, 0
    %v829 = vsel %vm773, %v756, 0
    %v832 = vsel %vm773, %v758, 0
    %v835 = vsel %vm773, %v760, 0
    %v838 = vsel %vm773, %v762, 0
    %v841 = vsel %vm773, %v764, 0
    %v844 = vsel %vm773, %v766, 0
    %v847 = vsel %vm773, %v768, 0
    %v850 = vsel %vm773, %v770, 0
    %v853 = vsel %vm773, %v772, 0
    %855 = vmatprep.subr.mxu0 %v702
    %856 = vmatpush1.msra.mxu0 %v651
    %857 = vmatprep.subr.mxu0 %v703
    %858 = vmatpush1.msra.mxu0 %v652
    %859 = vmatprep.subr.mxu0 %v704
    %860 = vmatpush1.msra.mxu0 %v653
    %861 = vmatprep.subr.mxu0 %v705
    %862 = vmatpush1.msra.mxu0 %v654
    %863 = vmatprep.subr.mxu0 %v706
    %864 = vmatpush1.msra.mxu0 %v655
    %865 = vmatprep.subr.mxu0 %v707
    %866 = vmatpush1.msra.mxu0 %v656
    %867 = vmatprep.subr.mxu0 %v708
    %868 = vmatpush1.msra.mxu0 %v657
    %869 = vmatprep.subr.mxu0 %v709
    %870 = vmatpush1.msra.mxu0 %v658
    %871 = vmatprep.subr.mxu0 %v710
    %872 = vmatpush1.msra.mxu0 %v659
    %873 = vmatprep.subr.mxu0 %v711
    %874 = vmatpush1.msra.mxu0 %v660
    %875 = vmatprep.subr.mxu0 %v712
    %876 = vmatpush1.msra.mxu0 %v661
    %877 = vmatprep.subr.mxu0 %v713
    %878 = vmatpush1.msra.mxu0 %v662
    %879 = vmatprep.subr.mxu0 %v714
    %880 = vmatpush1.msra.mxu0 %v663
    %881 = vmatprep.subr.mxu0 %v715
    %882 = vmatpush1.msra.mxu0 %v664
    %883 = vmatprep.subr.mxu0 %v716
    %884 = vmatpush1.msra.mxu0 %v665
    %885 = vmatprep.subr.mxu0 %v717
    %886 = vmatpush1.msra.mxu0 %v666
    %887 = vmatprep.subr.mxu0 %v718
    %888 = vmatpush1.msra.mxu0 %v667
    %889 = vmatprep.subr.mxu0 0.0
    %890 = vmatpush1.msra.mxu0 0.0
    %891 = vmatprep.subr.mxu0 0.0
    %892 = vmatpush1.msra.mxu0 0.0
    %893 = vmatprep.subr.mxu0 0.0
    %894 = vmatpush1.msra.mxu0 0.0
    %895 = vmatprep.subr.mxu0 0.0
    %896 = vmatpush1.msra.mxu0 0.0
    %897 = vmatprep.subr.mxu0 0.0
    %898 = vmatpush1.msra.mxu0 0.0
    %899 = vmatprep.subr.mxu0 0.0
    %900 = vmatpush1.msra.mxu0 0.0
    %901 = vmatprep.subr.mxu0 0.0
    %902 = vmatpush1.msra.mxu0 0.0
    %903 = vmatprep.subr.mxu0 0.0
    %904 = vmatpush1.msra.mxu0 0.0
    %905 = vmatprep.subr.mxu0 0.0
    %906 = vmatpush1.msra.mxu0 0.0
    %907 = vmatprep.subr.mxu0 0.0
    %908 = vmatpush1.msra.mxu0 0.0
    %909 = vmatprep.subr.mxu0 0.0
    %910 = vmatpush1.msra.mxu0 0.0
    %911 = vmatprep.subr.mxu0 0.0
    %912 = vmatpush1.msra.mxu0 0.0
    %913 = vmatprep.subr.mxu0 0.0
    %914 = vmatpush1.msra.mxu0 0.0
    %915 = vmatprep.subr.mxu0 0.0
    %916 = vmatpush1.msra.mxu0 0.0
    %917 = vmatprep.subr.mxu0 0.0
    %918 = vmatpush1.msra.mxu0 0.0
    %919 = vmatprep.mubr.f32.mxu0 %v775
    %920 = vmatmul.mubr.f32.gmra.mrb[0].mxu0 %v719
    %v921 = vpop.f32.mrb[0].mxu0
    %v922 = vadd.f32 0.0, %v921
    %v923 = vpop.f32.mrb[0].mxu0
    %v924 = vadd.f32 0.0, %v923
    %925 = vmatprep.mubr.f32.mxu0 %v778
    %926 = vmatmul.mubr.f32.gmra.mrb[0].mxu0 %v721
    %v927 = vpop.f32.mrb[0].mxu0
    %v928 = vadd.f32 0.0, %v927
    %v929 = vpop.f32.mrb[0].mxu0
    %v930 = vadd.f32 0.0, %v929
    %931 = vmatprep.mubr.f32.mxu0 %v781
    %932 = vmatmul.mubr.f32.gmra.mrb[0].mxu0 %v723
    %v933 = vpop.f32.mrb[0].mxu0
    %v934 = vadd.f32 0.0, %v933
    %v935 = vpop.f32.mrb[0].mxu0
    %v936 = vadd.f32 0.0, %v935
    %937 = vmatprep.mubr.f32.mxu0 %v784
    %938 = vmatmul.mubr.f32.gmra.mrb[0].mxu0 %v725
    %v939 = vpop.f32.mrb[0].mxu0
    %v940 = vadd.f32 0.0, %v939
    %v941 = vpop.f32.mrb[0].mxu0
    %v942 = vadd.f32 0.0, %v941
    %943 = vmatprep.mubr.f32.mxu0 %v787
    %944 = vmatmul.mubr.f32.gmra.mrb[0].mxu0 %v727
    %v945 = vpop.f32.mrb[0].mxu0
    %v946 = vadd.f32 0.0, %v945
    %v947 = vpop.f32.mrb[0].mxu0
    %v948 = vadd.f32 0.0, %v947
    %949 = vmatprep.mubr.f32.mxu0 %v790
    %950 = vmatmul.mubr.f32.gmra.mrb[0].mxu0 %v729
    %v951 = vpop.f32.mrb[0].mxu0
    %v952 = vadd.f32 0.0, %v951
    %v953 = vpop.f32.mrb[0].mxu0
    %v954 = vadd.f32 0.0, %v953
    %955 = vmatprep.mubr.f32.mxu0 %v793
    %956 = vmatmul.mubr.f32.gmra.mrb[0].mxu0 %v731
    %v957 = vpop.f32.mrb[0].mxu0
    %v958 = vadd.f32 0.0, %v957
    %v959 = vpop.f32.mrb[0].mxu0
    %v960 = vadd.f32 0.0, %v959
    %961 = vmatprep.mubr.f32.mxu0 %v796
    %962 = vmatmul.mubr.f32.gmra.mrb[0].mxu0 %v733
    %v963 = vpop.f32.mrb[0].mxu0
    %v964 = vadd.f32 0.0, %v963
    %v965 = vpop.f32.mrb[0].mxu0
    %v966 = vadd.f32 0.0, %v965
    %967 = vmatprep.mubr.f32.mxu0 %v799
    %968 = vmatmul.mubr.f32.gmra.mrb[0].mxu0 %v735
    %v969 = vpop.f32.mrb[0].mxu0
    %v970 = vadd.f32 0.0, %v969
    %v971 = vpop.f32.mrb[0].mxu0
    %v972 = vadd.f32 0.0, %v971
    %973 = vmatprep.mubr.f32.mxu0 %v802
    %974 = vmatmul.mubr.f32.gmra.mrb[0].mxu0 %v737
    %v975 = vpop.f32.mrb[0].mxu0
    %v976 = vadd.f32 0.0, %v975
    %v977 = vpop.f32.mrb[0].mxu0
    %v978 = vadd.f32 0.0, %v977
    %979 = vmatprep.mubr.f32.mxu0 %v805
    %980 = vmatmul.mubr.f32.gmra.mrb[0].mxu0 %v739
    %v981 = vpop.f32.mrb[0].mxu0
    %v982 = vadd.f32 0.0, %v981
    %v983 = vpop.f32.mrb[0].mxu0
    %v984 = vadd.f32 0.0, %v983
    %985 = vmatprep.mubr.f32.mxu0 %v808
    %986 = vmatmul.mubr.f32.gmra.mrb[0].mxu0 %v741
    %v987 = vpop.f32.mrb[0].mxu0
    %v988 = vadd.f32 0.0, %v987
    %v989 = vpop.f32.mrb[0].mxu0
    %v990 = vadd.f32 0.0, %v989
    %991 = vmatprep.mubr.f32.mxu0 %v811
    %992 = vmatmul.mubr.f32.gmra.mrb[0].mxu0 %v743
    %v993 = vpop.f32.mrb[0].mxu0
    %v994 = vadd.f32 0.0, %v993
    %v995 = vpop.f32.mrb[0].mxu0
    %v996 = vadd.f32 0.0, %v995
    %997 = vmatprep.mubr.f32.mxu0 %v814
    %998 = vmatmul.mubr.f32.gmra.mrb[0].mxu0 %v745
    %v999 = vpop.f32.mrb[0].mxu0
    %v1000 = vadd.f32 0.0, %v999
    %v1001 = vpop.f32.mrb[0].mxu0
    %v1002 = vadd.f32 0.0, %v1001
    %1003 = vmatprep.mubr.f32.mxu0 %v817
    %1004 = vmatmul.mubr.f32.gmra.mrb[0].mxu0 %v747
    %v1005 = vpop.f32.mrb[0].mxu0
    %v1006 = vadd.f32 0.0, %v1005
    %v1007 = vpop.f32.mrb[0].mxu0
    %v1008 = vadd.f32 0.0, %v1007
    %1009 = vmatprep.mubr.f32.mxu0 %v820
    %1010 = vmatmul.mubr.f32.gmra.mrb[0].mxu0 %v749
    %v1011 = vpop.f32.mrb[0].mxu0
    %v1012 = vadd.f32 0.0, %v1011
    %v1013 = vpop.f32.mrb[0].mxu0
    %v1014 = vadd.f32 0.0, %v1013
    %1015 = vmatprep.mubr.f32.mxu0 %v823
    %1016 = vmatmul.mubr.f32.gmra.mrb[0].mxu0 %v751
    %v1017 = vpop.f32.mrb[0].mxu0
    %v1018 = vadd.f32 0.0, %v1017
    %v1019 = vpop.f32.mrb[0].mxu0
    %v1020 = vadd.f32 0.0, %v1019
    %1021 = vmatprep.mubr.f32.mxu0 %v826
    %1022 = vmatmul.mubr.f32.gmra.mrb[0].mxu0 %v753
    %v1023 = vpop.f32.mrb[0].mxu0
    %v1024 = vadd.f32 0.0, %v1023
    %v1025 = vpop.f32.mrb[0].mxu0
    %v1026 = vadd.f32 0.0, %v1025
    %1027 = vmatprep.mubr.f32.mxu0 %v829
    %1028 = vmatmul.mubr.f32.gmra.mrb[0].mxu0 %v755
    %v1029 = vpop.f32.mrb[0].mxu0
    %v1030 = vadd.f32 0.0, %v1029
    %v1031 = vpop.f32.mrb[0].mxu0
    %v1032 = vadd.f32 0.0, %v1031
    %1033 = vmatprep.mubr.f32.mxu0 %v832
    %1034 = vmatmul.mubr.f32.gmra.mrb[0].mxu0 %v757
    %v1035 = vpop.f32.mrb[0].mxu0
    %v1036 = vadd.f32 0.0, %v1035
    %v1037 = vpop.f32.mrb[0].mxu0
    %v1038 = vadd.f32 0.0, %v1037
    %1039 = vmatprep.mubr.f32.mxu0 %v835
    %1040 = vmatmul.mubr.f32.gmra.mrb[0].mxu0 %v759
    %v1041 = vpop.f32.mrb[0].mxu0
    %v1042 = vadd.f32 0.0, %v1041
    %v1043 = vpop.f32.mrb[0].mxu0
    %v1044 = vadd.f32 0.0, %v1043
    %1045 = vmatprep.mubr.f32.mxu0 %v838
    %1046 = vmatmul.mubr.f32.gmra.mrb[0].mxu0 %v761
    %v1047 = vpop.f32.mrb[0].mxu0
    %v1048 = vadd.f32 0.0, %v1047
    %v1049 = vpop.f32.mrb[0].mxu0
    %v1050 = vadd.f32 0.0, %v1049
    %1051 = vmatprep.mubr.f32.mxu0 %v841
    %1052 = vmatmul.mubr.f32.gmra.mrb[0].mxu0 %v763
    %v1053 = vpop.f32.mrb[0].mxu0
    %v1054 = vadd.f32 0.0, %v1053
    %v1055 = vpop.f32.mrb[0].mxu0
    %v1056 = vadd.f32 0.0, %v1055
    %1057 = vmatprep.mubr.f32.mxu0 %v844
    %1058 = vmatmul.mubr.f32.gmra.mrb[0].mxu0 %v765
    %v1059 = vpop.f32.mrb[0].mxu0
    %v1060 = vadd.f32 0.0, %v1059
    %v1061 = vpop.f32.mrb[0].mxu0
    %v1062 = vadd.f32 0.0, %v1061
    %1063 = vmatprep.mubr.f32.mxu0 %v847
    %1064 = vmatmul.mubr.f32.gmra.mrb[0].mxu0 %v767
    %v1065 = vpop.f32.mrb[0].mxu0
    %v1066 = vadd.f32 0.0, %v1065
    %v1067 = vpop.f32.mrb[0].mxu0
    %v1068 = vadd.f32 0.0, %v1067
    %1069 = vmatprep.mubr.f32.mxu0 %v850
    %1070 = vmatmul.mubr.f32.gmra.mrb[0].mxu0 %v769
    %v1071 = vpop.f32.mrb[0].mxu0
    %v1072 = vadd.f32 0.0, %v1071
    %v1073 = vpop.f32.mrb[0].mxu0
    %v1074 = vadd.f32 0.0, %v1073
    %1075 = vmatprep.mubr.f32.mxu0 %v853
    %1076 = vmatmul.mubr.f32.gmra.mrb[0].mxu0 %v771
    %v1077 = vpop.f32.mrb[0].mxu0
    %v1078 = vadd.f32 0.0, %v1077
    %v1079 = vpop.f32.mrb[0].mxu0
    %v1080 = vadd.f32 0.0, %v1079
    %1081 = vdwg.mxu0
    %1082 = vst [vmem:[#allocation2] sm:$0xff] %v922
    %1083 = vst [vmem:[#allocation2 + $0x8] sm:$0xff] %v924
    %1084 = vst [vmem:[#allocation2 + $0x10] sm:$0xff] %v928
    %1085 = vst [vmem:[#allocation2 + $0x18] sm:$0xff] %v930
    %1086 = vst [vmem:[#allocation2 + $0x20] sm:$0xff] %v934
    %1087 = vst [vmem:[#allocation2 + $0x28] sm:$0xff] %v936
    %1088 = vst [vmem:[#allocation2 + $0x30] sm:$0xff] %v940
    %1089 = vst [vmem:[#allocation2 + $0x38] sm:$0xff] %v942
    %1090 = vst [vmem:[#allocation2 + $0x40] sm:$0xff] %v946
    %1091 = vst [vmem:[#allocation2 + $0x48] sm:$0xff] %v948
    %1092 = vst [vmem:[#allocation2 + $0x50] sm:$0xff] %v952
    %1093 = vst [vmem:[#allocation2 + $0x58] sm:$0xff] %v954
    %1094 = vst [vmem:[#allocation2 + $0x60] sm:$0xff] %v958
    %1095 = vst [vmem:[#allocation2 + $0x68] sm:$0xff] %v960
    %1096 = vst [vmem:[#allocation2 + $0x70] sm:$0xff] %v964
    %1097 = vst [vmem:[#allocation2 + $0x78] sm:$0xff] %v966
    %1098 = vst [vmem:[#allocation2 + $0x80] sm:$0xff] %v970
    %1099 = vst [vmem:[#allocation2 + $0x88] sm:$0xff] %v972
    %1100 = vst [vmem:[#allocation2 + $0x90] sm:$0xff] %v976
    %1101 = vst [vmem:[#allocation2 + $0x98] sm:$0xff] %v978
    %1102 = vst [vmem:[#allocation2 + $0xa0] sm:$0xff] %v982
    %1103 = vst [vmem:[#allocation2 + $0xa8] sm:$0xff] %v984
    %1104 = vst [vmem:[#allocation2 + $0xb0] sm:$0xff] %v988
    %1105 = vst [vmem:[#allocation2 + $0xb8] sm:$0xff] %v990
    %1106 = vst [vmem:[#allocation2 + $0xc0] sm:$0xff] %v994
    %1107 = vst [vmem:[#allocation2 + $0xc8] sm:$0xff] %v996
    %1108 = vst [vmem:[#allocation2 + $0xd0] sm:$0xff] %v1000
    %1109 = vst [vmem:[#allocation2 + $0xd8] sm:$0xff] %v1002
    %1110 = vst [vmem:[#allocation2 + $0xe0] sm:$0xff] %v1006
    %1111 = vst [vmem:[#allocation2 + $0xe8] sm:$0xff] %v1008
    %1112 = vst [vmem:[#allocation2 + $0xf0] sm:$0xff] %v1012
    %1113 = vst [vmem:[#allocation2 + $0xf8] sm:$0xff] %v1014
    %1114 = vst [vmem:[#allocation2 + $0x100] sm:$0xff] %v1018
    %1115 = vst [vmem:[#allocation2 + $0x108] sm:$0xff] %v1020
    %1116 = vst [vmem:[#allocation2 + $0x110] sm:$0xff] %v1024
    %1117 = vst [vmem:[#allocation2 + $0x118] sm:$0xff] %v1026
    %1118 = vst [vmem:[#allocation2 + $0x120] sm:$0xff] %v1030
    %1119 = vst [vmem:[#allocation2 + $0x128] sm:$0xff] %v1032
    %1120 = vst [vmem:[#allocation2 + $0x130] sm:$0xff] %v1036
    %1121 = vst [vmem:[#allocation2 + $0x138] sm:$0xff] %v1038
    %1122 = vst [vmem:[#allocation2 + $0x140] sm:$0xff] %v1042
    %1123 = vst [vmem:[#allocation2 + $0x148] sm:$0xff] %v1044
    %1124 = vst [vmem:[#allocation2 + $0x150] sm:$0xff] %v1048
    %1125 = vst [vmem:[#allocation2 + $0x158] sm:$0xff] %v1050
    %1126 = vst [vmem:[#allocation2 + $0x160] sm:$0xff] %v1054
    %1127 = vst [vmem:[#allocation2 + $0x168] sm:$0xff] %v1056
    %1128 = vst [vmem:[#allocation2 + $0x170] sm:$0xff] %v1060
    %1129 = vst [vmem:[#allocation2 + $0x178] sm:$0xff] %v1062
    %1130 = vst [vmem:[#allocation2 + $0x180] sm:$0xff] %v1066
    %1131 = vst [vmem:[#allocation2 + $0x188] sm:$0xff] %v1068
    %1132 = vst [vmem:[#allocation2 + $0x190] sm:$0xff] %v1072
    %1133 = vst [vmem:[#allocation2 + $0x198] sm:$0xff] %v1074
    %1134 = vst [vmem:[#allocation2 + $0x1a0] sm:$0xff] %v1078
    %1135 = vst [vmem:[#allocation2 + $0x1a8] sm:$0xff] %v1080
    %v1136 = vld [vmem:[#allocation2] ss:$0 sm:$0xff]
    %v1137 = vld [vmem:[#allocation2 + $0x1] ss:$0 sm:$0xff]
    %v1138 = vld [vmem:[#allocation2 + $0x2] ss:$0 sm:$0xff]
    %v1139 = vld [vmem:[#allocation2 + $0x3] ss:$0 sm:$0xff]
    %v1140 = vld [vmem:[#allocation2 + $0x4] ss:$0 sm:$0xff]
    %v1141 = vld [vmem:[#allocation2 + $0x5] ss:$0 sm:$0xff]
    %v1142 = vld [vmem:[#allocation2 + $0x6] ss:$0 sm:$0xff]
    %v1143 = vld [vmem:[#allocation2 + $0x7] ss:$0 sm:$0xff]
    %v1144 = vld [vmem:[#allocation2 + $0x10] ss:$0 sm:$0xff]
    %v1145 = vld [vmem:[#allocation2 + $0x11] ss:$0 sm:$0xff]
    %v1146 = vld [vmem:[#allocation2 + $0x12] ss:$0 sm:$0xff]
    %v1147 = vsub.f32 0.0, %v1137
    %v1148 = vadd.f32 %v1136, 1e-12
    %v1149 = vrcp.pop %v1148
    %v1150 = vmul.f32 %v1147, %v1149
    %v1151 = vmul.f32 %v1150, %v1150
    %v1152 = vsub.f32 1.0, %v1151
    %v1153 = vmul.f32 %v1136, %v1152
    %v1154 = vmul.f32 %v1150, %v1137
    %v1155 = vadd.f32 %v1138, %v1154
    %v1156 = vsub.f32 0.0, %v1155
    %v1157 = vadd.f32 %v1153, 1e-12
    %v1158 = vrcp.pop %v1157
    %v1159 = vmul.f32 %v1156, %v1158
    %v1160 = vmul.f32 %v1159, %v1150
    %v1161 = vadd.f32 %v1150, %v1160
    %v1162 = vmul.f32 %v1159, %v1159
    %v1163 = vsub.f32 1.0, %v1162
    %v1164 = vmul.f32 %v1153, %v1163
    %v1165 = vmul.f32 %v1161, %v1138
    %v1166 = vadd.f32 %v1139, %v1165
    %v1167 = vmul.f32 %v1159, %v1137
    %v1168 = vadd.f32 %v1166, %v1167
    %v1169 = vsub.f32 0.0, %v1168
    %v1170 = vadd.f32 %v1164, 1e-12
    %v1171 = vrcp.pop %v1170
    %v1172 = vmul.f32 %v1169, %v1171
    %v1173 = vmul.f32 %v1172, %v1159
    %v1174 = vadd.f32 %v1161, %v1173
    %v1175 = vmul.f32 %v1172, %v1161
    %v1176 = vadd.f32 %v1159, %v1175
    %v1177 = vmul.f32 %v1172, %v1172
    %v1178 = vsub.f32 1.0, %v1177
    %v1179 = vmul.f32 %v1164, %v1178
    %v1180 = vmul.f32 %v1174, %v1139
    %v1181 = vadd.f32 %v1140, %v1180
    %v1182 = vmul.f32 %v1176, %v1138
    %v1183 = vadd.f32 %v1181, %v1182
    %v1184 = vmul.f32 %v1172, %v1137
    %v1185 = vadd.f32 %v1183, %v1184
    %v1186 = vsub.f32 0.0, %v1185
    %v1187 = vadd.f32 %v1179, 1e-12
    %v1188 = vrcp.pop %v1187
    %v1189 = vmul.f32 %v1186, %v1188
    %v1190 = vmul.f32 %v1189, %v1172
    %v1191 = vadd.f32 %v1174, %v1190
    %v1192 = vmul.f32 %v1189, %v1176
    %v1193 = vadd.f32 %v1176, %v1192
    %v1194 = vmul.f32 %v1189, %v1174
    %v1195 = vadd.f32 %v1172, %v1194
    %v1196 = vmul.f32 %v1189, %v1189
    %v1197 = vsub.f32 1.0, %v1196
    %v1198 = vmul.f32 %v1179, %v1197
    %v1199 = vmul.f32 %v1191, %v1140
    %v1200 = vadd.f32 %v1141, %v1199
    %v1201 = vmul.f32 %v1193, %v1139
    %v1202 = vadd.f32 %v1200, %v1201
    %v1203 = vmul.f32 %v1195, %v1138
    %v1204 = vadd.f32 %v1202, %v1203
    %v1205 = vmul.f32 %v1189, %v1137
    %v1206 = vadd.f32 %v1204, %v1205
    %v1207 = vsub.f32 0.0, %v1206
    %v1208 = vadd.f32 %v1198, 1e-12
    %v1209 = vrcp.pop %v1208
    %v1210 = vmul.f32 %v1207, %v1209
    %v1211 = vmul.f32 %v1210, %v1189
    %v1212 = vadd.f32 %v1191, %v1211
    %v1213 = vmul.f32 %v1210, %v1195
    %v1214 = vadd.f32 %v1193, %v1213
    %v1215 = vmul.f32 %v1210, %v1193
    %v1216 = vadd.f32 %v1195, %v1215
    %v1217 = vmul.f32 %v1210, %v1191
    %v1218 = vadd.f32 %v1189, %v1217
    %v1219 = vmul.f32 %v1210, %v1210
    %v1220 = vsub.f32 1.0, %v1219
    %v1221 = vmul.f32 %v1198, %v1220
    %v1222 = vmul.f32 %v1212, %v1141
    %v1223 = vadd.f32 %v1142, %v1222
    %v1224 = vmul.f32 %v1214, %v1140
    %v1225 = vadd.f32 %v1223, %v1224
    %v1226 = vmul.f32 %v1216, %v1139
    %v1227 = vadd.f32 %v1225, %v1226
    %v1228 = vmul.f32 %v1218, %v1138
    %v1229 = vadd.f32 %v1227, %v1228
    %v1230 = vmul.f32 %v1210, %v1137
    %v1231 = vadd.f32 %v1229, %v1230
    %v1232 = vsub.f32 0.0, %v1231
    %v1233 = vadd.f32 %v1221, 1e-12
    %v1234 = vrcp.pop %v1233
    %v1235 = vmul.f32 %v1232, %v1234
    %v1236 = vmul.f32 %v1235, %v1210
    %v1237 = vadd.f32 %v1212, %v1236
    %v1238 = vmul.f32 %v1235, %v1218
    %v1239 = vadd.f32 %v1214, %v1238
    %v1240 = vmul.f32 %v1235, %v1216
    %v1241 = vadd.f32 %v1216, %v1240
    %v1242 = vmul.f32 %v1235, %v1214
    %v1243 = vadd.f32 %v1218, %v1242
    %v1244 = vmul.f32 %v1235, %v1212
    %v1245 = vadd.f32 %v1210, %v1244
    %v1246 = vmul.f32 %v1235, %v1235
    %v1247 = vsub.f32 1.0, %v1246
    %v1248 = vmul.f32 %v1221, %v1247
    %v1249 = vmul.f32 %v1237, %v1142
    %v1250 = vadd.f32 %v1143, %v1249
    %v1251 = vmul.f32 %v1239, %v1141
    %v1252 = vadd.f32 %v1250, %v1251
    %v1253 = vmul.f32 %v1241, %v1140
    %v1254 = vadd.f32 %v1252, %v1253
    %v1255 = vmul.f32 %v1243, %v1139
    %v1256 = vadd.f32 %v1254, %v1255
    %v1257 = vmul.f32 %v1245, %v1138
    %v1258 = vadd.f32 %v1256, %v1257
    %v1259 = vmul.f32 %v1235, %v1137
    %v1260 = vadd.f32 %v1258, %v1259
    %v1261 = vsub.f32 0.0, %v1260
    %v1262 = vadd.f32 %v1248, 1e-12
    %v1263 = vrcp.pop %v1262
    %v1264 = vmul.f32 %v1261, %v1263
    %v1265 = vmul.f32 %v1264, %v1235
    %v1266 = vadd.f32 %v1237, %v1265
    %v1267 = vmul.f32 %v1264, %v1245
    %v1268 = vadd.f32 %v1239, %v1267
    %v1269 = vmul.f32 %v1264, %v1243
    %v1270 = vadd.f32 %v1241, %v1269
    %v1271 = vmul.f32 %v1264, %v1241
    %v1272 = vadd.f32 %v1243, %v1271
    %v1273 = vmul.f32 %v1264, %v1239
    %v1274 = vadd.f32 %v1245, %v1273
    %v1275 = vmul.f32 %v1264, %v1237
    %v1276 = vadd.f32 %v1235, %v1275
    %v1277 = vmul.f32 %v1264, %v1264
    %v1278 = vsub.f32 1.0, %v1277
    %v1279 = vmul.f32 %v1248, %v1278
    %v1280 = vmul.f32 %v1266, %v1143
    %v1281 = vadd.f32 %v1144, %v1280
    %v1282 = vmul.f32 %v1268, %v1142
    %v1283 = vadd.f32 %v1281, %v1282
    %v1284 = vmul.f32 %v1270, %v1141
    %v1285 = vadd.f32 %v1283, %v1284
    %v1286 = vmul.f32 %v1272, %v1140
    %v1287 = vadd.f32 %v1285, %v1286
    %v1288 = vmul.f32 %v1274, %v1139
    %v1289 = vadd.f32 %v1287, %v1288
    %v1290 = vmul.f32 %v1276, %v1138
    %v1291 = vadd.f32 %v1289, %v1290
    %v1292 = vmul.f32 %v1264, %v1137
    %v1293 = vadd.f32 %v1291, %v1292
    %v1294 = vsub.f32 0.0, %v1293
    %v1295 = vadd.f32 %v1279, 1e-12
    %v1296 = vrcp.pop %v1295
    %v1297 = vmul.f32 %v1294, %v1296
    %v1298 = vmul.f32 %v1297, %v1264
    %v1299 = vadd.f32 %v1266, %v1298
    %v1300 = vmul.f32 %v1297, %v1276
    %v1301 = vadd.f32 %v1268, %v1300
    %v1302 = vmul.f32 %v1297, %v1274
    %v1303 = vadd.f32 %v1270, %v1302
    %v1304 = vmul.f32 %v1297, %v1272
    %v1305 = vadd.f32 %v1272, %v1304
    %v1306 = vmul.f32 %v1297, %v1270
    %v1307 = vadd.f32 %v1274, %v1306
    %v1308 = vmul.f32 %v1297, %v1268
    %v1309 = vadd.f32 %v1276, %v1308
    %v1310 = vmul.f32 %v1297, %v1266
    %v1311 = vadd.f32 %v1264, %v1310
    %v1312 = vmul.f32 %v1297, %v1297
    %v1313 = vsub.f32 1.0, %v1312
    %v1314 = vmul.f32 %v1279, %v1313
    %v1315 = vmul.f32 %v1299, %v1144
    %v1316 = vadd.f32 %v1145, %v1315
    %v1317 = vmul.f32 %v1301, %v1143
    %v1318 = vadd.f32 %v1316, %v1317
    %v1319 = vmul.f32 %v1303, %v1142
    %v1320 = vadd.f32 %v1318, %v1319
    %v1321 = vmul.f32 %v1305, %v1141
    %v1322 = vadd.f32 %v1320, %v1321
    %v1323 = vmul.f32 %v1307, %v1140
    %v1324 = vadd.f32 %v1322, %v1323
    %v1325 = vmul.f32 %v1309, %v1139
    %v1326 = vadd.f32 %v1324, %v1325
    %v1327 = vmul.f32 %v1311, %v1138
    %v1328 = vadd.f32 %v1326, %v1327
    %v1329 = vmul.f32 %v1297, %v1137
    %v1330 = vadd.f32 %v1328, %v1329
    %v1331 = vsub.f32 0.0, %v1330
    %v1332 = vadd.f32 %v1314, 1e-12
    %v1333 = vrcp.pop %v1332
    %v1334 = vmul.f32 %v1331, %v1333
    %v1335 = vmul.f32 %v1334, %v1297
    %v1336 = vadd.f32 %v1299, %v1335
    %v1337 = vmul.f32 %v1334, %v1311
    %v1338 = vadd.f32 %v1301, %v1337
    %v1339 = vmul.f32 %v1334, %v1309
    %v1340 = vadd.f32 %v1303, %v1339
    %v1341 = vmul.f32 %v1334, %v1307
    %v1342 = vadd.f32 %v1305, %v1341
    %v1343 = vmul.f32 %v1334, %v1305
    %v1344 = vadd.f32 %v1307, %v1343
    %v1345 = vmul.f32 %v1334, %v1303
    %v1346 = vadd.f32 %v1309, %v1345
    %v1347 = vmul.f32 %v1334, %v1301
    %v1348 = vadd.f32 %v1311, %v1347
    %v1349 = vmul.f32 %v1334, %v1299
    %v1350 = vadd.f32 %v1297, %v1349
    %v1351 = vmul.f32 %v1334, %v1334
    %v1352 = vsub.f32 1.0, %v1351
    %v1353 = vmul.f32 %v1314, %v1352
    %v1354 = vmul.f32 %v1336, %v1145
    %v1355 = vadd.f32 %v1146, %v1354
    %v1356 = vmul.f32 %v1338, %v1144
    %v1357 = vadd.f32 %v1355, %v1356
    %v1358 = vmul.f32 %v1340, %v1143
    %v1359 = vadd.f32 %v1357, %v1358
    %v1360 = vmul.f32 %v1342, %v1142
    %v1361 = vadd.f32 %v1359, %v1360
    %v1362 = vmul.f32 %v1344, %v1141
    %v1363 = vadd.f32 %v1361, %v1362
    %v1364 = vmul.f32 %v1346, %v1140
    %v1365 = vadd.f32 %v1363, %v1364
    %v1366 = vmul.f32 %v1348, %v1139
    %v1367 = vadd.f32 %v1365, %v1366
    %v1368 = vmul.f32 %v1350, %v1138
    %v1369 = vadd.f32 %v1367, %v1368
    %v1370 = vmul.f32 %v1334, %v1137
    %v1371 = vadd.f32 %v1369, %v1370
    %v1372 = vsub.f32 0.0, %v1371
    %v1373 = vadd.f32 %v1353, 1e-12
    %v1374 = vrcp.pop %v1373
    %v1375 = vmul.f32 %v1372, %v1374
    %v1376 = vmul.f32 %v1375, %v1334
    %v1377 = vadd.f32 %v1336, %v1376
    %v1378 = vmul.f32 %v1375, %v1350
    %v1379 = vadd.f32 %v1338, %v1378
    %v1380 = vmul.f32 %v1375, %v1348
    %v1381 = vadd.f32 %v1340, %v1380
    %v1382 = vmul.f32 %v1375, %v1346
    %v1383 = vadd.f32 %v1342, %v1382
    %v1384 = vmul.f32 %v1375, %v1344
    %v1385 = vadd.f32 %v1344, %v1384
    %v1386 = vmul.f32 %v1375, %v1342
    %v1387 = vadd.f32 %v1346, %v1386
    %v1388 = vmul.f32 %v1375, %v1340
    %v1389 = vadd.f32 %v1348, %v1388
    %v1390 = vmul.f32 %v1375, %v1338
    %v1391 = vadd.f32 %v1350, %v1390
    %v1392 = vmul.f32 %v1375, %v1336
    %v1393 = vadd.f32 %v1334, %v1392
    %v1394 = vld [vmem:[#allocation2 + $0x20] ss:$0 sm:$0xff]
    %v1395 = vld [vmem:[#allocation2 + $0x21] ss:$0 sm:$0xff]
    %v1396 = vld [vmem:[#allocation2 + $0x22] ss:$0 sm:$0xff]
    %v1397 = vld [vmem:[#allocation2 + $0x23] ss:$0 sm:$0xff]
    %v1398 = vld [vmem:[#allocation2 + $0x24] ss:$0 sm:$0xff]
    %v1399 = vld [vmem:[#allocation2 + $0x25] ss:$0 sm:$0xff]
    %v1400 = vld [vmem:[#allocation2 + $0x26] ss:$0 sm:$0xff]
    %v1401 = vld [vmem:[#allocation2 + $0x27] ss:$0 sm:$0xff]
    %v1402 = vld [vmem:[#allocation2 + $0x30] ss:$0 sm:$0xff]
    %v1403 = vld [vmem:[#allocation2 + $0x31] ss:$0 sm:$0xff]
    %v1404 = vld [vmem:[#allocation2 + $0x32] ss:$0 sm:$0xff]
    %v1405 = vld [vmem:[#allocation2 + $0x33] ss:$0 sm:$0xff]
    %v1406 = vld [vmem:[#allocation2 + $0x34] ss:$0 sm:$0xff]
    %v1407 = vld [vmem:[#allocation2 + $0x35] ss:$0 sm:$0xff]
    %v1408 = vld [vmem:[#allocation2 + $0x36] ss:$0 sm:$0xff]
    %v1409 = vld [vmem:[#allocation2 + $0x37] ss:$0 sm:$0xff]
    %v1410 = vld [vmem:[#allocation2 + $0x40] ss:$0 sm:$0xff]
    %v1411 = vld [vmem:[#allocation2 + $0x41] ss:$0 sm:$0xff]
    %v1412 = vld [vmem:[#allocation2 + $0x42] ss:$0 sm:$0xff]
    %v1413 = vld [vmem:[#allocation2 + $0x43] ss:$0 sm:$0xff]
    %v1414 = vld [vmem:[#allocation2 + $0x44] ss:$0 sm:$0xff]
    %v1415 = vld [vmem:[#allocation2 + $0x45] ss:$0 sm:$0xff]
    %v1416 = vld [vmem:[#allocation2 + $0x46] ss:$0 sm:$0xff]
    %v1417 = vld [vmem:[#allocation2 + $0x47] ss:$0 sm:$0xff]
    %v1418 = vld [vmem:[#allocation2 + $0x50] ss:$0 sm:$0xff]
    %v1419 = vld [vmem:[#allocation2 + $0x51] ss:$0 sm:$0xff]
    %v1420 = vld [vmem:[#allocation2 + $0x52] ss:$0 sm:$0xff]
    %v1421 = vld [vmem:[#allocation2 + $0x53] ss:$0 sm:$0xff]
    %v1422 = vld [vmem:[#allocation2 + $0x54] ss:$0 sm:$0xff]
    %v1423 = vld [vmem:[#allocation2 + $0x55] ss:$0 sm:$0xff]
    %v1424 = vld [vmem:[#allocation2 + $0x56] ss:$0 sm:$0xff]
    %v1425 = vsub.f32 0.0, %v1395
    %v1426 = vadd.f32 %v1394, 1e-12
    %v1427 = vrcp.pop %v1426
    %v1428 = vmul.f32 %v1425, %v1427
    %v1429 = vmul.f32 %v1428, %v1428
    %v1430 = vsub.f32 1.0, %v1429
    %v1431 = vmul.f32 %v1394, %v1430
    %v1432 = vmul.f32 %v1428, %v1395
    %v1433 = vadd.f32 %v1396, %v1432
    %v1434 = vsub.f32 0.0, %v1433
    %v1435 = vadd.f32 %v1431, 1e-12
    %v1436 = vrcp.pop %v1435
    %v1437 = vmul.f32 %v1434, %v1436
    %v1438 = vmul.f32 %v1437, %v1428
    %v1439 = vadd.f32 %v1428, %v1438
    %v1440 = vmul.f32 %v1437, %v1437
    %v1441 = vsub.f32 1.0, %v1440
    %v1442 = vmul.f32 %v1431, %v1441
    %v1443 = vmul.f32 %v1439, %v1396
    %v1444 = vadd.f32 %v1397, %v1443
    %v1445 = vmul.f32 %v1437, %v1395
    %v1446 = vadd.f32 %v1444, %v1445
    %v1447 = vsub.f32 0.0, %v1446
    %v1448 = vadd.f32 %v1442, 1e-12
    %v1449 = vrcp.pop %v1448
    %v1450 = vmul.f32 %v1447, %v1449
    %v1451 = vmul.f32 %v1450, %v1437
    %v1452 = vadd.f32 %v1439, %v1451
    %v1453 = vmul.f32 %v1450, %v1439
    %v1454 = vadd.f32 %v1437, %v1453
    %v1455 = vmul.f32 %v1450, %v1450
    %v1456 = vsub.f32 1.0, %v1455
    %v1457 = vmul.f32 %v1442, %v1456
    %v1458 = vmul.f32 %v1452, %v1397
    %v1459 = vadd.f32 %v1398, %v1458
    %v1460 = vmul.f32 %v1454, %v1396
    %v1461 = vadd.f32 %v1459, %v1460
    %v1462 = vmul.f32 %v1450, %v1395
    %v1463 = vadd.f32 %v1461, %v1462
    %v1464 = vsub.f32 0.0, %v1463
    %v1465 = vadd.f32 %v1457, 1e-12
    %v1466 = vrcp.pop %v1465
    %v1467 = vmul.f32 %v1464, %v1466
    %v1468 = vmul.f32 %v1467, %v1450
    %v1469 = vadd.f32 %v1452, %v1468
    %v1470 = vmul.f32 %v1467, %v1454
    %v1471 = vadd.f32 %v1454, %v1470
    %v1472 = vmul.f32 %v1467, %v1452
    %v1473 = vadd.f32 %v1450, %v1472
    %v1474 = vmul.f32 %v1467, %v1467
    %v1475 = vsub.f32 1.0, %v1474
    %v1476 = vmul.f32 %v1457, %v1475
    %v1477 = vmul.f32 %v1469, %v1398
    %v1478 = vadd.f32 %v1399, %v1477
    %v1479 = vmul.f32 %v1471, %v1397
    %v1480 = vadd.f32 %v1478, %v1479
    %v1481 = vmul.f32 %v1473, %v1396
    %v1482 = vadd.f32 %v1480, %v1481
    %v1483 = vmul.f32 %v1467, %v1395
    %v1484 = vadd.f32 %v1482, %v1483
    %v1485 = vsub.f32 0.0, %v1484
    %v1486 = vadd.f32 %v1476, 1e-12
    %v1487 = vrcp.pop %v1486
    %v1488 = vmul.f32 %v1485, %v1487
    %v1489 = vmul.f32 %v1488, %v1467
    %v1490 = vadd.f32 %v1469, %v1489
    %v1491 = vmul.f32 %v1488, %v1473
    %v1492 = vadd.f32 %v1471, %v1491
    %v1493 = vmul.f32 %v1488, %v1471
    %v1494 = vadd.f32 %v1473, %v1493
    %v1495 = vmul.f32 %v1488, %v1469
    %v1496 = vadd.f32 %v1467, %v1495
    %v1497 = vmul.f32 %v1488, %v1488
    %v1498 = vsub.f32 1.0, %v1497
    %v1499 = vmul.f32 %v1476, %v1498
    %v1500 = vmul.f32 %v1490, %v1399
    %v1501 = vadd.f32 %v1400, %v1500
    %v1502 = vmul.f32 %v1492, %v1398
    %v1503 = vadd.f32 %v1501, %v1502
    %v1504 = vmul.f32 %v1494, %v1397
    %v1505 = vadd.f32 %v1503, %v1504
    %v1506 = vmul.f32 %v1496, %v1396
    %v1507 = vadd.f32 %v1505, %v1506
    %v1508 = vmul.f32 %v1488, %v1395
    %v1509 = vadd.f32 %v1507, %v1508
    %v1510 = vsub.f32 0.0, %v1509
    %v1511 = vadd.f32 %v1499, 1e-12
    %v1512 = vrcp.pop %v1511
    %v1513 = vmul.f32 %v1510, %v1512
    %v1514 = vmul.f32 %v1513, %v1488
    %v1515 = vadd.f32 %v1490, %v1514
    %v1516 = vmul.f32 %v1513, %v1496
    %v1517 = vadd.f32 %v1492, %v1516
    %v1518 = vmul.f32 %v1513, %v1494
    %v1519 = vadd.f32 %v1494, %v1518
    %v1520 = vmul.f32 %v1513, %v1492
    %v1521 = vadd.f32 %v1496, %v1520
    %v1522 = vmul.f32 %v1513, %v1490
    %v1523 = vadd.f32 %v1488, %v1522
    %v1524 = vmul.f32 %v1513, %v1513
    %v1525 = vsub.f32 1.0, %v1524
    %v1526 = vmul.f32 %v1499, %v1525
    %v1527 = vmul.f32 %v1515, %v1400
    %v1528 = vadd.f32 %v1401, %v1527
    %v1529 = vmul.f32 %v1517, %v1399
    %v1530 = vadd.f32 %v1528, %v1529
    %v1531 = vmul.f32 %v1519, %v1398
    %v1532 = vadd.f32 %v1530, %v1531
    %v1533 = vmul.f32 %v1521, %v1397
    %v1534 = vadd.f32 %v1532, %v1533
    %v1535 = vmul.f32 %v1523, %v1396
    %v1536 = vadd.f32 %v1534, %v1535
    %v1537 = vmul.f32 %v1513, %v1395
    %v1538 = vadd.f32 %v1536, %v1537
    %v1539 = vsub.f32 0.0, %v1538
    %v1540 = vadd.f32 %v1526, 1e-12
    %v1541 = vrcp.pop %v1540
    %v1542 = vmul.f32 %v1539, %v1541
    %v1543 = vmul.f32 %v1542, %v1513
    %v1544 = vadd.f32 %v1515, %v1543
    %v1545 = vmul.f32 %v1542, %v1523
    %v1546 = vadd.f32 %v1517, %v1545
    %v1547 = vmul.f32 %v1542, %v1521
    %v1548 = vadd.f32 %v1519, %v1547
    %v1549 = vmul.f32 %v1542, %v1519
    %v1550 = vadd.f32 %v1521, %v1549
    %v1551 = vmul.f32 %v1542, %v1517
    %v1552 = vadd.f32 %v1523, %v1551
    %v1553 = vmul.f32 %v1542, %v1515
    %v1554 = vadd.f32 %v1513, %v1553
    %v1555 = vmul.f32 %v1542, %v1542
    %v1556 = vsub.f32 1.0, %v1555
    %v1557 = vmul.f32 %v1526, %v1556
    %v1558 = vmul.f32 %v1544, %v1401
    %v1559 = vadd.f32 %v1402, %v1558
    %v1560 = vmul.f32 %v1546, %v1400
    %v1561 = vadd.f32 %v1559, %v1560
    %v1562 = vmul.f32 %v1548, %v1399
    %v1563 = vadd.f32 %v1561, %v1562
    %v1564 = vmul.f32 %v1550, %v1398
    %v1565 = vadd.f32 %v1563, %v1564
    %v1566 = vmul.f32 %v1552, %v1397
    %v1567 = vadd.f32 %v1565, %v1566
    %v1568 = vmul.f32 %v1554, %v1396
    %v1569 = vadd.f32 %v1567, %v1568
    %v1570 = vmul.f32 %v1542, %v1395
    %v1571 = vadd.f32 %v1569, %v1570
    %v1572 = vsub.f32 0.0, %v1571
    %v1573 = vadd.f32 %v1557, 1e-12
    %v1574 = vrcp.pop %v1573
    %v1575 = vmul.f32 %v1572, %v1574
    %v1576 = vmul.f32 %v1575, %v1542
    %v1577 = vadd.f32 %v1544, %v1576
    %v1578 = vmul.f32 %v1575, %v1554
    %v1579 = vadd.f32 %v1546, %v1578
    %v1580 = vmul.f32 %v1575, %v1552
    %v1581 = vadd.f32 %v1548, %v1580
    %v1582 = vmul.f32 %v1575, %v1550
    %v1583 = vadd.f32 %v1550, %v1582
    %v1584 = vmul.f32 %v1575, %v1548
    %v1585 = vadd.f32 %v1552, %v1584
    %v1586 = vmul.f32 %v1575, %v1546
    %v1587 = vadd.f32 %v1554, %v1586
    %v1588 = vmul.f32 %v1575, %v1544
    %v1589 = vadd.f32 %v1542, %v1588
    %v1590 = vmul.f32 %v1575, %v1575
    %v1591 = vsub.f32 1.0, %v1590
    %v1592 = vmul.f32 %v1557, %v1591
    %v1593 = vmul.f32 %v1577, %v1402
    %v1594 = vadd.f32 %v1403, %v1593
    %v1595 = vmul.f32 %v1579, %v1401
    %v1596 = vadd.f32 %v1594, %v1595
    %v1597 = vmul.f32 %v1581, %v1400
    %v1598 = vadd.f32 %v1596, %v1597
    %v1599 = vmul.f32 %v1583, %v1399
    %v1600 = vadd.f32 %v1598, %v1599
    %v1601 = vmul.f32 %v1585, %v1398
    %v1602 = vadd.f32 %v1600, %v1601
    %v1603 = vmul.f32 %v1587, %v1397
    %v1604 = vadd.f32 %v1602, %v1603
    %v1605 = vmul.f32 %v1589, %v1396
    %v1606 = vadd.f32 %v1604, %v1605
    %v1607 = vmul.f32 %v1575, %v1395
    %v1608 = vadd.f32 %v1606, %v1607
    %v1609 = vsub.f32 0.0, %v1608
    %v1610 = vadd.f32 %v1592, 1e-12
    %v1611 = vrcp.pop %v1610
    %v1612 = vmul.f32 %v1609, %v1611
    %v1613 = vmul.f32 %v1612, %v1575
    %v1614 = vadd.f32 %v1577, %v1613
    %v1615 = vmul.f32 %v1612, %v1589
    %v1616 = vadd.f32 %v1579, %v1615
    %v1617 = vmul.f32 %v1612, %v1587
    %v1618 = vadd.f32 %v1581, %v1617
    %v1619 = vmul.f32 %v1612, %v1585
    %v1620 = vadd.f32 %v1583, %v1619
    %v1621 = vmul.f32 %v1612, %v1583
    %v1622 = vadd.f32 %v1585, %v1621
    %v1623 = vmul.f32 %v1612, %v1581
    %v1624 = vadd.f32 %v1587, %v1623
    %v1625 = vmul.f32 %v1612, %v1579
    %v1626 = vadd.f32 %v1589, %v1625
    %v1627 = vmul.f32 %v1612, %v1577
    %v1628 = vadd.f32 %v1575, %v1627
    %v1629 = vmul.f32 %v1612, %v1612
    %v1630 = vsub.f32 1.0, %v1629
    %v1631 = vmul.f32 %v1592, %v1630
    %v1632 = vmul.f32 %v1614, %v1403
    %v1633 = vadd.f32 %v1404, %v1632
    %v1634 = vmul.f32 %v1616, %v1402
    %v1635 = vadd.f32 %v1633, %v1634
    %v1636 = vmul.f32 %v1618, %v1401
    %v1637 = vadd.f32 %v1635, %v1636
    %v1638 = vmul.f32 %v1620, %v1400
    %v1639 = vadd.f32 %v1637, %v1638
    %v1640 = vmul.f32 %v1622, %v1399
    %v1641 = vadd.f32 %v1639, %v1640
    %v1642 = vmul.f32 %v1624, %v1398
    %v1643 = vadd.f32 %v1641, %v1642
    %v1644 = vmul.f32 %v1626, %v1397
    %v1645 = vadd.f32 %v1643, %v1644
    %v1646 = vmul.f32 %v1628, %v1396
    %v1647 = vadd.f32 %v1645, %v1646
    %v1648 = vmul.f32 %v1612, %v1395
    %v1649 = vadd.f32 %v1647, %v1648
    %v1650 = vsub.f32 0.0, %v1649
    %v1651 = vadd.f32 %v1631, 1e-12
    %v1652 = vrcp.pop %v1651
    %v1653 = vmul.f32 %v1650, %v1652
    %v1654 = vmul.f32 %v1653, %v1612
    %v1655 = vadd.f32 %v1614, %v1654
    %v1656 = vmul.f32 %v1653, %v1628
    %v1657 = vadd.f32 %v1616, %v1656
    %v1658 = vmul.f32 %v1653, %v1626
    %v1659 = vadd.f32 %v1618, %v1658
    %v1660 = vmul.f32 %v1653, %v1624
    %v1661 = vadd.f32 %v1620, %v1660
    %v1662 = vmul.f32 %v1653, %v1622
    %v1663 = vadd.f32 %v1622, %v1662
    %v1664 = vmul.f32 %v1653, %v1620
    %v1665 = vadd.f32 %v1624, %v1664
    %v1666 = vmul.f32 %v1653, %v1618
    %v1667 = vadd.f32 %v1626, %v1666
    %v1668 = vmul.f32 %v1653, %v1616
    %v1669 = vadd.f32 %v1628, %v1668
    %v1670 = vmul.f32 %v1653, %v1614
    %v1671 = vadd.f32 %v1612, %v1670
    %v1672 = vmul.f32 %v1653, %v1653
    %v1673 = vsub.f32 1.0, %v1672
    %v1674 = vmul.f32 %v1631, %v1673
    %v1675 = vmul.f32 %v1655, %v1404
    %v1676 = vadd.f32 %v1405, %v1675
    %v1677 = vmul.f32 %v1657, %v1403
    %v1678 = vadd.f32 %v1676, %v1677
    %v1679 = vmul.f32 %v1659, %v1402
    %v1680 = vadd.f32 %v1678, %v1679
    %v1681 = vmul.f32 %v1661, %v1401
    %v1682 = vadd.f32 %v1680, %v1681
    %v1683 = vmul.f32 %v1663, %v1400
    %v1684 = vadd.f32 %v1682, %v1683
    %v1685 = vmul.f32 %v1665, %v1399
    %v1686 = vadd.f32 %v1684, %v1685
    %v1687 = vmul.f32 %v1667, %v1398
    %v1688 = vadd.f32 %v1686, %v1687
    %v1689 = vmul.f32 %v1669, %v1397
    %v1690 = vadd.f32 %v1688, %v1689
    %v1691 = vmul.f32 %v1671, %v1396
    %v1692 = vadd.f32 %v1690, %v1691
    %v1693 = vmul.f32 %v1653, %v1395
    %v1694 = vadd.f32 %v1692, %v1693
    %v1695 = vsub.f32 0.0, %v1694
    %v1696 = vadd.f32 %v1674, 1e-12
    %v1697 = vrcp.pop %v1696
    %v1698 = vmul.f32 %v1695, %v1697
    %v1699 = vmul.f32 %v1698, %v1653
    %v1700 = vadd.f32 %v1655, %v1699
    %v1701 = vmul.f32 %v1698, %v1671
    %v1702 = vadd.f32 %v1657, %v1701
    %v1703 = vmul.f32 %v1698, %v1669
    %v1704 = vadd.f32 %v1659, %v1703
    %v1705 = vmul.f32 %v1698, %v1667
    %v1706 = vadd.f32 %v1661, %v1705
    %v1707 = vmul.f32 %v1698, %v1665
    %v1708 = vadd.f32 %v1663, %v1707
    %v1709 = vmul.f32 %v1698, %v1663
    %v1710 = vadd.f32 %v1665, %v1709
    %v1711 = vmul.f32 %v1698, %v1661
    %v1712 = vadd.f32 %v1667, %v1711
    %v1713 = vmul.f32 %v1698, %v1659
    %v1714 = vadd.f32 %v1669, %v1713
    %v1715 = vmul.f32 %v1698, %v1657
    %v1716 = vadd.f32 %v1671, %v1715
    %v1717 = vmul.f32 %v1698, %v1655
    %v1718 = vadd.f32 %v1653, %v1717
    %v1719 = vmul.f32 %v1698, %v1698
    %v1720 = vsub.f32 1.0, %v1719
    %v1721 = vmul.f32 %v1674, %v1720
    %v1722 = vmul.f32 %v1700, %v1405
    %v1723 = vadd.f32 %v1406, %v1722
    %v1724 = vmul.f32 %v1702, %v1404
    %v1725 = vadd.f32 %v1723, %v1724
    %v1726 = vmul.f32 %v1704, %v1403
    %v1727 = vadd.f32 %v1725, %v1726
    %v1728 = vmul.f32 %v1706, %v1402
    %v1729 = vadd.f32 %v1727, %v1728
    %v1730 = vmul.f32 %v1708, %v1401
    %v1731 = vadd.f32 %v1729, %v1730
    %v1732 = vmul.f32 %v1710, %v1400
    %v1733 = vadd.f32 %v1731, %v1732
    %v1734 = vmul.f32 %v1712, %v1399
    %v1735 = vadd.f32 %v1733, %v1734
    %v1736 = vmul.f32 %v1714, %v1398
    %v1737 = vadd.f32 %v1735, %v1736
    %v1738 = vmul.f32 %v1716, %v1397
    %v1739 = vadd.f32 %v1737, %v1738
    %v1740 = vmul.f32 %v1718, %v1396
    %v1741 = vadd.f32 %v1739, %v1740
    %v1742 = vmul.f32 %v1698, %v1395
    %v1743 = vadd.f32 %v1741, %v1742
    %v1744 = vsub.f32 0.0, %v1743
    %v1745 = vadd.f32 %v1721, 1e-12
    %v1746 = vrcp.pop %v1745
    %v1747 = vmul.f32 %v1744, %v1746
    %v1748 = vmul.f32 %v1747, %v1698
    %v1749 = vadd.f32 %v1700, %v1748
    %v1750 = vmul.f32 %v1747, %v1718
    %v1751 = vadd.f32 %v1702, %v1750
    %v1752 = vmul.f32 %v1747, %v1716
    %v1753 = vadd.f32 %v1704, %v1752
    %v1754 = vmul.f32 %v1747, %v1714
    %v1755 = vadd.f32 %v1706, %v1754
    %v1756 = vmul.f32 %v1747, %v1712
    %v1757 = vadd.f32 %v1708, %v1756
    %v1758 = vmul.f32 %v1747, %v1710
    %v1759 = vadd.f32 %v1710, %v1758
    %v1760 = vmul.f32 %v1747, %v1708
    %v1761 = vadd.f32 %v1712, %v1760
    %v1762 = vmul.f32 %v1747, %v1706
    %v1763 = vadd.f32 %v1714, %v1762
    %v1764 = vmul.f32 %v1747, %v1704
    %v1765 = vadd.f32 %v1716, %v1764
    %v1766 = vmul.f32 %v1747, %v1702
    %v1767 = vadd.f32 %v1718, %v1766
    %v1768 = vmul.f32 %v1747, %v1700
    %v1769 = vadd.f32 %v1698, %v1768
    %v1770 = vmul.f32 %v1747, %v1747
    %v1771 = vsub.f32 1.0, %v1770
    %v1772 = vmul.f32 %v1721, %v1771
    %v1773 = vmul.f32 %v1749, %v1406
    %v1774 = vadd.f32 %v1407, %v1773
    %v1775 = vmul.f32 %v1751, %v1405
    %v1776 = vadd.f32 %v1774, %v1775
    %v1777 = vmul.f32 %v1753, %v1404
    %v1778 = vadd.f32 %v1776, %v1777
    %v1779 = vmul.f32 %v1755, %v1403
    %v1780 = vadd.f32 %v1778, %v1779
    %v1781 = vmul.f32 %v1757, %v1402
    %v1782 = vadd.f32 %v1780, %v1781
    %v1783 = vmul.f32 %v1759, %v1401
    %v1784 = vadd.f32 %v1782, %v1783
    %v1785 = vmul.f32 %v1761, %v1400
    %v1786 = vadd.f32 %v1784, %v1785
    %v1787 = vmul.f32 %v1763, %v1399
    %v1788 = vadd.f32 %v1786, %v1787
    %v1789 = vmul.f32 %v1765, %v1398
    %v1790 = vadd.f32 %v1788, %v1789
    %v1791 = vmul.f32 %v1767, %v1397
    %v1792 = vadd.f32 %v1790, %v1791
    %v1793 = vmul.f32 %v1769, %v1396
    %v1794 = vadd.f32 %v1792, %v1793
    %v1795 = vmul.f32 %v1747, %v1395
    %v1796 = vadd.f32 %v1794, %v1795
    %v1797 = vsub.f32 0.0, %v1796
    %v1798 = vadd.f32 %v1772, 1e-12
    %v1799 = vrcp.pop %v1798
    %v1800 = vmul.f32 %v1797, %v1799
    %v1801 = vmul.f32 %v1800, %v1747
    %v1802 = vadd.f32 %v1749, %v1801
    %v1803 = vmul.f32 %v1800, %v1769
    %v1804 = vadd.f32 %v1751, %v1803
    %v1805 = vmul.f32 %v1800, %v1767
    %v1806 = vadd.f32 %v1753, %v1805
    %v1807 = vmul.f32 %v1800, %v1765
    %v1808 = vadd.f32 %v1755, %v1807
    %v1809 = vmul.f32 %v1800, %v1763
    %v1810 = vadd.f32 %v1757, %v1809
    %v1811 = vmul.f32 %v1800, %v1761
    %v1812 = vadd.f32 %v1759, %v1811
    %v1813 = vmul.f32 %v1800, %v1759
    %v1814 = vadd.f32 %v1761, %v1813
    %v1815 = vmul.f32 %v1800, %v1757
    %v1816 = vadd.f32 %v1763, %v1815
    %v1817 = vmul.f32 %v1800, %v1755
    %v1818 = vadd.f32 %v1765, %v1817
    %v1819 = vmul.f32 %v1800, %v1753
    %v1820 = vadd.f32 %v1767, %v1819
    %v1821 = vmul.f32 %v1800, %v1751
    %v1822 = vadd.f32 %v1769, %v1821
    %v1823 = vmul.f32 %v1800, %v1749
    %v1824 = vadd.f32 %v1747, %v1823
    %v1825 = vmul.f32 %v1800, %v1800
    %v1826 = vsub.f32 1.0, %v1825
    %v1827 = vmul.f32 %v1772, %v1826
    %v1828 = vmul.f32 %v1802, %v1407
    %v1829 = vadd.f32 %v1408, %v1828
    %v1830 = vmul.f32 %v1804, %v1406
    %v1831 = vadd.f32 %v1829, %v1830
    %v1832 = vmul.f32 %v1806, %v1405
    %v1833 = vadd.f32 %v1831, %v1832
    %v1834 = vmul.f32 %v1808, %v1404
    %v1835 = vadd.f32 %v1833, %v1834
    %v1836 = vmul.f32 %v1810, %v1403
    %v1837 = vadd.f32 %v1835, %v1836
    %v1838 = vmul.f32 %v1812, %v1402
    %v1839 = vadd.f32 %v1837, %v1838
    %v1840 = vmul.f32 %v1814, %v1401
    %v1841 = vadd.f32 %v1839, %v1840
    %v1842 = vmul.f32 %v1816, %v1400
    %v1843 = vadd.f32 %v1841, %v1842
    %v1844 = vmul.f32 %v1818, %v1399
    %v1845 = vadd.f32 %v1843, %v1844
    %v1846 = vmul.f32 %v1820, %v1398
    %v1847 = vadd.f32 %v1845, %v1846
    %v1848 = vmul.f32 %v1822, %v1397
    %v1849 = vadd.f32 %v1847, %v1848
    %v1850 = vmul.f32 %v1824, %v1396
    %v1851 = vadd.f32 %v1849, %v1850
    %v1852 = vmul.f32 %v1800, %v1395
    %v1853 = vadd.f32 %v1851, %v1852
    %v1854 = vsub.f32 0.0, %v1853
    %v1855 = vadd.f32 %v1827, 1e-12
    %v1856 = vrcp.pop %v1855
    %v1857 = vmul.f32 %v1854, %v1856
    %v1858 = vmul.f32 %v1857, %v1800
    %v1859 = vadd.f32 %v1802, %v1858
    %v1860 = vmul.f32 %v1857, %v1824
    %v1861 = vadd.f32 %v1804, %v1860
    %v1862 = vmul.f32 %v1857, %v1822
    %v1863 = vadd.f32 %v1806, %v1862
    %v1864 = vmul.f32 %v1857, %v1820
    %v1865 = vadd.f32 %v1808, %v1864
    %v1866 = vmul.f32 %v1857, %v1818
    %v1867 = vadd.f32 %v1810, %v1866
    %v1868 = vmul.f32 %v1857, %v1816
    %v1869 = vadd.f32 %v1812, %v1868
    %v1870 = vmul.f32 %v1857, %v1814
    %v1871 = vadd.f32 %v1814, %v1870
    %v1872 = vmul.f32 %v1857, %v1812
    %v1873 = vadd.f32 %v1816, %v1872
    %v1874 = vmul.f32 %v1857, %v1810
    %v1875 = vadd.f32 %v1818, %v1874
    %v1876 = vmul.f32 %v1857, %v1808
    %v1877 = vadd.f32 %v1820, %v1876
    %v1878 = vmul.f32 %v1857, %v1806
    %v1879 = vadd.f32 %v1822, %v1878
    %v1880 = vmul.f32 %v1857, %v1804
    %v1881 = vadd.f32 %v1824, %v1880
    %v1882 = vmul.f32 %v1857, %v1802
    %v1883 = vadd.f32 %v1800, %v1882
    %v1884 = vmul.f32 %v1857, %v1857
    %v1885 = vsub.f32 1.0, %v1884
    %v1886 = vmul.f32 %v1827, %v1885
    %v1887 = vmul.f32 %v1859, %v1408
    %v1888 = vadd.f32 %v1409, %v1887
    %v1889 = vmul.f32 %v1861, %v1407
    %v1890 = vadd.f32 %v1888, %v1889
    %v1891 = vmul.f32 %v1863, %v1406
    %v1892 = vadd.f32 %v1890, %v1891
    %v1893 = vmul.f32 %v1865, %v1405
    %v1894 = vadd.f32 %v1892, %v1893
    %v1895 = vmul.f32 %v1867, %v1404
    %v1896 = vadd.f32 %v1894, %v1895
    %v1897 = vmul.f32 %v1869, %v1403
    %v1898 = vadd.f32 %v1896, %v1897
    %v1899 = vmul.f32 %v1871, %v1402
    %v1900 = vadd.f32 %v1898, %v1899
    %v1901 = vmul.f32 %v1873, %v1401
    %v1902 = vadd.f32 %v1900, %v1901
    %v1903 = vmul.f32 %v1875, %v1400
    %v1904 = vadd.f32 %v1902, %v1903
    %v1905 = vmul.f32 %v1877, %v1399
    %v1906 = vadd.f32 %v1904, %v1905
    %v1907 = vmul.f32 %v1879, %v1398
    %v1908 = vadd.f32 %v1906, %v1907
    %v1909 = vmul.f32 %v1881, %v1397
    %v1910 = vadd.f32 %v1908, %v1909
    %v1911 = vmul.f32 %v1883, %v1396
    %v1912 = vadd.f32 %v1910, %v1911
    %v1913 = vmul.f32 %v1857, %v1395
    %v1914 = vadd.f32 %v1912, %v1913
    %v1915 = vsub.f32 0.0, %v1914
    %v1916 = vadd.f32 %v1886, 1e-12
    %v1917 = vrcp.pop %v1916
    %v1918 = vmul.f32 %v1915, %v1917
    %v1919 = vmul.f32 %v1918, %v1857
    %v1920 = vadd.f32 %v1859, %v1919
    %v1921 = vmul.f32 %v1918, %v1883
    %v1922 = vadd.f32 %v1861, %v1921
    %v1923 = vmul.f32 %v1918, %v1881
    %v1924 = vadd.f32 %v1863, %v1923
    %v1925 = vmul.f32 %v1918, %v1879
    %v1926 = vadd.f32 %v1865, %v1925
    %v1927 = vmul.f32 %v1918, %v1877
    %v1928 = vadd.f32 %v1867, %v1927
    %v1929 = vmul.f32 %v1918, %v1875
    %v1930 = vadd.f32 %v1869, %v1929
    %v1931 = vmul.f32 %v1918, %v1873
    %v1932 = vadd.f32 %v1871, %v1931
    %v1933 = vmul.f32 %v1918, %v1871
    %v1934 = vadd.f32 %v1873, %v1933
    %v1935 = vmul.f32 %v1918, %v1869
    %v1936 = vadd.f32 %v1875, %v1935
    %v1937 = vmul.f32 %v1918, %v1867
    %v1938 = vadd.f32 %v1877, %v1937
    %v1939 = vmul.f32 %v1918, %v1865
    %v1940 = vadd.f32 %v1879, %v1939
    %v1941 = vmul.f32 %v1918, %v1863
    %v1942 = vadd.f32 %v1881, %v1941
    %v1943 = vmul.f32 %v1918, %v1861
    %v1944 = vadd.f32 %v1883, %v1943
    %v1945 = vmul.f32 %v1918, %v1859
    %v1946 = vadd.f32 %v1857, %v1945
    %v1947 = vmul.f32 %v1918, %v1918
    %v1948 = vsub.f32 1.0, %v1947
    %v1949 = vmul.f32 %v1886, %v1948
    %v1950 = vmul.f32 %v1920, %v1409
    %v1951 = vadd.f32 %v1410, %v1950
    %v1952 = vmul.f32 %v1922, %v1408
    %v1953 = vadd.f32 %v1951, %v1952
    %v1954 = vmul.f32 %v1924, %v1407
    %v1955 = vadd.f32 %v1953, %v1954
    %v1956 = vmul.f32 %v1926, %v1406
    %v1957 = vadd.f32 %v1955, %v1956
    %v1958 = vmul.f32 %v1928, %v1405
    %v1959 = vadd.f32 %v1957, %v1958
    %v1960 = vmul.f32 %v1930, %v1404
    %v1961 = vadd.f32 %v1959, %v1960
    %v1962 = vmul.f32 %v1932, %v1403
    %v1963 = vadd.f32 %v1961, %v1962
    %v1964 = vmul.f32 %v1934, %v1402
    %v1965 = vadd.f32 %v1963, %v1964
    %v1966 = vmul.f32 %v1936, %v1401
    %v1967 = vadd.f32 %v1965, %v1966
    %v1968 = vmul.f32 %v1938, %v1400
    %v1969 = vadd.f32 %v1967, %v1968
    %v1970 = vmul.f32 %v1940, %v1399
    %v1971 = vadd.f32 %v1969, %v1970
    %v1972 = vmul.f32 %v1942, %v1398
    %v1973 = vadd.f32 %v1971, %v1972
    %v1974 = vmul.f32 %v1944, %v1397
    %v1975 = vadd.f32 %v1973, %v1974
    %v1976 = vmul.f32 %v1946, %v1396
    %v1977 = vadd.f32 %v1975, %v1976
    %v1978 = vmul.f32 %v1918, %v1395
    %v1979 = vadd.f32 %v1977, %v1978
    %v1980 = vsub.f32 0.0, %v1979
    %v1981 = vadd.f32 %v1949, 1e-12
    %v1982 = vrcp.pop %v1981
    %v1983 = vmul.f32 %v1980, %v1982
    %v1984 = vmul.f32 %v1983, %v1918
    %v1985 = vadd.f32 %v1920, %v1984
    %v1986 = vmul.f32 %v1983, %v1946
    %v1987 = vadd.f32 %v1922, %v1986
    %v1988 = vmul.f32 %v1983, %v1944
    %v1989 = vadd.f32 %v1924, %v1988
    %v1990 = vmul.f32 %v1983, %v1942
    %v1991 = vadd.f32 %v1926, %v1990
    %v1992 = vmul.f32 %v1983, %v1940
    %v1993 = vadd.f32 %v1928, %v1992
    %v1994 = vmul.f32 %v1983, %v1938
    %v1995 = vadd.f32 %v1930, %v1994
    %v1996 = vmul.f32 %v1983, %v1936
    %v1997 = vadd.f32 %v1932, %v1996
    %v1998 = vmul.f32 %v1983, %v1934
    %v1999 = vadd.f32 %v1934, %v1998
    %v2000 = vmul.f32 %v1983, %v1932
    %v2001 = vadd.f32 %v1936, %v2000
    %v2002 = vmul.f32 %v1983, %v1930
    %v2003 = vadd.f32 %v1938, %v2002
    %v2004 = vmul.f32 %v1983, %v1928
    %v2005 = vadd.f32 %v1940, %v2004
    %v2006 = vmul.f32 %v1983, %v1926
    %v2007 = vadd.f32 %v1942, %v2006
    %v2008 = vmul.f32 %v1983, %v1924
    %v2009 = vadd.f32 %v1944, %v2008
    %v2010 = vmul.f32 %v1983, %v1922
    %v2011 = vadd.f32 %v1946, %v2010
    %v2012 = vmul.f32 %v1983, %v1920
    %v2013 = vadd.f32 %v1918, %v2012
    %v2014 = vmul.f32 %v1983, %v1983
    %v2015 = vsub.f32 1.0, %v2014
    %v2016 = vmul.f32 %v1949, %v2015
    %v2017 = vmul.f32 %v1985, %v1410
    %v2018 = vadd.f32 %v1411, %v2017
    %v2019 = vmul.f32 %v1987, %v1409
    %v2020 = vadd.f32 %v2018, %v2019
    %v2021 = vmul.f32 %v1989, %v1408
    %v2022 = vadd.f32 %v2020, %v2021
    %v2023 = vmul.f32 %v1991, %v1407
    %v2024 = vadd.f32 %v2022, %v2023
    %v2025 = vmul.f32 %v1993, %v1406
    %v2026 = vadd.f32 %v2024, %v2025
    %v2027 = vmul.f32 %v1995, %v1405
    %v2028 = vadd.f32 %v2026, %v2027
    %v2029 = vmul.f32 %v1997, %v1404
    %v2030 = vadd.f32 %v2028, %v2029
    %v2031 = vmul.f32 %v1999, %v1403
    %v2032 = vadd.f32 %v2030, %v2031
    %v2033 = vmul.f32 %v2001, %v1402
    %v2034 = vadd.f32 %v2032, %v2033
    %v2035 = vmul.f32 %v2003, %v1401
    %v2036 = vadd.f32 %v2034, %v2035
    %v2037 = vmul.f32 %v2005, %v1400
    %v2038 = vadd.f32 %v2036, %v2037
    %v2039 = vmul.f32 %v2007, %v1399
    %v2040 = vadd.f32 %v2038, %v2039
    %v2041 = vmul.f32 %v2009, %v1398
    %v2042 = vadd.f32 %v2040, %v2041
    %v2043 = vmul.f32 %v2011, %v1397
    %v2044 = vadd.f32 %v2042, %v2043
    %v2045 = vmul.f32 %v2013, %v1396
    %v2046 = vadd.f32 %v2044, %v2045
    %v2047 = vmul.f32 %v1983, %v1395
    %v2048 = vadd.f32 %v2046, %v2047
    %v2049 = vsub.f32 0.0, %v2048
    %v2050 = vadd.f32 %v2016, 1e-12
    %v2051 = vrcp.pop %v2050
    %v2052 = vmul.f32 %v2049, %v2051
    %v2053 = vmul.f32 %v2052, %v1983
    %v2054 = vadd.f32 %v1985, %v2053
    %v2055 = vmul.f32 %v2052, %v2013
    %v2056 = vadd.f32 %v1987, %v2055
    %v2057 = vmul.f32 %v2052, %v2011
    %v2058 = vadd.f32 %v1989, %v2057
    %v2059 = vmul.f32 %v2052, %v2009
    %v2060 = vadd.f32 %v1991, %v2059
    %v2061 = vmul.f32 %v2052, %v2007
    %v2062 = vadd.f32 %v1993, %v2061
    %v2063 = vmul.f32 %v2052, %v2005
    %v2064 = vadd.f32 %v1995, %v2063
    %v2065 = vmul.f32 %v2052, %v2003
    %v2066 = vadd.f32 %v1997, %v2065
    %v2067 = vmul.f32 %v2052, %v2001
    %v2068 = vadd.f32 %v1999, %v2067
    %v2069 = vmul.f32 %v2052, %v1999
    %v2070 = vadd.f32 %v2001, %v2069
    %v2071 = vmul.f32 %v2052, %v1997
    %v2072 = vadd.f32 %v2003, %v2071
    %v2073 = vmul.f32 %v2052, %v1995
    %v2074 = vadd.f32 %v2005, %v2073
    %v2075 = vmul.f32 %v2052, %v1993
    %v2076 = vadd.f32 %v2007, %v2075
    %v2077 = vmul.f32 %v2052, %v1991
    %v2078 = vadd.f32 %v2009, %v2077
    %v2079 = vmul.f32 %v2052, %v1989
    %v2080 = vadd.f32 %v2011, %v2079
    %v2081 = vmul.f32 %v2052, %v1987
    %v2082 = vadd.f32 %v2013, %v2081
    %v2083 = vmul.f32 %v2052, %v1985
    %v2084 = vadd.f32 %v1983, %v2083
    %v2085 = vmul.f32 %v2052, %v2052
    %v2086 = vsub.f32 1.0, %v2085
    %v2087 = vmul.f32 %v2016, %v2086
    %v2088 = vmul.f32 %v2054, %v1411
    %v2089 = vadd.f32 %v1412, %v2088
    %v2090 = vmul.f32 %v2056, %v1410
    %v2091 = vadd.f32 %v2089, %v2090
    %v2092 = vmul.f32 %v2058, %v1409
    %v2093 = vadd.f32 %v2091, %v2092
    %v2094 = vmul.f32 %v2060, %v1408
    %v2095 = vadd.f32 %v2093, %v2094
    %v2096 = vmul.f32 %v2062, %v1407
    %v2097 = vadd.f32 %v2095, %v2096
    %v2098 = vmul.f32 %v2064, %v1406
    %v2099 = vadd.f32 %v2097, %v2098
    %v2100 = vmul.f32 %v2066, %v1405
    %v2101 = vadd.f32 %v2099, %v2100
    %v2102 = vmul.f32 %v2068, %v1404
    %v2103 = vadd.f32 %v2101, %v2102
    %v2104 = vmul.f32 %v2070, %v1403
    %v2105 = vadd.f32 %v2103, %v2104
    %v2106 = vmul.f32 %v2072, %v1402
    %v2107 = vadd.f32 %v2105, %v2106
    %v2108 = vmul.f32 %v2074, %v1401
    %v2109 = vadd.f32 %v2107, %v2108
    %v2110 = vmul.f32 %v2076, %v1400
    %v2111 = vadd.f32 %v2109, %v2110
    %v2112 = vmul.f32 %v2078, %v1399
    %v2113 = vadd.f32 %v2111, %v2112
    %v2114 = vmul.f32 %v2080, %v1398
    %v2115 = vadd.f32 %v2113, %v2114
    %v2116 = vmul.f32 %v2082, %v1397
    %v2117 = vadd.f32 %v2115, %v2116
    %v2118 = vmul.f32 %v2084, %v1396
    %v2119 = vadd.f32 %v2117, %v2118
    %v2120 = vmul.f32 %v2052, %v1395
    %v2121 = vadd.f32 %v2119, %v2120
    %v2122 = vsub.f32 0.0, %v2121
    %v2123 = vadd.f32 %v2087, 1e-12
    %v2124 = vrcp.pop %v2123
    %v2125 = vmul.f32 %v2122, %v2124
    %v2126 = vmul.f32 %v2125, %v2052
    %v2127 = vadd.f32 %v2054, %v2126
    %v2128 = vmul.f32 %v2125, %v2084
    %v2129 = vadd.f32 %v2056, %v2128
    %v2130 = vmul.f32 %v2125, %v2082
    %v2131 = vadd.f32 %v2058, %v2130
    %v2132 = vmul.f32 %v2125, %v2080
    %v2133 = vadd.f32 %v2060, %v2132
    %v2134 = vmul.f32 %v2125, %v2078
    %v2135 = vadd.f32 %v2062, %v2134
    %v2136 = vmul.f32 %v2125, %v2076
    %v2137 = vadd.f32 %v2064, %v2136
    %v2138 = vmul.f32 %v2125, %v2074
    %v2139 = vadd.f32 %v2066, %v2138
    %v2140 = vmul.f32 %v2125, %v2072
    %v2141 = vadd.f32 %v2068, %v2140
    %v2142 = vmul.f32 %v2125, %v2070
    %v2143 = vadd.f32 %v2070, %v2142
    %v2144 = vmul.f32 %v2125, %v2068
    %v2145 = vadd.f32 %v2072, %v2144
    %v2146 = vmul.f32 %v2125, %v2066
    %v2147 = vadd.f32 %v2074, %v2146
    %v2148 = vmul.f32 %v2125, %v2064
    %v2149 = vadd.f32 %v2076, %v2148
    %v2150 = vmul.f32 %v2125, %v2062
    %v2151 = vadd.f32 %v2078, %v2150
    %v2152 = vmul.f32 %v2125, %v2060
    %v2153 = vadd.f32 %v2080, %v2152
    %v2154 = vmul.f32 %v2125, %v2058
    %v2155 = vadd.f32 %v2082, %v2154
    %v2156 = vmul.f32 %v2125, %v2056
    %v2157 = vadd.f32 %v2084, %v2156
    %v2158 = vmul.f32 %v2125, %v2054
    %v2159 = vadd.f32 %v2052, %v2158
    %v2160 = vmul.f32 %v2125, %v2125
    %v2161 = vsub.f32 1.0, %v2160
    %v2162 = vmul.f32 %v2087, %v2161
    %v2163 = vmul.f32 %v2127, %v1412
    %v2164 = vadd.f32 %v1413, %v2163
    %v2165 = vmul.f32 %v2129, %v1411
    %v2166 = vadd.f32 %v2164, %v2165
    %v2167 = vmul.f32 %v2131, %v1410
    %v2168 = vadd.f32 %v2166, %v2167
    %v2169 = vmul.f32 %v2133, %v1409
    %v2170 = vadd.f32 %v2168, %v2169
    %v2171 = vmul.f32 %v2135, %v1408
    %v2172 = vadd.f32 %v2170, %v2171
    %v2173 = vmul.f32 %v2137, %v1407
    %v2174 = vadd.f32 %v2172, %v2173
    %v2175 = vmul.f32 %v2139, %v1406
    %v2176 = vadd.f32 %v2174, %v2175
    %v2177 = vmul.f32 %v2141, %v1405
    %v2178 = vadd.f32 %v2176, %v2177
    %v2179 = vmul.f32 %v2143, %v1404
    %v2180 = vadd.f32 %v2178, %v2179
    %v2181 = vmul.f32 %v2145, %v1403
    %v2182 = vadd.f32 %v2180, %v2181
    %v2183 = vmul.f32 %v2147, %v1402
    %v2184 = vadd.f32 %v2182, %v2183
    %v2185 = vmul.f32 %v2149, %v1401
    %v2186 = vadd.f32 %v2184, %v2185
    %v2187 = vmul.f32 %v2151, %v1400
    %v2188 = vadd.f32 %v2186, %v2187
    %v2189 = vmul.f32 %v2153, %v1399
    %v2190 = vadd.f32 %v2188, %v2189
    %v2191 = vmul.f32 %v2155, %v1398
    %v2192 = vadd.f32 %v2190, %v2191
    %v2193 = vmul.f32 %v2157, %v1397
    %v2194 = vadd.f32 %v2192, %v2193
    %v2195 = vmul.f32 %v2159, %v1396
    %v2196 = vadd.f32 %v2194, %v2195
    %v2197 = vmul.f32 %v2125, %v1395
    %v2198 = vadd.f32 %v2196, %v2197
    %v2199 = vsub.f32 0.0, %v2198
    %v2200 = vadd.f32 %v2162, 1e-12
    %v2201 = vrcp.pop %v2200
    %v2202 = vmul.f32 %v2199, %v2201
    %v2203 = vmul.f32 %v2202, %v2125
    %v2204 = vadd.f32 %v2127, %v2203
    %v2205 = vmul.f32 %v2202, %v2159
    %v2206 = vadd.f32 %v2129, %v2205
    %v2207 = vmul.f32 %v2202, %v2157
    %v2208 = vadd.f32 %v2131, %v2207
    %v2209 = vmul.f32 %v2202, %v2155
    %v2210 = vadd.f32 %v2133, %v2209
    %v2211 = vmul.f32 %v2202, %v2153
    %v2212 = vadd.f32 %v2135, %v2211
    %v2213 = vmul.f32 %v2202, %v2151
    %v2214 = vadd.f32 %v2137, %v2213
    %v2215 = vmul.f32 %v2202, %v2149
    %v2216 = vadd.f32 %v2139, %v2215
    %v2217 = vmul.f32 %v2202, %v2147
    %v2218 = vadd.f32 %v2141, %v2217
    %v2219 = vmul.f32 %v2202, %v2145
    %v2220 = vadd.f32 %v2143, %v2219
    %v2221 = vmul.f32 %v2202, %v2143
    %v2222 = vadd.f32 %v2145, %v2221
    %v2223 = vmul.f32 %v2202, %v2141
    %v2224 = vadd.f32 %v2147, %v2223
    %v2225 = vmul.f32 %v2202, %v2139
    %v2226 = vadd.f32 %v2149, %v2225
    %v2227 = vmul.f32 %v2202, %v2137
    %v2228 = vadd.f32 %v2151, %v2227
    %v2229 = vmul.f32 %v2202, %v2135
    %v2230 = vadd.f32 %v2153, %v2229
    %v2231 = vmul.f32 %v2202, %v2133
    %v2232 = vadd.f32 %v2155, %v2231
    %v2233 = vmul.f32 %v2202, %v2131
    %v2234 = vadd.f32 %v2157, %v2233
    %v2235 = vmul.f32 %v2202, %v2129
    %v2236 = vadd.f32 %v2159, %v2235
    %v2237 = vmul.f32 %v2202, %v2127
    %v2238 = vadd.f32 %v2125, %v2237
    %v2239 = vmul.f32 %v2202, %v2202
    %v2240 = vsub.f32 1.0, %v2239
    %v2241 = vmul.f32 %v2162, %v2240
    %v2242 = vmul.f32 %v2204, %v1413
    %v2243 = vadd.f32 %v1414, %v2242
    %v2244 = vmul.f32 %v2206, %v1412
    %v2245 = vadd.f32 %v2243, %v2244
    %v2246 = vmul.f32 %v2208, %v1411
    %v2247 = vadd.f32 %v2245, %v2246
    %v2248 = vmul.f32 %v2210, %v1410
    %v2249 = vadd.f32 %v2247, %v2248
    %v2250 = vmul.f32 %v2212, %v1409
    %v2251 = vadd.f32 %v2249, %v2250
    %v2252 = vmul.f32 %v2214, %v1408
    %v2253 = vadd.f32 %v2251, %v2252
    %v2254 = vmul.f32 %v2216, %v1407
    %v2255 = vadd.f32 %v2253, %v2254
    %v2256 = vmul.f32 %v2218, %v1406
    %v2257 = vadd.f32 %v2255, %v2256
    %v2258 = vmul.f32 %v2220, %v1405
    %v2259 = vadd.f32 %v2257, %v2258
    %v2260 = vmul.f32 %v2222, %v1404
    %v2261 = vadd.f32 %v2259, %v2260
    %v2262 = vmul.f32 %v2224, %v1403
    %v2263 = vadd.f32 %v2261, %v2262
    %v2264 = vmul.f32 %v2226, %v1402
    %v2265 = vadd.f32 %v2263, %v2264
    %v2266 = vmul.f32 %v2228, %v1401
    %v2267 = vadd.f32 %v2265, %v2266
    %v2268 = vmul.f32 %v2230, %v1400
    %v2269 = vadd.f32 %v2267, %v2268
    %v2270 = vmul.f32 %v2232, %v1399
    %v2271 = vadd.f32 %v2269, %v2270
    %v2272 = vmul.f32 %v2234, %v1398
    %v2273 = vadd.f32 %v2271, %v2272
    %v2274 = vmul.f32 %v2236, %v1397
    %v2275 = vadd.f32 %v2273, %v2274
    %v2276 = vmul.f32 %v2238, %v1396
    %v2277 = vadd.f32 %v2275, %v2276
    %v2278 = vmul.f32 %v2202, %v1395
    %v2279 = vadd.f32 %v2277, %v2278
    %v2280 = vsub.f32 0.0, %v2279
    %v2281 = vadd.f32 %v2241, 1e-12
    %v2282 = vrcp.pop %v2281
    %v2283 = vmul.f32 %v2280, %v2282
    %v2284 = vmul.f32 %v2283, %v2202
    %v2285 = vadd.f32 %v2204, %v2284
    %v2286 = vmul.f32 %v2283, %v2238
    %v2287 = vadd.f32 %v2206, %v2286
    %v2288 = vmul.f32 %v2283, %v2236
    %v2289 = vadd.f32 %v2208, %v2288
    %v2290 = vmul.f32 %v2283, %v2234
    %v2291 = vadd.f32 %v2210, %v2290
    %v2292 = vmul.f32 %v2283, %v2232
    %v2293 = vadd.f32 %v2212, %v2292
    %v2294 = vmul.f32 %v2283, %v2230
    %v2295 = vadd.f32 %v2214, %v2294
    %v2296 = vmul.f32 %v2283, %v2228
    %v2297 = vadd.f32 %v2216, %v2296
    %v2298 = vmul.f32 %v2283, %v2226
    %v2299 = vadd.f32 %v2218, %v2298
    %v2300 = vmul.f32 %v2283, %v2224
    %v2301 = vadd.f32 %v2220, %v2300
    %v2302 = vmul.f32 %v2283, %v2222
    %v2303 = vadd.f32 %v2222, %v2302
    %v2304 = vmul.f32 %v2283, %v2220
    %v2305 = vadd.f32 %v2224, %v2304
    %v2306 = vmul.f32 %v2283, %v2218
    %v2307 = vadd.f32 %v2226, %v2306
    %v2308 = vmul.f32 %v2283, %v2216
    %v2309 = vadd.f32 %v2228, %v2308
    %v2310 = vmul.f32 %v2283, %v2214
    %v2311 = vadd.f32 %v2230, %v2310
    %v2312 = vmul.f32 %v2283, %v2212
    %v2313 = vadd.f32 %v2232, %v2312
    %v2314 = vmul.f32 %v2283, %v2210
    %v2315 = vadd.f32 %v2234, %v2314
    %v2316 = vmul.f32 %v2283, %v2208
    %v2317 = vadd.f32 %v2236, %v2316
    %v2318 = vmul.f32 %v2283, %v2206
    %v2319 = vadd.f32 %v2238, %v2318
    %v2320 = vmul.f32 %v2283, %v2204
    %v2321 = vadd.f32 %v2202, %v2320
    %v2322 = vmul.f32 %v2283, %v2283
    %v2323 = vsub.f32 1.0, %v2322
    %v2324 = vmul.f32 %v2241, %v2323
    %v2325 = vmul.f32 %v2285, %v1414
    %v2326 = vadd.f32 %v1415, %v2325
    %v2327 = vmul.f32 %v2287, %v1413
    %v2328 = vadd.f32 %v2326, %v2327
    %v2329 = vmul.f32 %v2289, %v1412
    %v2330 = vadd.f32 %v2328, %v2329
    %v2331 = vmul.f32 %v2291, %v1411
    %v2332 = vadd.f32 %v2330, %v2331
    %v2333 = vmul.f32 %v2293, %v1410
    %v2334 = vadd.f32 %v2332, %v2333
    %v2335 = vmul.f32 %v2295, %v1409
    %v2336 = vadd.f32 %v2334, %v2335
    %v2337 = vmul.f32 %v2297, %v1408
    %v2338 = vadd.f32 %v2336, %v2337
    %v2339 = vmul.f32 %v2299, %v1407
    %v2340 = vadd.f32 %v2338, %v2339
    %v2341 = vmul.f32 %v2301, %v1406
    %v2342 = vadd.f32 %v2340, %v2341
    %v2343 = vmul.f32 %v2303, %v1405
    %v2344 = vadd.f32 %v2342, %v2343
    %v2345 = vmul.f32 %v2305, %v1404
    %v2346 = vadd.f32 %v2344, %v2345
    %v2347 = vmul.f32 %v2307, %v1403
    %v2348 = vadd.f32 %v2346, %v2347
    %v2349 = vmul.f32 %v2309, %v1402
    %v2350 = vadd.f32 %v2348, %v2349
    %v2351 = vmul.f32 %v2311, %v1401
    %v2352 = vadd.f32 %v2350, %v2351
    %v2353 = vmul.f32 %v2313, %v1400
    %v2354 = vadd.f32 %v2352, %v2353
    %v2355 = vmul.f32 %v2315, %v1399
    %v2356 = vadd.f32 %v2354, %v2355
    %v2357 = vmul.f32 %v2317, %v1398
    %v2358 = vadd.f32 %v2356, %v2357
    %v2359 = vmul.f32 %v2319, %v1397
    %v2360 = vadd.f32 %v2358, %v2359
    %v2361 = vmul.f32 %v2321, %v1396
    %v2362 = vadd.f32 %v2360, %v2361
    %v2363 = vmul.f32 %v2283, %v1395
    %v2364 = vadd.f32 %v2362, %v2363
    %v2365 = vsub.f32 0.0, %v2364
    %v2366 = vadd.f32 %v2324, 1e-12
    %v2367 = vrcp.pop %v2366
    %v2368 = vmul.f32 %v2365, %v2367
    %v2369 = vmul.f32 %v2368, %v2283
    %v2370 = vadd.f32 %v2285, %v2369
    %v2371 = vmul.f32 %v2368, %v2321
    %v2372 = vadd.f32 %v2287, %v2371
    %v2373 = vmul.f32 %v2368, %v2319
    %v2374 = vadd.f32 %v2289, %v2373
    %v2375 = vmul.f32 %v2368, %v2317
    %v2376 = vadd.f32 %v2291, %v2375
    %v2377 = vmul.f32 %v2368, %v2315
    %v2378 = vadd.f32 %v2293, %v2377
    %v2379 = vmul.f32 %v2368, %v2313
    %v2380 = vadd.f32 %v2295, %v2379
    %v2381 = vmul.f32 %v2368, %v2311
    %v2382 = vadd.f32 %v2297, %v2381
    %v2383 = vmul.f32 %v2368, %v2309
    %v2384 = vadd.f32 %v2299, %v2383
    %v2385 = vmul.f32 %v2368, %v2307
    %v2386 = vadd.f32 %v2301, %v2385
    %v2387 = vmul.f32 %v2368, %v2305
    %v2388 = vadd.f32 %v2303, %v2387
    %v2389 = vmul.f32 %v2368, %v2303
    %v2390 = vadd.f32 %v2305, %v2389
    %v2391 = vmul.f32 %v2368, %v2301
    %v2392 = vadd.f32 %v2307, %v2391
    %v2393 = vmul.f32 %v2368, %v2299
    %v2394 = vadd.f32 %v2309, %v2393
    %v2395 = vmul.f32 %v2368, %v2297
    %v2396 = vadd.f32 %v2311, %v2395
    %v2397 = vmul.f32 %v2368, %v2295
    %v2398 = vadd.f32 %v2313, %v2397
    %v2399 = vmul.f32 %v2368, %v2293
    %v2400 = vadd.f32 %v2315, %v2399
    %v2401 = vmul.f32 %v2368, %v2291
    %v2402 = vadd.f32 %v2317, %v2401
    %v2403 = vmul.f32 %v2368, %v2289
    %v2404 = vadd.f32 %v2319, %v2403
    %v2405 = vmul.f32 %v2368, %v2287
    %v2406 = vadd.f32 %v2321, %v2405
    %v2407 = vmul.f32 %v2368, %v2285
    %v2408 = vadd.f32 %v2283, %v2407
    %v2409 = vmul.f32 %v2368, %v2368
    %v2410 = vsub.f32 1.0, %v2409
    %v2411 = vmul.f32 %v2324, %v2410
    %v2412 = vmul.f32 %v2370, %v1415
    %v2413 = vadd.f32 %v1416, %v2412
    %v2414 = vmul.f32 %v2372, %v1414
    %v2415 = vadd.f32 %v2413, %v2414
    %v2416 = vmul.f32 %v2374, %v1413
    %v2417 = vadd.f32 %v2415, %v2416
    %v2418 = vmul.f32 %v2376, %v1412
    %v2419 = vadd.f32 %v2417, %v2418
    %v2420 = vmul.f32 %v2378, %v1411
    %v2421 = vadd.f32 %v2419, %v2420
    %v2422 = vmul.f32 %v2380, %v1410
    %v2423 = vadd.f32 %v2421, %v2422
    %v2424 = vmul.f32 %v2382, %v1409
    %v2425 = vadd.f32 %v2423, %v2424
    %v2426 = vmul.f32 %v2384, %v1408
    %v2427 = vadd.f32 %v2425, %v2426
    %v2428 = vmul.f32 %v2386, %v1407
    %v2429 = vadd.f32 %v2427, %v2428
    %v2430 = vmul.f32 %v2388, %v1406
    %v2431 = vadd.f32 %v2429, %v2430
    %v2432 = vmul.f32 %v2390, %v1405
    %v2433 = vadd.f32 %v2431, %v2432
    %v2434 = vmul.f32 %v2392, %v1404
    %v2435 = vadd.f32 %v2433, %v2434
    %v2436 = vmul.f32 %v2394, %v1403
    %v2437 = vadd.f32 %v2435, %v2436
    %v2438 = vmul.f32 %v2396, %v1402
    %v2439 = vadd.f32 %v2437, %v2438
    %v2440 = vmul.f32 %v2398, %v1401
    %v2441 = vadd.f32 %v2439, %v2440
    %v2442 = vmul.f32 %v2400, %v1400
    %v2443 = vadd.f32 %v2441, %v2442
    %v2444 = vmul.f32 %v2402, %v1399
    %v2445 = vadd.f32 %v2443, %v2444
    %v2446 = vmul.f32 %v2404, %v1398
    %v2447 = vadd.f32 %v2445, %v2446
    %v2448 = vmul.f32 %v2406, %v1397
    %v2449 = vadd.f32 %v2447, %v2448
    %v2450 = vmul.f32 %v2408, %v1396
    %v2451 = vadd.f32 %v2449, %v2450
    %v2452 = vmul.f32 %v2368, %v1395
    %v2453 = vadd.f32 %v2451, %v2452
    %v2454 = vsub.f32 0.0, %v2453
    %v2455 = vadd.f32 %v2411, 1e-12
    %v2456 = vrcp.pop %v2455
    %v2457 = vmul.f32 %v2454, %v2456
    %v2458 = vmul.f32 %v2457, %v2368
    %v2459 = vadd.f32 %v2370, %v2458
    %v2460 = vmul.f32 %v2457, %v2408
    %v2461 = vadd.f32 %v2372, %v2460
    %v2462 = vmul.f32 %v2457, %v2406
    %v2463 = vadd.f32 %v2374, %v2462
    %v2464 = vmul.f32 %v2457, %v2404
    %v2465 = vadd.f32 %v2376, %v2464
    %v2466 = vmul.f32 %v2457, %v2402
    %v2467 = vadd.f32 %v2378, %v2466
    %v2468 = vmul.f32 %v2457, %v2400
    %v2469 = vadd.f32 %v2380, %v2468
    %v2470 = vmul.f32 %v2457, %v2398
    %v2471 = vadd.f32 %v2382, %v2470
    %v2472 = vmul.f32 %v2457, %v2396
    %v2473 = vadd.f32 %v2384, %v2472
    %v2474 = vmul.f32 %v2457, %v2394
    %v2475 = vadd.f32 %v2386, %v2474
    %v2476 = vmul.f32 %v2457, %v2392
    %v2477 = vadd.f32 %v2388, %v2476
    %v2478 = vmul.f32 %v2457, %v2390
    %v2479 = vadd.f32 %v2390, %v2478
    %v2480 = vmul.f32 %v2457, %v2388
    %v2481 = vadd.f32 %v2392, %v2480
    %v2482 = vmul.f32 %v2457, %v2386
    %v2483 = vadd.f32 %v2394, %v2482
    %v2484 = vmul.f32 %v2457, %v2384
    %v2485 = vadd.f32 %v2396, %v2484
    %v2486 = vmul.f32 %v2457, %v2382
    %v2487 = vadd.f32 %v2398, %v2486
    %v2488 = vmul.f32 %v2457, %v2380
    %v2489 = vadd.f32 %v2400, %v2488
    %v2490 = vmul.f32 %v2457, %v2378
    %v2491 = vadd.f32 %v2402, %v2490
    %v2492 = vmul.f32 %v2457, %v2376
    %v2493 = vadd.f32 %v2404, %v2492
    %v2494 = vmul.f32 %v2457, %v2374
    %v2495 = vadd.f32 %v2406, %v2494
    %v2496 = vmul.f32 %v2457, %v2372
    %v2497 = vadd.f32 %v2408, %v2496
    %v2498 = vmul.f32 %v2457, %v2370
    %v2499 = vadd.f32 %v2368, %v2498
    %v2500 = vmul.f32 %v2457, %v2457
    %v2501 = vsub.f32 1.0, %v2500
    %v2502 = vmul.f32 %v2411, %v2501
    %v2503 = vmul.f32 %v2459, %v1416
    %v2504 = vadd.f32 %v1417, %v2503
    %v2505 = vmul.f32 %v2461, %v1415
    %v2506 = vadd.f32 %v2504, %v2505
    %v2507 = vmul.f32 %v2463, %v1414
    %v2508 = vadd.f32 %v2506, %v2507
    %v2509 = vmul.f32 %v2465, %v1413
    %v2510 = vadd.f32 %v2508, %v2509
    %v2511 = vmul.f32 %v2467, %v1412
    %v2512 = vadd.f32 %v2510, %v2511
    %v2513 = vmul.f32 %v2469, %v1411
    %v2514 = vadd.f32 %v2512, %v2513
    %v2515 = vmul.f32 %v2471, %v1410
    %v2516 = vadd.f32 %v2514, %v2515
    %v2517 = vmul.f32 %v2473, %v1409
    %v2518 = vadd.f32 %v2516, %v2517
    %v2519 = vmul.f32 %v2475, %v1408
    %v2520 = vadd.f32 %v2518, %v2519
    %v2521 = vmul.f32 %v2477, %v1407
    %v2522 = vadd.f32 %v2520, %v2521
    %v2523 = vmul.f32 %v2479, %v1406
    %v2524 = vadd.f32 %v2522, %v2523
    %v2525 = vmul.f32 %v2481, %v1405
    %v2526 = vadd.f32 %v2524, %v2525
    %v2527 = vmul.f32 %v2483, %v1404
    %v2528 = vadd.f32 %v2526, %v2527
    %v2529 = vmul.f32 %v2485, %v1403
    %v2530 = vadd.f32 %v2528, %v2529
    %v2531 = vmul.f32 %v2487, %v1402
    %v2532 = vadd.f32 %v2530, %v2531
    %v2533 = vmul.f32 %v2489, %v1401
    %v2534 = vadd.f32 %v2532, %v2533
    %v2535 = vmul.f32 %v2491, %v1400
    %v2536 = vadd.f32 %v2534, %v2535
    %v2537 = vmul.f32 %v2493, %v1399
    %v2538 = vadd.f32 %v2536, %v2537
    %v2539 = vmul.f32 %v2495, %v1398
    %v2540 = vadd.f32 %v2538, %v2539
    %v2541 = vmul.f32 %v2497, %v1397
    %v2542 = vadd.f32 %v2540, %v2541
    %v2543 = vmul.f32 %v2499, %v1396
    %v2544 = vadd.f32 %v2542, %v2543
    %v2545 = vmul.f32 %v2457, %v1395
    %v2546 = vadd.f32 %v2544, %v2545
    %v2547 = vsub.f32 0.0, %v2546
    %v2548 = vadd.f32 %v2502, 1e-12
    %v2549 = vrcp.pop %v2548
    %v2550 = vmul.f32 %v2547, %v2549
    %v2551 = vmul.f32 %v2550, %v2457
    %v2552 = vadd.f32 %v2459, %v2551
    %v2553 = vmul.f32 %v2550, %v2499
    %v2554 = vadd.f32 %v2461, %v2553
    %v2555 = vmul.f32 %v2550, %v2497
    %v2556 = vadd.f32 %v2463, %v2555
    %v2557 = vmul.f32 %v2550, %v2495
    %v2558 = vadd.f32 %v2465, %v2557
    %v2559 = vmul.f32 %v2550, %v2493
    %v2560 = vadd.f32 %v2467, %v2559
    %v2561 = vmul.f32 %v2550, %v2491
    %v2562 = vadd.f32 %v2469, %v2561
    %v2563 = vmul.f32 %v2550, %v2489
    %v2564 = vadd.f32 %v2471, %v2563
    %v2565 = vmul.f32 %v2550, %v2487
    %v2566 = vadd.f32 %v2473, %v2565
    %v2567 = vmul.f32 %v2550, %v2485
    %v2568 = vadd.f32 %v2475, %v2567
    %v2569 = vmul.f32 %v2550, %v2483
    %v2570 = vadd.f32 %v2477, %v2569
    %v2571 = vmul.f32 %v2550, %v2481
    %v2572 = vadd.f32 %v2479, %v2571
    %v2573 = vmul.f32 %v2550, %v2479
    %v2574 = vadd.f32 %v2481, %v2573
    %v2575 = vmul.f32 %v2550, %v2477
    %v2576 = vadd.f32 %v2483, %v2575
    %v2577 = vmul.f32 %v2550, %v2475
    %v2578 = vadd.f32 %v2485, %v2577
    %v2579 = vmul.f32 %v2550, %v2473
    %v2580 = vadd.f32 %v2487, %v2579
    %v2581 = vmul.f32 %v2550, %v2471
    %v2582 = vadd.f32 %v2489, %v2581
    %v2583 = vmul.f32 %v2550, %v2469
    %v2584 = vadd.f32 %v2491, %v2583
    %v2585 = vmul.f32 %v2550, %v2467
    %v2586 = vadd.f32 %v2493, %v2585
    %v2587 = vmul.f32 %v2550, %v2465
    %v2588 = vadd.f32 %v2495, %v2587
    %v2589 = vmul.f32 %v2550, %v2463
    %v2590 = vadd.f32 %v2497, %v2589
    %v2591 = vmul.f32 %v2550, %v2461
    %v2592 = vadd.f32 %v2499, %v2591
    %v2593 = vmul.f32 %v2550, %v2459
    %v2594 = vadd.f32 %v2457, %v2593
    %v2595 = vmul.f32 %v2550, %v2550
    %v2596 = vsub.f32 1.0, %v2595
    %v2597 = vmul.f32 %v2502, %v2596
    %v2598 = vmul.f32 %v2552, %v1417
    %v2599 = vadd.f32 %v1418, %v2598
    %v2600 = vmul.f32 %v2554, %v1416
    %v2601 = vadd.f32 %v2599, %v2600
    %v2602 = vmul.f32 %v2556, %v1415
    %v2603 = vadd.f32 %v2601, %v2602
    %v2604 = vmul.f32 %v2558, %v1414
    %v2605 = vadd.f32 %v2603, %v2604
    %v2606 = vmul.f32 %v2560, %v1413
    %v2607 = vadd.f32 %v2605, %v2606
    %v2608 = vmul.f32 %v2562, %v1412
    %v2609 = vadd.f32 %v2607, %v2608
    %v2610 = vmul.f32 %v2564, %v1411
    %v2611 = vadd.f32 %v2609, %v2610
    %v2612 = vmul.f32 %v2566, %v1410
    %v2613 = vadd.f32 %v2611, %v2612
    %v2614 = vmul.f32 %v2568, %v1409
    %v2615 = vadd.f32 %v2613, %v2614
    %v2616 = vmul.f32 %v2570, %v1408
    %v2617 = vadd.f32 %v2615, %v2616
    %v2618 = vmul.f32 %v2572, %v1407
    %v2619 = vadd.f32 %v2617, %v2618
    %v2620 = vmul.f32 %v2574, %v1406
    %v2621 = vadd.f32 %v2619, %v2620
    %v2622 = vmul.f32 %v2576, %v1405
    %v2623 = vadd.f32 %v2621, %v2622
    %v2624 = vmul.f32 %v2578, %v1404
    %v2625 = vadd.f32 %v2623, %v2624
    %v2626 = vmul.f32 %v2580, %v1403
    %v2627 = vadd.f32 %v2625, %v2626
    %v2628 = vmul.f32 %v2582, %v1402
    %v2629 = vadd.f32 %v2627, %v2628
    %v2630 = vmul.f32 %v2584, %v1401
    %v2631 = vadd.f32 %v2629, %v2630
    %v2632 = vmul.f32 %v2586, %v1400
    %v2633 = vadd.f32 %v2631, %v2632
    %v2634 = vmul.f32 %v2588, %v1399
    %v2635 = vadd.f32 %v2633, %v2634
    %v2636 = vmul.f32 %v2590, %v1398
    %v2637 = vadd.f32 %v2635, %v2636
    %v2638 = vmul.f32 %v2592, %v1397
    %v2639 = vadd.f32 %v2637, %v2638
    %v2640 = vmul.f32 %v2594, %v1396
    %v2641 = vadd.f32 %v2639, %v2640
    %v2642 = vmul.f32 %v2550, %v1395
    %v2643 = vadd.f32 %v2641, %v2642
    %v2644 = vsub.f32 0.0, %v2643
    %v2645 = vadd.f32 %v2597, 1e-12
    %v2646 = vrcp.pop %v2645
    %v2647 = vmul.f32 %v2644, %v2646
    %v2648 = vmul.f32 %v2647, %v2550
    %v2649 = vadd.f32 %v2552, %v2648
    %v2650 = vmul.f32 %v2647, %v2594
    %v2651 = vadd.f32 %v2554, %v2650
    %v2652 = vmul.f32 %v2647, %v2592
    %v2653 = vadd.f32 %v2556, %v2652
    %v2654 = vmul.f32 %v2647, %v2590
    %v2655 = vadd.f32 %v2558, %v2654
    %v2656 = vmul.f32 %v2647, %v2588
    %v2657 = vadd.f32 %v2560, %v2656
    %v2658 = vmul.f32 %v2647, %v2586
    %v2659 = vadd.f32 %v2562, %v2658
    %v2660 = vmul.f32 %v2647, %v2584
    %v2661 = vadd.f32 %v2564, %v2660
    %v2662 = vmul.f32 %v2647, %v2582
    %v2663 = vadd.f32 %v2566, %v2662
    %v2664 = vmul.f32 %v2647, %v2580
    %v2665 = vadd.f32 %v2568, %v2664
    %v2666 = vmul.f32 %v2647, %v2578
    %v2667 = vadd.f32 %v2570, %v2666
    %v2668 = vmul.f32 %v2647, %v2576
    %v2669 = vadd.f32 %v2572, %v2668
    %v2670 = vmul.f32 %v2647, %v2574
    %v2671 = vadd.f32 %v2574, %v2670
    %v2672 = vmul.f32 %v2647, %v2572
    %v2673 = vadd.f32 %v2576, %v2672
    %v2674 = vmul.f32 %v2647, %v2570
    %v2675 = vadd.f32 %v2578, %v2674
    %v2676 = vmul.f32 %v2647, %v2568
    %v2677 = vadd.f32 %v2580, %v2676
    %v2678 = vmul.f32 %v2647, %v2566
    %v2679 = vadd.f32 %v2582, %v2678
    %v2680 = vmul.f32 %v2647, %v2564
    %v2681 = vadd.f32 %v2584, %v2680
    %v2682 = vmul.f32 %v2647, %v2562
    %v2683 = vadd.f32 %v2586, %v2682
    %v2684 = vmul.f32 %v2647, %v2560
    %v2685 = vadd.f32 %v2588, %v2684
    %v2686 = vmul.f32 %v2647, %v2558
    %v2687 = vadd.f32 %v2590, %v2686
    %v2688 = vmul.f32 %v2647, %v2556
    %v2689 = vadd.f32 %v2592, %v2688
    %v2690 = vmul.f32 %v2647, %v2554
    %v2691 = vadd.f32 %v2594, %v2690
    %v2692 = vmul.f32 %v2647, %v2552
    %v2693 = vadd.f32 %v2550, %v2692
    %v2694 = vmul.f32 %v2647, %v2647
    %v2695 = vsub.f32 1.0, %v2694
    %v2696 = vmul.f32 %v2597, %v2695
    %v2697 = vmul.f32 %v2649, %v1418
    %v2698 = vadd.f32 %v1419, %v2697
    %v2699 = vmul.f32 %v2651, %v1417
    %v2700 = vadd.f32 %v2698, %v2699
    %v2701 = vmul.f32 %v2653, %v1416
    %v2702 = vadd.f32 %v2700, %v2701
    %v2703 = vmul.f32 %v2655, %v1415
    %v2704 = vadd.f32 %v2702, %v2703
    %v2705 = vmul.f32 %v2657, %v1414
    %v2706 = vadd.f32 %v2704, %v2705
    %v2707 = vmul.f32 %v2659, %v1413
    %v2708 = vadd.f32 %v2706, %v2707
    %v2709 = vmul.f32 %v2661, %v1412
    %v2710 = vadd.f32 %v2708, %v2709
    %v2711 = vmul.f32 %v2663, %v1411
    %v2712 = vadd.f32 %v2710, %v2711
    %v2713 = vmul.f32 %v2665, %v1410
    %v2714 = vadd.f32 %v2712, %v2713
    %v2715 = vmul.f32 %v2667, %v1409
    %v2716 = vadd.f32 %v2714, %v2715
    %v2717 = vmul.f32 %v2669, %v1408
    %v2718 = vadd.f32 %v2716, %v2717
    %v2719 = vmul.f32 %v2671, %v1407
    %v2720 = vadd.f32 %v2718, %v2719
    %v2721 = vmul.f32 %v2673, %v1406
    %v2722 = vadd.f32 %v2720, %v2721
    %v2723 = vmul.f32 %v2675, %v1405
    %v2724 = vadd.f32 %v2722, %v2723
    %v2725 = vmul.f32 %v2677, %v1404
    %v2726 = vadd.f32 %v2724, %v2725
    %v2727 = vmul.f32 %v2679, %v1403
    %v2728 = vadd.f32 %v2726, %v2727
    %v2729 = vmul.f32 %v2681, %v1402
    %v2730 = vadd.f32 %v2728, %v2729
    %v2731 = vmul.f32 %v2683, %v1401
    %v2732 = vadd.f32 %v2730, %v2731
    %v2733 = vmul.f32 %v2685, %v1400
    %v2734 = vadd.f32 %v2732, %v2733
    %v2735 = vmul.f32 %v2687, %v1399
    %v2736 = vadd.f32 %v2734, %v2735
    %v2737 = vmul.f32 %v2689, %v1398
    %v2738 = vadd.f32 %v2736, %v2737
    %v2739 = vmul.f32 %v2691, %v1397
    %v2740 = vadd.f32 %v2738, %v2739
    %v2741 = vmul.f32 %v2693, %v1396
    %v2742 = vadd.f32 %v2740, %v2741
    %v2743 = vmul.f32 %v2647, %v1395
    %v2744 = vadd.f32 %v2742, %v2743
    %v2745 = vsub.f32 0.0, %v2744
    %v2746 = vadd.f32 %v2696, 1e-12
    %v2747 = vrcp.pop %v2746
    %v2748 = vmul.f32 %v2745, %v2747
    %v2749 = vmul.f32 %v2748, %v2647
    %v2750 = vadd.f32 %v2649, %v2749
    %v2751 = vmul.f32 %v2748, %v2693
    %v2752 = vadd.f32 %v2651, %v2751
    %v2753 = vmul.f32 %v2748, %v2691
    %v2754 = vadd.f32 %v2653, %v2753
    %v2755 = vmul.f32 %v2748, %v2689
    %v2756 = vadd.f32 %v2655, %v2755
    %v2757 = vmul.f32 %v2748, %v2687
    %v2758 = vadd.f32 %v2657, %v2757
    %v2759 = vmul.f32 %v2748, %v2685
    %v2760 = vadd.f32 %v2659, %v2759
    %v2761 = vmul.f32 %v2748, %v2683
    %v2762 = vadd.f32 %v2661, %v2761
    %v2763 = vmul.f32 %v2748, %v2681
    %v2764 = vadd.f32 %v2663, %v2763
    %v2765 = vmul.f32 %v2748, %v2679
    %v2766 = vadd.f32 %v2665, %v2765
    %v2767 = vmul.f32 %v2748, %v2677
    %v2768 = vadd.f32 %v2667, %v2767
    %v2769 = vmul.f32 %v2748, %v2675
    %v2770 = vadd.f32 %v2669, %v2769
    %v2771 = vmul.f32 %v2748, %v2673
    %v2772 = vadd.f32 %v2671, %v2771
    %v2773 = vmul.f32 %v2748, %v2671
    %v2774 = vadd.f32 %v2673, %v2773
    %v2775 = vmul.f32 %v2748, %v2669
    %v2776 = vadd.f32 %v2675, %v2775
    %v2777 = vmul.f32 %v2748, %v2667
    %v2778 = vadd.f32 %v2677, %v2777
    %v2779 = vmul.f32 %v2748, %v2665
    %v2780 = vadd.f32 %v2679, %v2779
    %v2781 = vmul.f32 %v2748, %v2663
    %v2782 = vadd.f32 %v2681, %v2781
    %v2783 = vmul.f32 %v2748, %v2661
    %v2784 = vadd.f32 %v2683, %v2783
    %v2785 = vmul.f32 %v2748, %v2659
    %v2786 = vadd.f32 %v2685, %v2785
    %v2787 = vmul.f32 %v2748, %v2657
    %v2788 = vadd.f32 %v2687, %v2787
    %v2789 = vmul.f32 %v2748, %v2655
    %v2790 = vadd.f32 %v2689, %v2789
    %v2791 = vmul.f32 %v2748, %v2653
    %v2792 = vadd.f32 %v2691, %v2791
    %v2793 = vmul.f32 %v2748, %v2651
    %v2794 = vadd.f32 %v2693, %v2793
    %v2795 = vmul.f32 %v2748, %v2649
    %v2796 = vadd.f32 %v2647, %v2795
    %v2797 = vmul.f32 %v2748, %v2748
    %v2798 = vsub.f32 1.0, %v2797
    %v2799 = vmul.f32 %v2696, %v2798
    %v2800 = vmul.f32 %v2750, %v1419
    %v2801 = vadd.f32 %v1420, %v2800
    %v2802 = vmul.f32 %v2752, %v1418
    %v2803 = vadd.f32 %v2801, %v2802
    %v2804 = vmul.f32 %v2754, %v1417
    %v2805 = vadd.f32 %v2803, %v2804
    %v2806 = vmul.f32 %v2756, %v1416
    %v2807 = vadd.f32 %v2805, %v2806
    %v2808 = vmul.f32 %v2758, %v1415
    %v2809 = vadd.f32 %v2807, %v2808
    %v2810 = vmul.f32 %v2760, %v1414
    %v2811 = vadd.f32 %v2809, %v2810
    %v2812 = vmul.f32 %v2762, %v1413
    %v2813 = vadd.f32 %v2811, %v2812
    %v2814 = vmul.f32 %v2764, %v1412
    %v2815 = vadd.f32 %v2813, %v2814
    %v2816 = vmul.f32 %v2766, %v1411
    %v2817 = vadd.f32 %v2815, %v2816
    %v2818 = vmul.f32 %v2768, %v1410
    %v2819 = vadd.f32 %v2817, %v2818
    %v2820 = vmul.f32 %v2770, %v1409
    %v2821 = vadd.f32 %v2819, %v2820
    %v2822 = vmul.f32 %v2772, %v1408
    %v2823 = vadd.f32 %v2821, %v2822
    %v2824 = vmul.f32 %v2774, %v1407
    %v2825 = vadd.f32 %v2823, %v2824
    %v2826 = vmul.f32 %v2776, %v1406
    %v2827 = vadd.f32 %v2825, %v2826
    %v2828 = vmul.f32 %v2778, %v1405
    %v2829 = vadd.f32 %v2827, %v2828
    %v2830 = vmul.f32 %v2780, %v1404
    %v2831 = vadd.f32 %v2829, %v2830
    %v2832 = vmul.f32 %v2782, %v1403
    %v2833 = vadd.f32 %v2831, %v2832
    %v2834 = vmul.f32 %v2784, %v1402
    %v2835 = vadd.f32 %v2833, %v2834
    %v2836 = vmul.f32 %v2786, %v1401
    %v2837 = vadd.f32 %v2835, %v2836
    %v2838 = vmul.f32 %v2788, %v1400
    %v2839 = vadd.f32 %v2837, %v2838
    %v2840 = vmul.f32 %v2790, %v1399
    %v2841 = vadd.f32 %v2839, %v2840
    %v2842 = vmul.f32 %v2792, %v1398
    %v2843 = vadd.f32 %v2841, %v2842
    %v2844 = vmul.f32 %v2794, %v1397
    %v2845 = vadd.f32 %v2843, %v2844
    %v2846 = vmul.f32 %v2796, %v1396
    %v2847 = vadd.f32 %v2845, %v2846
    %v2848 = vmul.f32 %v2748, %v1395
    %v2849 = vadd.f32 %v2847, %v2848
    %v2850 = vsub.f32 0.0, %v2849
    %v2851 = vadd.f32 %v2799, 1e-12
    %v2852 = vrcp.pop %v2851
    %v2853 = vmul.f32 %v2850, %v2852
    %v2854 = vmul.f32 %v2853, %v2748
    %v2855 = vadd.f32 %v2750, %v2854
    %v2856 = vmul.f32 %v2853, %v2796
    %v2857 = vadd.f32 %v2752, %v2856
    %v2858 = vmul.f32 %v2853, %v2794
    %v2859 = vadd.f32 %v2754, %v2858
    %v2860 = vmul.f32 %v2853, %v2792
    %v2861 = vadd.f32 %v2756, %v2860
    %v2862 = vmul.f32 %v2853, %v2790
    %v2863 = vadd.f32 %v2758, %v2862
    %v2864 = vmul.f32 %v2853, %v2788
    %v2865 = vadd.f32 %v2760, %v2864
    %v2866 = vmul.f32 %v2853, %v2786
    %v2867 = vadd.f32 %v2762, %v2866
    %v2868 = vmul.f32 %v2853, %v2784
    %v2869 = vadd.f32 %v2764, %v2868
    %v2870 = vmul.f32 %v2853, %v2782
    %v2871 = vadd.f32 %v2766, %v2870
    %v2872 = vmul.f32 %v2853, %v2780
    %v2873 = vadd.f32 %v2768, %v2872
    %v2874 = vmul.f32 %v2853, %v2778
    %v2875 = vadd.f32 %v2770, %v2874
    %v2876 = vmul.f32 %v2853, %v2776
    %v2877 = vadd.f32 %v2772, %v2876
    %v2878 = vmul.f32 %v2853, %v2774
    %v2879 = vadd.f32 %v2774, %v2878
    %v2880 = vmul.f32 %v2853, %v2772
    %v2881 = vadd.f32 %v2776, %v2880
    %v2882 = vmul.f32 %v2853, %v2770
    %v2883 = vadd.f32 %v2778, %v2882
    %v2884 = vmul.f32 %v2853, %v2768
    %v2885 = vadd.f32 %v2780, %v2884
    %v2886 = vmul.f32 %v2853, %v2766
    %v2887 = vadd.f32 %v2782, %v2886
    %v2888 = vmul.f32 %v2853, %v2764
    %v2889 = vadd.f32 %v2784, %v2888
    %v2890 = vmul.f32 %v2853, %v2762
    %v2891 = vadd.f32 %v2786, %v2890
    %v2892 = vmul.f32 %v2853, %v2760
    %v2893 = vadd.f32 %v2788, %v2892
    %v2894 = vmul.f32 %v2853, %v2758
    %v2895 = vadd.f32 %v2790, %v2894
    %v2896 = vmul.f32 %v2853, %v2756
    %v2897 = vadd.f32 %v2792, %v2896
    %v2898 = vmul.f32 %v2853, %v2754
    %v2899 = vadd.f32 %v2794, %v2898
    %v2900 = vmul.f32 %v2853, %v2752
    %v2901 = vadd.f32 %v2796, %v2900
    %v2902 = vmul.f32 %v2853, %v2750
    %v2903 = vadd.f32 %v2748, %v2902
    %v2904 = vmul.f32 %v2853, %v2853
    %v2905 = vsub.f32 1.0, %v2904
    %v2906 = vmul.f32 %v2799, %v2905
    %v2907 = vmul.f32 %v2855, %v1420
    %v2908 = vadd.f32 %v1421, %v2907
    %v2909 = vmul.f32 %v2857, %v1419
    %v2910 = vadd.f32 %v2908, %v2909
    %v2911 = vmul.f32 %v2859, %v1418
    %v2912 = vadd.f32 %v2910, %v2911
    %v2913 = vmul.f32 %v2861, %v1417
    %v2914 = vadd.f32 %v2912, %v2913
    %v2915 = vmul.f32 %v2863, %v1416
    %v2916 = vadd.f32 %v2914, %v2915
    %v2917 = vmul.f32 %v2865, %v1415
    %v2918 = vadd.f32 %v2916, %v2917
    %v2919 = vmul.f32 %v2867, %v1414
    %v2920 = vadd.f32 %v2918, %v2919
    %v2921 = vmul.f32 %v2869, %v1413
    %v2922 = vadd.f32 %v2920, %v2921
    %v2923 = vmul.f32 %v2871, %v1412
    %v2924 = vadd.f32 %v2922, %v2923
    %v2925 = vmul.f32 %v2873, %v1411
    %v2926 = vadd.f32 %v2924, %v2925
    %v2927 = vmul.f32 %v2875, %v1410
    %v2928 = vadd.f32 %v2926, %v2927
    %v2929 = vmul.f32 %v2877, %v1409
    %v2930 = vadd.f32 %v2928, %v2929
    %v2931 = vmul.f32 %v2879, %v1408
    %v2932 = vadd.f32 %v2930, %v2931
    %v2933 = vmul.f32 %v2881, %v1407
    %v2934 = vadd.f32 %v2932, %v2933
    %v2935 = vmul.f32 %v2883, %v1406
    %v2936 = vadd.f32 %v2934, %v2935
    %v2937 = vmul.f32 %v2885, %v1405
    %v2938 = vadd.f32 %v2936, %v2937
    %v2939 = vmul.f32 %v2887, %v1404
    %v2940 = vadd.f32 %v2938, %v2939
    %v2941 = vmul.f32 %v2889, %v1403
    %v2942 = vadd.f32 %v2940, %v2941
    %v2943 = vmul.f32 %v2891, %v1402
    %v2944 = vadd.f32 %v2942, %v2943
    %v2945 = vmul.f32 %v2893, %v1401
    %v2946 = vadd.f32 %v2944, %v2945
    %v2947 = vmul.f32 %v2895, %v1400
    %v2948 = vadd.f32 %v2946, %v2947
    %v2949 = vmul.f32 %v2897, %v1399
    %v2950 = vadd.f32 %v2948, %v2949
    %v2951 = vmul.f32 %v2899, %v1398
    %v2952 = vadd.f32 %v2950, %v2951
    %v2953 = vmul.f32 %v2901, %v1397
    %v2954 = vadd.f32 %v2952, %v2953
    %v2955 = vmul.f32 %v2903, %v1396
    %v2956 = vadd.f32 %v2954, %v2955
    %v2957 = vmul.f32 %v2853, %v1395
    %v2958 = vadd.f32 %v2956, %v2957
    %v2959 = vsub.f32 0.0, %v2958
    %v2960 = vadd.f32 %v2906, 1e-12
    %v2961 = vrcp.pop %v2960
    %v2962 = vmul.f32 %v2959, %v2961
    %v2963 = vmul.f32 %v2962, %v2853
    %v2964 = vadd.f32 %v2855, %v2963
    %v2965 = vmul.f32 %v2962, %v2903
    %v2966 = vadd.f32 %v2857, %v2965
    %v2967 = vmul.f32 %v2962, %v2901
    %v2968 = vadd.f32 %v2859, %v2967
    %v2969 = vmul.f32 %v2962, %v2899
    %v2970 = vadd.f32 %v2861, %v2969
    %v2971 = vmul.f32 %v2962, %v2897
    %v2972 = vadd.f32 %v2863, %v2971
    %v2973 = vmul.f32 %v2962, %v2895
    %v2974 = vadd.f32 %v2865, %v2973
    %v2975 = vmul.f32 %v2962, %v2893
    %v2976 = vadd.f32 %v2867, %v2975
    %v2977 = vmul.f32 %v2962, %v2891
    %v2978 = vadd.f32 %v2869, %v2977
    %v2979 = vmul.f32 %v2962, %v2889
    %v2980 = vadd.f32 %v2871, %v2979
    %v2981 = vmul.f32 %v2962, %v2887
    %v2982 = vadd.f32 %v2873, %v2981
    %v2983 = vmul.f32 %v2962, %v2885
    %v2984 = vadd.f32 %v2875, %v2983
    %v2985 = vmul.f32 %v2962, %v2883
    %v2986 = vadd.f32 %v2877, %v2985
    %v2987 = vmul.f32 %v2962, %v2881
    %v2988 = vadd.f32 %v2879, %v2987
    %v2989 = vmul.f32 %v2962, %v2879
    %v2990 = vadd.f32 %v2881, %v2989
    %v2991 = vmul.f32 %v2962, %v2877
    %v2992 = vadd.f32 %v2883, %v2991
    %v2993 = vmul.f32 %v2962, %v2875
    %v2994 = vadd.f32 %v2885, %v2993
    %v2995 = vmul.f32 %v2962, %v2873
    %v2996 = vadd.f32 %v2887, %v2995
    %v2997 = vmul.f32 %v2962, %v2871
    %v2998 = vadd.f32 %v2889, %v2997
    %v2999 = vmul.f32 %v2962, %v2869
    %v3000 = vadd.f32 %v2891, %v2999
    %v3001 = vmul.f32 %v2962, %v2867
    %v3002 = vadd.f32 %v2893, %v3001
    %v3003 = vmul.f32 %v2962, %v2865
    %v3004 = vadd.f32 %v2895, %v3003
    %v3005 = vmul.f32 %v2962, %v2863
    %v3006 = vadd.f32 %v2897, %v3005
    %v3007 = vmul.f32 %v2962, %v2861
    %v3008 = vadd.f32 %v2899, %v3007
    %v3009 = vmul.f32 %v2962, %v2859
    %v3010 = vadd.f32 %v2901, %v3009
    %v3011 = vmul.f32 %v2962, %v2857
    %v3012 = vadd.f32 %v2903, %v3011
    %v3013 = vmul.f32 %v2962, %v2855
    %v3014 = vadd.f32 %v2853, %v3013
    %v3015 = vmul.f32 %v2962, %v2962
    %v3016 = vsub.f32 1.0, %v3015
    %v3017 = vmul.f32 %v2906, %v3016
    %v3018 = vmul.f32 %v2964, %v1421
    %v3019 = vadd.f32 %v1422, %v3018
    %v3020 = vmul.f32 %v2966, %v1420
    %v3021 = vadd.f32 %v3019, %v3020
    %v3022 = vmul.f32 %v2968, %v1419
    %v3023 = vadd.f32 %v3021, %v3022
    %v3024 = vmul.f32 %v2970, %v1418
    %v3025 = vadd.f32 %v3023, %v3024
    %v3026 = vmul.f32 %v2972, %v1417
    %v3027 = vadd.f32 %v3025, %v3026
    %v3028 = vmul.f32 %v2974, %v1416
    %v3029 = vadd.f32 %v3027, %v3028
    %v3030 = vmul.f32 %v2976, %v1415
    %v3031 = vadd.f32 %v3029, %v3030
    %v3032 = vmul.f32 %v2978, %v1414
    %v3033 = vadd.f32 %v3031, %v3032
    %v3034 = vmul.f32 %v2980, %v1413
    %v3035 = vadd.f32 %v3033, %v3034
    %v3036 = vmul.f32 %v2982, %v1412
    %v3037 = vadd.f32 %v3035, %v3036
    %v3038 = vmul.f32 %v2984, %v1411
    %v3039 = vadd.f32 %v3037, %v3038
    %v3040 = vmul.f32 %v2986, %v1410
    %v3041 = vadd.f32 %v3039, %v3040
    %v3042 = vmul.f32 %v2988, %v1409
    %v3043 = vadd.f32 %v3041, %v3042
    %v3044 = vmul.f32 %v2990, %v1408
    %v3045 = vadd.f32 %v3043, %v3044
    %v3046 = vmul.f32 %v2992, %v1407
    %v3047 = vadd.f32 %v3045, %v3046
    %v3048 = vmul.f32 %v2994, %v1406
    %v3049 = vadd.f32 %v3047, %v3048
    %v3050 = vmul.f32 %v2996, %v1405
    %v3051 = vadd.f32 %v3049, %v3050
    %v3052 = vmul.f32 %v2998, %v1404
    %v3053 = vadd.f32 %v3051, %v3052
    %v3054 = vmul.f32 %v3000, %v1403
    %v3055 = vadd.f32 %v3053, %v3054
    %v3056 = vmul.f32 %v3002, %v1402
    %v3057 = vadd.f32 %v3055, %v3056
    %v3058 = vmul.f32 %v3004, %v1401
    %v3059 = vadd.f32 %v3057, %v3058
    %v3060 = vmul.f32 %v3006, %v1400
    %v3061 = vadd.f32 %v3059, %v3060
    %v3062 = vmul.f32 %v3008, %v1399
    %v3063 = vadd.f32 %v3061, %v3062
    %v3064 = vmul.f32 %v3010, %v1398
    %v3065 = vadd.f32 %v3063, %v3064
    %v3066 = vmul.f32 %v3012, %v1397
    %v3067 = vadd.f32 %v3065, %v3066
    %v3068 = vmul.f32 %v3014, %v1396
    %v3069 = vadd.f32 %v3067, %v3068
    %v3070 = vmul.f32 %v2962, %v1395
    %v3071 = vadd.f32 %v3069, %v3070
    %v3072 = vsub.f32 0.0, %v3071
    %v3073 = vadd.f32 %v3017, 1e-12
    %v3074 = vrcp.pop %v3073
    %v3075 = vmul.f32 %v3072, %v3074
    %v3076 = vmul.f32 %v3075, %v2962
    %v3077 = vadd.f32 %v2964, %v3076
    %v3078 = vmul.f32 %v3075, %v3014
    %v3079 = vadd.f32 %v2966, %v3078
    %v3080 = vmul.f32 %v3075, %v3012
    %v3081 = vadd.f32 %v2968, %v3080
    %v3082 = vmul.f32 %v3075, %v3010
    %v3083 = vadd.f32 %v2970, %v3082
    %v3084 = vmul.f32 %v3075, %v3008
    %v3085 = vadd.f32 %v2972, %v3084
    %v3086 = vmul.f32 %v3075, %v3006
    %v3087 = vadd.f32 %v2974, %v3086
    %v3088 = vmul.f32 %v3075, %v3004
    %v3089 = vadd.f32 %v2976, %v3088
    %v3090 = vmul.f32 %v3075, %v3002
    %v3091 = vadd.f32 %v2978, %v3090
    %v3092 = vmul.f32 %v3075, %v3000
    %v3093 = vadd.f32 %v2980, %v3092
    %v3094 = vmul.f32 %v3075, %v2998
    %v3095 = vadd.f32 %v2982, %v3094
    %v3096 = vmul.f32 %v3075, %v2996
    %v3097 = vadd.f32 %v2984, %v3096
    %v3098 = vmul.f32 %v3075, %v2994
    %v3099 = vadd.f32 %v2986, %v3098
    %v3100 = vmul.f32 %v3075, %v2992
    %v3101 = vadd.f32 %v2988, %v3100
    %v3102 = vmul.f32 %v3075, %v2990
    %v3103 = vadd.f32 %v2990, %v3102
    %v3104 = vmul.f32 %v3075, %v2988
    %v3105 = vadd.f32 %v2992, %v3104
    %v3106 = vmul.f32 %v3075, %v2986
    %v3107 = vadd.f32 %v2994, %v3106
    %v3108 = vmul.f32 %v3075, %v2984
    %v3109 = vadd.f32 %v2996, %v3108
    %v3110 = vmul.f32 %v3075, %v2982
    %v3111 = vadd.f32 %v2998, %v3110
    %v3112 = vmul.f32 %v3075, %v2980
    %v3113 = vadd.f32 %v3000, %v3112
    %v3114 = vmul.f32 %v3075, %v2978
    %v3115 = vadd.f32 %v3002, %v3114
    %v3116 = vmul.f32 %v3075, %v2976
    %v3117 = vadd.f32 %v3004, %v3116
    %v3118 = vmul.f32 %v3075, %v2974
    %v3119 = vadd.f32 %v3006, %v3118
    %v3120 = vmul.f32 %v3075, %v2972
    %v3121 = vadd.f32 %v3008, %v3120
    %v3122 = vmul.f32 %v3075, %v2970
    %v3123 = vadd.f32 %v3010, %v3122
    %v3124 = vmul.f32 %v3075, %v2968
    %v3125 = vadd.f32 %v3012, %v3124
    %v3126 = vmul.f32 %v3075, %v2966
    %v3127 = vadd.f32 %v3014, %v3126
    %v3128 = vmul.f32 %v3075, %v2964
    %v3129 = vadd.f32 %v2962, %v3128
    %v3130 = vmul.f32 %v3075, %v3075
    %v3131 = vsub.f32 1.0, %v3130
    %v3132 = vmul.f32 %v3017, %v3131
    %v3133 = vmul.f32 %v3077, %v1422
    %v3134 = vadd.f32 %v1423, %v3133
    %v3135 = vmul.f32 %v3079, %v1421
    %v3136 = vadd.f32 %v3134, %v3135
    %v3137 = vmul.f32 %v3081, %v1420
    %v3138 = vadd.f32 %v3136, %v3137
    %v3139 = vmul.f32 %v3083, %v1419
    %v3140 = vadd.f32 %v3138, %v3139
    %v3141 = vmul.f32 %v3085, %v1418
    %v3142 = vadd.f32 %v3140, %v3141
    %v3143 = vmul.f32 %v3087, %v1417
    %v3144 = vadd.f32 %v3142, %v3143
    %v3145 = vmul.f32 %v3089, %v1416
    %v3146 = vadd.f32 %v3144, %v3145
    %v3147 = vmul.f32 %v3091, %v1415
    %v3148 = vadd.f32 %v3146, %v3147
    %v3149 = vmul.f32 %v3093, %v1414
    %v3150 = vadd.f32 %v3148, %v3149
    %v3151 = vmul.f32 %v3095, %v1413
    %v3152 = vadd.f32 %v3150, %v3151
    %v3153 = vmul.f32 %v3097, %v1412
    %v3154 = vadd.f32 %v3152, %v3153
    %v3155 = vmul.f32 %v3099, %v1411
    %v3156 = vadd.f32 %v3154, %v3155
    %v3157 = vmul.f32 %v3101, %v1410
    %v3158 = vadd.f32 %v3156, %v3157
    %v3159 = vmul.f32 %v3103, %v1409
    %v3160 = vadd.f32 %v3158, %v3159
    %v3161 = vmul.f32 %v3105, %v1408
    %v3162 = vadd.f32 %v3160, %v3161
    %v3163 = vmul.f32 %v3107, %v1407
    %v3164 = vadd.f32 %v3162, %v3163
    %v3165 = vmul.f32 %v3109, %v1406
    %v3166 = vadd.f32 %v3164, %v3165
    %v3167 = vmul.f32 %v3111, %v1405
    %v3168 = vadd.f32 %v3166, %v3167
    %v3169 = vmul.f32 %v3113, %v1404
    %v3170 = vadd.f32 %v3168, %v3169
    %v3171 = vmul.f32 %v3115, %v1403
    %v3172 = vadd.f32 %v3170, %v3171
    %v3173 = vmul.f32 %v3117, %v1402
    %v3174 = vadd.f32 %v3172, %v3173
    %v3175 = vmul.f32 %v3119, %v1401
    %v3176 = vadd.f32 %v3174, %v3175
    %v3177 = vmul.f32 %v3121, %v1400
    %v3178 = vadd.f32 %v3176, %v3177
    %v3179 = vmul.f32 %v3123, %v1399
    %v3180 = vadd.f32 %v3178, %v3179
    %v3181 = vmul.f32 %v3125, %v1398
    %v3182 = vadd.f32 %v3180, %v3181
    %v3183 = vmul.f32 %v3127, %v1397
    %v3184 = vadd.f32 %v3182, %v3183
    %v3185 = vmul.f32 %v3129, %v1396
    %v3186 = vadd.f32 %v3184, %v3185
    %v3187 = vmul.f32 %v3075, %v1395
    %v3188 = vadd.f32 %v3186, %v3187
    %v3189 = vsub.f32 0.0, %v3188
    %v3190 = vadd.f32 %v3132, 1e-12
    %v3191 = vrcp.pop %v3190
    %v3192 = vmul.f32 %v3189, %v3191
    %v3193 = vmul.f32 %v3192, %v3075
    %v3194 = vadd.f32 %v3077, %v3193
    %v3195 = vmul.f32 %v3192, %v3129
    %v3196 = vadd.f32 %v3079, %v3195
    %v3197 = vmul.f32 %v3192, %v3127
    %v3198 = vadd.f32 %v3081, %v3197
    %v3199 = vmul.f32 %v3192, %v3125
    %v3200 = vadd.f32 %v3083, %v3199
    %v3201 = vmul.f32 %v3192, %v3123
    %v3202 = vadd.f32 %v3085, %v3201
    %v3203 = vmul.f32 %v3192, %v3121
    %v3204 = vadd.f32 %v3087, %v3203
    %v3205 = vmul.f32 %v3192, %v3119
    %v3206 = vadd.f32 %v3089, %v3205
    %v3207 = vmul.f32 %v3192, %v3117
    %v3208 = vadd.f32 %v3091, %v3207
    %v3209 = vmul.f32 %v3192, %v3115
    %v3210 = vadd.f32 %v3093, %v3209
    %v3211 = vmul.f32 %v3192, %v3113
    %v3212 = vadd.f32 %v3095, %v3211
    %v3213 = vmul.f32 %v3192, %v3111
    %v3214 = vadd.f32 %v3097, %v3213
    %v3215 = vmul.f32 %v3192, %v3109
    %v3216 = vadd.f32 %v3099, %v3215
    %v3217 = vmul.f32 %v3192, %v3107
    %v3218 = vadd.f32 %v3101, %v3217
    %v3219 = vmul.f32 %v3192, %v3105
    %v3220 = vadd.f32 %v3103, %v3219
    %v3221 = vmul.f32 %v3192, %v3103
    %v3222 = vadd.f32 %v3105, %v3221
    %v3223 = vmul.f32 %v3192, %v3101
    %v3224 = vadd.f32 %v3107, %v3223
    %v3225 = vmul.f32 %v3192, %v3099
    %v3226 = vadd.f32 %v3109, %v3225
    %v3227 = vmul.f32 %v3192, %v3097
    %v3228 = vadd.f32 %v3111, %v3227
    %v3229 = vmul.f32 %v3192, %v3095
    %v3230 = vadd.f32 %v3113, %v3229
    %v3231 = vmul.f32 %v3192, %v3093
    %v3232 = vadd.f32 %v3115, %v3231
    %v3233 = vmul.f32 %v3192, %v3091
    %v3234 = vadd.f32 %v3117, %v3233
    %v3235 = vmul.f32 %v3192, %v3089
    %v3236 = vadd.f32 %v3119, %v3235
    %v3237 = vmul.f32 %v3192, %v3087
    %v3238 = vadd.f32 %v3121, %v3237
    %v3239 = vmul.f32 %v3192, %v3085
    %v3240 = vadd.f32 %v3123, %v3239
    %v3241 = vmul.f32 %v3192, %v3083
    %v3242 = vadd.f32 %v3125, %v3241
    %v3243 = vmul.f32 %v3192, %v3081
    %v3244 = vadd.f32 %v3127, %v3243
    %v3245 = vmul.f32 %v3192, %v3079
    %v3246 = vadd.f32 %v3129, %v3245
    %v3247 = vmul.f32 %v3192, %v3077
    %v3248 = vadd.f32 %v3075, %v3247
    %v3249 = vmul.f32 %v3192, %v3192
    %v3250 = vsub.f32 1.0, %v3249
    %v3251 = vmul.f32 %v3132, %v3250
    %v3252 = vmul.f32 %v3194, %v1423
    %v3253 = vadd.f32 %v1424, %v3252
    %v3254 = vmul.f32 %v3196, %v1422
    %v3255 = vadd.f32 %v3253, %v3254
    %v3256 = vmul.f32 %v3198, %v1421
    %v3257 = vadd.f32 %v3255, %v3256
    %v3258 = vmul.f32 %v3200, %v1420
    %v3259 = vadd.f32 %v3257, %v3258
    %v3260 = vmul.f32 %v3202, %v1419
    %v3261 = vadd.f32 %v3259, %v3260
    %v3262 = vmul.f32 %v3204, %v1418
    %v3263 = vadd.f32 %v3261, %v3262
    %v3264 = vmul.f32 %v3206, %v1417
    %v3265 = vadd.f32 %v3263, %v3264
    %v3266 = vmul.f32 %v3208, %v1416
    %v3267 = vadd.f32 %v3265, %v3266
    %v3268 = vmul.f32 %v3210, %v1415
    %v3269 = vadd.f32 %v3267, %v3268
    %v3270 = vmul.f32 %v3212, %v1414
    %v3271 = vadd.f32 %v3269, %v3270
    %v3272 = vmul.f32 %v3214, %v1413
    %v3273 = vadd.f32 %v3271, %v3272
    %v3274 = vmul.f32 %v3216, %v1412
    %v3275 = vadd.f32 %v3273, %v3274
    %v3276 = vmul.f32 %v3218, %v1411
    %v3277 = vadd.f32 %v3275, %v3276
    %v3278 = vmul.f32 %v3220, %v1410
    %v3279 = vadd.f32 %v3277, %v3278
    %v3280 = vmul.f32 %v3222, %v1409
    %v3281 = vadd.f32 %v3279, %v3280
    %v3282 = vmul.f32 %v3224, %v1408
    %v3283 = vadd.f32 %v3281, %v3282
    %v3284 = vmul.f32 %v3226, %v1407
    %v3285 = vadd.f32 %v3283, %v3284
    %v3286 = vmul.f32 %v3228, %v1406
    %v3287 = vadd.f32 %v3285, %v3286
    %v3288 = vmul.f32 %v3230, %v1405
    %v3289 = vadd.f32 %v3287, %v3288
    %v3290 = vmul.f32 %v3232, %v1404
    %v3291 = vadd.f32 %v3289, %v3290
    %v3292 = vmul.f32 %v3234, %v1403
    %v3293 = vadd.f32 %v3291, %v3292
    %v3294 = vmul.f32 %v3236, %v1402
    %v3295 = vadd.f32 %v3293, %v3294
    %v3296 = vmul.f32 %v3238, %v1401
    %v3297 = vadd.f32 %v3295, %v3296
    %v3298 = vmul.f32 %v3240, %v1400
    %v3299 = vadd.f32 %v3297, %v3298
    %v3300 = vmul.f32 %v3242, %v1399
    %v3301 = vadd.f32 %v3299, %v3300
    %v3302 = vmul.f32 %v3244, %v1398
    %v3303 = vadd.f32 %v3301, %v3302
    %v3304 = vmul.f32 %v3246, %v1397
    %v3305 = vadd.f32 %v3303, %v3304
    %v3306 = vmul.f32 %v3248, %v1396
    %v3307 = vadd.f32 %v3305, %v3306
    %v3308 = vmul.f32 %v3192, %v1395
    %v3309 = vadd.f32 %v3307, %v3308
    %v3310 = vsub.f32 0.0, %v3309
    %v3311 = vadd.f32 %v3251, 1e-12
    %v3312 = vrcp.pop %v3311
    %v3313 = vmul.f32 %v3310, %v3312
    %3314 = vst [vmem:[#allocation6 + $0x60] sm:$0x1] 1.0
    %3315 = vst [vmem:[#allocation6 + $0x61] sm:$0x1] %v1377
    %3316 = vst [vmem:[#allocation6 + $0x62] sm:$0x1] %v1379
    %3317 = vst [vmem:[#allocation6 + $0x63] sm:$0x1] %v1381
    %3318 = vst [vmem:[#allocation6 + $0x64] sm:$0x1] %v1383
    %3319 = vst [vmem:[#allocation6 + $0x65] sm:$0x1] %v1385
    %3320 = vst [vmem:[#allocation6 + $0x66] sm:$0x1] %v1387
    %3321 = vst [vmem:[#allocation6 + $0x67] sm:$0x1] %v1389
    %3322 = vst [vmem:[#allocation6 + $0x68] sm:$0x1] %v1391
    %3323 = vst [vmem:[#allocation6 + $0x69] sm:$0x1] %v1393
    %3324 = vst [vmem:[#allocation6 + $0x6a] sm:$0x1] %v1375
    %3325 = vst [vmem:[#allocation6 + $0x70] sm:$0x1] %v1428
    %3326 = vst [vmem:[#allocation6 + $0x71] sm:$0x1] %v1437
    %3327 = vst [vmem:[#allocation6 + $0x72] sm:$0x1] %v1450
    %3328 = vst [vmem:[#allocation6 + $0x73] sm:$0x1] %v1467
    %3329 = vst [vmem:[#allocation6 + $0x74] sm:$0x1] %v1488
    %3330 = vst [vmem:[#allocation6 + $0x75] sm:$0x1] %v1513
    %3331 = vst [vmem:[#allocation6 + $0x76] sm:$0x1] %v1542
    %3332 = vst [vmem:[#allocation6 + $0x77] sm:$0x1] %v1575
    %3333 = vst [vmem:[#allocation6 + $0x78] sm:$0x1] %v1612
    %3334 = vst [vmem:[#allocation6 + $0x79] sm:$0x1] %v1653
    %3335 = vst [vmem:[#allocation6 + $0x7a] sm:$0x1] %v1698
    %3336 = vst [vmem:[#allocation6 + $0x7b] sm:$0x1] %v1747
    %3337 = vst [vmem:[#allocation6 + $0x7c] sm:$0x1] %v1800
    %3338 = vst [vmem:[#allocation6 + $0x7d] sm:$0x1] %v1857
    %3339 = vst [vmem:[#allocation6 + $0x7e] sm:$0x1] %v1918
    %3340 = vst [vmem:[#allocation6 + $0x7f] sm:$0x1] %v1983
    %3341 = vst [vmem:[#allocation6 + $0x80] sm:$0x1] %v2052
    %3342 = vst [vmem:[#allocation6 + $0x81] sm:$0x1] %v2125
    %3343 = vst [vmem:[#allocation6 + $0x82] sm:$0x1] %v2202
    %3344 = vst [vmem:[#allocation6 + $0x83] sm:$0x1] %v2283
    %3345 = vst [vmem:[#allocation6 + $0x84] sm:$0x1] %v2368
    %3346 = vst [vmem:[#allocation6 + $0x85] sm:$0x1] %v2457
    %3347 = vst [vmem:[#allocation6 + $0x86] sm:$0x1] %v2550
    %3348 = vst [vmem:[#allocation6 + $0x87] sm:$0x1] %v2647
    %3349 = vst [vmem:[#allocation6 + $0x88] sm:$0x1] %v2748
    %3350 = vst [vmem:[#allocation6 + $0x89] sm:$0x1] %v2853
    %3351 = vst [vmem:[#allocation6 + $0x8a] sm:$0x1] %v2962
    %3352 = vst [vmem:[#allocation6 + $0x8b] sm:$0x1] %v3075
    %3353 = vst [vmem:[#allocation6 + $0x8c] sm:$0x1] %v3192
    %3354 = vst [vmem:[#allocation6 + $0x8d] sm:$0x1] %v3313
    %v3355 = vmul.f32 %v32, %v32
    %v3356 = vmul.f32 %v33, %v33
    %v3357 = vmul.f32 %v34, %v34
    %v3358 = vmul.f32 %v35, %v35
    %v3359 = vmul.f32 %v36, %v36
    %v3360 = vmul.f32 %v37, %v37
    %v3361 = vmul.f32 %v38, %v38
    %v3362 = vmul.f32 %v39, %v39
    %v3363 = vmul.f32 %v40, %v40
    %v3364 = vmul.f32 %v41, %v41
    %v3365 = vmul.f32 %v42, %v42
    %v3366 = vmul.f32 %v43, %v43
    %v3367 = vmul.f32 %v44, %v44
    %v3368 = vmul.f32 %v45, %v45
    %v3369 = vmul.f32 %v46, %v46
    %v3370 = vmul.f32 %v47, %v47
    %v3371 = vmul.f32 %v48, %v48
    %v3372 = vmul.f32 %v49, %v49
    %v3373 = vmul.f32 %v50, %v50
    %v3374 = vmul.f32 %v51, %v51
    %v3375 = vmul.f32 %v52, %v52
    %v3376 = vmul.f32 %v53, %v53
    %v3377 = vmul.f32 %v54, %v54
    %v3378 = vmul.f32 %v55, %v55
    %v3379 = vmul.f32 %v56, %v56
    %v3380 = vmul.f32 %v57, %v57
    %v3381 = vmul.f32 %v58, %v58
    %v3382 = vmul.f32 %v59, %v59
    %v3383 = vmul.f32 %v60, %v60
    %v3384 = vmul.f32 %v61, %v61
    %v3385 = vmul.f32 %v62, %v62
    %v3386 = vmul.f32 %v63, %v63
    %v3387 = vadd.f32 %v3355, %v3356
    %v3388 = vadd.f32 %v3387, %v3357
    %v3389 = vadd.f32 %v3388, %v3358
    %v3390 = vadd.f32 %v3389, %v3359
    %v3391 = vadd.f32 %v3390, %v3360
    %v3392 = vadd.f32 %v3391, %v3361
    %v3393 = vadd.f32 %v3392, %v3362
    %v3394 = vadd.f32 %v3393, %v3363
    %v3395 = vadd.f32 %v3394, %v3364
    %v3396 = vadd.f32 %v3395, %v3365
    %v3397 = vadd.f32 %v3396, %v3366
    %v3398 = vadd.f32 %v3397, %v3367
    %v3399 = vadd.f32 %v3398, %v3368
    %v3400 = vadd.f32 %v3399, %v3369
    %v3401 = vadd.f32 %v3400, %v3370
    %v3402 = vadd.f32 %v3401, %v3371
    %v3403 = vadd.f32 %v3402, %v3372
    %v3404 = vadd.f32 %v3403, %v3373
    %v3405 = vadd.f32 %v3404, %v3374
    %v3406 = vadd.f32 %v3405, %v3375
    %v3407 = vadd.f32 %v3406, %v3376
    %v3408 = vadd.f32 %v3407, %v3377
    %v3409 = vadd.f32 %v3408, %v3378
    %v3410 = vadd.f32 %v3409, %v3379
    %v3411 = vadd.f32 %v3410, %v3380
    %v3412 = vadd.f32 %v3411, %v3381
    %v3413 = vadd.f32 %v3412, %v3382
    %v3414 = vadd.f32 %v3413, %v3383
    %v3415 = vadd.f32 %v3414, %v3384
    %v3416 = vadd.f32 %v3415, %v3385
    %v3417 = vadd.f32 %v3416, %v3386
    %v3418 = vrot.slane %v3417, 4
    %v3419 = vadd.f32 %v3417, %v3418
    %v3420 = vrot.slane %v3419, 2
    %v3421 = vadd.f32 %v3419, %v3420
    %v3422 = vrot.slane %v3421, 1
    %v3423 = vadd.f32 %v3421, %v3422
    %v3424 = vadd.f32 %v3423, 1e-12
    %v3425 = vlog2.pop %v3424
    %v3426 = vmul.f32 %v3425, 0.6931472
    %v3427 = vmul.f32 %v3426, 4.3429446
    %v3428 = vrsqrt.pop %v702
    %v3429 = vmul.f32 %v702, %v3428
    %vm3430 = vcmp.eq.f32.partialorder %v702, inf
    %v3431 = vsel %vm3430, %v702, %v3429
    %vm3432 = vcmp.eq.f32.partialorder %v702, 0.0
    %v3433 = vand.u32 %v702, 2147483648
    %v3434 = vsel %vm3432, %v3433, %v3431
    %v3435 = vrsqrt.pop %v703
    %v3436 = vmul.f32 %v703, %v3435
    %vm3437 = vcmp.eq.f32.partialorder %v703, inf
    %v3438 = vsel %vm3437, %v703, %v3436
    %vm3439 = vcmp.eq.f32.partialorder %v703, 0.0
    %v3440 = vand.u32 %v703, 2147483648
    %v3441 = vsel %vm3439, %v3440, %v3438
    %v3442 = vrsqrt.pop %v704
    %v3443 = vmul.f32 %v704, %v3442
    %vm3444 = vcmp.eq.f32.partialorder %v704, inf
    %v3445 = vsel %vm3444, %v704, %v3443
    %vm3446 = vcmp.eq.f32.partialorder %v704, 0.0
    %v3447 = vand.u32 %v704, 2147483648
    %v3448 = vsel %vm3446, %v3447, %v3445
    %v3449 = vrsqrt.pop %v705
    %v3450 = vmul.f32 %v705, %v3449
    %vm3451 = vcmp.eq.f32.partialorder %v705, inf
    %v3452 = vsel %vm3451, %v705, %v3450
    %vm3453 = vcmp.eq.f32.partialorder %v705, 0.0
    %v3454 = vand.u32 %v705, 2147483648
    %v3455 = vsel %vm3453, %v3454, %v3452
    %v3456 = vrsqrt.pop %v706
    %v3457 = vmul.f32 %v706, %v3456
    %vm3458 = vcmp.eq.f32.partialorder %v706, inf
    %v3459 = vsel %vm3458, %v706, %v3457
    %vm3460 = vcmp.eq.f32.partialorder %v706, 0.0
    %v3461 = vand.u32 %v706, 2147483648
    %v3462 = vsel %vm3460, %v3461, %v3459
    %v3463 = vrsqrt.pop %v707
    %v3464 = vmul.f32 %v707, %v3463
    %vm3465 = vcmp.eq.f32.partialorder %v707, inf
    %v3466 = vsel %vm3465, %v707, %v3464
    %vm3467 = vcmp.eq.f32.partialorder %v707, 0.0
    %v3468 = vand.u32 %v707, 2147483648
    %v3469 = vsel %vm3467, %v3468, %v3466
    %v3470 = vrsqrt.pop %v708
    %v3471 = vmul.f32 %v708, %v3470
    %vm3472 = vcmp.eq.f32.partialorder %v708, inf
    %v3473 = vsel %vm3472, %v708, %v3471
    %vm3474 = vcmp.eq.f32.partialorder %v708, 0.0
    %v3475 = vand.u32 %v708, 2147483648
    %v3476 = vsel %vm3474, %v3475, %v3473
    %v3477 = vrsqrt.pop %v709
    %v3478 = vmul.f32 %v709, %v3477
    %vm3479 = vcmp.eq.f32.partialorder %v709, inf
    %v3480 = vsel %vm3479, %v709, %v3478
    %vm3481 = vcmp.eq.f32.partialorder %v709, 0.0
    %v3482 = vand.u32 %v709, 2147483648
    %v3483 = vsel %vm3481, %v3482, %v3480
    %v3484 = vrsqrt.pop %v710
    %v3485 = vmul.f32 %v710, %v3484
    %vm3486 = vcmp.eq.f32.partialorder %v710, inf
    %v3487 = vsel %vm3486, %v710, %v3485
    %vm3488 = vcmp.eq.f32.partialorder %v710, 0.0
    %v3489 = vand.u32 %v710, 2147483648
    %v3490 = vsel %vm3488, %v3489, %v3487
    %v3491 = vrsqrt.pop %v711
    %v3492 = vmul.f32 %v711, %v3491
    %vm3493 = vcmp.eq.f32.partialorder %v711, inf
    %v3494 = vsel %vm3493, %v711, %v3492
    %vm3495 = vcmp.eq.f32.partialorder %v711, 0.0
    %v3496 = vand.u32 %v711, 2147483648
    %v3497 = vsel %vm3495, %v3496, %v3494
    %v3498 = vrsqrt.pop %v712
    %v3499 = vmul.f32 %v712, %v3498
    %vm3500 = vcmp.eq.f32.partialorder %v712, inf
    %v3501 = vsel %vm3500, %v712, %v3499
    %vm3502 = vcmp.eq.f32.partialorder %v712, 0.0
    %v3503 = vand.u32 %v712, 2147483648
    %v3504 = vsel %vm3502, %v3503, %v3501
    %v3505 = vrsqrt.pop %v713
    %v3506 = vmul.f32 %v713, %v3505
    %vm3507 = vcmp.eq.f32.partialorder %v713, inf
    %v3508 = vsel %vm3507, %v713, %v3506
    %vm3509 = vcmp.eq.f32.partialorder %v713, 0.0
    %v3510 = vand.u32 %v713, 2147483648
    %v3511 = vsel %vm3509, %v3510, %v3508
    %v3512 = vrsqrt.pop %v714
    %v3513 = vmul.f32 %v714, %v3512
    %vm3514 = vcmp.eq.f32.partialorder %v714, inf
    %v3515 = vsel %vm3514, %v714, %v3513
    %vm3516 = vcmp.eq.f32.partialorder %v714, 0.0
    %v3517 = vand.u32 %v714, 2147483648
    %v3518 = vsel %vm3516, %v3517, %v3515
    %v3519 = vrsqrt.pop %v715
    %v3520 = vmul.f32 %v715, %v3519
    %vm3521 = vcmp.eq.f32.partialorder %v715, inf
    %v3522 = vsel %vm3521, %v715, %v3520
    %vm3523 = vcmp.eq.f32.partialorder %v715, 0.0
    %v3524 = vand.u32 %v715, 2147483648
    %v3525 = vsel %vm3523, %v3524, %v3522
    %v3526 = vrsqrt.pop %v716
    %v3527 = vmul.f32 %v716, %v3526
    %vm3528 = vcmp.eq.f32.partialorder %v716, inf
    %v3529 = vsel %vm3528, %v716, %v3527
    %vm3530 = vcmp.eq.f32.partialorder %v716, 0.0
    %v3531 = vand.u32 %v716, 2147483648
    %v3532 = vsel %vm3530, %v3531, %v3529
    %v3533 = vrsqrt.pop %v717
    %v3534 = vmul.f32 %v717, %v3533
    %vm3535 = vcmp.eq.f32.partialorder %v717, inf
    %v3536 = vsel %vm3535, %v717, %v3534
    %vm3537 = vcmp.eq.f32.partialorder %v717, 0.0
    %v3538 = vand.u32 %v717, 2147483648
    %v3539 = vsel %vm3537, %v3538, %v3536
    %v3540 = vrsqrt.pop %v718
    %v3541 = vmul.f32 %v718, %v3540
    %vm3542 = vcmp.eq.f32.partialorder %v718, inf
    %v3543 = vsel %vm3542, %v718, %v3541
    %vm3544 = vcmp.eq.f32.partialorder %v718, 0.0
    %v3545 = vand.u32 %v718, 2147483648
    %v3546 = vsel %vm3544, %v3545, %v3543
    %v3547 = vld [vmem:[%s3] sm:$0xff]
    %v3548 = vld [vmem:[%s3 + $0x8] sm:$0xff]
    %v3549 = vld [vmem:[%s3 + $0x10] sm:$0xff]
    %v3550 = vld [vmem:[%s3 + $0x18] sm:$0xff]
    %v3551 = vld [vmem:[%s3 + $0x20] sm:$0xff]
    %v3552 = vld [vmem:[%s3 + $0x28] sm:$0xff]
    %v3553 = vld [vmem:[%s3 + $0x30] sm:$0xff]
    %v3554 = vld [vmem:[%s3 + $0x38] sm:$0xff]
    %v3555 = vld [vmem:[%s3 + $0x40] sm:$0xff]
    %v3556 = vld [vmem:[%s3 + $0x48] sm:$0xff]
    %v3557 = vld [vmem:[%s3 + $0x50] sm:$0xff]
    %v3558 = vld [vmem:[%s3 + $0x58] sm:$0xff]
    %v3559 = vld [vmem:[%s3 + $0x60] sm:$0xff]
    %v3560 = vld [vmem:[%s3 + $0x68] sm:$0xff]
    %v3561 = vld [vmem:[%s3 + $0x70] sm:$0xff]
    %v3562 = vld [vmem:[%s3 + $0x78] sm:$0xff]
    %v3563 = vld [vmem:[%s3 + $0x80] sm:$0xff]
    %3565 = vset.pattern.permute.xlu0 0
    %3566 = vperm.xlu0 %3565, %v3547
    %v3567 = vpop.permute.xlu0 %3566
    %3570 = vset.pattern.permute.xlu0 0
    %3571 = vperm.xlu0 %3570, %v3548
    %v3572 = vpop.permute.xlu0 %3571
    %3575 = vset.pattern.permute.xlu0 0
    %3576 = vperm.xlu0 %3575, %v3549
    %v3577 = vpop.permute.xlu0 %3576
    %3580 = vset.pattern.permute.xlu0 0
    %3581 = vperm.xlu0 %3580, %v3550
    %v3582 = vpop.permute.xlu0 %3581
    %3585 = vset.pattern.permute.xlu0 0
    %3586 = vperm.xlu0 %3585, %v3551
    %v3587 = vpop.permute.xlu0 %3586
    %3590 = vset.pattern.permute.xlu0 0
    %3591 = vperm.xlu0 %3590, %v3552
    %v3592 = vpop.permute.xlu0 %3591
    %3595 = vset.pattern.permute.xlu0 0
    %3596 = vperm.xlu0 %3595, %v3553
    %v3597 = vpop.permute.xlu0 %3596
    %3600 = vset.pattern.permute.xlu0 0
    %3601 = vperm.xlu0 %3600, %v3554
    %v3602 = vpop.permute.xlu0 %3601
    %3605 = vset.pattern.permute.xlu0 0
    %3606 = vperm.xlu0 %3605, %v3555
    %v3607 = vpop.permute.xlu0 %3606
    %3610 = vset.pattern.permute.xlu0 0
    %3611 = vperm.xlu0 %3610, %v3556
    %v3612 = vpop.permute.xlu0 %3611
    %3615 = vset.pattern.permute.xlu0 0
    %3616 = vperm.xlu0 %3615, %v3557
    %v3617 = vpop.permute.xlu0 %3616
    %3620 = vset.pattern.permute.xlu0 0
    %3621 = vperm.xlu0 %3620, %v3558
    %v3622 = vpop.permute.xlu0 %3621
    %3625 = vset.pattern.permute.xlu0 0
    %3626 = vperm.xlu0 %3625, %v3559
    %v3627 = vpop.permute.xlu0 %3626
    %3630 = vset.pattern.permute.xlu0 0
    %3631 = vperm.xlu0 %3630, %v3560
    %v3632 = vpop.permute.xlu0 %3631
    %3635 = vset.pattern.permute.xlu0 0
    %3636 = vperm.xlu0 %3635, %v3561
    %v3637 = vpop.permute.xlu0 %3636
    %3640 = vset.pattern.permute.xlu0 0
    %3641 = vperm.xlu0 %3640, %v3562
    %v3642 = vpop.permute.xlu0 %3641
    %3645 = vset.pattern.permute.xlu0 0
    %3646 = vperm.xlu0 %3645, %v3563
    %v3647 = vpop.permute.xlu0 %3646
    %v3649 = vmul.f32 %v3434, %v3567
    %v3650 = vmul.f32 %v3441, %v3572
    %v3651 = vmul.f32 %v3448, %v3577
    %v3652 = vmul.f32 %v3455, %v3582
    %v3653 = vmul.f32 %v3462, %v3587
    %v3654 = vmul.f32 %v3469, %v3592
    %v3655 = vmul.f32 %v3476, %v3597
    %v3656 = vmul.f32 %v3483, %v3602
    %v3657 = vmul.f32 %v3490, %v3607
    %v3658 = vmul.f32 %v3497, %v3612
    %v3659 = vmul.f32 %v3504, %v3617
    %v3660 = vmul.f32 %v3511, %v3622
    %v3661 = vmul.f32 %v3518, %v3627
    %v3662 = vmul.f32 %v3525, %v3632
    %v3663 = vmul.f32 %v3532, %v3637
    %v3664 = vmul.f32 %v3539, %v3642
    %v3665 = vmul.f32 %v3546, %v3647
    %v3666 = vadd.f32 %v3649, %v3650
    %v3667 = vadd.f32 %v3666, %v3651
    %v3668 = vadd.f32 %v3667, %v3652
    %v3669 = vadd.f32 %v3668, %v3653
    %v3670 = vadd.f32 %v3669, %v3654
    %v3671 = vadd.f32 %v3670, %v3655
    %v3672 = vadd.f32 %v3671, %v3656
    %v3673 = vadd.f32 %v3672, %v3657
    %v3674 = vadd.f32 %v3673, %v3658
    %v3675 = vadd.f32 %v3674, %v3659
    %v3676 = vadd.f32 %v3675, %v3660
    %v3677 = vadd.f32 %v3676, %v3661
    %v3678 = vadd.f32 %v3677, %v3662
    %v3679 = vadd.f32 %v3678, %v3663
    %v3680 = vadd.f32 %v3679, %v3664
    %v3681 = vadd.f32 %v3680, %v3665
    %v3682 = vrot.slane %v3681, 4
    %v3683 = vadd.f32 %v3681, %v3682
    %v3684 = vrot.slane %v3683, 2
    %v3685 = vadd.f32 %v3683, %v3684
    %v3686 = vrot.slane %v3685, 1
    %v3687 = vadd.f32 %v3685, %v3686
    %v3688 = vadd.f32 %v3434, %v3441
    %v3689 = vadd.f32 %v3688, %v3448
    %v3690 = vadd.f32 %v3689, %v3455
    %v3691 = vadd.f32 %v3690, %v3462
    %v3692 = vadd.f32 %v3691, %v3469
    %v3693 = vadd.f32 %v3692, %v3476
    %v3694 = vadd.f32 %v3693, %v3483
    %v3695 = vadd.f32 %v3694, %v3490
    %v3696 = vadd.f32 %v3695, %v3497
    %v3697 = vadd.f32 %v3696, %v3504
    %v3698 = vadd.f32 %v3697, %v3511
    %v3699 = vadd.f32 %v3698, %v3518
    %v3700 = vadd.f32 %v3699, %v3525
    %v3701 = vadd.f32 %v3700, %v3532
    %v3702 = vadd.f32 %v3701, %v3539
    %v3703 = vadd.f32 %v3702, %v3546
    %v3704 = vrot.slane %v3703, 4
    %v3705 = vadd.f32 %v3703, %v3704
    %v3706 = vrot.slane %v3705, 2
    %v3707 = vadd.f32 %v3705, %v3706
    %v3708 = vrot.slane %v3707, 1
    %v3709 = vadd.f32 %v3707, %v3708
    %v3710 = vadd.f32 %v3709, 1e-12
    %v3711 = vrcp.pop %v3710
    %v3712 = vmul.f32 %v3687, %v3711
    %v3713 = vld [vmem:[#allocation2 + $0x1] ss:$0 sm:$0xff]
    %v3714 = vld [vmem:[#allocation2] ss:$0 sm:$0xff]
    %v3715 = vadd.f32 %v3714, 1e-12
    %v3716 = vrcp.pop %v3715
    %v3717 = vmul.f32 %v3713, %v3716
    %v3718 = vld [vmem:[#allocation2 + $0x68] sm:$0xff]
    %v3719 = vld [vmem:[#allocation2 + $0x78] sm:$0xff]
    %v3720 = vld [vmem:[#allocation2 + $0x88] sm:$0xff]
    %v3721 = vld [vmem:[#allocation2 + $0x98] sm:$0xff]
    %v3722 = vld [vmem:[#allocation2 + $0xa8] sm:$0xff]
    %v3723 = vld [vmem:[#allocation2 + $0xb8] sm:$0xff]
    %v3724 = vld [vmem:[#allocation2 + $0xc8] sm:$0xff]
    %v3725 = vld [vmem:[#allocation2 + $0xd8] sm:$0xff]
    %v3726 = vld [vmem:[#allocation2 + $0xe8] sm:$0xff]
    %v3727 = vld [vmem:[#allocation2 + $0xf8] sm:$0xff]
    %v3728 = vld [vmem:[#allocation2 + $0x108] sm:$0xff]
    %v3729 = vld [vmem:[#allocation2 + $0x118] sm:$0xff]
    %v3730 = vld [vmem:[#allocation2 + $0x128] sm:$0xff]
    %v3731 = vld [vmem:[#allocation2 + $0x138] sm:$0xff]
    %v3732 = vld [vmem:[#allocation2 + $0x148] sm:$0xff]
    %v3733 = vld [vmem:[#allocation2 + $0x158] sm:$0xff]
    %v3734 = vld [vmem:[#allocation2 + $0x168] sm:$0xff]
    %v3735 = vld [vmem:[#allocation2 + $0x178] sm:$0xff]
    %v3736 = vld [vmem:[#allocation2 + $0x188] sm:$0xff]
    %v3737 = vld [vmem:[#allocation2 + $0x198] sm:$0xff]
    %v3738 = vld [vmem:[#allocation2 + $0x1a8] sm:$0xff]
    %v3739 = vld [vmem:[#allocation2 + $0x68] ss:$0 sm:$0xff]
    %v3740 = vadd.f32 %v3739, 1e-12
    %v3741 = vrcp.pop %v3740
    %v3742 = vmul.f32 %v3718, %v3741
    %v3743 = vmul.f32 %v3719, %v3741
    %v3744 = vmul.f32 %v3720, %v3741
    %v3745 = vmul.f32 %v3721, %v3741
    %v3746 = vmul.f32 %v3722, %v3741
    %v3747 = vmul.f32 %v3723, %v3741
    %v3748 = vmul.f32 %v3724, %v3741
    %v3749 = vmul.f32 %v3725, %v3741
    %v3750 = vmul.f32 %v3726, %v3741
    %v3751 = vmul.f32 %v3727, %v3741
    %v3752 = vmul.f32 %v3728, %v3741
    %v3753 = vmul.f32 %v3729, %v3741
    %v3754 = vmul.f32 %v3730, %v3741
    %v3755 = vmul.f32 %v3731, %v3741
    %v3756 = vmul.f32 %v3732, %v3741
    %v3757 = vmul.f32 %v3733, %v3741
    %v3758 = vmul.f32 %v3734, %v3741
    %v3759 = vmul.f32 %v3735, %v3741
    %v3760 = vmul.f32 %v3736, %v3741
    %v3761 = vmul.f32 %v3737, %v3741
    %v3762 = vmul.f32 %v3738, %v3741
    %v3763 = vlaneseq
    %v3764 = vshrl.u32 %v3763, 7
    %v3765 = vadd.s32 %v3764, 8
    %v3766 = vadd.s32 %v3764, 16
    %v3767 = vadd.s32 %v3764, 24
    %v3768 = vadd.s32 %v3764, 32
    %v3769 = vadd.s32 %v3764, 40
    %v3770 = vadd.s32 %v3764, 48
    %v3771 = vadd.s32 %v3764, 56
    %v3772 = vadd.s32 %v3764, 64
    %v3773 = vadd.s32 %v3764, 72
    %v3774 = vadd.s32 %v3764, 80
    %v3775 = vadd.s32 %v3764, 88
    %v3776 = vadd.s32 %v3764, 96
    %v3777 = vadd.s32 %v3764, 104
    %v3778 = vadd.s32 %v3764, 112
    %v3779 = vadd.s32 %v3764, 120
    %v3780 = vadd.s32 %v3764, 128
    %v3781 = vadd.s32 %v3764, 136
    %v3782 = vadd.s32 %v3764, 144
    %v3783 = vadd.s32 %v3764, 152
    %v3784 = vadd.s32 %v3764, 160
    %v3785 = vcvt.s32.f32 %v3764
    %v3786 = vcvt.s32.f32 %v3765
    %v3787 = vcvt.s32.f32 %v3766
    %v3788 = vcvt.s32.f32 %v3767
    %v3789 = vcvt.s32.f32 %v3768
    %v3790 = vcvt.s32.f32 %v3769
    %v3791 = vcvt.s32.f32 %v3770
    %v3792 = vcvt.s32.f32 %v3771
    %v3793 = vcvt.s32.f32 %v3772
    %v3794 = vcvt.s32.f32 %v3773
    %v3795 = vcvt.s32.f32 %v3774
    %v3796 = vcvt.s32.f32 %v3775
    %v3797 = vcvt.s32.f32 %v3776
    %v3798 = vcvt.s32.f32 %v3777
    %v3799 = vcvt.s32.f32 %v3778
    %v3800 = vcvt.s32.f32 %v3779
    %v3801 = vcvt.s32.f32 %v3780
    %v3802 = vcvt.s32.f32 %v3781
    %v3803 = vcvt.s32.f32 %v3782
    %v3804 = vcvt.s32.f32 %v3783
    %v3805 = vcvt.s32.f32 %v3784
    %vm3806 = vcmp.ge.f32.partialorder %v3785, 16.0
    %vm3807 = vcmp.ge.f32.partialorder %v3786, 16.0
    %vm3808 = vcmp.ge.f32.partialorder %v3787, 16.0
    %vm3809 = vcmp.ge.f32.partialorder %v3788, 16.0
    %vm3810 = vcmp.ge.f32.partialorder %v3789, 16.0
    %vm3811 = vcmp.ge.f32.partialorder %v3790, 16.0
    %vm3812 = vcmp.ge.f32.partialorder %v3791, 16.0
    %vm3813 = vcmp.ge.f32.partialorder %v3792, 16.0
    %vm3814 = vcmp.ge.f32.partialorder %v3793, 16.0
    %vm3815 = vcmp.ge.f32.partialorder %v3794, 16.0
    %vm3816 = vcmp.ge.f32.partialorder %v3795, 16.0
    %vm3817 = vcmp.ge.f32.partialorder %v3796, 16.0
    %vm3818 = vcmp.ge.f32.partialorder %v3797, 16.0
    %vm3819 = vcmp.ge.f32.partialorder %v3798, 16.0
    %vm3820 = vcmp.ge.f32.partialorder %v3799, 16.0
    %vm3821 = vcmp.ge.f32.partialorder %v3800, 16.0
    %vm3822 = vcmp.ge.f32.partialorder %v3801, 16.0
    %vm3823 = vcmp.ge.f32.partialorder %v3802, 16.0
    %vm3824 = vcmp.ge.f32.partialorder %v3803, 16.0
    %vm3825 = vcmp.ge.f32.partialorder %v3804, 16.0
    %vm3826 = vcmp.ge.f32.partialorder %v3805, 16.0
    %vm3827 = vcmp.le.f32.partialorder %v3785, 160.0
    %vm3828 = vcmp.le.f32.partialorder %v3786, 160.0
    %vm3829 = vcmp.le.f32.partialorder %v3787, 160.0
    %vm3830 = vcmp.le.f32.partialorder %v3788, 160.0
    %vm3831 = vcmp.le.f32.partialorder %v3789, 160.0
    %vm3832 = vcmp.le.f32.partialorder %v3790, 160.0
    %vm3833 = vcmp.le.f32.partialorder %v3791, 160.0
    %vm3834 = vcmp.le.f32.partialorder %v3792, 160.0
    %vm3835 = vcmp.le.f32.partialorder %v3793, 160.0
    %vm3836 = vcmp.le.f32.partialorder %v3794, 160.0
    %vm3837 = vcmp.le.f32.partialorder %v3795, 160.0
    %vm3838 = vcmp.le.f32.partialorder %v3796, 160.0
    %vm3839 = vcmp.le.f32.partialorder %v3797, 160.0
    %vm3840 = vcmp.le.f32.partialorder %v3798, 160.0
    %vm3841 = vcmp.le.f32.partialorder %v3799, 160.0
    %vm3842 = vcmp.le.f32.partialorder %v3800, 160.0
    %vm3843 = vcmp.le.f32.partialorder %v3801, 160.0
    %vm3844 = vcmp.le.f32.partialorder %v3802, 160.0
    %vm3845 = vcmp.le.f32.partialorder %v3803, 160.0
    %vm3846 = vcmp.le.f32.partialorder %v3804, 160.0
    %vm3847 = vcmp.le.f32.partialorder %v3805, 160.0
    %vm3848 = vmand %vm3806, %vm3827
    %vm3849 = vmand %vm3807, %vm3828
    %vm3850 = vmand %vm3808, %vm3829
    %vm3851 = vmand %vm3809, %vm3830
    %vm3852 = vmand %vm3810, %vm3831
    %vm3853 = vmand %vm3811, %vm3832
    %vm3854 = vmand %vm3812, %vm3833
    %vm3855 = vmand %vm3813, %vm3834
    %vm3856 = vmand %vm3814, %vm3835
    %vm3857 = vmand %vm3815, %vm3836
    %vm3858 = vmand %vm3816, %vm3837
    %vm3859 = vmand %vm3817, %vm3838
    %vm3860 = vmand %vm3818, %vm3839
    %vm3861 = vmand %vm3819, %vm3840
    %vm3862 = vmand %vm3820, %vm3841
    %vm3863 = vmand %vm3821, %vm3842
    %vm3864 = vmand %vm3822, %vm3843
    %vm3865 = vmand %vm3823, %vm3844
    %vm3866 = vmand %vm3824, %vm3845
    %vm3867 = vmand %vm3825, %vm3846
    %vm3868 = vmand %vm3826, %vm3847
    %v3869 = vsel %vm3848, %v3742, -inf
    %v3870 = vsel %vm3849, %v3743, -inf
    %v3871 = vsel %vm3850, %v3744, -inf
    %v3872 = vsel %vm3851, %v3745, -inf
    %v3873 = vsel %vm3852, %v3746, -inf
    %v3874 = vsel %vm3853, %v3747, -inf
    %v3875 = vsel %vm3854, %v3748, -inf
    %v3876 = vsel %vm3855, %v3749, -inf
    %v3877 = vsel %vm3856, %v3750, -inf
    %v3878 = vsel %vm3857, %v3751, -inf
    %v3879 = vsel %vm3858, %v3752, -inf
    %v3880 = vsel %vm3859, %v3753, -inf
    %v3881 = vsel %vm3860, %v3754, -inf
    %v3882 = vsel %vm3861, %v3755, -inf
    %v3883 = vsel %vm3862, %v3756, -inf
    %v3884 = vsel %vm3863, %v3757, -inf
    %v3885 = vsel %vm3864, %v3758, -inf
    %v3886 = vsel %vm3865, %v3759, -inf
    %v3887 = vsel %vm3866, %v3760, -inf
    %v3888 = vsel %vm3867, %v3761, -inf
    %v3889 = vsel %vm3868, %v3762, -inf
    %v3890 = vmax.f32 %v3869, %v3873
    %v3891 = vmax.f32 %v3870, %v3874
    %v3892 = vmax.f32 %v3871, %v3875
    %v3893 = vmax.f32 %v3872, %v3876
    %v3894 = vmax.f32 %v3890, %v3877
    %v3895 = vmax.f32 %v3891, %v3878
    %v3896 = vmax.f32 %v3892, %v3879
    %v3897 = vmax.f32 %v3893, %v3880
    %v3898 = vmax.f32 %v3894, %v3881
    %v3899 = vmax.f32 %v3895, %v3882
    %v3900 = vmax.f32 %v3896, %v3883
    %v3901 = vmax.f32 %v3897, %v3884
    %v3902 = vmax.f32 %v3898, %v3885
    %v3903 = vmax.f32 %v3899, %v3886
    %v3904 = vmax.f32 %v3900, %v3887
    %v3905 = vmax.f32 %v3901, %v3888
    %v3906 = vmax.f32 %v3902, %v3889
    %v3907 = vmax.f32 %v3906, %v3903
    %v3908 = vmax.f32 %v3904, %v3905
    %v3909 = vmax.f32 %v3907, %v3908
    %v3910 = vrot.slane %v3909, 4
    %v3911 = vmax.f32 %v3909, %v3910
    %v3912 = vrot.slane %v3911, 2
    %v3913 = vmax.f32 %v3911, %v3912
    %v3914 = vrot.slane %v3913, 1
    %v3915 = vmax.f32 %v3913, %v3914
    %vm3916 = vcmp.ge.f32.partialorder %v3869, %v3915
    %vm3917 = vcmp.ge.f32.partialorder %v3870, %v3915
    %vm3918 = vcmp.ge.f32.partialorder %v3871, %v3915
    %vm3919 = vcmp.ge.f32.partialorder %v3872, %v3915
    %vm3920 = vcmp.ge.f32.partialorder %v3873, %v3915
    %vm3921 = vcmp.ge.f32.partialorder %v3874, %v3915
    %vm3922 = vcmp.ge.f32.partialorder %v3875, %v3915
    %vm3923 = vcmp.ge.f32.partialorder %v3876, %v3915
    %vm3924 = vcmp.ge.f32.partialorder %v3877, %v3915
    %vm3925 = vcmp.ge.f32.partialorder %v3878, %v3915
    %vm3926 = vcmp.ge.f32.partialorder %v3879, %v3915
    %vm3927 = vcmp.ge.f32.partialorder %v3880, %v3915
    %vm3928 = vcmp.ge.f32.partialorder %v3881, %v3915
    %vm3929 = vcmp.ge.f32.partialorder %v3882, %v3915
    %vm3930 = vcmp.ge.f32.partialorder %v3883, %v3915
    %vm3931 = vcmp.ge.f32.partialorder %v3884, %v3915
    %vm3932 = vcmp.ge.f32.partialorder %v3885, %v3915
    %vm3933 = vcmp.ge.f32.partialorder %v3886, %v3915
    %vm3934 = vcmp.ge.f32.partialorder %v3887, %v3915
    %vm3935 = vcmp.ge.f32.partialorder %v3888, %v3915
    %vm3936 = vcmp.ge.f32.partialorder %v3889, %v3915
    %vm3937 = vmand %vm3916, %vm3848
    %vm3938 = vmand %vm3917, %vm3849
    %vm3939 = vmand %vm3918, %vm3850
    %vm3940 = vmand %vm3919, %vm3851
    %vm3941 = vmand %vm3920, %vm3852
    %vm3942 = vmand %vm3921, %vm3853
    %vm3943 = vmand %vm3922, %vm3854
    %vm3944 = vmand %vm3923, %vm3855
    %vm3945 = vmand %vm3924, %vm3856
    %vm3946 = vmand %vm3925, %vm3857
    %vm3947 = vmand %vm3926, %vm3858
    %vm3948 = vmand %vm3927, %vm3859
    %vm3949 = vmand %vm3928, %vm3860
    %vm3950 = vmand %vm3929, %vm3861
    %vm3951 = vmand %vm3930, %vm3862
    %vm3952 = vmand %vm3931, %vm3863
    %vm3953 = vmand %vm3932, %vm3864
    %vm3954 = vmand %vm3933, %vm3865
    %vm3955 = vmand %vm3934, %vm3866
    %vm3956 = vmand %vm3935, %vm3867
    %vm3957 = vmand %vm3936, %vm3868
    %v3958 = vsel %vm3937, %v3785, 0.0
    %v3959 = vsel %vm3938, %v3786, 0.0
    %v3960 = vsel %vm3939, %v3787, 0.0
    %v3961 = vsel %vm3940, %v3788, 0.0
    %v3962 = vsel %vm3941, %v3789, 0.0
    %v3963 = vsel %vm3942, %v3790, 0.0
    %v3964 = vsel %vm3943, %v3791, 0.0
    %v3965 = vsel %vm3944, %v3792, 0.0
    %v3966 = vsel %vm3945, %v3793, 0.0
    %v3967 = vsel %vm3946, %v3794, 0.0
    %v3968 = vsel %vm3947, %v3795, 0.0
    %v3969 = vsel %vm3948, %v3796, 0.0
    %v3970 = vsel %vm3949, %v3797, 0.0
    %v3971 = vsel %vm3950, %v3798, 0.0
    %v3972 = vsel %vm3951, %v3799, 0.0
    %v3973 = vsel %vm3952, %v3800, 0.0
    %v3974 = vsel %vm3953, %v3801, 0.0
    %v3975 = vsel %vm3954, %v3802, 0.0
    %v3976 = vsel %vm3955, %v3803, 0.0
    %v3977 = vsel %vm3956, %v3804, 0.0
    %v3978 = vsel %vm3957, %v3805, 0.0
    %v3979 = vmax.f32 %v3958, %v3962
    %v3980 = vmax.f32 %v3959, %v3963
    %v3981 = vmax.f32 %v3960, %v3964
    %v3982 = vmax.f32 %v3961, %v3965
    %v3983 = vmax.f32 %v3979, %v3966
    %v3984 = vmax.f32 %v3980, %v3967
    %v3985 = vmax.f32 %v3981, %v3968
    %v3986 = vmax.f32 %v3982, %v3969
    %v3987 = vmax.f32 %v3983, %v3970
    %v3988 = vmax.f32 %v3984, %v3971
    %v3989 = vmax.f32 %v3985, %v3972
    %v3990 = vmax.f32 %v3986, %v3973
    %v3991 = vmax.f32 %v3987, %v3974
    %v3992 = vmax.f32 %v3988, %v3975
    %v3993 = vmax.f32 %v3989, %v3976
    %v3994 = vmax.f32 %v3990, %v3977
    %v3995 = vmax.f32 %v3991, %v3978
    %v3996 = vmax.f32 %v3995, %v3992
    %v3997 = vmax.f32 %v3993, %v3994
    %v3998 = vmax.f32 %v3996, %v3997
    %v3999 = vrot.slane %v3998, 4
    %v4000 = vmax.f32 %v3998, %v3999
    %v4001 = vrot.slane %v4000, 2
    %v4002 = vmax.f32 %v4000, %v4001
    %v4003 = vrot.slane %v4002, 1
    %v4004 = vmax.f32 %v4002, %v4003
    %v4005 = vmax.f32 %v4004, 1.0
    %4006 = vst [vmem:[#allocation6 + $0x90] sm:$0x1] %v3427
    %4007 = vst [vmem:[#allocation6 + $0x91] sm:$0x1] %v3712
    %4008 = vst [vmem:[#allocation6 + $0x92] sm:$0x1] %v3717
    %v4009 = vrcp.pop %v4005
    %v4010 = vmul.f32 8000.0, %v4009
    %v4011 = vlog2.pop %v4010
    %v4012 = vmul.f32 %v4011, 0.6931472
    %4013 = vst [vmem:[#allocation6 + $0x93] sm:$0x1] %v4012
    %v4014 = vmax.f32 %v3915, 0.0
    %v4015 = vmin.f32 %v4014, 1.0
    %4016 = vst [vmem:[#allocation6 + $0x94] sm:$0x1] %v4015
    %4017 = vst [vmem:[#allocation6 + $0x95] sm:$0x1] %v3915
    // Predicated region
    $region22: #{tpu_custom_call.1} parent=1 // pred_check
      _
    $region23: #{tpu_custom_call.1} parent=1 // pred_check_branch
      %4019 = sbr.rel (0) target = $region25
    $region24: #{tpu_custom_call.1} parent=1 // pred_region
      %s4021 = ssub.s32 2432, 2432
      %4022 = vsyncadd [#allocation5], %s4021
      %s4023 = sshll.u32 [#allocation6], 4
      %s4024 = int_to_ptr.vmem [resolvable:$true] %s4023
      %4029 = dma.vmem_to_hbm [thread:$0]  %s4024, 2432, %s4, [#allocation5], 128, 128, 8
    $region25: #{tpu_custom_call.1} parent=1 // pred_fallthru
      _
    // Predicated region
    $region26: #{tpu_custom_call.1} parent=1 // pred_check
      _
    $region27: #{tpu_custom_call.1} parent=1 // pred_check_branch
      %4031 = sbr.rel (0) target = $region29
    $region28: #{tpu_custom_call.1} parent=1 // pred_region
      %4032 = dma.done [#allocation5], 2432
    $region29: #{tpu_custom_call.1} parent=1 // pred_fallthru
      _
    %4033 = vsyncpa [#allocation4], 1
    %4034 = vsyncpa [#allocation5], 1

</llo_original>
